<compile_context>
chip_gen: v7x
topology: tpu7x:2x2x1
jax: 0.10.0
libtpu: 0.0.40
codegen_flags: <defaults>
</compile_context>

<pallas_src>
import functools

import numpy as np
import jax
import jax.numpy as jnp
from jax.experimental import pallas as pl
from jax.experimental.pallas import tpu as pltpu


def _round_up(v, m):
    return ((v + m - 1) // m) * m


# ---------------------------------------------------------------------------
# In-kernel helpers (layout-safe ops only: static slices, sublane concat,
# elementwise max, leading-dim reshapes)
# ---------------------------------------------------------------------------

def _pool_rows(h):
    """Max over adjacent row (y) pairs: (TB, H, L) -> (TB, H//2, L).

    Kept as pairwise static slices + one sublane concatenate (known to lower in
    Mosaic) rather than a strided value slice h[:, 0::2, :]; it runs after the
    cheap W pool so it only touches half the lanes.
    """
    return jnp.concatenate(
        [jnp.maximum(h[:, 2 * k:2 * k + 1, :], h[:, 2 * k + 1:2 * k + 2, :])
         for k in range(h.shape[1] // 2)],
        axis=1)


# ---------------------------------------------------------------------------
# The fused forward kernel (conv1 + pool/relu + conv2 + pool/relu + fc)
# ---------------------------------------------------------------------------

def _fused_forward_kernel(x_ref, w1_ref, b1_ref, w2_ref, b2_ref, wf_ref, bf_ref,
                          o_ref, *, c1, c2):
    tb = x_ref.shape[0]
    cdt = w1_ref.dtype                       # matmul input dtype (bf16 prod / f32 check)
    x = x_ref[...].astype(cdt)               # (TB, 28, 28), lanes = x_in

    # ---- conv1: 1 -> c1, 5x5 valid, fused bias -------------------------------
    # LHS rows = (n, y_out), lanes = (dy, x_in); the banded (Toeplitz-over-x)
    # weight carries the dx taps, so the whole conv is ONE MXU matmul.
    l1 = jnp.concatenate([x[:, dy:dy + 24, :] for dy in range(5)], axis=-1)
    l1 = l1.reshape(tb * 24, 5 * 28)                              # (TB*24, 140)
    h1 = jnp.dot(l1, w1_ref[...], preferred_element_type=jnp.float32) + b1_ref[...]

    # W pool first: weight columns are x-parity-major (even-x block | odd-x
    # block), so the pool over x is a max of two 128-aligned contiguous halves
    # and the pooled result is back in plain (x, c) lane order.
    half1 = 12 * c1
    m1 = jnp.maximum(h1[:, :half1], h1[:, half1:]).reshape(tb, 24, half1)
    a1 = jnp.maximum(_pool_rows(m1), 0.0)                         # H pool + ReLU (f32)
    a1 = a1.astype(w2_ref.dtype)                                  # (TB, 12, 12*c1)

    # ---- conv2: c1 -> c2, 5x5 valid, fused bias -------------------------------
    l2 = jnp.concatenate([a1[:, dy:dy + 8, :] for dy in range(5)], axis=-1)
    l2 = l2.reshape(tb * 8, 5 * 12 * c1)                          # (TB*8, 1920)
    h2 = jnp.dot(l2, w2_ref[...], preferred_element_type=jnp.float32) + b2_ref[...]

    half2 = 4 * c2
    m2 = jnp.maximum(h2[:, :half2], h2[:, half2:]).reshape(tb, 8, half2)
    a2 = jnp.maximum(_pool_rows(m2), 0.0)                         # (TB, 4, 4*c2) f32
    a2 = a2.astype(wf_ref.dtype)

    # ---- fc: one matmul per pooled row (avoids a sublane->lane relayout of the
    # flatten); wf rows are pre-permuted to the kernel's (y, x, c) feature order.
    acc = None
    for yo in range(4):
        feat = a2[:, yo, :]                                       # (TB, 4*c2)
        wslc = wf_ref[yo * 4 * c2:(yo + 1) * 4 * c2, :]           # (4*c2, 128)
        part = jnp.dot(feat, wslc, preferred_element_type=jnp.float32)
        acc = part if acc is None else acc + part
    o_ref[...] = acc + bf_ref[...]                                # (TB, 128) lane-dense store


# ---------------------------------------------------------------------------
# One-time parameter preparation (PyTorch layout -> kernel-ready matrices)
# ---------------------------------------------------------------------------

def _band_conv_weight(w_oihw, w_in, dtype):
    """Banded matmul weight of shape (kh*w_in*cin, w_out*cout).

    Row index   = (dy, x_in, c_in)   -- matches the in-kernel im2col over dy.
    Column index= (x_out parity-major, c_out):
        col = p*(w_out//2)*cout + (x_out//2)*cout + c_out,  p = x_out % 2
    so the 2x2 pool's W step is max(h[..., :half], h[..., half:]) on aligned
    halves and the pooled output is in plain (x, c) lane order.
    """
    cout, cin, kh, kw = w_oihw.shape
    w_out = w_in - kw + 1
    w = np.asarray(jax.device_get(w_oihw), np.float32)
    mat = np.zeros((kh, w_in, cin, w_out, cout), np.float32)
    for dy in range(kh):
        for dx in range(kw):
            for xo in range(w_out):
                mat[dy, xo + dx, :, xo, :] = w[:, :, dy, dx].T
    order = list(range(0, w_out, 2)) + list(range(1, w_out, 2))   # parity-major x_out
    mat = mat[:, :, :, order, :]
    return jnp.asarray(mat.reshape(kh * w_in * cin, w_out * cout), dtype)


def prepare_params(params, *, dtype=jnp.bfloat16, lane_pad=128):
    """Convert PyTorch-layout params into the kernel's resident matrices (run once).

    `dtype` is the MXU input dtype (bfloat16 in production, float32 for the
    tight correctness baseline). Biases stay float32 (added to f32 accumulators).
    """
    c1 = params["conv1_w"].shape[0]
    c2 = params["conv2_w"].shape[0]
    num_classes = params["fc_w"].shape[0]
    n_pad = _round_up(num_classes, lane_pad)

    w1t = _band_conv_weight(params["conv1_w"], 28, dtype)                 # (140, 24*c1)
    b1r = jnp.tile(params["conv1_b"].astype(jnp.float32), 24).reshape(1, 24 * c1)
    w2t = _band_conv_weight(params["conv2_w"], 12, dtype)                 # (5*12*c1, 8*c2)
    b2r = jnp.tile(params["conv2_b"].astype(jnp.float32), 8).reshape(1, 8 * c2)

    # fc.weight columns follow torch's NCHW flatten (c, h, w); re-permute to the
    # kernel's (h, w, c) order and zero-pad classes to a full 128-lane store.
    wf = params["fc_w"].astype(jnp.float32).reshape(num_classes, c2, 4, 4)
    wf = jnp.transpose(wf, (2, 3, 1, 0)).reshape(16 * c2, num_classes)
    wf = jnp.pad(wf, ((0, 0), (0, n_pad - num_classes))).astype(dtype)
    bf = jnp.pad(params["fc_b"].astype(jnp.float32),
                 (0, n_pad - num_classes)).reshape(1, n_pad)

    return {"w1t": w1t, "b1": b1r, "w2t": w2t, "b2": b2r, "wf": wf, "bf": bf}


# ---------------------------------------------------------------------------
# Public forward
# ---------------------------------------------------------------------------

def _const_block_spec(shape):
    """BlockSpec for a grid-invariant (VMEM-resident) operand.

    Single-buffered when pipeline_mode=pl.Buffered(1) is available (the block
    never changes, so double buffering only wastes VMEM — matters on v7x's
    64 MiB); falls back to the default spec otherwise.
    """
    idx_map = lambda i: (0,) * len(shape)
    try:
        return pl.BlockSpec(shape, idx_map, pipeline_mode=pl.Buffered(1))
    except Exception:  # pipeline_mode/Buffered not available in this JAX build
        return pl.BlockSpec(shape, idx_map)


def simple_cnn_forward(prepared, x_nchw, *, num_classes=62, batch_tile=64):
    """x_nchw: (N, 1, 28, 28) float32 (PyTorch layout). Returns (N, num_classes) f32.

    batch_tile: 64 is a good default everywhere; 32-64 on v7x, up to 128 on
    v5e/v6e if the batch is large.
    """
    w1t, b1, w2t, b2, wf, bf = (prepared[k] for k in ("w1t", "b1", "w2t", "b2", "wf", "bf"))
    c1 = b1.shape[1] // 24
    c2 = b2.shape[1] // 8
    n_cls_pad = wf.shape[1]
    cdt = w1t.dtype

    n, cin, hh, ww = x_nchw.shape
    assert (cin, hh, ww) == (1, 28, 28), "SimpleCNN's fc layer fixes the input to 1x28x28"

    # Input in the matmul dtype (halves the per-step x DMA for the bf16 path).
    x = x_nchw[:, 0, :, :].astype(cdt)                            # (N, 28, 28)

    # Tile selection: biggest tile <= batch_tile, but keep >= 2 grid steps when
    # the batch allows it so v7x's 2 TensorCores both get work on the single
    # "parallel" axis (irrelevant on v5e/v6e's single TC).
    tb = min(_round_up(batch_tile, 8), _round_up(n, 8))
    if pl.cdiv(n, tb) == 1 and n > 8:
        tb = _round_up(pl.cdiv(n, 2), 8)
    n_tiles = pl.cdiv(n, tb)
    n_padded = n_tiles * tb
    if n_padded != n:
        x = jnp.pad(x, ((0, n_padded - n), (0, 0), (0, 0)))

    kernel = functools.partial(_fused_forward_kernel, c1=c1, c2=c2)

    flops = 2 * n_padded * (24 * w1t.shape[0] * w1t.shape[1]
                            + 8 * w2t.shape[0] * w2t.shape[1]
                            + 16 * c2 * n_cls_pad)
    bytes_accessed = int(x.size * x.dtype.itemsize
                         + sum(a.size * a.dtype.itemsize
                               for a in (w1t, b1, w2t, b2, wf, bf))
                         + n_padded * n_cls_pad * 4)

    logits_padded = pl.pallas_call(
        kernel,
        out_shape=jax.ShapeDtypeStruct((n_padded, n_cls_pad), jnp.float32),
        grid_spec=pltpu.PrefetchScalarGridSpec(
            num_scalar_prefetch=0,
            grid=(n_tiles,),
            in_specs=[
                pl.BlockSpec((tb, 28, 28), lambda i: (i, 0, 0)),   # batch tile of images
                _const_block_spec(w1t.shape),                      # VMEM-resident weights
                _const_block_spec(b1.shape),
                _const_block_spec(w2t.shape),
                _const_block_spec(b2.shape),
                _const_block_spec(wf.shape),
                _const_block_spec(bf.shape),
            ],
            out_specs=pl.BlockSpec((tb, n_cls_pad), lambda i: (i, 0)),
        ),
        compiler_params=pltpu.CompilerParams(
            dimension_semantics=("parallel",),      # batch tiles across v7x's 2 TensorCores
            vmem_limit_bytes=48 * 1024 * 1024,      # fits v7x (64 MiB/TC); ample on v5e/v6e
        ),
        cost_estimate=pl.CostEstimate(flops=flops, transcendentals=0,
                                      bytes_accessed=bytes_accessed),
    )(x, w1t, b1, w2t, b2, wf, bf)

    return logits_padded[:n, :num_classes]


# ---------------------------------------------------------------------------
# Params + pure-JAX reference (for validation only)
# ---------------------------------------------------------------------------

def init_params(key, channel_1=32, channel_2=64, num_classes=62):
    k1, k2, k3, k4, k5, k6 = jax.random.split(key, 6)
    return {
        # PyTorch shapes: conv.weight = (Cout, Cin, kh, kw), fc.weight = (out, in)
        "conv1_w": jax.random.normal(k1, (channel_1, 1, 5, 5), jnp.float32) * 0.1,
        "conv1_b": jax.random.normal(k2, (channel_1,), jnp.float32) * 0.1,
        "conv2_w": jax.random.normal(k3, (channel_2, channel_1, 5, 5), jnp.float32) * 0.05,
        "conv2_b": jax.random.normal(k4, (channel_2,), jnp.float32) * 0.05,
        "fc_w": jax.random.normal(k5, (num_classes, 16 * channel_2), jnp.float32) * 0.03,
        "fc_b": jax.random.normal(k6, (num_classes,), jnp.float32) * 0.03,
    }


def _reference_forward(params, x_nchw):
    """Pure-JAX (XLA) replica of the PyTorch forward, used to validate the kernel."""
    hp = jax.lax.Precision.HIGHEST
    x = jnp.transpose(x_nchw, (0, 2, 3, 1)).astype(jnp.float32)        # NHWC

    def conv(v, w_oihw, b):
        w = jnp.transpose(w_oihw, (2, 3, 1, 0)).astype(jnp.float32)    # HWIO
        y = jax.lax.conv_general_dilated(
            v, w, window_strides=(1, 1), padding="VALID",
            dimension_numbers=("NHWC", "HWIO", "NHWC"), precision=hp)
        return y + b

    def pool_relu(v):
        v = jax.lax.reduce_window(v, -jnp.inf, jax.lax.max,
                                  (1, 2, 2, 1), (1, 2, 2, 1), "VALID")
        return jnp.maximum(v, 0.0)

    out = pool_relu(conv(x, params["conv1_w"], params["conv1_b"]))
    out = pool_relu(conv(out, params["conv2_w"], params["conv2_b"]))
    flat = jnp.transpose(out, (0, 3, 1, 2)).reshape(out.shape[0], -1)  # NCHW flatten
    return jnp.dot(flat, params["fc_w"].T, precision=hp) + params["fc_b"]


if __name__ == "__main__":
    key = jax.random.PRNGKey(0)
    kx1, kx2, kp = jax.random.split(key, 3)
    params = init_params(kp)   # 28x28 input forced by fc = Linear(16*channel_2, ...)

    fwd = jax.jit(functools.partial(simple_cnn_forward, num_classes=62, batch_tile=64))

    # --- f32-weight baseline: tight functional check (layout / permutation bugs
    #     can't hide behind bf16 rounding noise). ------------------------------
    x_small = jax.random.normal(kx1, (2, 1, 28, 28), jnp.float32)
    prep_f32 = prepare_params(params, dtype=jnp.float32)
    out_f32 = jax.block_until_ready(fwd(prep_f32, x_small))
    assert out_f32.shape == (2, 62), out_f32.shape
    assert out_f32.dtype == jnp.float32, out_f32.dtype
    ref_small = jax.block_until_ready(_reference_forward(params, x_small))
    err_f32 = float(jnp.max(jnp.abs(out_f32 - ref_small)))
    assert err_f32 < 3e-2, f"f32 kernel/reference mismatch: max abs err {err_f32}"

    # --- bf16 production path on a multi-tile batch (exercises the parallel
    #     grid and batch padding); looser tolerance for bf16 matmul rounding. ---
    x_big = jax.random.normal(kx2, (20, 1, 28, 28), jnp.float32)
    prep_bf16 = prepare_params(params)                     # bfloat16 matmul weights
    out_bf16 = jax.block_until_ready(fwd(prep_bf16, x_big))
    assert out_bf16.shape == (20, 62), out_bf16.shape
    assert out_bf16.dtype == jnp.float32, out_bf16.dtype
    ref_big = jax.block_until_ready(_reference_forward(params, x_big))
    err_bf16 = float(jnp.max(jnp.abs(out_bf16 - ref_big)))
    assert err_bf16 < 1e-1, f"bf16 kernel/reference mismatch: max abs err {err_bf16}"

    print("KERNEL_OK")
</pallas_src>

<mosaic_0001>
module attributes {stable_mosaic.version = 11 : i64} {
  func.func @_fused_forward_kernel(%arg0: i32, %arg1: memref<8x28x28xf32, #tpu.memory_space<vmem>>, %arg2: memref<140x768xf32, #tpu.memory_space<vmem>>, %arg3: memref<1x768xf32, #tpu.memory_space<vmem>>, %arg4: memref<1920x512xf32, #tpu.memory_space<vmem>>, %arg5: memref<1x512xf32, #tpu.memory_space<vmem>>, %arg6: memref<1024x128xf32, #tpu.memory_space<vmem>>, %arg7: memref<1x128xf32, #tpu.memory_space<vmem>>, %arg8: memref<8x128xf32, #tpu.memory_space<vmem>>) attributes {dimension_semantics = [#tpu.dimension_semantics<parallel>], iteration_bounds = array<i64: 1>, scalar_prefetch = 0 : i64, scratch_operands = 0 : i64, tpu.core_type = #tpu.core_type<tc>, window_params = [{transform_indices = @transform_0, window_bounds = array<i64: 8, 28, 28>}, {pipeline_mode = #tpu.pipeline_mode<synchronous>, transform_indices = @transform_1, window_bounds = array<i64: 140, 768>}, {pipeline_mode = #tpu.pipeline_mode<synchronous>, transform_indices = @transform_2, window_bounds = array<i64: 1, 768>}, {pipeline_mode = #tpu.pipeline_mode<synchronous>, transform_indices = @transform_3, window_bounds = array<i64: 1920, 512>}, {pipeline_mode = #tpu.pipeline_mode<synchronous>, transform_indices = @transform_4, window_bounds = array<i64: 1, 512>}, {pipeline_mode = #tpu.pipeline_mode<synchronous>, transform_indices = @transform_5, window_bounds = array<i64: 1024, 128>}, {pipeline_mode = #tpu.pipeline_mode<synchronous>, transform_indices = @transform_6, window_bounds = array<i64: 1, 128>}, {transform_indices = @transform_7, window_bounds = array<i64: 8, 128>}]} {
    %c0 = arith.constant 0 : index
    %c0_0 = arith.constant 0 : index
    %c0_1 = arith.constant 0 : index
    %0 = vector.load %arg1[%c0, %c0_0, %c0_1] : memref<8x28x28xf32, #tpu.memory_space<vmem>>, vector<8x28x28xf32>
    %1 = vector.extract_strided_slice %0 {offsets = [0, 0, 0], sizes = [8, 24, 28], strides = [1, 1, 1]} : vector<8x28x28xf32> to vector<8x24x28xf32>
    %2 = vector.extract_strided_slice %0 {offsets = [0, 1, 0], sizes = [8, 24, 28], strides = [1, 1, 1]} : vector<8x28x28xf32> to vector<8x24x28xf32>
    %3 = vector.extract_strided_slice %0 {offsets = [0, 2, 0], sizes = [8, 24, 28], strides = [1, 1, 1]} : vector<8x28x28xf32> to vector<8x24x28xf32>
    %4 = vector.extract_strided_slice %0 {offsets = [0, 3, 0], sizes = [8, 24, 28], strides = [1, 1, 1]} : vector<8x28x28xf32> to vector<8x24x28xf32>
    %5 = vector.extract_strided_slice %0 {offsets = [0, 4, 0], sizes = [8, 24, 28], strides = [1, 1, 1]} : vector<8x28x28xf32> to vector<8x24x28xf32>
    %6 = tpu.concatenate %1, %2, %3, %4, %5 in 2 : vector<8x24x28xf32>, vector<8x24x28xf32>, vector<8x24x28xf32>, vector<8x24x28xf32>, vector<8x24x28xf32> -> vector<8x24x140xf32>
    %7 = vector.shape_cast %6 : vector<8x24x140xf32> to vector<192x140xf32>
    %c0_2 = arith.constant 0 : index
    %c0_3 = arith.constant 0 : index
    %8 = vector.load %arg2[%c0_2, %c0_3] : memref<140x768xf32, #tpu.memory_space<vmem>>, vector<140x768xf32>
    %cst = arith.constant dense<0.000000e+00> : vector<192x768xf32>
    %9 = tpu.matmul %7, %8, %cst {dimension_numbers = #tpu.dot_dimension_numbers<[1], [0], [0], [1], [0, 0, 1, 1], [], []>} : vector<192x140xf32>, vector<140x768xf32>, vector<192x768xf32> -> vector<192x768xf32>
    %c0_4 = arith.constant 0 : index
    %c0_5 = arith.constant 0 : index
    %10 = vector.load %arg3[%c0_4, %c0_5] : memref<1x768xf32, #tpu.memory_space<vmem>>, vector<1x768xf32>
    %11 = vector.broadcast %10 : vector<1x768xf32> to vector<192x768xf32>
    %12 = arith.addf %9, %11 : vector<192x768xf32>
    %13 = vector.extract_strided_slice %12 {offsets = [0, 0], sizes = [192, 384], strides = [1, 1]} : vector<192x768xf32> to vector<192x384xf32>
    %14 = vector.extract_strided_slice %12 {offsets = [0, 384], sizes = [192, 384], strides = [1, 1]} : vector<192x768xf32> to vector<192x384xf32>
    %15 = arith.maximumf %13, %14 : vector<192x384xf32>
    %16 = vector.shape_cast %15 : vector<192x384xf32> to vector<8x24x384xf32>
    %17 = vector.extract_strided_slice %16 {offsets = [0, 0, 0], sizes = [8, 1, 384], strides = [1, 1, 1]} : vector<8x24x384xf32> to vector<8x1x384xf32>
    %18 = vector.extract_strided_slice %16 {offsets = [0, 1, 0], sizes = [8, 1, 384], strides = [1, 1, 1]} : vector<8x24x384xf32> to vector<8x1x384xf32>
    %19 = arith.maximumf %17, %18 : vector<8x1x384xf32>
    %20 = vector.extract_strided_slice %16 {offsets = [0, 2, 0], sizes = [8, 1, 384], strides = [1, 1, 1]} : vector<8x24x384xf32> to vector<8x1x384xf32>
    %21 = vector.extract_strided_slice %16 {offsets = [0, 3, 0], sizes = [8, 1, 384], strides = [1, 1, 1]} : vector<8x24x384xf32> to vector<8x1x384xf32>
    %22 = arith.maximumf %20, %21 : vector<8x1x384xf32>
    %23 = vector.extract_strided_slice %16 {offsets = [0, 4, 0], sizes = [8, 1, 384], strides = [1, 1, 1]} : vector<8x24x384xf32> to vector<8x1x384xf32>
    %24 = vector.extract_strided_slice %16 {offsets = [0, 5, 0], sizes = [8, 1, 384], strides = [1, 1, 1]} : vector<8x24x384xf32> to vector<8x1x384xf32>
    %25 = arith.maximumf %23, %24 : vector<8x1x384xf32>
    %26 = vector.extract_strided_slice %16 {offsets = [0, 6, 0], sizes = [8, 1, 384], strides = [1, 1, 1]} : vector<8x24x384xf32> to vector<8x1x384xf32>
    %27 = vector.extract_strided_slice %16 {offsets = [0, 7, 0], sizes = [8, 1, 384], strides = [1, 1, 1]} : vector<8x24x384xf32> to vector<8x1x384xf32>
    %28 = arith.maximumf %26, %27 : vector<8x1x384xf32>
    %29 = vector.extract_strided_slice %16 {offsets = [0, 8, 0], sizes = [8, 1, 384], strides = [1, 1, 1]} : vector<8x24x384xf32> to vector<8x1x384xf32>
    %30 = vector.extract_strided_slice %16 {offsets = [0, 9, 0], sizes = [8, 1, 384], strides = [1, 1, 1]} : vector<8x24x384xf32> to vector<8x1x384xf32>
    %31 = arith.maximumf %29, %30 : vector<8x1x384xf32>
    %32 = vector.extract_strided_slice %16 {offsets = [0, 10, 0], sizes = [8, 1, 384], strides = [1, 1, 1]} : vector<8x24x384xf32> to vector<8x1x384xf32>
    %33 = vector.extract_strided_slice %16 {offsets = [0, 11, 0], sizes = [8, 1, 384], strides = [1, 1, 1]} : vector<8x24x384xf32> to vector<8x1x384xf32>
    %34 = arith.maximumf %32, %33 : vector<8x1x384xf32>
    %35 = vector.extract_strided_slice %16 {offsets = [0, 12, 0], sizes = [8, 1, 384], strides = [1, 1, 1]} : vector<8x24x384xf32> to vector<8x1x384xf32>
    %36 = vector.extract_strided_slice %16 {offsets = [0, 13, 0], sizes = [8, 1, 384], strides = [1, 1, 1]} : vector<8x24x384xf32> to vector<8x1x384xf32>
    %37 = arith.maximumf %35, %36 : vector<8x1x384xf32>
    %38 = vector.extract_strided_slice %16 {offsets = [0, 14, 0], sizes = [8, 1, 384], strides = [1, 1, 1]} : vector<8x24x384xf32> to vector<8x1x384xf32>
    %39 = vector.extract_strided_slice %16 {offsets = [0, 15, 0], sizes = [8, 1, 384], strides = [1, 1, 1]} : vector<8x24x384xf32> to vector<8x1x384xf32>
    %40 = arith.maximumf %38, %39 : vector<8x1x384xf32>
    %41 = vector.extract_strided_slice %16 {offsets = [0, 16, 0], sizes = [8, 1, 384], strides = [1, 1, 1]} : vector<8x24x384xf32> to vector<8x1x384xf32>
    %42 = vector.extract_strided_slice %16 {offsets = [0, 17, 0], sizes = [8, 1, 384], strides = [1, 1, 1]} : vector<8x24x384xf32> to vector<8x1x384xf32>
    %43 = arith.maximumf %41, %42 : vector<8x1x384xf32>
    %44 = vector.extract_strided_slice %16 {offsets = [0, 18, 0], sizes = [8, 1, 384], strides = [1, 1, 1]} : vector<8x24x384xf32> to vector<8x1x384xf32>
    %45 = vector.extract_strided_slice %16 {offsets = [0, 19, 0], sizes = [8, 1, 384], strides = [1, 1, 1]} : vector<8x24x384xf32> to vector<8x1x384xf32>
    %46 = arith.maximumf %44, %45 : vector<8x1x384xf32>
    %47 = vector.extract_strided_slice %16 {offsets = [0, 20, 0], sizes = [8, 1, 384], strides = [1, 1, 1]} : vector<8x24x384xf32> to vector<8x1x384xf32>
    %48 = vector.extract_strided_slice %16 {offsets = [0, 21, 0], sizes = [8, 1, 384], strides = [1, 1, 1]} : vector<8x24x384xf32> to vector<8x1x384xf32>
    %49 = arith.maximumf %47, %48 : vector<8x1x384xf32>
    %50 = vector.extract_strided_slice %16 {offsets = [0, 22, 0], sizes = [8, 1, 384], strides = [1, 1, 1]} : vector<8x24x384xf32> to vector<8x1x384xf32>
    %51 = vector.extract_strided_slice %16 {offsets = [0, 23, 0], sizes = [8, 1, 384], strides = [1, 1, 1]} : vector<8x24x384xf32> to vector<8x1x384xf32>
    %52 = arith.maximumf %50, %51 : vector<8x1x384xf32>
    %53 = tpu.concatenate %19, %22, %25, %28, %31, %34, %37, %40, %43, %46, %49, %52 in 1 : vector<8x1x384xf32>, vector<8x1x384xf32>, vector<8x1x384xf32>, vector<8x1x384xf32>, vector<8x1x384xf32>, vector<8x1x384xf32>, vector<8x1x384xf32>, vector<8x1x384xf32>, vector<8x1x384xf32>, vector<8x1x384xf32>, vector<8x1x384xf32>, vector<8x1x384xf32> -> vector<8x12x384xf32>
    %cst_6 = arith.constant 0.000000e+00 : f32
    %54 = vector.broadcast %cst_6 : f32 to vector<8x12x384xf32>
    %55 = arith.maximumf %53, %54 : vector<8x12x384xf32>
    %56 = vector.extract_strided_slice %55 {offsets = [0, 0, 0], sizes = [8, 8, 384], strides = [1, 1, 1]} : vector<8x12x384xf32> to vector<8x8x384xf32>
    %57 = vector.extract_strided_slice %55 {offsets = [0, 1, 0], sizes = [8, 8, 384], strides = [1, 1, 1]} : vector<8x12x384xf32> to vector<8x8x384xf32>
    %58 = vector.extract_strided_slice %55 {offsets = [0, 2, 0], sizes = [8, 8, 384], strides = [1, 1, 1]} : vector<8x12x384xf32> to vector<8x8x384xf32>
    %59 = vector.extract_strided_slice %55 {offsets = [0, 3, 0], sizes = [8, 8, 384], strides = [1, 1, 1]} : vector<8x12x384xf32> to vector<8x8x384xf32>
    %60 = vector.extract_strided_slice %55 {offsets = [0, 4, 0], sizes = [8, 8, 384], strides = [1, 1, 1]} : vector<8x12x384xf32> to vector<8x8x384xf32>
    %61 = tpu.concatenate %56, %57, %58, %59, %60 in 2 : vector<8x8x384xf32>, vector<8x8x384xf32>, vector<8x8x384xf32>, vector<8x8x384xf32>, vector<8x8x384xf32> -> vector<8x8x1920xf32>
    %62 = vector.shape_cast %61 : vector<8x8x1920xf32> to vector<64x1920xf32>
    %c0_7 = arith.constant 0 : index
    %c0_8 = arith.constant 0 : index
    %63 = vector.load %arg4[%c0_7, %c0_8] : memref<1920x512xf32, #tpu.memory_space<vmem>>, vector<1920x512xf32>
    %cst_9 = arith.constant dense<0.000000e+00> : vector<64x512xf32>
    %64 = tpu.matmul %62, %63, %cst_9 {dimension_numbers = #tpu.dot_dimension_numbers<[1], [0], [0], [1], [0, 0, 1, 1], [], []>} : vector<64x1920xf32>, vector<1920x512xf32>, vector<64x512xf32> -> vector<64x512xf32>
    %c0_10 = arith.constant 0 : index
    %c0_11 = arith.constant 0 : index
    %65 = vector.load %arg5[%c0_10, %c0_11] : memref<1x512xf32, #tpu.memory_space<vmem>>, vector<1x512xf32>
    %66 = vector.broadcast %65 : vector<1x512xf32> to vector<64x512xf32>
    %67 = arith.addf %64, %66 : vector<64x512xf32>
    %68 = vector.extract_strided_slice %67 {offsets = [0, 0], sizes = [64, 256], strides = [1, 1]} : vector<64x512xf32> to vector<64x256xf32>
    %69 = vector.extract_strided_slice %67 {offsets = [0, 256], sizes = [64, 256], strides = [1, 1]} : vector<64x512xf32> to vector<64x256xf32>
    %70 = arith.maximumf %68, %69 : vector<64x256xf32>
    %71 = vector.shape_cast %70 : vector<64x256xf32> to vector<8x8x256xf32>
    %72 = vector.extract_strided_slice %71 {offsets = [0, 0, 0], sizes = [8, 1, 256], strides = [1, 1, 1]} : vector<8x8x256xf32> to vector<8x1x256xf32>
    %73 = vector.extract_strided_slice %71 {offsets = [0, 1, 0], sizes = [8, 1, 256], strides = [1, 1, 1]} : vector<8x8x256xf32> to vector<8x1x256xf32>
    %74 = arith.maximumf %72, %73 : vector<8x1x256xf32>
    %75 = vector.extract_strided_slice %71 {offsets = [0, 2, 0], sizes = [8, 1, 256], strides = [1, 1, 1]} : vector<8x8x256xf32> to vector<8x1x256xf32>
    %76 = vector.extract_strided_slice %71 {offsets = [0, 3, 0], sizes = [8, 1, 256], strides = [1, 1, 1]} : vector<8x8x256xf32> to vector<8x1x256xf32>
    %77 = arith.maximumf %75, %76 : vector<8x1x256xf32>
    %78 = vector.extract_strided_slice %71 {offsets = [0, 4, 0], sizes = [8, 1, 256], strides = [1, 1, 1]} : vector<8x8x256xf32> to vector<8x1x256xf32>
    %79 = vector.extract_strided_slice %71 {offsets = [0, 5, 0], sizes = [8, 1, 256], strides = [1, 1, 1]} : vector<8x8x256xf32> to vector<8x1x256xf32>
    %80 = arith.maximumf %78, %79 : vector<8x1x256xf32>
    %81 = vector.extract_strided_slice %71 {offsets = [0, 6, 0], sizes = [8, 1, 256], strides = [1, 1, 1]} : vector<8x8x256xf32> to vector<8x1x256xf32>
    %82 = vector.extract_strided_slice %71 {offsets = [0, 7, 0], sizes = [8, 1, 256], strides = [1, 1, 1]} : vector<8x8x256xf32> to vector<8x1x256xf32>
    %83 = arith.maximumf %81, %82 : vector<8x1x256xf32>
    %84 = tpu.concatenate %74, %77, %80, %83 in 1 : vector<8x1x256xf32>, vector<8x1x256xf32>, vector<8x1x256xf32>, vector<8x1x256xf32> -> vector<8x4x256xf32>
    %cst_12 = arith.constant 0.000000e+00 : f32
    %85 = vector.broadcast %cst_12 : f32 to vector<8x4x256xf32>
    %86 = arith.maximumf %84, %85 : vector<8x4x256xf32>
    %87 = vector.extract_strided_slice %86 {offsets = [0, 0, 0], sizes = [8, 1, 256], strides = [1, 1, 1]} : vector<8x4x256xf32> to vector<8x1x256xf32>
    %88 = vector.shape_cast %87 : vector<8x1x256xf32> to vector<8x256xf32>
    %c0_13 = arith.constant 0 : index
    %c0_14 = arith.constant 0 : index
    %89 = vector.load %arg6[%c0_13, %c0_14] : memref<1024x128xf32, #tpu.memory_space<vmem>>, vector<256x128xf32>
    %cst_15 = arith.constant dense<0.000000e+00> : vector<8x128xf32>
    %90 = tpu.matmul %88, %89, %cst_15 {dimension_numbers = #tpu.dot_dimension_numbers<[1], [0], [0], [1], [0, 0, 1, 1], [], []>} : vector<8x256xf32>, vector<256x128xf32>, vector<8x128xf32> -> vector<8x128xf32>
    %91 = vector.extract_strided_slice %86 {offsets = [0, 1, 0], sizes = [8, 1, 256], strides = [1, 1, 1]} : vector<8x4x256xf32> to vector<8x1x256xf32>
    %92 = vector.shape_cast %91 : vector<8x1x256xf32> to vector<8x256xf32>
    %c256 = arith.constant 256 : index
    %c0_16 = arith.constant 0 : index
    %93 = vector.load %arg6[%c256, %c0_16] : memref<1024x128xf32, #tpu.memory_space<vmem>>, vector<256x128xf32>
    %cst_17 = arith.constant dense<0.000000e+00> : vector<8x128xf32>
    %94 = tpu.matmul %92, %93, %cst_17 {dimension_numbers = #tpu.dot_dimension_numbers<[1], [0], [0], [1], [0, 0, 1, 1], [], []>} : vector<8x256xf32>, vector<256x128xf32>, vector<8x128xf32> -> vector<8x128xf32>
    %95 = arith.addf %90, %94 : vector<8x128xf32>
    %96 = vector.extract_strided_slice %86 {offsets = [0, 2, 0], sizes = [8, 1, 256], strides = [1, 1, 1]} : vector<8x4x256xf32> to vector<8x1x256xf32>
    %97 = vector.shape_cast %96 : vector<8x1x256xf32> to vector<8x256xf32>
    %c512 = arith.constant 512 : index
    %c0_18 = arith.constant 0 : index
    %98 = vector.load %arg6[%c512, %c0_18] : memref<1024x128xf32, #tpu.memory_space<vmem>>, vector<256x128xf32>
    %cst_19 = arith.constant dense<0.000000e+00> : vector<8x128xf32>
    %99 = tpu.matmul %97, %98, %cst_19 {dimension_numbers = #tpu.dot_dimension_numbers<[1], [0], [0], [1], [0, 0, 1, 1], [], []>} : vector<8x256xf32>, vector<256x128xf32>, vector<8x128xf32> -> vector<8x128xf32>
    %100 = arith.addf %95, %99 : vector<8x128xf32>
    %101 = vector.extract_strided_slice %86 {offsets = [0, 3, 0], sizes = [8, 1, 256], strides = [1, 1, 1]} : vector<8x4x256xf32> to vector<8x1x256xf32>
    %102 = vector.shape_cast %101 : vector<8x1x256xf32> to vector<8x256xf32>
    %c768 = arith.constant 768 : index
    %c0_20 = arith.constant 0 : index
    %103 = vector.load %arg6[%c768, %c0_20] : memref<1024x128xf32, #tpu.memory_space<vmem>>, vector<256x128xf32>
    %cst_21 = arith.constant dense<0.000000e+00> : vector<8x128xf32>
    %104 = tpu.matmul %102, %103, %cst_21 {dimension_numbers = #tpu.dot_dimension_numbers<[1], [0], [0], [1], [0, 0, 1, 1], [], []>} : vector<8x256xf32>, vector<256x128xf32>, vector<8x128xf32> -> vector<8x128xf32>
    %105 = arith.addf %100, %104 : vector<8x128xf32>
    %c0_22 = arith.constant 0 : index
    %c0_23 = arith.constant 0 : index
    %106 = vector.load %arg7[%c0_22, %c0_23] : memref<1x128xf32, #tpu.memory_space<vmem>>, vector<1x128xf32>
    %107 = vector.broadcast %106 : vector<1x128xf32> to vector<8x128xf32>
    %108 = arith.addf %105, %107 : vector<8x128xf32>
    %c0_24 = arith.constant 0 : index
    %c0_25 = arith.constant 0 : index
    %109 = vector.load %arg8[%c0_24, %c0_25] : memref<8x128xf32, #tpu.memory_space<vmem>>, vector<8x128xf32>
    tpu.vector_store %arg8[%c0_24, %c0_25], %108 {strides = array<i32>} : memref<8x128xf32, #tpu.memory_space<vmem>>, vector<8x128xf32>,
    return
  }
  func.func @transform_0(%arg0: i32) -> (i32, i32, i32) {
    %c0_i32 = arith.constant 0 : i32
    %c0_i32_0 = arith.constant 0 : i32
    %c0_i32_1 = arith.constant 0 : i32
    return %arg0, %c0_i32, %c0_i32_0 : i32, i32, i32
  }
  func.func @transform_1(%arg0: i32) -> (i32, i32) {
    %c0_i32 = arith.constant 0 : i32
    %c0_i32_0 = arith.constant 0 : i32
    %c0_i32_1 = arith.constant 0 : i32
    return %c0_i32, %c0_i32_0 : i32, i32
  }
  func.func @transform_2(%arg0: i32) -> (i32, i32) {
    %c0_i32 = arith.constant 0 : i32
    %c0_i32_0 = arith.constant 0 : i32
    %c0_i32_1 = arith.constant 0 : i32
    return %c0_i32, %c0_i32_0 : i32, i32
  }
  func.func @transform_3(%arg0: i32) -> (i32, i32) {
    %c0_i32 = arith.constant 0 : i32
    %c0_i32_0 = arith.constant 0 : i32
    %c0_i32_1 = arith.constant 0 : i32
    return %c0_i32, %c0_i32_0 : i32, i32
  }
  func.func @transform_4(%arg0: i32) -> (i32, i32) {
    %c0_i32 = arith.constant 0 : i32
    %c0_i32_0 = arith.constant 0 : i32
    %c0_i32_1 = arith.constant 0 : i32
    return %c0_i32, %c0_i32_0 : i32, i32
  }
  func.func @transform_5(%arg0: i32) -> (i32, i32) {
    %c0_i32 = arith.constant 0 : i32
    %c0_i32_0 = arith.constant 0 : i32
    %c0_i32_1 = arith.constant 0 : i32
    return %c0_i32, %c0_i32_0 : i32, i32
  }
  func.func @transform_6(%arg0: i32) -> (i32, i32) {
    %c0_i32 = arith.constant 0 : i32
    %c0_i32_0 = arith.constant 0 : i32
    %c0_i32_1 = arith.constant 0 : i32
    return %c0_i32, %c0_i32_0 : i32, i32
  }
  func.func @transform_7(%arg0: i32) -> (i32, i32) {
    %c0_i32 = arith.constant 0 : i32
    %c0_i32_0 = arith.constant 0 : i32
    return %arg0, %c0_i32 : i32, i32
  }
}

</mosaic_0001>

<llo_original>
// kernel: simple_cnn_forward.1
$region0: #{simple_cnn_forward.1}
  #allocation0 [shape = 'u32[]', space=smem, size = 0x4, offset = 0x4, fixed_abs, tag = 'smem constant byte address 0x4 - core index']
  #allocation1 [shape = 'u32[144,128]{1,0:T(1,128)}', space=vmem, size = 0x12000, scoped, tag = 'internal scratch']
  %s0 = inlined_call_operand.vmem [shape: f32[8,28,28], index: 0, kind: input, shape index: {}]
  %s1 = inlined_call_operand.hbm [shape: f32[140,768], index: 1, kind: input, shape index: {}]
  %s2 = inlined_call_operand.hbm [shape: f32[1,768], index: 2, kind: input, shape index: {}]
  %s3 = inlined_call_operand.hbm [shape: f32[1920,512], index: 3, kind: input, shape index: {}]
  %s4 = inlined_call_operand.hbm [shape: f32[1,512], index: 4, kind: input, shape index: {}]
  %s5 = inlined_call_operand.hbm [shape: f32[1024,128], index: 5, kind: input, shape index: {}]
  %s6 = inlined_call_operand.hbm [shape: f32[1,128], index: 6, kind: input, shape index: {}]
  %s7 = inlined_call_operand.vmem [shape: f32[8,128], index: 7, kind: output, shape index: {}]
  %s8 = sld [smem:[#allocation0]]
  $region62: #{simple_cnn_forward.1} parent=0
    _
  %s10 = ssub.s32 1, %s8
  %s11 = scalar_select 0, %s10, %s8
  $region1: #{simple_cnn_forward.1} parent=0
    #allocation2 [shape = 'u8[442368]{0}', space=vmem, size = 0x6c000, scoped, tag = 'input window, operand 1, single buffered']
    #allocation3 [shape = 's32[1]{0}', space=sflag, size = 0x4, scoped, tag = 'scoped memory for simple_cnn_forward.1']
    #allocation4 [shape = 'u8[3072]{0}', space=vmem, size = 0xc00, scoped, tag = 'input window, operand 2, single buffered']
    #allocation5 [shape = 's32[1]{0}', space=sflag, size = 0x4, scoped, tag = 'scoped memory for simple_cnn_forward.1']
    #allocation6 [shape = 'u8[3932160]{0}', space=vmem, size = 0x3c0000, scoped, tag = 'input window, operand 3, single buffered']
    #allocation7 [shape = 'u8[2048]{0}', space=vmem, size = 0x800, scoped, tag = 'input window, operand 4, single buffered']
    #allocation8 [shape = 's32[1]{0}', space=sflag, size = 0x4, scoped, tag = 'scoped memory for simple_cnn_forward.1']
    #allocation9 [shape = 'u8[524288]{0}', space=vmem, size = 0x80000, scoped, tag = 'input window, operand 5, single buffered']
    #allocation10 [shape = 'u8[512]{0}', space=vmem, size = 0x400, scoped, tag = 'input window, operand 6, single buffered']
    #allocation11 [shape = 's32[1]{0}', space=sflag, size = 0x4, scoped, tag = 'scoped memory for simple_cnn_forward.1']
    %12 = vsyncpa [#allocation3], 0
    %13 = vsyncpa [#allocation5], 0
    %14 = vsyncpa [#allocation8], 0
    %15 = vsyncpa [#allocation11], 0
    // Predicated region
    $region2: #{simple_cnn_forward.1} parent=1 // pred_check
      _
    $region3: #{simple_cnn_forward.1} parent=1 // pred_check_branch
      %17 = sbr.rel (0) target = $region5
    $region4: #{simple_cnn_forward.1} parent=1 // pred_region
      _
    $region5: #{simple_cnn_forward.1} parent=1 // pred_fallthru
      _
    // Predicated region
    $region6: #{simple_cnn_forward.1} parent=1 // pred_check
      _
    $region7: #{simple_cnn_forward.1} parent=1 // pred_check_branch
      %19 = sbr.rel (0) target = $region9
    $region8: #{simple_cnn_forward.1} parent=1 // pred_region
      %s21 = ssub.s32 13824, 13824
      %22 = vsyncadd [#allocation3], %s21
      %s23 = sshll.u32 [#allocation2], 4
      %s24 = int_to_ptr.vmem [resolvable:$true] %s23
      %29 = dma.hbm_to_vmem [thread:$0]  %s1, 13824, %s24, [#allocation3], 768, 768, 48
    $region9: #{simple_cnn_forward.1} parent=1 // pred_fallthru
      _
    // Predicated region
    $region10: #{simple_cnn_forward.1} parent=1 // pred_check
      _
    $region11: #{simple_cnn_forward.1} parent=1 // pred_check_branch
      %31 = sbr.rel (0) target = $region13
    $region12: #{simple_cnn_forward.1} parent=1 // pred_region
      %s33 = ssub.s32 96, 96
      %34 = vsyncadd [#allocation5], %s33
      %s36 = sshll.u32 [#allocation4], 4
      %s37 = int_to_ptr.vmem [resolvable:$true] %s36
      %39 = dma.hbm_to_vmem [thread:$0]  %s2, 96, %s37, [#allocation5]
    $region13: #{simple_cnn_forward.1} parent=1 // pred_fallthru
      _
    // Predicated region
    $region14: #{simple_cnn_forward.1} parent=1 // pred_check
      _
    $region15: #{simple_cnn_forward.1} parent=1 // pred_check_branch
      %41 = sbr.rel (0) target = $region17
    $region16: #{simple_cnn_forward.1} parent=1 // pred_region
      %s43 = ssub.s32 122880, 122880
      %44 = vsyncadd [#allocation5], %s43
      %s45 = sshll.u32 [#allocation6], 4
      %s46 = int_to_ptr.vmem [resolvable:$true] %s45
      %51 = dma.hbm_to_vmem [thread:$0]  %s3, 122880, %s46, [#allocation5], 512, 512, 32
    $region17: #{simple_cnn_forward.1} parent=1 // pred_fallthru
      _
    // Predicated region
    $region18: #{simple_cnn_forward.1} parent=1 // pred_check
      _
    $region19: #{simple_cnn_forward.1} parent=1 // pred_check_branch
      %53 = sbr.rel (0) target = $region21
    $region20: #{simple_cnn_forward.1} parent=1 // pred_region
      %s55 = ssub.s32 64, 64
      %56 = vsyncadd [#allocation8], %s55
      %s58 = sshll.u32 [#allocation7], 4
      %s59 = int_to_ptr.vmem [resolvable:$true] %s58
      %61 = dma.hbm_to_vmem [thread:$0]  %s4, 64, %s59, [#allocation8]
    $region21: #{simple_cnn_forward.1} parent=1 // pred_fallthru
      _
    // Predicated region
    $region22: #{simple_cnn_forward.1} parent=1 // pred_check
      _
    $region23: #{simple_cnn_forward.1} parent=1 // pred_check_branch
      %63 = sbr.rel (0) target = $region25
    $region24: #{simple_cnn_forward.1} parent=1 // pred_region
      %s65 = ssub.s32 16384, 16384
      %66 = vsyncadd [#allocation8], %s65
      %s67 = sshll.u32 [#allocation9], 4
      %s68 = int_to_ptr.vmem [resolvable:$true] %s67
      %73 = dma.hbm_to_vmem [thread:$0]  %s5, 16384, %s68, [#allocation8], 128, 128, 8
    $region25: #{simple_cnn_forward.1} parent=1 // pred_fallthru
      _
    // Predicated region
    $region26: #{simple_cnn_forward.1} parent=1 // pred_check
      _
    $region27: #{simple_cnn_forward.1} parent=1 // pred_check_branch
      %75 = sbr.rel (0) target = $region29
    $region28: #{simple_cnn_forward.1} parent=1 // pred_region
      %s77 = ssub.s32 16, 16
      %78 = vsyncadd [#allocation11], %s77
      %s80 = sshll.u32 [#allocation10], 4
      %s81 = int_to_ptr.vmem [resolvable:$true] %s80
      %83 = dma.hbm_to_vmem [thread:$0]  %s6, 16, %s81, [#allocation11]
    $region29: #{simple_cnn_forward.1} parent=1 // pred_fallthru
      _
    // Predicated region
    $region30: #{simple_cnn_forward.1} parent=1 // pred_check
      _
    $region31: #{simple_cnn_forward.1} parent=1 // pred_check_branch
      %85 = sbr.rel (0) target = $region33
    $region32: #{simple_cnn_forward.1} parent=1 // pred_region
      %86 = dma.done [#allocation3], 13824
    $region33: #{simple_cnn_forward.1} parent=1 // pred_fallthru
      _
    // Predicated region
    $region34: #{simple_cnn_forward.1} parent=1 // pred_check
      _
    $region35: #{simple_cnn_forward.1} parent=1 // pred_check_branch
      %88 = sbr.rel (0) target = $region37
    $region36: #{simple_cnn_forward.1} parent=1 // pred_region
      %89 = dma.done [#allocation5], 96
    $region37: #{simple_cnn_forward.1} parent=1 // pred_fallthru
      _
    // Predicated region
    $region38: #{simple_cnn_forward.1} parent=1 // pred_check
      _
    $region39: #{simple_cnn_forward.1} parent=1 // pred_check_branch
      %91 = sbr.rel (0) target = $region41
    $region40: #{simple_cnn_forward.1} parent=1 // pred_region
      %92 = dma.done [#allocation5], 122880
    $region41: #{simple_cnn_forward.1} parent=1 // pred_fallthru
      _
    // Predicated region
    $region42: #{simple_cnn_forward.1} parent=1 // pred_check
      _
    $region43: #{simple_cnn_forward.1} parent=1 // pred_check_branch
      %94 = sbr.rel (0) target = $region45
    $region44: #{simple_cnn_forward.1} parent=1 // pred_region
      %95 = dma.done [#allocation8], 64
    $region45: #{simple_cnn_forward.1} parent=1 // pred_fallthru
      _
    // Predicated region
    $region46: #{simple_cnn_forward.1} parent=1 // pred_check
      _
    $region47: #{simple_cnn_forward.1} parent=1 // pred_check_branch
      %97 = sbr.rel (0) target = $region49
    $region48: #{simple_cnn_forward.1} parent=1 // pred_region
      %98 = dma.done [#allocation8], 16384
    $region49: #{simple_cnn_forward.1} parent=1 // pred_fallthru
      _
    // Predicated region
    $region50: #{simple_cnn_forward.1} parent=1 // pred_check
      _
    $region51: #{simple_cnn_forward.1} parent=1 // pred_check_branch
      %100 = sbr.rel (0) target = $region53
    $region52: #{simple_cnn_forward.1} parent=1 // pred_region
      %101 = dma.done [#allocation11], 16
    $region53: #{simple_cnn_forward.1} parent=1 // pred_fallthru
      _
    %v102 = vld [vmem:[%s0] sm:$0xff]
    %v103 = vld [vmem:[%s0 + $0x8] sm:$0xff]
    %v104 = vld [vmem:[%s0 + $0x10] sm:$0xff]
    %v105 = vld [vmem:[%s0 + $0x18] sm:$0xf]
    %v106 = vld [vmem:[%s0 + $0x20] sm:$0xff]
    %v107 = vld [vmem:[%s0 + $0x28] sm:$0xff]
    %v108 = vld [vmem:[%s0 + $0x30] sm:$0xff]
    %v109 = vld [vmem:[%s0 + $0x38] sm:$0xf]
    %v110 = vld [vmem:[%s0 + $0x40] sm:$0xff]
    %v111 = vld [vmem:[%s0 + $0x48] sm:$0xff]
    %v112 = vld [vmem:[%s0 + $0x50] sm:$0xff]
    %v113 = vld [vmem:[%s0 + $0x58] sm:$0xf]
    %v114 = vld [vmem:[%s0 + $0x60] sm:$0xff]
    %v115 = vld [vmem:[%s0 + $0x68] sm:$0xff]
    %v116 = vld [vmem:[%s0 + $0x70] sm:$0xff]
    %v117 = vld [vmem:[%s0 + $0x78] sm:$0xf]
    %v118 = vld [vmem:[%s0 + $0x80] sm:$0xff]
    %v119 = vld [vmem:[%s0 + $0x88] sm:$0xff]
    %v120 = vld [vmem:[%s0 + $0x90] sm:$0xff]
    %v121 = vld [vmem:[%s0 + $0x98] sm:$0xf]
    %v122 = vld [vmem:[%s0 + $0xa0] sm:$0xff]
    %v123 = vld [vmem:[%s0 + $0xa8] sm:$0xff]
    %v124 = vld [vmem:[%s0 + $0xb0] sm:$0xff]
    %v125 = vld [vmem:[%s0 + $0xb8] sm:$0xf]
    %v126 = vld [vmem:[%s0 + $0xc0] sm:$0xff]
    %v127 = vld [vmem:[%s0 + $0xc8] sm:$0xff]
    %v128 = vld [vmem:[%s0 + $0xd0] sm:$0xff]
    %v129 = vld [vmem:[%s0 + $0xd8] sm:$0xf]
    %v130 = vld [vmem:[%s0 + $0xe0] sm:$0xff]
    %v131 = vld [vmem:[%s0 + $0xe8] sm:$0xff]
    %v132 = vld [vmem:[%s0 + $0xf0] sm:$0xff]
    %v133 = vld [vmem:[%s0 + $0xf8] sm:$0xf]
    %vm166 = vcmask 1046528
    %v167 = vrot.slane %v102, 1
    %v168 = vrot.slane %v103, 1
    %v169 = vsel %vm166, %v167, %v168
    %v170 = vrot.slane %v104, 1
    %v171 = vsel %vm166, %v168, %v170
    %v172 = vrot.slane %v105, 1
    %v173 = vsel %vm166, %v170, %v172
    %v174 = vrot.slane %v106, 1
    %v175 = vrot.slane %v107, 1
    %v176 = vsel %vm166, %v174, %v175
    %v177 = vrot.slane %v108, 1
    %v178 = vsel %vm166, %v175, %v177
    %v179 = vrot.slane %v109, 1
    %v180 = vsel %vm166, %v177, %v179
    %v181 = vrot.slane %v110, 1
    %v182 = vrot.slane %v111, 1
    %v183 = vsel %vm166, %v181, %v182
    %v184 = vrot.slane %v112, 1
    %v185 = vsel %vm166, %v182, %v184
    %v186 = vrot.slane %v113, 1
    %v187 = vsel %vm166, %v184, %v186
    %v188 = vrot.slane %v114, 1
    %v189 = vrot.slane %v115, 1
    %v190 = vsel %vm166, %v188, %v189
    %v191 = vrot.slane %v116, 1
    %v192 = vsel %vm166, %v189, %v191
    %v193 = vrot.slane %v117, 1
    %v194 = vsel %vm166, %v191, %v193
    %v195 = vrot.slane %v118, 1
    %v196 = vrot.slane %v119, 1
    %v197 = vsel %vm166, %v195, %v196
    %v198 = vrot.slane %v120, 1
    %v199 = vsel %vm166, %v196, %v198
    %v200 = vrot.slane %v121, 1
    %v201 = vsel %vm166, %v198, %v200
    %v202 = vrot.slane %v122, 1
    %v203 = vrot.slane %v123, 1
    %v204 = vsel %vm166, %v202, %v203
    %v205 = vrot.slane %v124, 1
    %v206 = vsel %vm166, %v203, %v205
    %v207 = vrot.slane %v125, 1
    %v208 = vsel %vm166, %v205, %v207
    %v209 = vrot.slane %v126, 1
    %v210 = vrot.slane %v127, 1
    %v211 = vsel %vm166, %v209, %v210
    %v212 = vrot.slane %v128, 1
    %v213 = vsel %vm166, %v210, %v212
    %v214 = vrot.slane %v129, 1
    %v215 = vsel %vm166, %v212, %v214
    %v216 = vrot.slane %v130, 1
    %v217 = vrot.slane %v131, 1
    %v218 = vsel %vm166, %v216, %v217
    %v219 = vrot.slane %v132, 1
    %v220 = vsel %vm166, %v217, %v219
    %v221 = vrot.slane %v133, 1
    %v222 = vsel %vm166, %v219, %v221
    %223 = vrot.lane.b32.xlu0 %v169, 28
    %v224 = vpop.permute.xlu0 %223
    %225 = vrot.lane.b32.xlu0 %v171, 28
    %v226 = vpop.permute.xlu0 %225
    %227 = vrot.lane.b32.xlu0 %v173, 28
    %v228 = vpop.permute.xlu0 %227
    %229 = vrot.lane.b32.xlu0 %v176, 28
    %v230 = vpop.permute.xlu0 %229
    %231 = vrot.lane.b32.xlu0 %v178, 28
    %v232 = vpop.permute.xlu0 %231
    %233 = vrot.lane.b32.xlu0 %v180, 28
    %v234 = vpop.permute.xlu0 %233
    %235 = vrot.lane.b32.xlu0 %v183, 28
    %v236 = vpop.permute.xlu0 %235
    %237 = vrot.lane.b32.xlu0 %v185, 28
    %v238 = vpop.permute.xlu0 %237
    %239 = vrot.lane.b32.xlu0 %v187, 28
    %v240 = vpop.permute.xlu0 %239
    %241 = vrot.lane.b32.xlu0 %v190, 28
    %v242 = vpop.permute.xlu0 %241
    %243 = vrot.lane.b32.xlu0 %v192, 28
    %v244 = vpop.permute.xlu0 %243
    %245 = vrot.lane.b32.xlu0 %v194, 28
    %v246 = vpop.permute.xlu0 %245
    %247 = vrot.lane.b32.xlu0 %v197, 28
    %v248 = vpop.permute.xlu0 %247
    %249 = vrot.lane.b32.xlu0 %v199, 28
    %v250 = vpop.permute.xlu0 %249
    %251 = vrot.lane.b32.xlu0 %v201, 28
    %v252 = vpop.permute.xlu0 %251
    %253 = vrot.lane.b32.xlu0 %v204, 28
    %v254 = vpop.permute.xlu0 %253
    %255 = vrot.lane.b32.xlu0 %v206, 28
    %v256 = vpop.permute.xlu0 %255
    %257 = vrot.lane.b32.xlu0 %v208, 28
    %v258 = vpop.permute.xlu0 %257
    %259 = vrot.lane.b32.xlu0 %v211, 28
    %v260 = vpop.permute.xlu0 %259
    %261 = vrot.lane.b32.xlu0 %v213, 28
    %v262 = vpop.permute.xlu0 %261
    %263 = vrot.lane.b32.xlu0 %v215, 28
    %v264 = vpop.permute.xlu0 %263
    %265 = vrot.lane.b32.xlu0 %v218, 28
    %v266 = vpop.permute.xlu0 %265
    %267 = vrot.lane.b32.xlu0 %v220, 28
    %v268 = vpop.permute.xlu0 %267
    %269 = vrot.lane.b32.xlu0 %v222, 28
    %v270 = vpop.permute.xlu0 %269
    %vm295 = vcmask 1045504
    %v296 = vrot.slane %v102, 2
    %v297 = vrot.slane %v103, 2
    %v298 = vsel %vm295, %v296, %v297
    %v299 = vrot.slane %v104, 2
    %v300 = vsel %vm295, %v297, %v299
    %v301 = vrot.slane %v105, 2
    %v302 = vsel %vm295, %v299, %v301
    %v303 = vrot.slane %v106, 2
    %v304 = vrot.slane %v107, 2
    %v305 = vsel %vm295, %v303, %v304
    %v306 = vrot.slane %v108, 2
    %v307 = vsel %vm295, %v304, %v306
    %v308 = vrot.slane %v109, 2
    %v309 = vsel %vm295, %v306, %v308
    %v310 = vrot.slane %v110, 2
    %v311 = vrot.slane %v111, 2
    %v312 = vsel %vm295, %v310, %v311
    %v313 = vrot.slane %v112, 2
    %v314 = vsel %vm295, %v311, %v313
    %v315 = vrot.slane %v113, 2
    %v316 = vsel %vm295, %v313, %v315
    %v317 = vrot.slane %v114, 2
    %v318 = vrot.slane %v115, 2
    %v319 = vsel %vm295, %v317, %v318
    %v320 = vrot.slane %v116, 2
    %v321 = vsel %vm295, %v318, %v320
    %v322 = vrot.slane %v117, 2
    %v323 = vsel %vm295, %v320, %v322
    %v324 = vrot.slane %v118, 2
    %v325 = vrot.slane %v119, 2
    %v326 = vsel %vm295, %v324, %v325
    %v327 = vrot.slane %v120, 2
    %v328 = vsel %vm295, %v325, %v327
    %v329 = vrot.slane %v121, 2
    %v330 = vsel %vm295, %v327, %v329
    %v331 = vrot.slane %v122, 2
    %v332 = vrot.slane %v123, 2
    %v333 = vsel %vm295, %v331, %v332
    %v334 = vrot.slane %v124, 2
    %v335 = vsel %vm295, %v332, %v334
    %v336 = vrot.slane %v125, 2
    %v337 = vsel %vm295, %v334, %v336
    %v338 = vrot.slane %v126, 2
    %v339 = vrot.slane %v127, 2
    %v340 = vsel %vm295, %v338, %v339
    %v341 = vrot.slane %v128, 2
    %v342 = vsel %vm295, %v339, %v341
    %v343 = vrot.slane %v129, 2
    %v344 = vsel %vm295, %v341, %v343
    %v345 = vrot.slane %v130, 2
    %v346 = vrot.slane %v131, 2
    %v347 = vsel %vm295, %v345, %v346
    %v348 = vrot.slane %v132, 2
    %v349 = vsel %vm295, %v346, %v348
    %v350 = vrot.slane %v133, 2
    %v351 = vsel %vm295, %v348, %v350
    %352 = vrot.lane.b32.xlu0 %v298, 56
    %v353 = vpop.permute.xlu0 %352
    %354 = vrot.lane.b32.xlu0 %v300, 56
    %v355 = vpop.permute.xlu0 %354
    %356 = vrot.lane.b32.xlu0 %v302, 56
    %v357 = vpop.permute.xlu0 %356
    %358 = vrot.lane.b32.xlu0 %v305, 56
    %v359 = vpop.permute.xlu0 %358
    %360 = vrot.lane.b32.xlu0 %v307, 56
    %v361 = vpop.permute.xlu0 %360
    %362 = vrot.lane.b32.xlu0 %v309, 56
    %v363 = vpop.permute.xlu0 %362
    %364 = vrot.lane.b32.xlu0 %v312, 56
    %v365 = vpop.permute.xlu0 %364
    %366 = vrot.lane.b32.xlu0 %v314, 56
    %v367 = vpop.permute.xlu0 %366
    %368 = vrot.lane.b32.xlu0 %v316, 56
    %v369 = vpop.permute.xlu0 %368
    %370 = vrot.lane.b32.xlu0 %v319, 56
    %v371 = vpop.permute.xlu0 %370
    %372 = vrot.lane.b32.xlu0 %v321, 56
    %v373 = vpop.permute.xlu0 %372
    %374 = vrot.lane.b32.xlu0 %v323, 56
    %v375 = vpop.permute.xlu0 %374
    %376 = vrot.lane.b32.xlu0 %v326, 56
    %v377 = vpop.permute.xlu0 %376
    %378 = vrot.lane.b32.xlu0 %v328, 56
    %v379 = vpop.permute.xlu0 %378
    %380 = vrot.lane.b32.xlu0 %v330, 56
    %v381 = vpop.permute.xlu0 %380
    %382 = vrot.lane.b32.xlu0 %v333, 56
    %v383 = vpop.permute.xlu0 %382
    %384 = vrot.lane.b32.xlu0 %v335, 56
    %v385 = vpop.permute.xlu0 %384
    %386 = vrot.lane.b32.xlu0 %v337, 56
    %v387 = vpop.permute.xlu0 %386
    %388 = vrot.lane.b32.xlu0 %v340, 56
    %v389 = vpop.permute.xlu0 %388
    %390 = vrot.lane.b32.xlu0 %v342, 56
    %v391 = vpop.permute.xlu0 %390
    %392 = vrot.lane.b32.xlu0 %v344, 56
    %v393 = vpop.permute.xlu0 %392
    %394 = vrot.lane.b32.xlu0 %v347, 56
    %v395 = vpop.permute.xlu0 %394
    %396 = vrot.lane.b32.xlu0 %v349, 56
    %v397 = vpop.permute.xlu0 %396
    %398 = vrot.lane.b32.xlu0 %v351, 56
    %v399 = vpop.permute.xlu0 %398
    %vm424 = vcmask 1044480
    %v425 = vrot.slane %v102, 3
    %v426 = vrot.slane %v103, 3
    %v427 = vsel %vm424, %v425, %v426
    %v428 = vrot.slane %v104, 3
    %v429 = vsel %vm424, %v426, %v428
    %v430 = vrot.slane %v105, 3
    %v431 = vsel %vm424, %v428, %v430
    %v432 = vrot.slane %v106, 3
    %v433 = vrot.slane %v107, 3
    %v434 = vsel %vm424, %v432, %v433
    %v435 = vrot.slane %v108, 3
    %v436 = vsel %vm424, %v433, %v435
    %v437 = vrot.slane %v109, 3
    %v438 = vsel %vm424, %v435, %v437
    %v439 = vrot.slane %v110, 3
    %v440 = vrot.slane %v111, 3
    %v441 = vsel %vm424, %v439, %v440
    %v442 = vrot.slane %v112, 3
    %v443 = vsel %vm424, %v440, %v442
    %v444 = vrot.slane %v113, 3
    %v445 = vsel %vm424, %v442, %v444
    %v446 = vrot.slane %v114, 3
    %v447 = vrot.slane %v115, 3
    %v448 = vsel %vm424, %v446, %v447
    %v449 = vrot.slane %v116, 3
    %v450 = vsel %vm424, %v447, %v449
    %v451 = vrot.slane %v117, 3
    %v452 = vsel %vm424, %v449, %v451
    %v453 = vrot.slane %v118, 3
    %v454 = vrot.slane %v119, 3
    %v455 = vsel %vm424, %v453, %v454
    %v456 = vrot.slane %v120, 3
    %v457 = vsel %vm424, %v454, %v456
    %v458 = vrot.slane %v121, 3
    %v459 = vsel %vm424, %v456, %v458
    %v460 = vrot.slane %v122, 3
    %v461 = vrot.slane %v123, 3
    %v462 = vsel %vm424, %v460, %v461
    %v463 = vrot.slane %v124, 3
    %v464 = vsel %vm424, %v461, %v463
    %v465 = vrot.slane %v125, 3
    %v466 = vsel %vm424, %v463, %v465
    %v467 = vrot.slane %v126, 3
    %v468 = vrot.slane %v127, 3
    %v469 = vsel %vm424, %v467, %v468
    %v470 = vrot.slane %v128, 3
    %v471 = vsel %vm424, %v468, %v470
    %v472 = vrot.slane %v129, 3
    %v473 = vsel %vm424, %v470, %v472
    %v474 = vrot.slane %v130, 3
    %v475 = vrot.slane %v131, 3
    %v476 = vsel %vm424, %v474, %v475
    %v477 = vrot.slane %v132, 3
    %v478 = vsel %vm424, %v475, %v477
    %v479 = vrot.slane %v133, 3
    %v480 = vsel %vm424, %v477, %v479
    %481 = vrot.lane.b32.xlu0 %v427, 84
    %v482 = vpop.permute.xlu0 %481
    %483 = vrot.lane.b32.xlu0 %v429, 84
    %v484 = vpop.permute.xlu0 %483
    %485 = vrot.lane.b32.xlu0 %v431, 84
    %v486 = vpop.permute.xlu0 %485
    %487 = vrot.lane.b32.xlu0 %v434, 84
    %v488 = vpop.permute.xlu0 %487
    %489 = vrot.lane.b32.xlu0 %v436, 84
    %v490 = vpop.permute.xlu0 %489
    %491 = vrot.lane.b32.xlu0 %v438, 84
    %v492 = vpop.permute.xlu0 %491
    %493 = vrot.lane.b32.xlu0 %v441, 84
    %v494 = vpop.permute.xlu0 %493
    %495 = vrot.lane.b32.xlu0 %v443, 84
    %v496 = vpop.permute.xlu0 %495
    %497 = vrot.lane.b32.xlu0 %v445, 84
    %v498 = vpop.permute.xlu0 %497
    %499 = vrot.lane.b32.xlu0 %v448, 84
    %v500 = vpop.permute.xlu0 %499
    %501 = vrot.lane.b32.xlu0 %v450, 84
    %v502 = vpop.permute.xlu0 %501
    %503 = vrot.lane.b32.xlu0 %v452, 84
    %v504 = vpop.permute.xlu0 %503
    %505 = vrot.lane.b32.xlu0 %v455, 84
    %v506 = vpop.permute.xlu0 %505
    %507 = vrot.lane.b32.xlu0 %v457, 84
    %v508 = vpop.permute.xlu0 %507
    %509 = vrot.lane.b32.xlu0 %v459, 84
    %v510 = vpop.permute.xlu0 %509
    %511 = vrot.lane.b32.xlu0 %v462, 84
    %v512 = vpop.permute.xlu0 %511
    %513 = vrot.lane.b32.xlu0 %v464, 84
    %v514 = vpop.permute.xlu0 %513
    %515 = vrot.lane.b32.xlu0 %v466, 84
    %v516 = vpop.permute.xlu0 %515
    %517 = vrot.lane.b32.xlu0 %v469, 84
    %v518 = vpop.permute.xlu0 %517
    %519 = vrot.lane.b32.xlu0 %v471, 84
    %v520 = vpop.permute.xlu0 %519
    %521 = vrot.lane.b32.xlu0 %v473, 84
    %v522 = vpop.permute.xlu0 %521
    %523 = vrot.lane.b32.xlu0 %v476, 84
    %v524 = vpop.permute.xlu0 %523
    %525 = vrot.lane.b32.xlu0 %v478, 84
    %v526 = vpop.permute.xlu0 %525
    %527 = vrot.lane.b32.xlu0 %v480, 84
    %v528 = vpop.permute.xlu0 %527
    %vm553 = vcmask 1043456
    %v554 = vrot.slane %v102, 4
    %v555 = vrot.slane %v103, 4
    %v556 = vsel %vm553, %v554, %v555
    %v557 = vrot.slane %v104, 4
    %v558 = vsel %vm553, %v555, %v557
    %v559 = vrot.slane %v105, 4
    %v560 = vsel %vm553, %v557, %v559
    %v561 = vrot.slane %v106, 4
    %v562 = vrot.slane %v107, 4
    %v563 = vsel %vm553, %v561, %v562
    %v564 = vrot.slane %v108, 4
    %v565 = vsel %vm553, %v562, %v564
    %v566 = vrot.slane %v109, 4
    %v567 = vsel %vm553, %v564, %v566
    %v568 = vrot.slane %v110, 4
    %v569 = vrot.slane %v111, 4
    %v570 = vsel %vm553, %v568, %v569
    %v571 = vrot.slane %v112, 4
    %v572 = vsel %vm553, %v569, %v571
    %v573 = vrot.slane %v113, 4
    %v574 = vsel %vm553, %v571, %v573
    %v575 = vrot.slane %v114, 4
    %v576 = vrot.slane %v115, 4
    %v577 = vsel %vm553, %v575, %v576
    %v578 = vrot.slane %v116, 4
    %v579 = vsel %vm553, %v576, %v578
    %v580 = vrot.slane %v117, 4
    %v581 = vsel %vm553, %v578, %v580
    %v582 = vrot.slane %v118, 4
    %v583 = vrot.slane %v119, 4
    %v584 = vsel %vm553, %v582, %v583
    %v585 = vrot.slane %v120, 4
    %v586 = vsel %vm553, %v583, %v585
    %v587 = vrot.slane %v121, 4
    %v588 = vsel %vm553, %v585, %v587
    %v589 = vrot.slane %v122, 4
    %v590 = vrot.slane %v123, 4
    %v591 = vsel %vm553, %v589, %v590
    %v592 = vrot.slane %v124, 4
    %v593 = vsel %vm553, %v590, %v592
    %v594 = vrot.slane %v125, 4
    %v595 = vsel %vm553, %v592, %v594
    %v596 = vrot.slane %v126, 4
    %v597 = vrot.slane %v127, 4
    %v598 = vsel %vm553, %v596, %v597
    %v599 = vrot.slane %v128, 4
    %v600 = vsel %vm553, %v597, %v599
    %v601 = vrot.slane %v129, 4
    %v602 = vsel %vm553, %v599, %v601
    %v603 = vrot.slane %v130, 4
    %v604 = vrot.slane %v131, 4
    %v605 = vsel %vm553, %v603, %v604
    %v606 = vrot.slane %v132, 4
    %v607 = vsel %vm553, %v604, %v606
    %v608 = vrot.slane %v133, 4
    %v609 = vsel %vm553, %v606, %v608
    %610 = vrot.lane.b32.xlu0 %v556, 112
    %v611 = vpop.permute.xlu0 %610
    %612 = vrot.lane.b32.xlu0 %v558, 112
    %v613 = vpop.permute.xlu0 %612
    %614 = vrot.lane.b32.xlu0 %v560, 112
    %v615 = vpop.permute.xlu0 %614
    %616 = vrot.lane.b32.xlu0 %v563, 112
    %v617 = vpop.permute.xlu0 %616
    %618 = vrot.lane.b32.xlu0 %v565, 112
    %v619 = vpop.permute.xlu0 %618
    %620 = vrot.lane.b32.xlu0 %v567, 112
    %v621 = vpop.permute.xlu0 %620
    %622 = vrot.lane.b32.xlu0 %v570, 112
    %v623 = vpop.permute.xlu0 %622
    %624 = vrot.lane.b32.xlu0 %v572, 112
    %v625 = vpop.permute.xlu0 %624
    %626 = vrot.lane.b32.xlu0 %v574, 112
    %v627 = vpop.permute.xlu0 %626
    %628 = vrot.lane.b32.xlu0 %v577, 112
    %v629 = vpop.permute.xlu0 %628
    %630 = vrot.lane.b32.xlu0 %v579, 112
    %v631 = vpop.permute.xlu0 %630
    %632 = vrot.lane.b32.xlu0 %v581, 112
    %v633 = vpop.permute.xlu0 %632
    %634 = vrot.lane.b32.xlu0 %v584, 112
    %v635 = vpop.permute.xlu0 %634
    %636 = vrot.lane.b32.xlu0 %v586, 112
    %v637 = vpop.permute.xlu0 %636
    %638 = vrot.lane.b32.xlu0 %v588, 112
    %v639 = vpop.permute.xlu0 %638
    %640 = vrot.lane.b32.xlu0 %v591, 112
    %v641 = vpop.permute.xlu0 %640
    %642 = vrot.lane.b32.xlu0 %v593, 112
    %v643 = vpop.permute.xlu0 %642
    %644 = vrot.lane.b32.xlu0 %v595, 112
    %v645 = vpop.permute.xlu0 %644
    %646 = vrot.lane.b32.xlu0 %v598, 112
    %v647 = vpop.permute.xlu0 %646
    %648 = vrot.lane.b32.xlu0 %v600, 112
    %v649 = vpop.permute.xlu0 %648
    %650 = vrot.lane.b32.xlu0 %v602, 112
    %v651 = vpop.permute.xlu0 %650
    %652 = vrot.lane.b32.xlu0 %v605, 112
    %v653 = vpop.permute.xlu0 %652
    %654 = vrot.lane.b32.xlu0 %v607, 112
    %v655 = vpop.permute.xlu0 %654
    %656 = vrot.lane.b32.xlu0 %v609, 112
    %v657 = vpop.permute.xlu0 %656
    %vm682 = vcmask 228352
    %v683 = vsel %vm682, %v102, %v224
    %v684 = vsel %vm682, %v103, %v226
    %v685 = vsel %vm682, %v104, %v228
    %v686 = vsel %vm682, %v106, %v230
    %v687 = vsel %vm682, %v107, %v232
    %v688 = vsel %vm682, %v108, %v234
    %v689 = vsel %vm682, %v110, %v236
    %v690 = vsel %vm682, %v111, %v238
    %v691 = vsel %vm682, %v112, %v240
    %v692 = vsel %vm682, %v114, %v242
    %v693 = vsel %vm682, %v115, %v244
    %v694 = vsel %vm682, %v116, %v246
    %v695 = vsel %vm682, %v118, %v248
    %v696 = vsel %vm682, %v119, %v250
    %v697 = vsel %vm682, %v120, %v252
    %v698 = vsel %vm682, %v122, %v254
    %v699 = vsel %vm682, %v123, %v256
    %v700 = vsel %vm682, %v124, %v258
    %v701 = vsel %vm682, %v126, %v260
    %v702 = vsel %vm682, %v127, %v262
    %v703 = vsel %vm682, %v128, %v264
    %v704 = vsel %vm682, %v130, %v266
    %v705 = vsel %vm682, %v131, %v268
    %v706 = vsel %vm682, %v132, %v270
    %vm707 = vcmask 457728
    %v708 = vsel %vm707, %v683, %v353
    %v709 = vsel %vm707, %v684, %v355
    %v710 = vsel %vm707, %v685, %v357
    %v711 = vsel %vm707, %v686, %v359
    %v712 = vsel %vm707, %v687, %v361
    %v713 = vsel %vm707, %v688, %v363
    %v714 = vsel %vm707, %v689, %v365
    %v715 = vsel %vm707, %v690, %v367
    %v716 = vsel %vm707, %v691, %v369
    %v717 = vsel %vm707, %v692, %v371
    %v718 = vsel %vm707, %v693, %v373
    %v719 = vsel %vm707, %v694, %v375
    %v720 = vsel %vm707, %v695, %v377
    %v721 = vsel %vm707, %v696, %v379
    %v722 = vsel %vm707, %v697, %v381
    %v723 = vsel %vm707, %v698, %v383
    %v724 = vsel %vm707, %v699, %v385
    %v725 = vsel %vm707, %v700, %v387
    %v726 = vsel %vm707, %v701, %v389
    %v727 = vsel %vm707, %v702, %v391
    %v728 = vsel %vm707, %v703, %v393
    %v729 = vsel %vm707, %v704, %v395
    %v730 = vsel %vm707, %v705, %v397
    %v731 = vsel %vm707, %v706, %v399
    %vm732 = vcmask 687104
    %v733 = vsel %vm732, %v708, %v482
    %v734 = vsel %vm732, %v709, %v484
    %v735 = vsel %vm732, %v710, %v486
    %v736 = vsel %vm732, %v711, %v488
    %v737 = vsel %vm732, %v712, %v490
    %v738 = vsel %vm732, %v713, %v492
    %v739 = vsel %vm732, %v714, %v494
    %v740 = vsel %vm732, %v715, %v496
    %v741 = vsel %vm732, %v716, %v498
    %v742 = vsel %vm732, %v717, %v500
    %v743 = vsel %vm732, %v718, %v502
    %v744 = vsel %vm732, %v719, %v504
    %v745 = vsel %vm732, %v720, %v506
    %v746 = vsel %vm732, %v721, %v508
    %v747 = vsel %vm732, %v722, %v510
    %v748 = vsel %vm732, %v723, %v512
    %v749 = vsel %vm732, %v724, %v514
    %v750 = vsel %vm732, %v725, %v516
    %v751 = vsel %vm732, %v726, %v518
    %v752 = vsel %vm732, %v727, %v520
    %v753 = vsel %vm732, %v728, %v522
    %v754 = vsel %vm732, %v729, %v524
    %v755 = vsel %vm732, %v730, %v526
    %v756 = vsel %vm732, %v731, %v528
    %vm757 = vcmask 916480
    %v758 = vsel %vm757, %v733, %v611
    %v759 = vsel %vm757, %v734, %v613
    %v760 = vsel %vm757, %v735, %v615
    %v761 = vsel %vm757, %v736, %v617
    %v762 = vsel %vm757, %v737, %v619
    %v763 = vsel %vm757, %v738, %v621
    %v764 = vsel %vm757, %v739, %v623
    %v765 = vsel %vm757, %v740, %v625
    %v766 = vsel %vm757, %v741, %v627
    %v767 = vsel %vm757, %v742, %v629
    %v768 = vsel %vm757, %v743, %v631
    %v769 = vsel %vm757, %v744, %v633
    %v770 = vsel %vm757, %v745, %v635
    %v771 = vsel %vm757, %v746, %v637
    %v772 = vsel %vm757, %v747, %v639
    %v773 = vsel %vm757, %v748, %v641
    %v774 = vsel %vm757, %v749, %v643
    %v775 = vsel %vm757, %v750, %v645
    %v776 = vsel %vm757, %v751, %v647
    %v777 = vsel %vm757, %v752, %v649
    %v778 = vsel %vm757, %v753, %v651
    %v779 = vsel %vm757, %v754, %v653
    %v780 = vsel %vm757, %v755, %v655
    %v781 = vsel %vm757, %v756, %v657
    %v782 = vld [vmem:[#allocation2] sm:$0xff]
    %v783 = vld [vmem:[#allocation2 + $0x8] sm:$0xff]
    %v784 = vld [vmem:[#allocation2 + $0x10] sm:$0xff]
    %v785 = vld [vmem:[#allocation2 + $0x18] sm:$0xff]
    %v786 = vld [vmem:[#allocation2 + $0x20] sm:$0xff]
    %v787 = vld [vmem:[#allocation2 + $0x28] sm:$0xff]
    %v788 = vld [vmem:[#allocation2 + $0x30] sm:$0xff]
    %v789 = vld [vmem:[#allocation2 + $0x38] sm:$0xff]
    %v790 = vld [vmem:[#allocation2 + $0x40] sm:$0xff]
    %v791 = vld [vmem:[#allocation2 + $0x48] sm:$0xff]
    %v792 = vld [vmem:[#allocation2 + $0x50] sm:$0xff]
    %v793 = vld [vmem:[#allocation2 + $0x58] sm:$0xff]
    %v794 = vld [vmem:[#allocation2 + $0x60] sm:$0xff]
    %v795 = vld [vmem:[#allocation2 + $0x68] sm:$0xff]
    %v796 = vld [vmem:[#allocation2 + $0x70] sm:$0xff]
    %v797 = vld [vmem:[#allocation2 + $0x78] sm:$0xff]
    %v798 = vld [vmem:[#allocation2 + $0x80] sm:$0xff]
    %v799 = vld [vmem:[#allocation2 + $0x88] sm:$0xff]
    %v800 = vld [vmem:[#allocation2 + $0x90] sm:$0xff]
    %v801 = vld [vmem:[#allocation2 + $0x98] sm:$0xff]
    %v802 = vld [vmem:[#allocation2 + $0xa0] sm:$0xff]
    %v803 = vld [vmem:[#allocation2 + $0xa8] sm:$0xff]
    %v804 = vld [vmem:[#allocation2 + $0xb0] sm:$0xff]
    %v805 = vld [vmem:[#allocation2 + $0xb8] sm:$0xff]
    %v806 = vld [vmem:[#allocation2 + $0xc0] sm:$0xff]
    %v807 = vld [vmem:[#allocation2 + $0xc8] sm:$0xff]
    %v808 = vld [vmem:[#allocation2 + $0xd0] sm:$0xff]
    %v809 = vld [vmem:[#allocation2 + $0xd8] sm:$0xff]
    %v810 = vld [vmem:[#allocation2 + $0xe0] sm:$0xff]
    %v811 = vld [vmem:[#allocation2 + $0xe8] sm:$0xff]
    %v812 = vld [vmem:[#allocation2 + $0xf0] sm:$0xff]
    %v813 = vld [vmem:[#allocation2 + $0xf8] sm:$0xff]
    %v814 = vld [vmem:[#allocation2 + $0x100] sm:$0xff]
    %v815 = vld [vmem:[#allocation2 + $0x108] sm:$0xff]
    %v816 = vld [vmem:[#allocation2 + $0x110] sm:$0xff]
    %v817 = vld [vmem:[#allocation2 + $0x118] sm:$0xff]
    %v818 = vld [vmem:[#allocation2 + $0x120] sm:$0xff]
    %v819 = vld [vmem:[#allocation2 + $0x128] sm:$0xff]
    %v820 = vld [vmem:[#allocation2 + $0x130] sm:$0xff]
    %v821 = vld [vmem:[#allocation2 + $0x138] sm:$0xff]
    %v822 = vld [vmem:[#allocation2 + $0x140] sm:$0xff]
    %v823 = vld [vmem:[#allocation2 + $0x148] sm:$0xff]
    %v824 = vld [vmem:[#allocation2 + $0x150] sm:$0xff]
    %v825 = vld [vmem:[#allocation2 + $0x158] sm:$0xff]
    %v826 = vld [vmem:[#allocation2 + $0x160] sm:$0xff]
    %v827 = vld [vmem:[#allocation2 + $0x168] sm:$0xff]
    %v828 = vld [vmem:[#allocation2 + $0x170] sm:$0xff]
    %v829 = vld [vmem:[#allocation2 + $0x178] sm:$0xff]
    %v830 = vld [vmem:[#allocation2 + $0x180] sm:$0xff]
    %v831 = vld [vmem:[#allocation2 + $0x188] sm:$0xff]
    %v832 = vld [vmem:[#allocation2 + $0x190] sm:$0xff]
    %v833 = vld [vmem:[#allocation2 + $0x198] sm:$0xff]
    %v834 = vld [vmem:[#allocation2 + $0x1a0] sm:$0xff]
    %v835 = vld [vmem:[#allocation2 + $0x1a8] sm:$0xff]
    %v836 = vld [vmem:[#allocation2 + $0x1b0] sm:$0xff]
    %v837 = vld [vmem:[#allocation2 + $0x1b8] sm:$0xff]
    %v838 = vld [vmem:[#allocation2 + $0x1c0] sm:$0xff]
    %v839 = vld [vmem:[#allocation2 + $0x1c8] sm:$0xff]
    %v840 = vld [vmem:[#allocation2 + $0x1d0] sm:$0xff]
    %v841 = vld [vmem:[#allocation2 + $0x1d8] sm:$0xff]
    %v842 = vld [vmem:[#allocation2 + $0x1e0] sm:$0xff]
    %v843 = vld [vmem:[#allocation2 + $0x1e8] sm:$0xff]
    %v844 = vld [vmem:[#allocation2 + $0x1f0] sm:$0xff]
    %v845 = vld [vmem:[#allocation2 + $0x1f8] sm:$0xff]
    %v846 = vld [vmem:[#allocation2 + $0x200] sm:$0xff]
    %v847 = vld [vmem:[#allocation2 + $0x208] sm:$0xff]
    %v848 = vld [vmem:[#allocation2 + $0x210] sm:$0xff]
    %v849 = vld [vmem:[#allocation2 + $0x218] sm:$0xff]
    %v850 = vld [vmem:[#allocation2 + $0x220] sm:$0xff]
    %v851 = vld [vmem:[#allocation2 + $0x228] sm:$0xff]
    %v852 = vld [vmem:[#allocation2 + $0x230] sm:$0xff]
    %v853 = vld [vmem:[#allocation2 + $0x238] sm:$0xff]
    %v854 = vld [vmem:[#allocation2 + $0x240] sm:$0xff]
    %v855 = vld [vmem:[#allocation2 + $0x248] sm:$0xff]
    %v856 = vld [vmem:[#allocation2 + $0x250] sm:$0xff]
    %v857 = vld [vmem:[#allocation2 + $0x258] sm:$0xff]
    %v858 = vld [vmem:[#allocation2 + $0x260] sm:$0xff]
    %v859 = vld [vmem:[#allocation2 + $0x268] sm:$0xff]
    %v860 = vld [vmem:[#allocation2 + $0x270] sm:$0xff]
    %v861 = vld [vmem:[#allocation2 + $0x278] sm:$0xff]
    %v862 = vld [vmem:[#allocation2 + $0x280] sm:$0xff]
    %v863 = vld [vmem:[#allocation2 + $0x288] sm:$0xff]
    %v864 = vld [vmem:[#allocation2 + $0x290] sm:$0xff]
    %v865 = vld [vmem:[#allocation2 + $0x298] sm:$0xff]
    %v866 = vld [vmem:[#allocation2 + $0x2a0] sm:$0xff]
    %v867 = vld [vmem:[#allocation2 + $0x2a8] sm:$0xff]
    %v868 = vld [vmem:[#allocation2 + $0x2b0] sm:$0xff]
    %v869 = vld [vmem:[#allocation2 + $0x2b8] sm:$0xff]
    %v870 = vld [vmem:[#allocation2 + $0x2c0] sm:$0xff]
    %v871 = vld [vmem:[#allocation2 + $0x2c8] sm:$0xff]
    %v872 = vld [vmem:[#allocation2 + $0x2d0] sm:$0xff]
    %v873 = vld [vmem:[#allocation2 + $0x2d8] sm:$0xff]
    %v874 = vld [vmem:[#allocation2 + $0x2e0] sm:$0xff]
    %v875 = vld [vmem:[#allocation2 + $0x2e8] sm:$0xff]
    %v876 = vld [vmem:[#allocation2 + $0x2f0] sm:$0xff]
    %v877 = vld [vmem:[#allocation2 + $0x2f8] sm:$0xff]
    %v878 = vld [vmem:[#allocation2 + $0x300] sm:$0xff]
    %v879 = vld [vmem:[#allocation2 + $0x308] sm:$0xff]
    %v880 = vld [vmem:[#allocation2 + $0x310] sm:$0xff]
    %v881 = vld [vmem:[#allocation2 + $0x318] sm:$0xff]
    %v882 = vld [vmem:[#allocation2 + $0x320] sm:$0xff]
    %v883 = vld [vmem:[#allocation2 + $0x328] sm:$0xff]
    %v884 = vld [vmem:[#allocation2 + $0x330] sm:$0xf]
    %v885 = vld [vmem:[#allocation2 + $0x338] sm:$0xf]
    %v886 = vld [vmem:[#allocation2 + $0x340] sm:$0xf]
    %v887 = vld [vmem:[#allocation2 + $0x348] sm:$0xf]
    %v888 = vld [vmem:[#allocation2 + $0x350] sm:$0xf]
    %v889 = vld [vmem:[#allocation2 + $0x358] sm:$0xf]
    %v890 = vld [vmem:[#allocation4] sm:$0x3f]
    %v892 = vlaneseq
    %v893 = vshrl.u32 %v892, 7
    %v894 = vsub.s32 0, %v893
    %v895 = vrot.slane %v890, %v894
    %v896 = vlaneseq
    %v897 = vshrl.u32 %v896, 7
    %v898 = vsub.s32 1, %v897
    %v899 = vrot.slane %v890, %v898
    %v900 = vlaneseq
    %v901 = vshrl.u32 %v900, 7
    %v902 = vsub.s32 2, %v901
    %v903 = vrot.slane %v890, %v902
    %v904 = vlaneseq
    %v905 = vshrl.u32 %v904, 7
    %v906 = vsub.s32 3, %v905
    %v907 = vrot.slane %v890, %v906
    %v908 = vlaneseq
    %v909 = vshrl.u32 %v908, 7
    %v910 = vsub.s32 4, %v909
    %v911 = vrot.slane %v890, %v910
    %v912 = vlaneseq
    %v913 = vshrl.u32 %v912, 7
    %v914 = vsub.s32 5, %v913
    %v915 = vrot.slane %v890, %v914
    %vm922 = vcmask 97280
    %v923 = vsel %vm922, %v611, 0
    %v925 = vsel %vm922, %v613, 0
    %v927 = vsel %vm922, %v615, 0
    %v929 = vsel %vm922, %v617, 0
    %v931 = vsel %vm922, %v619, 0
    %v933 = vsel %vm922, %v621, 0
    %v935 = vsel %vm922, %v623, 0
    %v937 = vsel %vm922, %v625, 0
    %v939 = vsel %vm922, %v627, 0
    %v941 = vsel %vm922, %v629, 0
    %v943 = vsel %vm922, %v631, 0
    %v945 = vsel %vm922, %v633, 0
    %v947 = vsel %vm922, %v635, 0
    %v949 = vsel %vm922, %v637, 0
    %v951 = vsel %vm922, %v639, 0
    %v953 = vsel %vm922, %v641, 0
    %v955 = vsel %vm922, %v643, 0
    %v957 = vsel %vm922, %v645, 0
    %v959 = vsel %vm922, %v647, 0
    %v961 = vsel %vm922, %v649, 0
    %v963 = vsel %vm922, %v651, 0
    %v965 = vsel %vm922, %v653, 0
    %v967 = vsel %vm922, %v655, 0
    %v969 = vsel %vm922, %v657, 0
    %v972 = vsel %vm553, %v884, 0
    %v975 = vsel %vm553, %v885, 0
    %v978 = vsel %vm553, %v886, 0
    %v981 = vsel %vm553, %v887, 0
    %v984 = vsel %vm553, %v888, 0
    %v987 = vsel %vm553, %v889, 0
    %989 = vmatprep.subr.mxu0 %v783
    %990 = vmatpush1.msra.mxu0 %v782
    %991 = vmatprep.subr.mxu0 %v789
    %992 = vmatpush1.msra.mxu0 %v788
    %993 = vmatprep.subr.mxu0 %v795
    %994 = vmatpush1.msra.mxu0 %v794
    %995 = vmatprep.subr.mxu0 %v801
    %996 = vmatpush1.msra.mxu0 %v800
    %997 = vmatprep.subr.mxu0 %v807
    %998 = vmatpush1.msra.mxu0 %v806
    %999 = vmatprep.subr.mxu0 %v813
    %1000 = vmatpush1.msra.mxu0 %v812
    %1001 = vmatprep.subr.mxu0 %v819
    %1002 = vmatpush1.msra.mxu0 %v818
    %1003 = vmatprep.subr.mxu0 %v825
    %1004 = vmatpush1.msra.mxu0 %v824
    %1005 = vmatprep.subr.mxu0 %v831
    %1006 = vmatpush1.msra.mxu0 %v830
    %1007 = vmatprep.subr.mxu0 %v837
    %1008 = vmatpush1.msra.mxu0 %v836
    %1009 = vmatprep.subr.mxu0 %v843
    %1010 = vmatpush1.msra.mxu0 %v842
    %1011 = vmatprep.subr.mxu0 %v849
    %1012 = vmatpush1.msra.mxu0 %v848
    %1013 = vmatprep.subr.mxu0 %v855
    %1014 = vmatpush1.msra.mxu0 %v854
    %1015 = vmatprep.subr.mxu0 %v861
    %1016 = vmatpush1.msra.mxu0 %v860
    %1017 = vmatprep.subr.mxu0 %v867
    %1018 = vmatpush1.msra.mxu0 %v866
    %1019 = vmatprep.subr.mxu0 %v873
    %1020 = vmatpush1.msra.mxu0 %v872
    %1021 = vmatprep.subr.mxu0 %v879
    %1022 = vmatpush1.msra.mxu0 %v878
    %1023 = vmatprep.subr.mxu0 %v975
    %1024 = vmatpush1.msra.mxu0 %v972
    %1025 = vmatprep.subr.mxu0 0.0
    %1026 = vmatpush1.msra.mxu0 0.0
    %1027 = vmatprep.subr.mxu0 0.0
    %1028 = vmatpush1.msra.mxu0 0.0
    %1029 = vmatprep.subr.mxu0 0.0
    %1030 = vmatpush1.msra.mxu0 0.0
    %1031 = vmatprep.subr.mxu0 0.0
    %1032 = vmatpush1.msra.mxu0 0.0
    %1033 = vmatprep.subr.mxu0 0.0
    %1034 = vmatpush1.msra.mxu0 0.0
    %1035 = vmatprep.subr.mxu0 0.0
    %1036 = vmatpush1.msra.mxu0 0.0
    %1037 = vmatprep.subr.mxu0 0.0
    %1038 = vmatpush1.msra.mxu0 0.0
    %1039 = vmatprep.subr.mxu0 0.0
    %1040 = vmatpush1.msra.mxu0 0.0
    %1041 = vmatprep.subr.mxu0 0.0
    %1042 = vmatpush1.msra.mxu0 0.0
    %1043 = vmatprep.subr.mxu0 0.0
    %1044 = vmatpush1.msra.mxu0 0.0
    %1045 = vmatprep.subr.mxu0 0.0
    %1046 = vmatpush1.msra.mxu0 0.0
    %1047 = vmatprep.subr.mxu0 0.0
    %1048 = vmatpush1.msra.mxu0 0.0
    %1049 = vmatprep.subr.mxu0 0.0
    %1050 = vmatpush1.msra.mxu0 0.0
    %1051 = vmatprep.subr.mxu0 0.0
    %1052 = vmatpush1.msra.mxu0 0.0
    %1053 = vmatprep.mubr.f32.mxu0 %v923
    %1054 = vmatmul.mubr.f32.gmra.mrb[0].mxu0 %v758
    %v1055 = vpop.f32.mrb[0].mxu0
    %v1056 = vadd.f32 %v895, %v1055
    %v1057 = vpop.f32.mrb[0].mxu0
    %v1058 = vadd.f32 %v899, %v1057
    %1059 = vmatprep.mubr.f32.mxu0 %v925
    %1060 = vmatmul.mubr.f32.gmra.mrb[0].mxu0 %v759
    %v1061 = vpop.f32.mrb[0].mxu0
    %v1062 = vadd.f32 %v895, %v1061
    %v1063 = vpop.f32.mrb[0].mxu0
    %v1064 = vadd.f32 %v899, %v1063
    %1065 = vmatprep.mubr.f32.mxu0 %v927
    %1066 = vmatmul.mubr.f32.gmra.mrb[0].mxu0 %v760
    %v1067 = vpop.f32.mrb[0].mxu0
    %v1068 = vadd.f32 %v895, %v1067
    %v1069 = vpop.f32.mrb[0].mxu0
    %v1070 = vadd.f32 %v899, %v1069
    %1071 = vmatprep.mubr.f32.mxu0 %v929
    %1072 = vmatmul.mubr.f32.gmra.mrb[0].mxu0 %v761
    %v1073 = vpop.f32.mrb[0].mxu0
    %v1074 = vadd.f32 %v895, %v1073
    %v1075 = vpop.f32.mrb[0].mxu0
    %v1076 = vadd.f32 %v899, %v1075
    %1077 = vmatprep.mubr.f32.mxu0 %v931
    %1078 = vmatmul.mubr.f32.gmra.mrb[0].mxu0 %v762
    %v1079 = vpop.f32.mrb[0].mxu0
    %v1080 = vadd.f32 %v895, %v1079
    %v1081 = vpop.f32.mrb[0].mxu0
    %v1082 = vadd.f32 %v899, %v1081
    %1083 = vmatprep.mubr.f32.mxu0 %v933
    %1084 = vmatmul.mubr.f32.gmra.mrb[0].mxu0 %v763
    %v1085 = vpop.f32.mrb[0].mxu0
    %v1086 = vadd.f32 %v895, %v1085
    %v1087 = vpop.f32.mrb[0].mxu0
    %v1088 = vadd.f32 %v899, %v1087
    %1089 = vmatprep.mubr.f32.mxu0 %v935
    %1090 = vmatmul.mubr.f32.gmra.mrb[0].mxu0 %v764
    %v1091 = vpop.f32.mrb[0].mxu0
    %v1092 = vadd.f32 %v895, %v1091
    %v1093 = vpop.f32.mrb[0].mxu0
    %v1094 = vadd.f32 %v899, %v1093
    %1095 = vmatprep.mubr.f32.mxu0 %v937
    %1096 = vmatmul.mubr.f32.gmra.mrb[0].mxu0 %v765
    %v1097 = vpop.f32.mrb[0].mxu0
    %v1098 = vadd.f32 %v895, %v1097
    %v1099 = vpop.f32.mrb[0].mxu0
    %v1100 = vadd.f32 %v899, %v1099
    %1101 = vmatprep.mubr.f32.mxu0 %v939
    %1102 = vmatmul.mubr.f32.gmra.mrb[0].mxu0 %v766
    %v1103 = vpop.f32.mrb[0].mxu0
    %v1104 = vadd.f32 %v895, %v1103
    %v1105 = vpop.f32.mrb[0].mxu0
    %v1106 = vadd.f32 %v899, %v1105
    %1107 = vmatprep.mubr.f32.mxu0 %v941
    %1108 = vmatmul.mubr.f32.gmra.mrb[0].mxu0 %v767
    %v1109 = vpop.f32.mrb[0].mxu0
    %v1110 = vadd.f32 %v895, %v1109
    %v1111 = vpop.f32.mrb[0].mxu0
    %v1112 = vadd.f32 %v899, %v1111
    %1113 = vmatprep.mubr.f32.mxu0 %v943
    %1114 = vmatmul.mubr.f32.gmra.mrb[0].mxu0 %v768
    %v1115 = vpop.f32.mrb[0].mxu0
    %v1116 = vadd.f32 %v895, %v1115
    %v1117 = vpop.f32.mrb[0].mxu0
    %v1118 = vadd.f32 %v899, %v1117
    %1119 = vmatprep.mubr.f32.mxu0 %v945
    %1120 = vmatmul.mubr.f32.gmra.mrb[0].mxu0 %v769
    %v1121 = vpop.f32.mrb[0].mxu0
    %v1122 = vadd.f32 %v895, %v1121
    %v1123 = vpop.f32.mrb[0].mxu0
    %v1124 = vadd.f32 %v899, %v1123
    %1125 = vmatprep.mubr.f32.mxu0 %v947
    %1126 = vmatmul.mubr.f32.gmra.mrb[0].mxu0 %v770
    %v1127 = vpop.f32.mrb[0].mxu0
    %v1128 = vadd.f32 %v895, %v1127
    %v1129 = vpop.f32.mrb[0].mxu0
    %v1130 = vadd.f32 %v899, %v1129
    %1131 = vmatprep.mubr.f32.mxu0 %v949
    %1132 = vmatmul.mubr.f32.gmra.mrb[0].mxu0 %v771
    %v1133 = vpop.f32.mrb[0].mxu0
    %v1134 = vadd.f32 %v895, %v1133
    %v1135 = vpop.f32.mrb[0].mxu0
    %v1136 = vadd.f32 %v899, %v1135
    %1137 = vmatprep.mubr.f32.mxu0 %v951
    %1138 = vmatmul.mubr.f32.gmra.mrb[0].mxu0 %v772
    %v1139 = vpop.f32.mrb[0].mxu0
    %v1140 = vadd.f32 %v895, %v1139
    %v1141 = vpop.f32.mrb[0].mxu0
    %v1142 = vadd.f32 %v899, %v1141
    %1143 = vmatprep.mubr.f32.mxu0 %v953
    %1144 = vmatmul.mubr.f32.gmra.mrb[0].mxu0 %v773
    %v1145 = vpop.f32.mrb[0].mxu0
    %v1146 = vadd.f32 %v895, %v1145
    %v1147 = vpop.f32.mrb[0].mxu0
    %v1148 = vadd.f32 %v899, %v1147
    %1149 = vmatprep.mubr.f32.mxu0 %v955
    %1150 = vmatmul.mubr.f32.gmra.mrb[0].mxu0 %v774
    %v1151 = vpop.f32.mrb[0].mxu0
    %v1152 = vadd.f32 %v895, %v1151
    %v1153 = vpop.f32.mrb[0].mxu0
    %v1154 = vadd.f32 %v899, %v1153
    %1155 = vmatprep.mubr.f32.mxu0 %v957
    %1156 = vmatmul.mubr.f32.gmra.mrb[0].mxu0 %v775
    %v1157 = vpop.f32.mrb[0].mxu0
    %v1158 = vadd.f32 %v895, %v1157
    %v1159 = vpop.f32.mrb[0].mxu0
    %v1160 = vadd.f32 %v899, %v1159
    %1161 = vmatprep.mubr.f32.mxu0 %v959
    %1162 = vmatmul.mubr.f32.gmra.mrb[0].mxu0 %v776
    %v1163 = vpop.f32.mrb[0].mxu0
    %v1164 = vadd.f32 %v895, %v1163
    %v1165 = vpop.f32.mrb[0].mxu0
    %v1166 = vadd.f32 %v899, %v1165
    %1167 = vmatprep.mubr.f32.mxu0 %v961
    %1168 = vmatmul.mubr.f32.gmra.mrb[0].mxu0 %v777
    %v1169 = vpop.f32.mrb[0].mxu0
    %v1170 = vadd.f32 %v895, %v1169
    %v1171 = vpop.f32.mrb[0].mxu0
    %v1172 = vadd.f32 %v899, %v1171
    %1173 = vmatprep.mubr.f32.mxu0 %v963
    %1174 = vmatmul.mubr.f32.gmra.mrb[0].mxu0 %v778
    %v1175 = vpop.f32.mrb[0].mxu0
    %v1176 = vadd.f32 %v895, %v1175
    %v1177 = vpop.f32.mrb[0].mxu0
    %v1178 = vadd.f32 %v899, %v1177
    %1179 = vmatprep.mubr.f32.mxu0 %v965
    %1180 = vmatmul.mubr.f32.gmra.mrb[0].mxu0 %v779
    %v1181 = vpop.f32.mrb[0].mxu0
    %v1182 = vadd.f32 %v895, %v1181
    %v1183 = vpop.f32.mrb[0].mxu0
    %v1184 = vadd.f32 %v899, %v1183
    %1185 = vmatprep.mubr.f32.mxu0 %v967
    %1186 = vmatmul.mubr.f32.gmra.mrb[0].mxu0 %v780
    %v1187 = vpop.f32.mrb[0].mxu0
    %v1188 = vadd.f32 %v895, %v1187
    %v1189 = vpop.f32.mrb[0].mxu0
    %v1190 = vadd.f32 %v899, %v1189
    %1191 = vmatprep.mubr.f32.mxu0 %v969
    %1192 = vmatmul.mubr.f32.gmra.mrb[0].mxu0 %v781
    %v1193 = vpop.f32.mrb[0].mxu0
    %v1194 = vadd.f32 %v895, %v1193
    %v1195 = vpop.f32.mrb[0].mxu0
    %v1196 = vadd.f32 %v899, %v1195
    %1197 = vdwg.mxu0
    %1198 = vmatprep.subr.mxu0 %v785
    %1199 = vmatpush1.msra.mxu0 %v784
    %1200 = vmatprep.subr.mxu0 %v791
    %1201 = vmatpush1.msra.mxu0 %v790
    %1202 = vmatprep.subr.mxu0 %v797
    %1203 = vmatpush1.msra.mxu0 %v796
    %1204 = vmatprep.subr.mxu0 %v803
    %1205 = vmatpush1.msra.mxu0 %v802
    %1206 = vmatprep.subr.mxu0 %v809
    %1207 = vmatpush1.msra.mxu0 %v808
    %1208 = vmatprep.subr.mxu0 %v815
    %1209 = vmatpush1.msra.mxu0 %v814
    %1210 = vmatprep.subr.mxu0 %v821
    %1211 = vmatpush1.msra.mxu0 %v820
    %1212 = vmatprep.subr.mxu0 %v827
    %1213 = vmatpush1.msra.mxu0 %v826
    %1214 = vmatprep.subr.mxu0 %v833
    %1215 = vmatpush1.msra.mxu0 %v832
    %1216 = vmatprep.subr.mxu0 %v839
    %1217 = vmatpush1.msra.mxu0 %v838
    %1218 = vmatprep.subr.mxu0 %v845
    %1219 = vmatpush1.msra.mxu0 %v844
    %1220 = vmatprep.subr.mxu0 %v851
    %1221 = vmatpush1.msra.mxu0 %v850
    %1222 = vmatprep.subr.mxu0 %v857
    %1223 = vmatpush1.msra.mxu0 %v856
    %1224 = vmatprep.subr.mxu0 %v863
    %1225 = vmatpush1.msra.mxu0 %v862
    %1226 = vmatprep.subr.mxu0 %v869
    %1227 = vmatpush1.msra.mxu0 %v868
    %1228 = vmatprep.subr.mxu0 %v875
    %1229 = vmatpush1.msra.mxu0 %v874
    %1230 = vmatprep.subr.mxu0 %v881
    %1231 = vmatpush1.msra.mxu0 %v880
    %1232 = vmatprep.subr.mxu0 %v981
    %1233 = vmatpush1.msra.mxu0 %v978
    %1234 = vmatprep.subr.mxu0 0.0
    %1235 = vmatpush1.msra.mxu0 0.0
    %1236 = vmatprep.subr.mxu0 0.0
    %1237 = vmatpush1.msra.mxu0 0.0
    %1238 = vmatprep.subr.mxu0 0.0
    %1239 = vmatpush1.msra.mxu0 0.0
    %1240 = vmatprep.subr.mxu0 0.0
    %1241 = vmatpush1.msra.mxu0 0.0
    %1242 = vmatprep.subr.mxu0 0.0
    %1243 = vmatpush1.msra.mxu0 0.0
    %1244 = vmatprep.subr.mxu0 0.0
    %1245 = vmatpush1.msra.mxu0 0.0
    %1246 = vmatprep.subr.mxu0 0.0
    %1247 = vmatpush1.msra.mxu0 0.0
    %1248 = vmatprep.subr.mxu0 0.0
    %1249 = vmatpush1.msra.mxu0 0.0
    %1250 = vmatprep.subr.mxu0 0.0
    %1251 = vmatpush1.msra.mxu0 0.0
    %1252 = vmatprep.subr.mxu0 0.0
    %1253 = vmatpush1.msra.mxu0 0.0
    %1254 = vmatprep.subr.mxu0 0.0
    %1255 = vmatpush1.msra.mxu0 0.0
    %1256 = vmatprep.subr.mxu0 0.0
    %1257 = vmatpush1.msra.mxu0 0.0
    %1258 = vmatprep.subr.mxu0 0.0
    %1259 = vmatpush1.msra.mxu0 0.0
    %1260 = vmatprep.subr.mxu0 0.0
    %1261 = vmatpush1.msra.mxu0 0.0
    %1262 = vmatprep.mubr.f32.mxu0 %v923
    %1263 = vmatmul.mubr.f32.gmra.mrb[0].mxu0 %v758
    %v1264 = vpop.f32.mrb[0].mxu0
    %v1265 = vadd.f32 %v903, %v1264
    %v1266 = vpop.f32.mrb[0].mxu0
    %v1267 = vadd.f32 %v907, %v1266
    %1268 = vmatprep.mubr.f32.mxu0 %v925
    %1269 = vmatmul.mubr.f32.gmra.mrb[0].mxu0 %v759
    %v1270 = vpop.f32.mrb[0].mxu0
    %v1271 = vadd.f32 %v903, %v1270
    %v1272 = vpop.f32.mrb[0].mxu0
    %v1273 = vadd.f32 %v907, %v1272
    %1274 = vmatprep.mubr.f32.mxu0 %v927
    %1275 = vmatmul.mubr.f32.gmra.mrb[0].mxu0 %v760
    %v1276 = vpop.f32.mrb[0].mxu0
    %v1277 = vadd.f32 %v903, %v1276
    %v1278 = vpop.f32.mrb[0].mxu0
    %v1279 = vadd.f32 %v907, %v1278
    %1280 = vmatprep.mubr.f32.mxu0 %v929
    %1281 = vmatmul.mubr.f32.gmra.mrb[0].mxu0 %v761
    %v1282 = vpop.f32.mrb[0].mxu0
    %v1283 = vadd.f32 %v903, %v1282
    %v1284 = vpop.f32.mrb[0].mxu0
    %v1285 = vadd.f32 %v907, %v1284
    %1286 = vmatprep.mubr.f32.mxu0 %v931
    %1287 = vmatmul.mubr.f32.gmra.mrb[0].mxu0 %v762
    %v1288 = vpop.f32.mrb[0].mxu0
    %v1289 = vadd.f32 %v903, %v1288
    %v1290 = vpop.f32.mrb[0].mxu0
    %v1291 = vadd.f32 %v907, %v1290
    %1292 = vmatprep.mubr.f32.mxu0 %v933
    %1293 = vmatmul.mubr.f32.gmra.mrb[0].mxu0 %v763
    %v1294 = vpop.f32.mrb[0].mxu0
    %v1295 = vadd.f32 %v903, %v1294
    %v1296 = vpop.f32.mrb[0].mxu0
    %v1297 = vadd.f32 %v907, %v1296
    %1298 = vmatprep.mubr.f32.mxu0 %v935
    %1299 = vmatmul.mubr.f32.gmra.mrb[0].mxu0 %v764
    %v1300 = vpop.f32.mrb[0].mxu0
    %v1301 = vadd.f32 %v903, %v1300
    %v1302 = vpop.f32.mrb[0].mxu0
    %v1303 = vadd.f32 %v907, %v1302
    %1304 = vmatprep.mubr.f32.mxu0 %v937
    %1305 = vmatmul.mubr.f32.gmra.mrb[0].mxu0 %v765
    %v1306 = vpop.f32.mrb[0].mxu0
    %v1307 = vadd.f32 %v903, %v1306
    %v1308 = vpop.f32.mrb[0].mxu0
    %v1309 = vadd.f32 %v907, %v1308
    %1310 = vmatprep.mubr.f32.mxu0 %v939
    %1311 = vmatmul.mubr.f32.gmra.mrb[0].mxu0 %v766
    %v1312 = vpop.f32.mrb[0].mxu0
    %v1313 = vadd.f32 %v903, %v1312
    %v1314 = vpop.f32.mrb[0].mxu0
    %v1315 = vadd.f32 %v907, %v1314
    %1316 = vmatprep.mubr.f32.mxu0 %v941
    %1317 = vmatmul.mubr.f32.gmra.mrb[0].mxu0 %v767
    %v1318 = vpop.f32.mrb[0].mxu0
    %v1319 = vadd.f32 %v903, %v1318
    %v1320 = vpop.f32.mrb[0].mxu0
    %v1321 = vadd.f32 %v907, %v1320
    %1322 = vmatprep.mubr.f32.mxu0 %v943
    %1323 = vmatmul.mubr.f32.gmra.mrb[0].mxu0 %v768
    %v1324 = vpop.f32.mrb[0].mxu0
    %v1325 = vadd.f32 %v903, %v1324
    %v1326 = vpop.f32.mrb[0].mxu0
    %v1327 = vadd.f32 %v907, %v1326
    %1328 = vmatprep.mubr.f32.mxu0 %v945
    %1329 = vmatmul.mubr.f32.gmra.mrb[0].mxu0 %v769
    %v1330 = vpop.f32.mrb[0].mxu0
    %v1331 = vadd.f32 %v903, %v1330
    %v1332 = vpop.f32.mrb[0].mxu0
    %v1333 = vadd.f32 %v907, %v1332
    %1334 = vmatprep.mubr.f32.mxu0 %v947
    %1335 = vmatmul.mubr.f32.gmra.mrb[0].mxu0 %v770
    %v1336 = vpop.f32.mrb[0].mxu0
    %v1337 = vadd.f32 %v903, %v1336
    %v1338 = vpop.f32.mrb[0].mxu0
    %v1339 = vadd.f32 %v907, %v1338
    %1340 = vmatprep.mubr.f32.mxu0 %v949
    %1341 = vmatmul.mubr.f32.gmra.mrb[0].mxu0 %v771
    %v1342 = vpop.f32.mrb[0].mxu0
    %v1343 = vadd.f32 %v903, %v1342
    %v1344 = vpop.f32.mrb[0].mxu0
    %v1345 = vadd.f32 %v907, %v1344
    %1346 = vmatprep.mubr.f32.mxu0 %v951
    %1347 = vmatmul.mubr.f32.gmra.mrb[0].mxu0 %v772
    %v1348 = vpop.f32.mrb[0].mxu0
    %v1349 = vadd.f32 %v903, %v1348
    %v1350 = vpop.f32.mrb[0].mxu0
    %v1351 = vadd.f32 %v907, %v1350
    %1352 = vmatprep.mubr.f32.mxu0 %v953
    %1353 = vmatmul.mubr.f32.gmra.mrb[0].mxu0 %v773
    %v1354 = vpop.f32.mrb[0].mxu0
    %v1355 = vadd.f32 %v903, %v1354
    %v1356 = vpop.f32.mrb[0].mxu0
    %v1357 = vadd.f32 %v907, %v1356
    %1358 = vmatprep.mubr.f32.mxu0 %v955
    %1359 = vmatmul.mubr.f32.gmra.mrb[0].mxu0 %v774
    %v1360 = vpop.f32.mrb[0].mxu0
    %v1361 = vadd.f32 %v903, %v1360
    %v1362 = vpop.f32.mrb[0].mxu0
    %v1363 = vadd.f32 %v907, %v1362
    %1364 = vmatprep.mubr.f32.mxu0 %v957
    %1365 = vmatmul.mubr.f32.gmra.mrb[0].mxu0 %v775
    %v1366 = vpop.f32.mrb[0].mxu0
    %v1367 = vadd.f32 %v903, %v1366
    %v1368 = vpop.f32.mrb[0].mxu0
    %v1369 = vadd.f32 %v907, %v1368
    %1370 = vmatprep.mubr.f32.mxu0 %v959
    %1371 = vmatmul.mubr.f32.gmra.mrb[0].mxu0 %v776
    %v1372 = vpop.f32.mrb[0].mxu0
    %v1373 = vadd.f32 %v903, %v1372
    %v1374 = vpop.f32.mrb[0].mxu0
    %v1375 = vadd.f32 %v907, %v1374
    %1376 = vmatprep.mubr.f32.mxu0 %v961
    %1377 = vmatmul.mubr.f32.gmra.mrb[0].mxu0 %v777
    %v1378 = vpop.f32.mrb[0].mxu0
    %v1379 = vadd.f32 %v903, %v1378
    %v1380 = vpop.f32.mrb[0].mxu0
    %v1381 = vadd.f32 %v907, %v1380
    %1382 = vmatprep.mubr.f32.mxu0 %v963
    %1383 = vmatmul.mubr.f32.gmra.mrb[0].mxu0 %v778
    %v1384 = vpop.f32.mrb[0].mxu0
    %v1385 = vadd.f32 %v903, %v1384
    %v1386 = vpop.f32.mrb[0].mxu0
    %v1387 = vadd.f32 %v907, %v1386
    %1388 = vmatprep.mubr.f32.mxu0 %v965
    %1389 = vmatmul.mubr.f32.gmra.mrb[0].mxu0 %v779
    %v1390 = vpop.f32.mrb[0].mxu0
    %v1391 = vadd.f32 %v903, %v1390
    %v1392 = vpop.f32.mrb[0].mxu0
    %v1393 = vadd.f32 %v907, %v1392
    %1394 = vmatprep.mubr.f32.mxu0 %v967
    %1395 = vmatmul.mubr.f32.gmra.mrb[0].mxu0 %v780
    %v1396 = vpop.f32.mrb[0].mxu0
    %v1397 = vadd.f32 %v903, %v1396
    %v1398 = vpop.f32.mrb[0].mxu0
    %v1399 = vadd.f32 %v907, %v1398
    %1400 = vmatprep.mubr.f32.mxu0 %v969
    %1401 = vmatmul.mubr.f32.gmra.mrb[0].mxu0 %v781
    %v1402 = vpop.f32.mrb[0].mxu0
    %v1403 = vadd.f32 %v903, %v1402
    %v1404 = vpop.f32.mrb[0].mxu0
    %v1405 = vadd.f32 %v907, %v1404
    %1406 = vdwg.mxu0
    %1407 = vmatprep.subr.mxu0 %v787
    %1408 = vmatpush1.msra.mxu0 %v786
    %1409 = vmatprep.subr.mxu0 %v793
    %1410 = vmatpush1.msra.mxu0 %v792
    %1411 = vmatprep.subr.mxu0 %v799
    %1412 = vmatpush1.msra.mxu0 %v798
    %1413 = vmatprep.subr.mxu0 %v805
    %1414 = vmatpush1.msra.mxu0 %v804
    %1415 = vmatprep.subr.mxu0 %v811
    %1416 = vmatpush1.msra.mxu0 %v810
    %1417 = vmatprep.subr.mxu0 %v817
    %1418 = vmatpush1.msra.mxu0 %v816
    %1419 = vmatprep.subr.mxu0 %v823
    %1420 = vmatpush1.msra.mxu0 %v822
    %1421 = vmatprep.subr.mxu0 %v829
    %1422 = vmatpush1.msra.mxu0 %v828
    %1423 = vmatprep.subr.mxu0 %v835
    %1424 = vmatpush1.msra.mxu0 %v834
    %1425 = vmatprep.subr.mxu0 %v841
    %1426 = vmatpush1.msra.mxu0 %v840
    %1427 = vmatprep.subr.mxu0 %v847
    %1428 = vmatpush1.msra.mxu0 %v846
    %1429 = vmatprep.subr.mxu0 %v853
    %1430 = vmatpush1.msra.mxu0 %v852
    %1431 = vmatprep.subr.mxu0 %v859
    %1432 = vmatpush1.msra.mxu0 %v858
    %1433 = vmatprep.subr.mxu0 %v865
    %1434 = vmatpush1.msra.mxu0 %v864
    %1435 = vmatprep.subr.mxu0 %v871
    %1436 = vmatpush1.msra.mxu0 %v870
    %1437 = vmatprep.subr.mxu0 %v877
    %1438 = vmatpush1.msra.mxu0 %v876
    %1439 = vmatprep.subr.mxu0 %v883
    %1440 = vmatpush1.msra.mxu0 %v882
    %1441 = vmatprep.subr.mxu0 %v987
    %1442 = vmatpush1.msra.mxu0 %v984
    %1443 = vmatprep.subr.mxu0 0.0
    %1444 = vmatpush1.msra.mxu0 0.0
    %1445 = vmatprep.subr.mxu0 0.0
    %1446 = vmatpush1.msra.mxu0 0.0
    %1447 = vmatprep.subr.mxu0 0.0
    %1448 = vmatpush1.msra.mxu0 0.0
    %1449 = vmatprep.subr.mxu0 0.0
    %1450 = vmatpush1.msra.mxu0 0.0
    %1451 = vmatprep.subr.mxu0 0.0
    %1452 = vmatpush1.msra.mxu0 0.0
    %1453 = vmatprep.subr.mxu0 0.0
    %1454 = vmatpush1.msra.mxu0 0.0
    %1455 = vmatprep.subr.mxu0 0.0
    %1456 = vmatpush1.msra.mxu0 0.0
    %1457 = vmatprep.subr.mxu0 0.0
    %1458 = vmatpush1.msra.mxu0 0.0
    %1459 = vmatprep.subr.mxu0 0.0
    %1460 = vmatpush1.msra.mxu0 0.0
    %1461 = vmatprep.subr.mxu0 0.0
    %1462 = vmatpush1.msra.mxu0 0.0
    %1463 = vmatprep.subr.mxu0 0.0
    %1464 = vmatpush1.msra.mxu0 0.0
    %1465 = vmatprep.subr.mxu0 0.0
    %1466 = vmatpush1.msra.mxu0 0.0
    %1467 = vmatprep.subr.mxu0 0.0
    %1468 = vmatpush1.msra.mxu0 0.0
    %1469 = vmatprep.subr.mxu0 0.0
    %1470 = vmatpush1.msra.mxu0 0.0
    %1471 = vmatprep.mubr.f32.mxu0 %v923
    %1472 = vmatmul.mubr.f32.gmra.mrb[0].mxu0 %v758
    %v1473 = vpop.f32.mrb[0].mxu0
    %v1474 = vadd.f32 %v911, %v1473
    %v1475 = vpop.f32.mrb[0].mxu0
    %v1476 = vadd.f32 %v915, %v1475
    %1477 = vmatprep.mubr.f32.mxu0 %v925
    %1478 = vmatmul.mubr.f32.gmra.mrb[0].mxu0 %v759
    %v1479 = vpop.f32.mrb[0].mxu0
    %v1480 = vadd.f32 %v911, %v1479
    %v1481 = vpop.f32.mrb[0].mxu0
    %v1482 = vadd.f32 %v915, %v1481
    %1483 = vmatprep.mubr.f32.mxu0 %v927
    %1484 = vmatmul.mubr.f32.gmra.mrb[0].mxu0 %v760
    %v1485 = vpop.f32.mrb[0].mxu0
    %v1486 = vadd.f32 %v911, %v1485
    %v1487 = vpop.f32.mrb[0].mxu0
    %v1488 = vadd.f32 %v915, %v1487
    %1489 = vmatprep.mubr.f32.mxu0 %v929
    %1490 = vmatmul.mubr.f32.gmra.mrb[0].mxu0 %v761
    %v1491 = vpop.f32.mrb[0].mxu0
    %v1492 = vadd.f32 %v911, %v1491
    %v1493 = vpop.f32.mrb[0].mxu0
    %v1494 = vadd.f32 %v915, %v1493
    %1495 = vmatprep.mubr.f32.mxu0 %v931
    %1496 = vmatmul.mubr.f32.gmra.mrb[0].mxu0 %v762
    %v1497 = vpop.f32.mrb[0].mxu0
    %v1498 = vadd.f32 %v911, %v1497
    %v1499 = vpop.f32.mrb[0].mxu0
    %v1500 = vadd.f32 %v915, %v1499
    %1501 = vmatprep.mubr.f32.mxu0 %v933
    %1502 = vmatmul.mubr.f32.gmra.mrb[0].mxu0 %v763
    %v1503 = vpop.f32.mrb[0].mxu0
    %v1504 = vadd.f32 %v911, %v1503
    %v1505 = vpop.f32.mrb[0].mxu0
    %v1506 = vadd.f32 %v915, %v1505
    %1507 = vmatprep.mubr.f32.mxu0 %v935
    %1508 = vmatmul.mubr.f32.gmra.mrb[0].mxu0 %v764
    %v1509 = vpop.f32.mrb[0].mxu0
    %v1510 = vadd.f32 %v911, %v1509
    %v1511 = vpop.f32.mrb[0].mxu0
    %v1512 = vadd.f32 %v915, %v1511
    %1513 = vmatprep.mubr.f32.mxu0 %v937
    %1514 = vmatmul.mubr.f32.gmra.mrb[0].mxu0 %v765
    %v1515 = vpop.f32.mrb[0].mxu0
    %v1516 = vadd.f32 %v911, %v1515
    %v1517 = vpop.f32.mrb[0].mxu0
    %v1518 = vadd.f32 %v915, %v1517
    %1519 = vmatprep.mubr.f32.mxu0 %v939
    %1520 = vmatmul.mubr.f32.gmra.mrb[0].mxu0 %v766
    %v1521 = vpop.f32.mrb[0].mxu0
    %v1522 = vadd.f32 %v911, %v1521
    %v1523 = vpop.f32.mrb[0].mxu0
    %v1524 = vadd.f32 %v915, %v1523
    %1525 = vmatprep.mubr.f32.mxu0 %v941
    %1526 = vmatmul.mubr.f32.gmra.mrb[0].mxu0 %v767
    %v1527 = vpop.f32.mrb[0].mxu0
    %v1528 = vadd.f32 %v911, %v1527
    %v1529 = vpop.f32.mrb[0].mxu0
    %v1530 = vadd.f32 %v915, %v1529
    %1531 = vmatprep.mubr.f32.mxu0 %v943
    %1532 = vmatmul.mubr.f32.gmra.mrb[0].mxu0 %v768
    %v1533 = vpop.f32.mrb[0].mxu0
    %v1534 = vadd.f32 %v911, %v1533
    %v1535 = vpop.f32.mrb[0].mxu0
    %v1536 = vadd.f32 %v915, %v1535
    %1537 = vmatprep.mubr.f32.mxu0 %v945
    %1538 = vmatmul.mubr.f32.gmra.mrb[0].mxu0 %v769
    %v1539 = vpop.f32.mrb[0].mxu0
    %v1540 = vadd.f32 %v911, %v1539
    %v1541 = vpop.f32.mrb[0].mxu0
    %v1542 = vadd.f32 %v915, %v1541
    %1543 = vmatprep.mubr.f32.mxu0 %v947
    %1544 = vmatmul.mubr.f32.gmra.mrb[0].mxu0 %v770
    %v1545 = vpop.f32.mrb[0].mxu0
    %v1546 = vadd.f32 %v911, %v1545
    %v1547 = vpop.f32.mrb[0].mxu0
    %v1548 = vadd.f32 %v915, %v1547
    %1549 = vmatprep.mubr.f32.mxu0 %v949
    %1550 = vmatmul.mubr.f32.gmra.mrb[0].mxu0 %v771
    %v1551 = vpop.f32.mrb[0].mxu0
    %v1552 = vadd.f32 %v911, %v1551
    %v1553 = vpop.f32.mrb[0].mxu0
    %v1554 = vadd.f32 %v915, %v1553
    %1555 = vmatprep.mubr.f32.mxu0 %v951
    %1556 = vmatmul.mubr.f32.gmra.mrb[0].mxu0 %v772
    %v1557 = vpop.f32.mrb[0].mxu0
    %v1558 = vadd.f32 %v911, %v1557
    %v1559 = vpop.f32.mrb[0].mxu0
    %v1560 = vadd.f32 %v915, %v1559
    %1561 = vmatprep.mubr.f32.mxu0 %v953
    %1562 = vmatmul.mubr.f32.gmra.mrb[0].mxu0 %v773
    %v1563 = vpop.f32.mrb[0].mxu0
    %v1564 = vadd.f32 %v911, %v1563
    %v1565 = vpop.f32.mrb[0].mxu0
    %v1566 = vadd.f32 %v915, %v1565
    %1567 = vmatprep.mubr.f32.mxu0 %v955
    %1568 = vmatmul.mubr.f32.gmra.mrb[0].mxu0 %v774
    %v1569 = vpop.f32.mrb[0].mxu0
    %v1570 = vadd.f32 %v911, %v1569
    %v1571 = vpop.f32.mrb[0].mxu0
    %v1572 = vadd.f32 %v915, %v1571
    %1573 = vmatprep.mubr.f32.mxu0 %v957
    %1574 = vmatmul.mubr.f32.gmra.mrb[0].mxu0 %v775
    %v1575 = vpop.f32.mrb[0].mxu0
    %v1576 = vadd.f32 %v911, %v1575
    %v1577 = vpop.f32.mrb[0].mxu0
    %v1578 = vadd.f32 %v915, %v1577
    %1579 = vmatprep.mubr.f32.mxu0 %v959
    %1580 = vmatmul.mubr.f32.gmra.mrb[0].mxu0 %v776
    %v1581 = vpop.f32.mrb[0].mxu0
    %v1582 = vadd.f32 %v911, %v1581
    %v1583 = vpop.f32.mrb[0].mxu0
    %v1584 = vadd.f32 %v915, %v1583
    %1585 = vmatprep.mubr.f32.mxu0 %v961
    %1586 = vmatmul.mubr.f32.gmra.mrb[0].mxu0 %v777
    %v1587 = vpop.f32.mrb[0].mxu0
    %v1588 = vadd.f32 %v911, %v1587
    %v1589 = vpop.f32.mrb[0].mxu0
    %v1590 = vadd.f32 %v915, %v1589
    %1591 = vmatprep.mubr.f32.mxu0 %v963
    %1592 = vmatmul.mubr.f32.gmra.mrb[0].mxu0 %v778
    %v1593 = vpop.f32.mrb[0].mxu0
    %v1594 = vadd.f32 %v911, %v1593
    %v1595 = vpop.f32.mrb[0].mxu0
    %v1596 = vadd.f32 %v915, %v1595
    %1597 = vmatprep.mubr.f32.mxu0 %v965
    %1598 = vmatmul.mubr.f32.gmra.mrb[0].mxu0 %v779
    %v1599 = vpop.f32.mrb[0].mxu0
    %v1600 = vadd.f32 %v911, %v1599
    %v1601 = vpop.f32.mrb[0].mxu0
    %v1602 = vadd.f32 %v915, %v1601
    %1603 = vmatprep.mubr.f32.mxu0 %v967
    %1604 = vmatmul.mubr.f32.gmra.mrb[0].mxu0 %v780
    %v1605 = vpop.f32.mrb[0].mxu0
    %v1606 = vadd.f32 %v911, %v1605
    %v1607 = vpop.f32.mrb[0].mxu0
    %v1608 = vadd.f32 %v915, %v1607
    %1609 = vmatprep.mubr.f32.mxu0 %v969
    %1610 = vmatmul.mubr.f32.gmra.mrb[0].mxu0 %v781
    %v1611 = vpop.f32.mrb[0].mxu0
    %v1612 = vadd.f32 %v911, %v1611
    %v1613 = vpop.f32.mrb[0].mxu0
    %v1614 = vadd.f32 %v915, %v1613
    %1615 = vdwg.mxu0
    %v1616 = vmax.f32 %v1056, %v1267
    %v1617 = vmax.f32 %v1058, %v1474
    %v1618 = vmax.f32 %v1265, %v1476
    %v1619 = vmax.f32 %v1062, %v1273
    %v1620 = vmax.f32 %v1064, %v1480
    %v1621 = vmax.f32 %v1271, %v1482
    %v1622 = vmax.f32 %v1068, %v1279
    %v1623 = vmax.f32 %v1070, %v1486
    %v1624 = vmax.f32 %v1277, %v1488
    %v1625 = vmax.f32 %v1074, %v1285
    %v1626 = vmax.f32 %v1076, %v1492
    %v1627 = vmax.f32 %v1283, %v1494
    %v1628 = vmax.f32 %v1080, %v1291
    %v1629 = vmax.f32 %v1082, %v1498
    %v1630 = vmax.f32 %v1289, %v1500
    %v1631 = vmax.f32 %v1086, %v1297
    %v1632 = vmax.f32 %v1088, %v1504
    %v1633 = vmax.f32 %v1295, %v1506
    %v1634 = vmax.f32 %v1092, %v1303
    %v1635 = vmax.f32 %v1094, %v1510
    %v1636 = vmax.f32 %v1301, %v1512
    %v1637 = vmax.f32 %v1098, %v1309
    %v1638 = vmax.f32 %v1100, %v1516
    %v1639 = vmax.f32 %v1307, %v1518
    %v1640 = vmax.f32 %v1104, %v1315
    %v1641 = vmax.f32 %v1106, %v1522
    %v1642 = vmax.f32 %v1313, %v1524
    %v1643 = vmax.f32 %v1110, %v1321
    %v1644 = vmax.f32 %v1112, %v1528
    %v1645 = vmax.f32 %v1319, %v1530
    %v1646 = vmax.f32 %v1116, %v1327
    %v1647 = vmax.f32 %v1118, %v1534
    %v1648 = vmax.f32 %v1325, %v1536
    %v1649 = vmax.f32 %v1122, %v1333
    %v1650 = vmax.f32 %v1124, %v1540
    %v1651 = vmax.f32 %v1331, %v1542
    %v1652 = vmax.f32 %v1128, %v1339
    %v1653 = vmax.f32 %v1130, %v1546
    %v1654 = vmax.f32 %v1337, %v1548
    %v1655 = vmax.f32 %v1134, %v1345
    %v1656 = vmax.f32 %v1136, %v1552
    %v1657 = vmax.f32 %v1343, %v1554
    %v1658 = vmax.f32 %v1140, %v1351
    %v1659 = vmax.f32 %v1142, %v1558
    %v1660 = vmax.f32 %v1349, %v1560
    %v1661 = vmax.f32 %v1146, %v1357
    %v1662 = vmax.f32 %v1148, %v1564
    %v1663 = vmax.f32 %v1355, %v1566
    %v1664 = vmax.f32 %v1152, %v1363
    %v1665 = vmax.f32 %v1154, %v1570
    %v1666 = vmax.f32 %v1361, %v1572
    %v1667 = vmax.f32 %v1158, %v1369
    %v1668 = vmax.f32 %v1160, %v1576
    %v1669 = vmax.f32 %v1367, %v1578
    %v1670 = vmax.f32 %v1164, %v1375
    %v1671 = vmax.f32 %v1166, %v1582
    %v1672 = vmax.f32 %v1373, %v1584
    %v1673 = vmax.f32 %v1170, %v1381
    %v1674 = vmax.f32 %v1172, %v1588
    %v1675 = vmax.f32 %v1379, %v1590
    %v1676 = vmax.f32 %v1176, %v1387
    %v1677 = vmax.f32 %v1178, %v1594
    %v1678 = vmax.f32 %v1385, %v1596
    %v1679 = vmax.f32 %v1182, %v1393
    %v1680 = vmax.f32 %v1184, %v1600
    %v1681 = vmax.f32 %v1391, %v1602
    %v1682 = vmax.f32 %v1188, %v1399
    %v1683 = vmax.f32 %v1190, %v1606
    %v1684 = vmax.f32 %v1397, %v1608
    %v1685 = vmax.f32 %v1194, %v1405
    %v1686 = vmax.f32 %v1196, %v1612
    %v1687 = vmax.f32 %v1403, %v1614
    %v1712 = vrot.slane %v1616, 1
    %v1713 = vrot.slane %v1617, 1
    %v1714 = vrot.slane %v1618, 1
    %v1715 = vrot.slane %v1625, 1
    %v1716 = vrot.slane %v1626, 1
    %v1717 = vrot.slane %v1627, 1
    %v1718 = vrot.slane %v1634, 1
    %v1719 = vrot.slane %v1635, 1
    %v1720 = vrot.slane %v1636, 1
    %v1721 = vrot.slane %v1643, 1
    %v1722 = vrot.slane %v1644, 1
    %v1723 = vrot.slane %v1645, 1
    %v1724 = vrot.slane %v1652, 1
    %v1725 = vrot.slane %v1653, 1
    %v1726 = vrot.slane %v1654, 1
    %v1727 = vrot.slane %v1661, 1
    %v1728 = vrot.slane %v1662, 1
    %v1729 = vrot.slane %v1663, 1
    %v1730 = vrot.slane %v1670, 1
    %v1731 = vrot.slane %v1671, 1
    %v1732 = vrot.slane %v1672, 1
    %v1733 = vrot.slane %v1679, 1
    %v1734 = vrot.slane %v1680, 1
    %v1735 = vrot.slane %v1681, 1
    %v1760 = vmax.f32 %v1616, %v1712
    %v1761 = vmax.f32 %v1617, %v1713
    %v1762 = vmax.f32 %v1618, %v1714
    %v1763 = vmax.f32 %v1625, %v1715
    %v1764 = vmax.f32 %v1626, %v1716
    %v1765 = vmax.f32 %v1627, %v1717
    %v1766 = vmax.f32 %v1634, %v1718
    %v1767 = vmax.f32 %v1635, %v1719
    %v1768 = vmax.f32 %v1636, %v1720
    %v1769 = vmax.f32 %v1643, %v1721
    %v1770 = vmax.f32 %v1644, %v1722
    %v1771 = vmax.f32 %v1645, %v1723
    %v1772 = vmax.f32 %v1652, %v1724
    %v1773 = vmax.f32 %v1653, %v1725
    %v1774 = vmax.f32 %v1654, %v1726
    %v1775 = vmax.f32 %v1661, %v1727
    %v1776 = vmax.f32 %v1662, %v1728
    %v1777 = vmax.f32 %v1663, %v1729
    %v1778 = vmax.f32 %v1670, %v1730
    %v1779 = vmax.f32 %v1671, %v1731
    %v1780 = vmax.f32 %v1672, %v1732
    %v1781 = vmax.f32 %v1679, %v1733
    %v1782 = vmax.f32 %v1680, %v1734
    %v1783 = vmax.f32 %v1681, %v1735
    %v1808 = vrot.slane %v1619, 1
    %v1809 = vrot.slane %v1620, 1
    %v1810 = vrot.slane %v1621, 1
    %v1811 = vrot.slane %v1628, 1
    %v1812 = vrot.slane %v1629, 1
    %v1813 = vrot.slane %v1630, 1
    %v1814 = vrot.slane %v1637, 1
    %v1815 = vrot.slane %v1638, 1
    %v1816 = vrot.slane %v1639, 1
    %v1817 = vrot.slane %v1646, 1
    %v1818 = vrot.slane %v1647, 1
    %v1819 = vrot.slane %v1648, 1
    %v1820 = vrot.slane %v1655, 1
    %v1821 = vrot.slane %v1656, 1
    %v1822 = vrot.slane %v1657, 1
    %v1823 = vrot.slane %v1664, 1
    %v1824 = vrot.slane %v1665, 1
    %v1825 = vrot.slane %v1666, 1
    %v1826 = vrot.slane %v1673, 1
    %v1827 = vrot.slane %v1674, 1
    %v1828 = vrot.slane %v1675, 1
    %v1829 = vrot.slane %v1682, 1
    %v1830 = vrot.slane %v1683, 1
    %v1831 = vrot.slane %v1684, 1
    %v1856 = vmax.f32 %v1619, %v1808
    %v1857 = vmax.f32 %v1620, %v1809
    %v1858 = vmax.f32 %v1621, %v1810
    %v1859 = vmax.f32 %v1628, %v1811
    %v1860 = vmax.f32 %v1629, %v1812
    %v1861 = vmax.f32 %v1630, %v1813
    %v1862 = vmax.f32 %v1637, %v1814
    %v1863 = vmax.f32 %v1638, %v1815
    %v1864 = vmax.f32 %v1639, %v1816
    %v1865 = vmax.f32 %v1646, %v1817
    %v1866 = vmax.f32 %v1647, %v1818
    %v1867 = vmax.f32 %v1648, %v1819
    %v1868 = vmax.f32 %v1655, %v1820
    %v1869 = vmax.f32 %v1656, %v1821
    %v1870 = vmax.f32 %v1657, %v1822
    %v1871 = vmax.f32 %v1664, %v1823
    %v1872 = vmax.f32 %v1665, %v1824
    %v1873 = vmax.f32 %v1666, %v1825
    %v1874 = vmax.f32 %v1673, %v1826
    %v1875 = vmax.f32 %v1674, %v1827
    %v1876 = vmax.f32 %v1675, %v1828
    %v1877 = vmax.f32 %v1682, %v1829
    %v1878 = vmax.f32 %v1683, %v1830
    %v1879 = vmax.f32 %v1684, %v1831
    %v1904 = vrot.slane %v1622, 1
    %v1905 = vrot.slane %v1623, 1
    %v1906 = vrot.slane %v1624, 1
    %v1907 = vrot.slane %v1631, 1
    %v1908 = vrot.slane %v1632, 1
    %v1909 = vrot.slane %v1633, 1
    %v1910 = vrot.slane %v1640, 1
    %v1911 = vrot.slane %v1641, 1
    %v1912 = vrot.slane %v1642, 1
    %v1913 = vrot.slane %v1649, 1
    %v1914 = vrot.slane %v1650, 1
    %v1915 = vrot.slane %v1651, 1
    %v1916 = vrot.slane %v1658, 1
    %v1917 = vrot.slane %v1659, 1
    %v1918 = vrot.slane %v1660, 1
    %v1919 = vrot.slane %v1667, 1
    %v1920 = vrot.slane %v1668, 1
    %v1921 = vrot.slane %v1669, 1
    %v1922 = vrot.slane %v1676, 1
    %v1923 = vrot.slane %v1677, 1
    %v1924 = vrot.slane %v1678, 1
    %v1925 = vrot.slane %v1685, 1
    %v1926 = vrot.slane %v1686, 1
    %v1927 = vrot.slane %v1687, 1
    %v1952 = vmax.f32 %v1622, %v1904
    %v1953 = vmax.f32 %v1623, %v1905
    %v1954 = vmax.f32 %v1624, %v1906
    %v1955 = vmax.f32 %v1631, %v1907
    %v1956 = vmax.f32 %v1632, %v1908
    %v1957 = vmax.f32 %v1633, %v1909
    %v1958 = vmax.f32 %v1640, %v1910
    %v1959 = vmax.f32 %v1641, %v1911
    %v1960 = vmax.f32 %v1642, %v1912
    %v1961 = vmax.f32 %v1649, %v1913
    %v1962 = vmax.f32 %v1650, %v1914
    %v1963 = vmax.f32 %v1651, %v1915
    %v1964 = vmax.f32 %v1658, %v1916
    %v1965 = vmax.f32 %v1659, %v1917
    %v1966 = vmax.f32 %v1660, %v1918
    %v1967 = vmax.f32 %v1667, %v1919
    %v1968 = vmax.f32 %v1668, %v1920
    %v1969 = vmax.f32 %v1669, %v1921
    %v1970 = vmax.f32 %v1676, %v1922
    %v1971 = vmax.f32 %v1677, %v1923
    %v1972 = vmax.f32 %v1678, %v1924
    %v1973 = vmax.f32 %v1685, %v1925
    %v1974 = vmax.f32 %v1686, %v1926
    %v1975 = vmax.f32 %v1687, %v1927
    %v2000 = vrot.slane %v1760, 1
    %v2001 = vrot.slane %v1761, 1
    %v2002 = vrot.slane %v1762, 1
    %v2003 = vrot.slane %v1763, 1
    %v2004 = vrot.slane %v1764, 1
    %v2005 = vrot.slane %v1765, 1
    %v2006 = vrot.slane %v1766, 1
    %v2007 = vrot.slane %v1767, 1
    %v2008 = vrot.slane %v1768, 1
    %v2009 = vrot.slane %v1769, 1
    %v2010 = vrot.slane %v1770, 1
    %v2011 = vrot.slane %v1771, 1
    %v2012 = vrot.slane %v1772, 1
    %v2013 = vrot.slane %v1773, 1
    %v2014 = vrot.slane %v1774, 1
    %v2015 = vrot.slane %v1775, 1
    %v2016 = vrot.slane %v1776, 1
    %v2017 = vrot.slane %v1777, 1
    %v2018 = vrot.slane %v1778, 1
    %v2019 = vrot.slane %v1779, 1
    %v2020 = vrot.slane %v1780, 1
    %v2021 = vrot.slane %v1781, 1
    %v2022 = vrot.slane %v1782, 1
    %v2023 = vrot.slane %v1783, 1
    %v2048 = vrot.slane %v1760, 2
    %v2049 = vrot.slane %v1761, 2
    %v2050 = vrot.slane %v1762, 2
    %v2051 = vrot.slane %v1763, 2
    %v2052 = vrot.slane %v1764, 2
    %v2053 = vrot.slane %v1765, 2
    %v2054 = vrot.slane %v1766, 2
    %v2055 = vrot.slane %v1767, 2
    %v2056 = vrot.slane %v1768, 2
    %v2057 = vrot.slane %v1769, 2
    %v2058 = vrot.slane %v1770, 2
    %v2059 = vrot.slane %v1771, 2
    %v2060 = vrot.slane %v1772, 2
    %v2061 = vrot.slane %v1773, 2
    %v2062 = vrot.slane %v1774, 2
    %v2063 = vrot.slane %v1775, 2
    %v2064 = vrot.slane %v1776, 2
    %v2065 = vrot.slane %v1777, 2
    %v2066 = vrot.slane %v1778, 2
    %v2067 = vrot.slane %v1779, 2
    %v2068 = vrot.slane %v1780, 2
    %v2069 = vrot.slane %v1781, 2
    %v2070 = vrot.slane %v1782, 2
    %v2071 = vrot.slane %v1783, 2
    %v2096 = vrot.slane %v1760, 3
    %v2097 = vrot.slane %v1761, 3
    %v2098 = vrot.slane %v1762, 3
    %v2099 = vrot.slane %v1763, 3
    %v2100 = vrot.slane %v1764, 3
    %v2101 = vrot.slane %v1765, 3
    %v2102 = vrot.slane %v1766, 3
    %v2103 = vrot.slane %v1767, 3
    %v2104 = vrot.slane %v1768, 3
    %v2105 = vrot.slane %v1769, 3
    %v2106 = vrot.slane %v1770, 3
    %v2107 = vrot.slane %v1771, 3
    %v2108 = vrot.slane %v1772, 3
    %v2109 = vrot.slane %v1773, 3
    %v2110 = vrot.slane %v1774, 3
    %v2111 = vrot.slane %v1775, 3
    %v2112 = vrot.slane %v1776, 3
    %v2113 = vrot.slane %v1777, 3
    %v2114 = vrot.slane %v1778, 3
    %v2115 = vrot.slane %v1779, 3
    %v2116 = vrot.slane %v1780, 3
    %v2117 = vrot.slane %v1781, 3
    %v2118 = vrot.slane %v1782, 3
    %v2119 = vrot.slane %v1783, 3
    %v2168 = vrot.slane %v1856, 4
    %v2169 = vrot.slane %v1857, 4
    %v2170 = vrot.slane %v1858, 4
    %v2171 = vrot.slane %v1859, 4
    %v2172 = vrot.slane %v1860, 4
    %v2173 = vrot.slane %v1861, 4
    %v2174 = vrot.slane %v1862, 4
    %v2175 = vrot.slane %v1863, 4
    %v2176 = vrot.slane %v1864, 4
    %v2177 = vrot.slane %v1865, 4
    %v2178 = vrot.slane %v1866, 4
    %v2179 = vrot.slane %v1867, 4
    %v2180 = vrot.slane %v1868, 4
    %v2181 = vrot.slane %v1869, 4
    %v2182 = vrot.slane %v1870, 4
    %v2183 = vrot.slane %v1871, 4
    %v2184 = vrot.slane %v1872, 4
    %v2185 = vrot.slane %v1873, 4
    %v2186 = vrot.slane %v1874, 4
    %v2187 = vrot.slane %v1875, 4
    %v2188 = vrot.slane %v1876, 4
    %v2189 = vrot.slane %v1877, 4
    %v2190 = vrot.slane %v1878, 4
    %v2191 = vrot.slane %v1879, 4
    %v2216 = vrot.slane %v1856, 5
    %v2217 = vrot.slane %v1857, 5
    %v2218 = vrot.slane %v1858, 5
    %v2219 = vrot.slane %v1859, 5
    %v2220 = vrot.slane %v1860, 5
    %v2221 = vrot.slane %v1861, 5
    %v2222 = vrot.slane %v1862, 5
    %v2223 = vrot.slane %v1863, 5
    %v2224 = vrot.slane %v1864, 5
    %v2225 = vrot.slane %v1865, 5
    %v2226 = vrot.slane %v1866, 5
    %v2227 = vrot.slane %v1867, 5
    %v2228 = vrot.slane %v1868, 5
    %v2229 = vrot.slane %v1869, 5
    %v2230 = vrot.slane %v1870, 5
    %v2231 = vrot.slane %v1871, 5
    %v2232 = vrot.slane %v1872, 5
    %v2233 = vrot.slane %v1873, 5
    %v2234 = vrot.slane %v1874, 5
    %v2235 = vrot.slane %v1875, 5
    %v2236 = vrot.slane %v1876, 5
    %v2237 = vrot.slane %v1877, 5
    %v2238 = vrot.slane %v1878, 5
    %v2239 = vrot.slane %v1879, 5
    %v2264 = vrot.slane %v1856, 6
    %v2265 = vrot.slane %v1857, 6
    %v2266 = vrot.slane %v1858, 6
    %v2267 = vrot.slane %v1859, 6
    %v2268 = vrot.slane %v1860, 6
    %v2269 = vrot.slane %v1861, 6
    %v2270 = vrot.slane %v1862, 6
    %v2271 = vrot.slane %v1863, 6
    %v2272 = vrot.slane %v1864, 6
    %v2273 = vrot.slane %v1865, 6
    %v2274 = vrot.slane %v1866, 6
    %v2275 = vrot.slane %v1867, 6
    %v2276 = vrot.slane %v1868, 6
    %v2277 = vrot.slane %v1869, 6
    %v2278 = vrot.slane %v1870, 6
    %v2279 = vrot.slane %v1871, 6
    %v2280 = vrot.slane %v1872, 6
    %v2281 = vrot.slane %v1873, 6
    %v2282 = vrot.slane %v1874, 6
    %v2283 = vrot.slane %v1875, 6
    %v2284 = vrot.slane %v1876, 6
    %v2285 = vrot.slane %v1877, 6
    %v2286 = vrot.slane %v1878, 6
    %v2287 = vrot.slane %v1879, 6
    %v2312 = vrot.slane %v1856, 7
    %v2313 = vrot.slane %v1857, 7
    %v2314 = vrot.slane %v1858, 7
    %v2315 = vrot.slane %v1859, 7
    %v2316 = vrot.slane %v1860, 7
    %v2317 = vrot.slane %v1861, 7
    %v2318 = vrot.slane %v1862, 7
    %v2319 = vrot.slane %v1863, 7
    %v2320 = vrot.slane %v1864, 7
    %v2321 = vrot.slane %v1865, 7
    %v2322 = vrot.slane %v1866, 7
    %v2323 = vrot.slane %v1867, 7
    %v2324 = vrot.slane %v1868, 7
    %v2325 = vrot.slane %v1869, 7
    %v2326 = vrot.slane %v1870, 7
    %v2327 = vrot.slane %v1871, 7
    %v2328 = vrot.slane %v1872, 7
    %v2329 = vrot.slane %v1873, 7
    %v2330 = vrot.slane %v1874, 7
    %v2331 = vrot.slane %v1875, 7
    %v2332 = vrot.slane %v1876, 7
    %v2333 = vrot.slane %v1877, 7
    %v2334 = vrot.slane %v1878, 7
    %v2335 = vrot.slane %v1879, 7
    %v2384 = vrot.slane %v1952, 1
    %v2385 = vrot.slane %v1953, 1
    %v2386 = vrot.slane %v1954, 1
    %v2387 = vrot.slane %v1955, 1
    %v2388 = vrot.slane %v1956, 1
    %v2389 = vrot.slane %v1957, 1
    %v2390 = vrot.slane %v1958, 1
    %v2391 = vrot.slane %v1959, 1
    %v2392 = vrot.slane %v1960, 1
    %v2393 = vrot.slane %v1961, 1
    %v2394 = vrot.slane %v1962, 1
    %v2395 = vrot.slane %v1963, 1
    %v2396 = vrot.slane %v1964, 1
    %v2397 = vrot.slane %v1965, 1
    %v2398 = vrot.slane %v1966, 1
    %v2399 = vrot.slane %v1967, 1
    %v2400 = vrot.slane %v1968, 1
    %v2401 = vrot.slane %v1969, 1
    %v2402 = vrot.slane %v1970, 1
    %v2403 = vrot.slane %v1971, 1
    %v2404 = vrot.slane %v1972, 1
    %v2405 = vrot.slane %v1973, 1
    %v2406 = vrot.slane %v1974, 1
    %v2407 = vrot.slane %v1975, 1
    %v2432 = vrot.slane %v1952, 2
    %v2433 = vrot.slane %v1953, 2
    %v2434 = vrot.slane %v1954, 2
    %v2435 = vrot.slane %v1955, 2
    %v2436 = vrot.slane %v1956, 2
    %v2437 = vrot.slane %v1957, 2
    %v2438 = vrot.slane %v1958, 2
    %v2439 = vrot.slane %v1959, 2
    %v2440 = vrot.slane %v1960, 2
    %v2441 = vrot.slane %v1961, 2
    %v2442 = vrot.slane %v1962, 2
    %v2443 = vrot.slane %v1963, 2
    %v2444 = vrot.slane %v1964, 2
    %v2445 = vrot.slane %v1965, 2
    %v2446 = vrot.slane %v1966, 2
    %v2447 = vrot.slane %v1967, 2
    %v2448 = vrot.slane %v1968, 2
    %v2449 = vrot.slane %v1969, 2
    %v2450 = vrot.slane %v1970, 2
    %v2451 = vrot.slane %v1971, 2
    %v2452 = vrot.slane %v1972, 2
    %v2453 = vrot.slane %v1973, 2
    %v2454 = vrot.slane %v1974, 2
    %v2455 = vrot.slane %v1975, 2
    %v2480 = vrot.slane %v1952, 3
    %v2481 = vrot.slane %v1953, 3
    %v2482 = vrot.slane %v1954, 3
    %v2483 = vrot.slane %v1955, 3
    %v2484 = vrot.slane %v1956, 3
    %v2485 = vrot.slane %v1957, 3
    %v2486 = vrot.slane %v1958, 3
    %v2487 = vrot.slane %v1959, 3
    %v2488 = vrot.slane %v1960, 3
    %v2489 = vrot.slane %v1961, 3
    %v2490 = vrot.slane %v1962, 3
    %v2491 = vrot.slane %v1963, 3
    %v2492 = vrot.slane %v1964, 3
    %v2493 = vrot.slane %v1965, 3
    %v2494 = vrot.slane %v1966, 3
    %v2495 = vrot.slane %v1967, 3
    %v2496 = vrot.slane %v1968, 3
    %v2497 = vrot.slane %v1969, 3
    %v2498 = vrot.slane %v1970, 3
    %v2499 = vrot.slane %v1971, 3
    %v2500 = vrot.slane %v1972, 3
    %v2501 = vrot.slane %v1973, 3
    %v2502 = vrot.slane %v1974, 3
    %v2503 = vrot.slane %v1975, 3
    %vm2528 = vcmask 1040384
    %v2529 = vsel %vm2528, %v1760, %v2000
    %v2530 = vsel %vm2528, %v1761, %v2001
    %v2531 = vsel %vm2528, %v1762, %v2002
    %v2532 = vsel %vm2528, %v1763, %v2003
    %v2533 = vsel %vm2528, %v1764, %v2004
    %v2534 = vsel %vm2528, %v1765, %v2005
    %v2535 = vsel %vm2528, %v1766, %v2006
    %v2536 = vsel %vm2528, %v1767, %v2007
    %v2537 = vsel %vm2528, %v1768, %v2008
    %v2538 = vsel %vm2528, %v1769, %v2009
    %v2539 = vsel %vm2528, %v1770, %v2010
    %v2540 = vsel %vm2528, %v1771, %v2011
    %v2541 = vsel %vm2528, %v1772, %v2012
    %v2542 = vsel %vm2528, %v1773, %v2013
    %v2543 = vsel %vm2528, %v1774, %v2014
    %v2544 = vsel %vm2528, %v1775, %v2015
    %v2545 = vsel %vm2528, %v1776, %v2016
    %v2546 = vsel %vm2528, %v1777, %v2017
    %v2547 = vsel %vm2528, %v1778, %v2018
    %v2548 = vsel %vm2528, %v1779, %v2019
    %v2549 = vsel %vm2528, %v1780, %v2020
    %v2550 = vsel %vm2528, %v1781, %v2021
    %v2551 = vsel %vm2528, %v1782, %v2022
    %v2552 = vsel %vm2528, %v1783, %v2023
    %vm2553 = vcmask 1041408
    %v2554 = vsel %vm2553, %v2529, %v2048
    %v2555 = vsel %vm2553, %v2530, %v2049
    %v2556 = vsel %vm2553, %v2531, %v2050
    %v2557 = vsel %vm2553, %v2532, %v2051
    %v2558 = vsel %vm2553, %v2533, %v2052
    %v2559 = vsel %vm2553, %v2534, %v2053
    %v2560 = vsel %vm2553, %v2535, %v2054
    %v2561 = vsel %vm2553, %v2536, %v2055
    %v2562 = vsel %vm2553, %v2537, %v2056
    %v2563 = vsel %vm2553, %v2538, %v2057
    %v2564 = vsel %vm2553, %v2539, %v2058
    %v2565 = vsel %vm2553, %v2540, %v2059
    %v2566 = vsel %vm2553, %v2541, %v2060
    %v2567 = vsel %vm2553, %v2542, %v2061
    %v2568 = vsel %vm2553, %v2543, %v2062
    %v2569 = vsel %vm2553, %v2544, %v2063
    %v2570 = vsel %vm2553, %v2545, %v2064
    %v2571 = vsel %vm2553, %v2546, %v2065
    %v2572 = vsel %vm2553, %v2547, %v2066
    %v2573 = vsel %vm2553, %v2548, %v2067
    %v2574 = vsel %vm2553, %v2549, %v2068
    %v2575 = vsel %vm2553, %v2550, %v2069
    %v2576 = vsel %vm2553, %v2551, %v2070
    %v2577 = vsel %vm2553, %v2552, %v2071
    %vm2578 = vcmask 1042432
    %v2579 = vsel %vm2578, %v2554, %v2096
    %v2580 = vsel %vm2578, %v2555, %v2097
    %v2581 = vsel %vm2578, %v2556, %v2098
    %v2582 = vsel %vm2578, %v2557, %v2099
    %v2583 = vsel %vm2578, %v2558, %v2100
    %v2584 = vsel %vm2578, %v2559, %v2101
    %v2585 = vsel %vm2578, %v2560, %v2102
    %v2586 = vsel %vm2578, %v2561, %v2103
    %v2587 = vsel %vm2578, %v2562, %v2104
    %v2588 = vsel %vm2578, %v2563, %v2105
    %v2589 = vsel %vm2578, %v2564, %v2106
    %v2590 = vsel %vm2578, %v2565, %v2107
    %v2591 = vsel %vm2578, %v2566, %v2108
    %v2592 = vsel %vm2578, %v2567, %v2109
    %v2593 = vsel %vm2578, %v2568, %v2110
    %v2594 = vsel %vm2578, %v2569, %v2111
    %v2595 = vsel %vm2578, %v2570, %v2112
    %v2596 = vsel %vm2578, %v2571, %v2113
    %v2597 = vsel %vm2578, %v2572, %v2114
    %v2598 = vsel %vm2578, %v2573, %v2115
    %v2599 = vsel %vm2578, %v2574, %v2116
    %v2600 = vsel %vm2578, %v2575, %v2117
    %v2601 = vsel %vm2578, %v2576, %v2118
    %v2602 = vsel %vm2578, %v2577, %v2119
    %v2603 = vsel %vm553, %v2579, %v2168
    %v2604 = vsel %vm553, %v2580, %v2169
    %v2605 = vsel %vm553, %v2581, %v2170
    %v2606 = vsel %vm553, %v2582, %v2171
    %v2607 = vsel %vm553, %v2583, %v2172
    %v2608 = vsel %vm553, %v2584, %v2173
    %v2609 = vsel %vm553, %v2585, %v2174
    %v2610 = vsel %vm553, %v2586, %v2175
    %v2611 = vsel %vm553, %v2587, %v2176
    %v2612 = vsel %vm553, %v2588, %v2177
    %v2613 = vsel %vm553, %v2589, %v2178
    %v2614 = vsel %vm553, %v2590, %v2179
    %v2615 = vsel %vm553, %v2591, %v2180
    %v2616 = vsel %vm553, %v2592, %v2181
    %v2617 = vsel %vm553, %v2593, %v2182
    %v2618 = vsel %vm553, %v2594, %v2183
    %v2619 = vsel %vm553, %v2595, %v2184
    %v2620 = vsel %vm553, %v2596, %v2185
    %v2621 = vsel %vm553, %v2597, %v2186
    %v2622 = vsel %vm553, %v2598, %v2187
    %v2623 = vsel %vm553, %v2599, %v2188
    %v2624 = vsel %vm553, %v2600, %v2189
    %v2625 = vsel %vm553, %v2601, %v2190
    %v2626 = vsel %vm553, %v2602, %v2191
    %v2627 = vsel %vm424, %v2603, %v2216
    %v2628 = vsel %vm424, %v2604, %v2217
    %v2629 = vsel %vm424, %v2605, %v2218
    %v2630 = vsel %vm424, %v2606, %v2219
    %v2631 = vsel %vm424, %v2607, %v2220
    %v2632 = vsel %vm424, %v2608, %v2221
    %v2633 = vsel %vm424, %v2609, %v2222
    %v2634 = vsel %vm424, %v2610, %v2223
    %v2635 = vsel %vm424, %v2611, %v2224
    %v2636 = vsel %vm424, %v2612, %v2225
    %v2637 = vsel %vm424, %v2613, %v2226
    %v2638 = vsel %vm424, %v2614, %v2227
    %v2639 = vsel %vm424, %v2615, %v2228
    %v2640 = vsel %vm424, %v2616, %v2229
    %v2641 = vsel %vm424, %v2617, %v2230
    %v2642 = vsel %vm424, %v2618, %v2231
    %v2643 = vsel %vm424, %v2619, %v2232
    %v2644 = vsel %vm424, %v2620, %v2233
    %v2645 = vsel %vm424, %v2621, %v2234
    %v2646 = vsel %vm424, %v2622, %v2235
    %v2647 = vsel %vm424, %v2623, %v2236
    %v2648 = vsel %vm424, %v2624, %v2237
    %v2649 = vsel %vm424, %v2625, %v2238
    %v2650 = vsel %vm424, %v2626, %v2239
    %v2651 = vsel %vm295, %v2627, %v2264
    %v2652 = vsel %vm295, %v2628, %v2265
    %v2653 = vsel %vm295, %v2629, %v2266
    %v2654 = vsel %vm295, %v2630, %v2267
    %v2655 = vsel %vm295, %v2631, %v2268
    %v2656 = vsel %vm295, %v2632, %v2269
    %v2657 = vsel %vm295, %v2633, %v2270
    %v2658 = vsel %vm295, %v2634, %v2271
    %v2659 = vsel %vm295, %v2635, %v2272
    %v2660 = vsel %vm295, %v2636, %v2273
    %v2661 = vsel %vm295, %v2637, %v2274
    %v2662 = vsel %vm295, %v2638, %v2275
    %v2663 = vsel %vm295, %v2639, %v2276
    %v2664 = vsel %vm295, %v2640, %v2277
    %v2665 = vsel %vm295, %v2641, %v2278
    %v2666 = vsel %vm295, %v2642, %v2279
    %v2667 = vsel %vm295, %v2643, %v2280
    %v2668 = vsel %vm295, %v2644, %v2281
    %v2669 = vsel %vm295, %v2645, %v2282
    %v2670 = vsel %vm295, %v2646, %v2283
    %v2671 = vsel %vm295, %v2647, %v2284
    %v2672 = vsel %vm295, %v2648, %v2285
    %v2673 = vsel %vm295, %v2649, %v2286
    %v2674 = vsel %vm295, %v2650, %v2287
    %v2675 = vsel %vm166, %v2651, %v2312
    %v2676 = vsel %vm166, %v2652, %v2313
    %v2677 = vsel %vm166, %v2653, %v2314
    %v2678 = vsel %vm166, %v2654, %v2315
    %v2679 = vsel %vm166, %v2655, %v2316
    %v2680 = vsel %vm166, %v2656, %v2317
    %v2681 = vsel %vm166, %v2657, %v2318
    %v2682 = vsel %vm166, %v2658, %v2319
    %v2683 = vsel %vm166, %v2659, %v2320
    %v2684 = vsel %vm166, %v2660, %v2321
    %v2685 = vsel %vm166, %v2661, %v2322
    %v2686 = vsel %vm166, %v2662, %v2323
    %v2687 = vsel %vm166, %v2663, %v2324
    %v2688 = vsel %vm166, %v2664, %v2325
    %v2689 = vsel %vm166, %v2665, %v2326
    %v2690 = vsel %vm166, %v2666, %v2327
    %v2691 = vsel %vm166, %v2667, %v2328
    %v2692 = vsel %vm166, %v2668, %v2329
    %v2693 = vsel %vm166, %v2669, %v2330
    %v2694 = vsel %vm166, %v2670, %v2331
    %v2695 = vsel %vm166, %v2671, %v2332
    %v2696 = vsel %vm166, %v2672, %v2333
    %v2697 = vsel %vm166, %v2673, %v2334
    %v2698 = vsel %vm166, %v2674, %v2335
    %v2699 = vsel %vm2528, %v1952, %v2384
    %v2700 = vsel %vm2528, %v1953, %v2385
    %v2701 = vsel %vm2528, %v1954, %v2386
    %v2702 = vsel %vm2528, %v1955, %v2387
    %v2703 = vsel %vm2528, %v1956, %v2388
    %v2704 = vsel %vm2528, %v1957, %v2389
    %v2705 = vsel %vm2528, %v1958, %v2390
    %v2706 = vsel %vm2528, %v1959, %v2391
    %v2707 = vsel %vm2528, %v1960, %v2392
    %v2708 = vsel %vm2528, %v1961, %v2393
    %v2709 = vsel %vm2528, %v1962, %v2394
    %v2710 = vsel %vm2528, %v1963, %v2395
    %v2711 = vsel %vm2528, %v1964, %v2396
    %v2712 = vsel %vm2528, %v1965, %v2397
    %v2713 = vsel %vm2528, %v1966, %v2398
    %v2714 = vsel %vm2528, %v1967, %v2399
    %v2715 = vsel %vm2528, %v1968, %v2400
    %v2716 = vsel %vm2528, %v1969, %v2401
    %v2717 = vsel %vm2528, %v1970, %v2402
    %v2718 = vsel %vm2528, %v1971, %v2403
    %v2719 = vsel %vm2528, %v1972, %v2404
    %v2720 = vsel %vm2528, %v1973, %v2405
    %v2721 = vsel %vm2528, %v1974, %v2406
    %v2722 = vsel %vm2528, %v1975, %v2407
    %v2723 = vsel %vm2553, %v2699, %v2432
    %v2724 = vsel %vm2553, %v2700, %v2433
    %v2725 = vsel %vm2553, %v2701, %v2434
    %v2726 = vsel %vm2553, %v2702, %v2435
    %v2727 = vsel %vm2553, %v2703, %v2436
    %v2728 = vsel %vm2553, %v2704, %v2437
    %v2729 = vsel %vm2553, %v2705, %v2438
    %v2730 = vsel %vm2553, %v2706, %v2439
    %v2731 = vsel %vm2553, %v2707, %v2440
    %v2732 = vsel %vm2553, %v2708, %v2441
    %v2733 = vsel %vm2553, %v2709, %v2442
    %v2734 = vsel %vm2553, %v2710, %v2443
    %v2735 = vsel %vm2553, %v2711, %v2444
    %v2736 = vsel %vm2553, %v2712, %v2445
    %v2737 = vsel %vm2553, %v2713, %v2446
    %v2738 = vsel %vm2553, %v2714, %v2447
    %v2739 = vsel %vm2553, %v2715, %v2448
    %v2740 = vsel %vm2553, %v2716, %v2449
    %v2741 = vsel %vm2553, %v2717, %v2450
    %v2742 = vsel %vm2553, %v2718, %v2451
    %v2743 = vsel %vm2553, %v2719, %v2452
    %v2744 = vsel %vm2553, %v2720, %v2453
    %v2745 = vsel %vm2553, %v2721, %v2454
    %v2746 = vsel %vm2553, %v2722, %v2455
    %v2747 = vsel %vm2578, %v2723, %v2480
    %v2748 = vsel %vm2578, %v2724, %v2481
    %v2749 = vsel %vm2578, %v2725, %v2482
    %v2750 = vsel %vm2578, %v2726, %v2483
    %v2751 = vsel %vm2578, %v2727, %v2484
    %v2752 = vsel %vm2578, %v2728, %v2485
    %v2753 = vsel %vm2578, %v2729, %v2486
    %v2754 = vsel %vm2578, %v2730, %v2487
    %v2755 = vsel %vm2578, %v2731, %v2488
    %v2756 = vsel %vm2578, %v2732, %v2489
    %v2757 = vsel %vm2578, %v2733, %v2490
    %v2758 = vsel %vm2578, %v2734, %v2491
    %v2759 = vsel %vm2578, %v2735, %v2492
    %v2760 = vsel %vm2578, %v2736, %v2493
    %v2761 = vsel %vm2578, %v2737, %v2494
    %v2762 = vsel %vm2578, %v2738, %v2495
    %v2763 = vsel %vm2578, %v2739, %v2496
    %v2764 = vsel %vm2578, %v2740, %v2497
    %v2765 = vsel %vm2578, %v2741, %v2498
    %v2766 = vsel %vm2578, %v2742, %v2499
    %v2767 = vsel %vm2578, %v2743, %v2500
    %v2768 = vsel %vm2578, %v2744, %v2501
    %v2769 = vsel %vm2578, %v2745, %v2502
    %v2770 = vsel %vm2578, %v2746, %v2503
    %v2771 = vmax.f32 %v2675, 0.0
    %v2772 = vmax.f32 %v2676, 0.0
    %v2773 = vmax.f32 %v2677, 0.0
    %v2774 = vmax.f32 %v2747, 0.0
    %v2775 = vmax.f32 %v2748, 0.0
    %v2776 = vmax.f32 %v2749, 0.0
    %v2777 = vmax.f32 %v2678, 0.0
    %v2778 = vmax.f32 %v2679, 0.0
    %v2779 = vmax.f32 %v2680, 0.0
    %v2780 = vmax.f32 %v2750, 0.0
    %v2781 = vmax.f32 %v2751, 0.0
    %v2782 = vmax.f32 %v2752, 0.0
    %v2783 = vmax.f32 %v2681, 0.0
    %v2784 = vmax.f32 %v2682, 0.0
    %v2785 = vmax.f32 %v2683, 0.0
    %v2786 = vmax.f32 %v2753, 0.0
    %v2787 = vmax.f32 %v2754, 0.0
    %v2788 = vmax.f32 %v2755, 0.0
    %v2789 = vmax.f32 %v2684, 0.0
    %v2790 = vmax.f32 %v2685, 0.0
    %v2791 = vmax.f32 %v2686, 0.0
    %v2792 = vmax.f32 %v2756, 0.0
    %v2793 = vmax.f32 %v2757, 0.0
    %v2794 = vmax.f32 %v2758, 0.0
    %v2795 = vmax.f32 %v2687, 0.0
    %v2796 = vmax.f32 %v2688, 0.0
    %v2797 = vmax.f32 %v2689, 0.0
    %v2798 = vmax.f32 %v2759, 0.0
    %v2799 = vmax.f32 %v2760, 0.0
    %v2800 = vmax.f32 %v2761, 0.0
    %v2801 = vmax.f32 %v2690, 0.0
    %v2802 = vmax.f32 %v2691, 0.0
    %v2803 = vmax.f32 %v2692, 0.0
    %v2804 = vmax.f32 %v2762, 0.0
    %v2805 = vmax.f32 %v2763, 0.0
    %v2806 = vmax.f32 %v2764, 0.0
    %v2807 = vmax.f32 %v2693, 0.0
    %v2808 = vmax.f32 %v2694, 0.0
    %v2809 = vmax.f32 %v2695, 0.0
    %v2810 = vmax.f32 %v2765, 0.0
    %v2811 = vmax.f32 %v2766, 0.0
    %v2812 = vmax.f32 %v2767, 0.0
    %v2813 = vmax.f32 %v2696, 0.0
    %v2814 = vmax.f32 %v2697, 0.0
    %v2815 = vmax.f32 %v2698, 0.0
    %v2816 = vmax.f32 %v2768, 0.0
    %v2817 = vmax.f32 %v2769, 0.0
    %v2818 = vmax.f32 %v2770, 0.0
    %v2867 = vrot.slane %v2771, 1
    %v2868 = vrot.slane %v2774, 1
    %v2869 = vsel %vm166, %v2867, %v2868
    %v2870 = vrot.slane %v2772, 1
    %v2871 = vrot.slane %v2775, 1
    %v2872 = vsel %vm166, %v2870, %v2871
    %v2873 = vrot.slane %v2773, 1
    %v2874 = vrot.slane %v2776, 1
    %v2875 = vsel %vm166, %v2873, %v2874
    %v2876 = vrot.slane %v2777, 1
    %v2877 = vrot.slane %v2780, 1
    %v2878 = vsel %vm166, %v2876, %v2877
    %v2879 = vrot.slane %v2778, 1
    %v2880 = vrot.slane %v2781, 1
    %v2881 = vsel %vm166, %v2879, %v2880
    %v2882 = vrot.slane %v2779, 1
    %v2883 = vrot.slane %v2782, 1
    %v2884 = vsel %vm166, %v2882, %v2883
    %v2885 = vrot.slane %v2783, 1
    %v2886 = vrot.slane %v2786, 1
    %v2887 = vsel %vm166, %v2885, %v2886
    %v2888 = vrot.slane %v2784, 1
    %v2889 = vrot.slane %v2787, 1
    %v2890 = vsel %vm166, %v2888, %v2889
    %v2891 = vrot.slane %v2785, 1
    %v2892 = vrot.slane %v2788, 1
    %v2893 = vsel %vm166, %v2891, %v2892
    %v2894 = vrot.slane %v2789, 1
    %v2895 = vrot.slane %v2792, 1
    %v2896 = vsel %vm166, %v2894, %v2895
    %v2897 = vrot.slane %v2790, 1
    %v2898 = vrot.slane %v2793, 1
    %v2899 = vsel %vm166, %v2897, %v2898
    %v2900 = vrot.slane %v2791, 1
    %v2901 = vrot.slane %v2794, 1
    %v2902 = vsel %vm166, %v2900, %v2901
    %v2903 = vrot.slane %v2795, 1
    %v2904 = vrot.slane %v2798, 1
    %v2905 = vsel %vm166, %v2903, %v2904
    %v2906 = vrot.slane %v2796, 1
    %v2907 = vrot.slane %v2799, 1
    %v2908 = vsel %vm166, %v2906, %v2907
    %v2909 = vrot.slane %v2797, 1
    %v2910 = vrot.slane %v2800, 1
    %v2911 = vsel %vm166, %v2909, %v2910
    %v2912 = vrot.slane %v2801, 1
    %v2913 = vrot.slane %v2804, 1
    %v2914 = vsel %vm166, %v2912, %v2913
    %v2915 = vrot.slane %v2802, 1
    %v2916 = vrot.slane %v2805, 1
    %v2917 = vsel %vm166, %v2915, %v2916
    %v2918 = vrot.slane %v2803, 1
    %v2919 = vrot.slane %v2806, 1
    %v2920 = vsel %vm166, %v2918, %v2919
    %v2921 = vrot.slane %v2807, 1
    %v2922 = vrot.slane %v2810, 1
    %v2923 = vsel %vm166, %v2921, %v2922
    %v2924 = vrot.slane %v2808, 1
    %v2925 = vrot.slane %v2811, 1
    %v2926 = vsel %vm166, %v2924, %v2925
    %v2927 = vrot.slane %v2809, 1
    %v2928 = vrot.slane %v2812, 1
    %v2929 = vsel %vm166, %v2927, %v2928
    %v2930 = vrot.slane %v2813, 1
    %v2931 = vrot.slane %v2816, 1
    %v2932 = vsel %vm166, %v2930, %v2931
    %v2933 = vrot.slane %v2814, 1
    %v2934 = vrot.slane %v2817, 1
    %v2935 = vsel %vm166, %v2933, %v2934
    %v2936 = vrot.slane %v2815, 1
    %v2937 = vrot.slane %v2818, 1
    %v2938 = vsel %vm166, %v2936, %v2937
    %v2963 = vrot.slane %v2771, 2
    %v2964 = vrot.slane %v2774, 2
    %v2965 = vsel %vm295, %v2963, %v2964
    %v2966 = vrot.slane %v2772, 2
    %v2967 = vrot.slane %v2775, 2
    %v2968 = vsel %vm295, %v2966, %v2967
    %v2969 = vrot.slane %v2773, 2
    %v2970 = vrot.slane %v2776, 2
    %v2971 = vsel %vm295, %v2969, %v2970
    %v2972 = vrot.slane %v2777, 2
    %v2973 = vrot.slane %v2780, 2
    %v2974 = vsel %vm295, %v2972, %v2973
    %v2975 = vrot.slane %v2778, 2
    %v2976 = vrot.slane %v2781, 2
    %v2977 = vsel %vm295, %v2975, %v2976
    %v2978 = vrot.slane %v2779, 2
    %v2979 = vrot.slane %v2782, 2
    %v2980 = vsel %vm295, %v2978, %v2979
    %v2981 = vrot.slane %v2783, 2
    %v2982 = vrot.slane %v2786, 2
    %v2983 = vsel %vm295, %v2981, %v2982
    %v2984 = vrot.slane %v2784, 2
    %v2985 = vrot.slane %v2787, 2
    %v2986 = vsel %vm295, %v2984, %v2985
    %v2987 = vrot.slane %v2785, 2
    %v2988 = vrot.slane %v2788, 2
    %v2989 = vsel %vm295, %v2987, %v2988
    %v2990 = vrot.slane %v2789, 2
    %v2991 = vrot.slane %v2792, 2
    %v2992 = vsel %vm295, %v2990, %v2991
    %v2993 = vrot.slane %v2790, 2
    %v2994 = vrot.slane %v2793, 2
    %v2995 = vsel %vm295, %v2993, %v2994
    %v2996 = vrot.slane %v2791, 2
    %v2997 = vrot.slane %v2794, 2
    %v2998 = vsel %vm295, %v2996, %v2997
    %v2999 = vrot.slane %v2795, 2
    %v3000 = vrot.slane %v2798, 2
    %v3001 = vsel %vm295, %v2999, %v3000
    %v3002 = vrot.slane %v2796, 2
    %v3003 = vrot.slane %v2799, 2
    %v3004 = vsel %vm295, %v3002, %v3003
    %v3005 = vrot.slane %v2797, 2
    %v3006 = vrot.slane %v2800, 2
    %v3007 = vsel %vm295, %v3005, %v3006
    %v3008 = vrot.slane %v2801, 2
    %v3009 = vrot.slane %v2804, 2
    %v3010 = vsel %vm295, %v3008, %v3009
    %v3011 = vrot.slane %v2802, 2
    %v3012 = vrot.slane %v2805, 2
    %v3013 = vsel %vm295, %v3011, %v3012
    %v3014 = vrot.slane %v2803, 2
    %v3015 = vrot.slane %v2806, 2
    %v3016 = vsel %vm295, %v3014, %v3015
    %v3017 = vrot.slane %v2807, 2
    %v3018 = vrot.slane %v2810, 2
    %v3019 = vsel %vm295, %v3017, %v3018
    %v3020 = vrot.slane %v2808, 2
    %v3021 = vrot.slane %v2811, 2
    %v3022 = vsel %vm295, %v3020, %v3021
    %v3023 = vrot.slane %v2809, 2
    %v3024 = vrot.slane %v2812, 2
    %v3025 = vsel %vm295, %v3023, %v3024
    %v3026 = vrot.slane %v2813, 2
    %v3027 = vrot.slane %v2816, 2
    %v3028 = vsel %vm295, %v3026, %v3027
    %v3029 = vrot.slane %v2814, 2
    %v3030 = vrot.slane %v2817, 2
    %v3031 = vsel %vm295, %v3029, %v3030
    %v3032 = vrot.slane %v2815, 2
    %v3033 = vrot.slane %v2818, 2
    %v3034 = vsel %vm295, %v3032, %v3033
    %v3059 = vrot.slane %v2771, 3
    %v3060 = vrot.slane %v2774, 3
    %v3061 = vsel %vm424, %v3059, %v3060
    %v3062 = vrot.slane %v2772, 3
    %v3063 = vrot.slane %v2775, 3
    %v3064 = vsel %vm424, %v3062, %v3063
    %v3065 = vrot.slane %v2773, 3
    %v3066 = vrot.slane %v2776, 3
    %v3067 = vsel %vm424, %v3065, %v3066
    %v3068 = vrot.slane %v2777, 3
    %v3069 = vrot.slane %v2780, 3
    %v3070 = vsel %vm424, %v3068, %v3069
    %v3071 = vrot.slane %v2778, 3
    %v3072 = vrot.slane %v2781, 3
    %v3073 = vsel %vm424, %v3071, %v3072
    %v3074 = vrot.slane %v2779, 3
    %v3075 = vrot.slane %v2782, 3
    %v3076 = vsel %vm424, %v3074, %v3075
    %v3077 = vrot.slane %v2783, 3
    %v3078 = vrot.slane %v2786, 3
    %v3079 = vsel %vm424, %v3077, %v3078
    %v3080 = vrot.slane %v2784, 3
    %v3081 = vrot.slane %v2787, 3
    %v3082 = vsel %vm424, %v3080, %v3081
    %v3083 = vrot.slane %v2785, 3
    %v3084 = vrot.slane %v2788, 3
    %v3085 = vsel %vm424, %v3083, %v3084
    %v3086 = vrot.slane %v2789, 3
    %v3087 = vrot.slane %v2792, 3
    %v3088 = vsel %vm424, %v3086, %v3087
    %v3089 = vrot.slane %v2790, 3
    %v3090 = vrot.slane %v2793, 3
    %v3091 = vsel %vm424, %v3089, %v3090
    %v3092 = vrot.slane %v2791, 3
    %v3093 = vrot.slane %v2794, 3
    %v3094 = vsel %vm424, %v3092, %v3093
    %v3095 = vrot.slane %v2795, 3
    %v3096 = vrot.slane %v2798, 3
    %v3097 = vsel %vm424, %v3095, %v3096
    %v3098 = vrot.slane %v2796, 3
    %v3099 = vrot.slane %v2799, 3
    %v3100 = vsel %vm424, %v3098, %v3099
    %v3101 = vrot.slane %v2797, 3
    %v3102 = vrot.slane %v2800, 3
    %v3103 = vsel %vm424, %v3101, %v3102
    %v3104 = vrot.slane %v2801, 3
    %v3105 = vrot.slane %v2804, 3
    %v3106 = vsel %vm424, %v3104, %v3105
    %v3107 = vrot.slane %v2802, 3
    %v3108 = vrot.slane %v2805, 3
    %v3109 = vsel %vm424, %v3107, %v3108
    %v3110 = vrot.slane %v2803, 3
    %v3111 = vrot.slane %v2806, 3
    %v3112 = vsel %vm424, %v3110, %v3111
    %v3113 = vrot.slane %v2807, 3
    %v3114 = vrot.slane %v2810, 3
    %v3115 = vsel %vm424, %v3113, %v3114
    %v3116 = vrot.slane %v2808, 3
    %v3117 = vrot.slane %v2811, 3
    %v3118 = vsel %vm424, %v3116, %v3117
    %v3119 = vrot.slane %v2809, 3
    %v3120 = vrot.slane %v2812, 3
    %v3121 = vsel %vm424, %v3119, %v3120
    %v3122 = vrot.slane %v2813, 3
    %v3123 = vrot.slane %v2816, 3
    %v3124 = vsel %vm424, %v3122, %v3123
    %v3125 = vrot.slane %v2814, 3
    %v3126 = vrot.slane %v2817, 3
    %v3127 = vsel %vm424, %v3125, %v3126
    %v3128 = vrot.slane %v2815, 3
    %v3129 = vrot.slane %v2818, 3
    %v3130 = vsel %vm424, %v3128, %v3129
    %v3155 = vrot.slane %v2771, 4
    %v3156 = vrot.slane %v2774, 4
    %v3157 = vsel %vm553, %v3155, %v3156
    %v3158 = vrot.slane %v2772, 4
    %v3159 = vrot.slane %v2775, 4
    %v3160 = vsel %vm553, %v3158, %v3159
    %v3161 = vrot.slane %v2773, 4
    %v3162 = vrot.slane %v2776, 4
    %v3163 = vsel %vm553, %v3161, %v3162
    %v3164 = vrot.slane %v2777, 4
    %v3165 = vrot.slane %v2780, 4
    %v3166 = vsel %vm553, %v3164, %v3165
    %v3167 = vrot.slane %v2778, 4
    %v3168 = vrot.slane %v2781, 4
    %v3169 = vsel %vm553, %v3167, %v3168
    %v3170 = vrot.slane %v2779, 4
    %v3171 = vrot.slane %v2782, 4
    %v3172 = vsel %vm553, %v3170, %v3171
    %v3173 = vrot.slane %v2783, 4
    %v3174 = vrot.slane %v2786, 4
    %v3175 = vsel %vm553, %v3173, %v3174
    %v3176 = vrot.slane %v2784, 4
    %v3177 = vrot.slane %v2787, 4
    %v3178 = vsel %vm553, %v3176, %v3177
    %v3179 = vrot.slane %v2785, 4
    %v3180 = vrot.slane %v2788, 4
    %v3181 = vsel %vm553, %v3179, %v3180
    %v3182 = vrot.slane %v2789, 4
    %v3183 = vrot.slane %v2792, 4
    %v3184 = vsel %vm553, %v3182, %v3183
    %v3185 = vrot.slane %v2790, 4
    %v3186 = vrot.slane %v2793, 4
    %v3187 = vsel %vm553, %v3185, %v3186
    %v3188 = vrot.slane %v2791, 4
    %v3189 = vrot.slane %v2794, 4
    %v3190 = vsel %vm553, %v3188, %v3189
    %v3191 = vrot.slane %v2795, 4
    %v3192 = vrot.slane %v2798, 4
    %v3193 = vsel %vm553, %v3191, %v3192
    %v3194 = vrot.slane %v2796, 4
    %v3195 = vrot.slane %v2799, 4
    %v3196 = vsel %vm553, %v3194, %v3195
    %v3197 = vrot.slane %v2797, 4
    %v3198 = vrot.slane %v2800, 4
    %v3199 = vsel %vm553, %v3197, %v3198
    %v3200 = vrot.slane %v2801, 4
    %v3201 = vrot.slane %v2804, 4
    %v3202 = vsel %vm553, %v3200, %v3201
    %v3203 = vrot.slane %v2802, 4
    %v3204 = vrot.slane %v2805, 4
    %v3205 = vsel %vm553, %v3203, %v3204
    %v3206 = vrot.slane %v2803, 4
    %v3207 = vrot.slane %v2806, 4
    %v3208 = vsel %vm553, %v3206, %v3207
    %v3209 = vrot.slane %v2807, 4
    %v3210 = vrot.slane %v2810, 4
    %v3211 = vsel %vm553, %v3209, %v3210
    %v3212 = vrot.slane %v2808, 4
    %v3213 = vrot.slane %v2811, 4
    %v3214 = vsel %vm553, %v3212, %v3213
    %v3215 = vrot.slane %v2809, 4
    %v3216 = vrot.slane %v2812, 4
    %v3217 = vsel %vm553, %v3215, %v3216
    %v3218 = vrot.slane %v2813, 4
    %v3219 = vrot.slane %v2816, 4
    %v3220 = vsel %vm553, %v3218, %v3219
    %v3221 = vrot.slane %v2814, 4
    %v3222 = vrot.slane %v2817, 4
    %v3223 = vsel %vm553, %v3221, %v3222
    %v3224 = vrot.slane %v2815, 4
    %v3225 = vrot.slane %v2818, 4
    %v3226 = vsel %vm553, %v3224, %v3225
    %v3251 = vld [vmem:[#allocation6] sm:$0xff]
    %v3252 = vld [vmem:[#allocation6 + $0x8] sm:$0xff]
    %v3253 = vld [vmem:[#allocation6 + $0x10] sm:$0xff]
    %v3254 = vld [vmem:[#allocation6 + $0x18] sm:$0xff]
    %v3255 = vld [vmem:[#allocation6 + $0x20] sm:$0xff]
    %v3256 = vld [vmem:[#allocation6 + $0x28] sm:$0xff]
    %v3257 = vld [vmem:[#allocation6 + $0x30] sm:$0xff]
    %v3258 = vld [vmem:[#allocation6 + $0x38] sm:$0xff]
    %v3259 = vld [vmem:[#allocation6 + $0x40] sm:$0xff]
    %v3260 = vld [vmem:[#allocation6 + $0x48] sm:$0xff]
    %v3261 = vld [vmem:[#allocation6 + $0x50] sm:$0xff]
    %v3262 = vld [vmem:[#allocation6 + $0x58] sm:$0xff]
    %v3263 = vld [vmem:[#allocation6 + $0x60] sm:$0xff]
    %v3264 = vld [vmem:[#allocation6 + $0x68] sm:$0xff]
    %v3265 = vld [vmem:[#allocation6 + $0x70] sm:$0xff]
    %v3266 = vld [vmem:[#allocation6 + $0x78] sm:$0xff]
    %v3267 = vld [vmem:[#allocation6 + $0x80] sm:$0xff]
    %v3268 = vld [vmem:[#allocation6 + $0x88] sm:$0xff]
    %v3269 = vld [vmem:[#allocation6 + $0x90] sm:$0xff]
    %v3270 = vld [vmem:[#allocation6 + $0x98] sm:$0xff]
    %v3271 = vld [vmem:[#allocation6 + $0xa0] sm:$0xff]
    %v3272 = vld [vmem:[#allocation6 + $0xa8] sm:$0xff]
    %v3273 = vld [vmem:[#allocation6 + $0xb0] sm:$0xff]
    %v3274 = vld [vmem:[#allocation6 + $0xb8] sm:$0xff]
    %v3275 = vld [vmem:[#allocation6 + $0xc0] sm:$0xff]
    %v3276 = vld [vmem:[#allocation6 + $0xc8] sm:$0xff]
    %v3277 = vld [vmem:[#allocation6 + $0xd0] sm:$0xff]
    %v3278 = vld [vmem:[#allocation6 + $0xd8] sm:$0xff]
    %v3279 = vld [vmem:[#allocation6 + $0xe0] sm:$0xff]
    %v3280 = vld [vmem:[#allocation6 + $0xe8] sm:$0xff]
    %v3281 = vld [vmem:[#allocation6 + $0xf0] sm:$0xff]
    %v3282 = vld [vmem:[#allocation6 + $0xf8] sm:$0xff]
    %v3283 = vld [vmem:[#allocation6 + $0x100] sm:$0xff]
    %v3284 = vld [vmem:[#allocation6 + $0x108] sm:$0xff]
    %v3285 = vld [vmem:[#allocation6 + $0x110] sm:$0xff]
    %v3286 = vld [vmem:[#allocation6 + $0x118] sm:$0xff]
    %v3287 = vld [vmem:[#allocation6 + $0x120] sm:$0xff]
    %v3288 = vld [vmem:[#allocation6 + $0x128] sm:$0xff]
    %v3289 = vld [vmem:[#allocation6 + $0x130] sm:$0xff]
    %v3290 = vld [vmem:[#allocation6 + $0x138] sm:$0xff]
    %v3291 = vld [vmem:[#allocation6 + $0x140] sm:$0xff]
    %v3292 = vld [vmem:[#allocation6 + $0x148] sm:$0xff]
    %v3293 = vld [vmem:[#allocation6 + $0x150] sm:$0xff]
    %v3294 = vld [vmem:[#allocation6 + $0x158] sm:$0xff]
    %v3295 = vld [vmem:[#allocation6 + $0x160] sm:$0xff]
    %v3296 = vld [vmem:[#allocation6 + $0x168] sm:$0xff]
    %v3297 = vld [vmem:[#allocation6 + $0x170] sm:$0xff]
    %v3298 = vld [vmem:[#allocation6 + $0x178] sm:$0xff]
    %v3299 = vld [vmem:[#allocation6 + $0x180] sm:$0xff]
    %v3300 = vld [vmem:[#allocation6 + $0x188] sm:$0xff]
    %v3301 = vld [vmem:[#allocation6 + $0x190] sm:$0xff]
    %v3302 = vld [vmem:[#allocation6 + $0x198] sm:$0xff]
    %v3303 = vld [vmem:[#allocation6 + $0x1a0] sm:$0xff]
    %v3304 = vld [vmem:[#allocation6 + $0x1a8] sm:$0xff]
    %v3305 = vld [vmem:[#allocation6 + $0x1b0] sm:$0xff]
    %v3306 = vld [vmem:[#allocation6 + $0x1b8] sm:$0xff]
    %v3307 = vld [vmem:[#allocation6 + $0x1c0] sm:$0xff]
    %v3308 = vld [vmem:[#allocation6 + $0x1c8] sm:$0xff]
    %v3309 = vld [vmem:[#allocation6 + $0x1d0] sm:$0xff]
    %v3310 = vld [vmem:[#allocation6 + $0x1d8] sm:$0xff]
    %v3311 = vld [vmem:[#allocation6 + $0x1e0] sm:$0xff]
    %v3312 = vld [vmem:[#allocation6 + $0x1e8] sm:$0xff]
    %v3313 = vld [vmem:[#allocation6 + $0x1f0] sm:$0xff]
    %v3314 = vld [vmem:[#allocation6 + $0x1f8] sm:$0xff]
    %v3315 = vld [vmem:[#allocation6 + $0x200] sm:$0xff]
    %v3316 = vld [vmem:[#allocation6 + $0x208] sm:$0xff]
    %v3317 = vld [vmem:[#allocation6 + $0x210] sm:$0xff]
    %v3318 = vld [vmem:[#allocation6 + $0x218] sm:$0xff]
    %v3319 = vld [vmem:[#allocation6 + $0x220] sm:$0xff]
    %v3320 = vld [vmem:[#allocation6 + $0x228] sm:$0xff]
    %v3321 = vld [vmem:[#allocation6 + $0x230] sm:$0xff]
    %v3322 = vld [vmem:[#allocation6 + $0x238] sm:$0xff]
    %v3323 = vld [vmem:[#allocation6 + $0x240] sm:$0xff]
    %v3324 = vld [vmem:[#allocation6 + $0x248] sm:$0xff]
    %v3325 = vld [vmem:[#allocation6 + $0x250] sm:$0xff]
    %v3326 = vld [vmem:[#allocation6 + $0x258] sm:$0xff]
    %v3327 = vld [vmem:[#allocation6 + $0x260] sm:$0xff]
    %v3328 = vld [vmem:[#allocation6 + $0x268] sm:$0xff]
    %v3329 = vld [vmem:[#allocation6 + $0x270] sm:$0xff]
    %v3330 = vld [vmem:[#allocation6 + $0x278] sm:$0xff]
    %v3331 = vld [vmem:[#allocation6 + $0x280] sm:$0xff]
    %v3332 = vld [vmem:[#allocation6 + $0x288] sm:$0xff]
    %v3333 = vld [vmem:[#allocation6 + $0x290] sm:$0xff]
    %v3334 = vld [vmem:[#allocation6 + $0x298] sm:$0xff]
    %v3335 = vld [vmem:[#allocation6 + $0x2a0] sm:$0xff]
    %v3336 = vld [vmem:[#allocation6 + $0x2a8] sm:$0xff]
    %v3337 = vld [vmem:[#allocation6 + $0x2b0] sm:$0xff]
    %v3338 = vld [vmem:[#allocation6 + $0x2b8] sm:$0xff]
    %v3339 = vld [vmem:[#allocation6 + $0x2c0] sm:$0xff]
    %v3340 = vld [vmem:[#allocation6 + $0x2c8] sm:$0xff]
    %v3341 = vld [vmem:[#allocation6 + $0x2d0] sm:$0xff]
    %v3342 = vld [vmem:[#allocation6 + $0x2d8] sm:$0xff]
    %v3343 = vld [vmem:[#allocation6 + $0x2e0] sm:$0xff]
    %v3344 = vld [vmem:[#allocation6 + $0x2e8] sm:$0xff]
    %v3345 = vld [vmem:[#allocation6 + $0x2f0] sm:$0xff]
    %v3346 = vld [vmem:[#allocation6 + $0x2f8] sm:$0xff]
    %v3347 = vld [vmem:[#allocation6 + $0x300] sm:$0xff]
    %v3348 = vld [vmem:[#allocation6 + $0x308] sm:$0xff]
    %v3349 = vld [vmem:[#allocation6 + $0x310] sm:$0xff]
    %v3350 = vld [vmem:[#allocation6 + $0x318] sm:$0xff]
    %v3351 = vld [vmem:[#allocation6 + $0x320] sm:$0xff]
    %v3352 = vld [vmem:[#allocation6 + $0x328] sm:$0xff]
    %v3353 = vld [vmem:[#allocation6 + $0x330] sm:$0xff]
    %v3354 = vld [vmem:[#allocation6 + $0x338] sm:$0xff]
    %v3355 = vld [vmem:[#allocation6 + $0x340] sm:$0xff]
    %v3356 = vld [vmem:[#allocation6 + $0x348] sm:$0xff]
    %v3357 = vld [vmem:[#allocation6 + $0x350] sm:$0xff]
    %v3358 = vld [vmem:[#allocation6 + $0x358] sm:$0xff]
    %v3359 = vld [vmem:[#allocation6 + $0x360] sm:$0xff]
    %v3360 = vld [vmem:[#allocation6 + $0x368] sm:$0xff]
    %v3361 = vld [vmem:[#allocation6 + $0x370] sm:$0xff]
    %v3362 = vld [vmem:[#allocation6 + $0x378] sm:$0xff]
    %v3363 = vld [vmem:[#allocation6 + $0x380] sm:$0xff]
    %v3364 = vld [vmem:[#allocation6 + $0x388] sm:$0xff]
    %v3365 = vld [vmem:[#allocation6 + $0x390] sm:$0xff]
    %v3366 = vld [vmem:[#allocation6 + $0x398] sm:$0xff]
    %v3367 = vld [vmem:[#allocation6 + $0x3a0] sm:$0xff]
    %v3368 = vld [vmem:[#allocation6 + $0x3a8] sm:$0xff]
    %v3369 = vld [vmem:[#allocation6 + $0x3b0] sm:$0xff]
    %v3370 = vld [vmem:[#allocation6 + $0x3b8] sm:$0xff]
    %v3371 = vld [vmem:[#allocation6 + $0x3c0] sm:$0xff]
    %v3372 = vld [vmem:[#allocation6 + $0x3c8] sm:$0xff]
    %v3373 = vld [vmem:[#allocation6 + $0x3d0] sm:$0xff]
    %v3374 = vld [vmem:[#allocation6 + $0x3d8] sm:$0xff]
    %v3375 = vld [vmem:[#allocation6 + $0x3e0] sm:$0xff]
    %v3376 = vld [vmem:[#allocation6 + $0x3e8] sm:$0xff]
    %v3377 = vld [vmem:[#allocation6 + $0x3f0] sm:$0xff]
    %v3378 = vld [vmem:[#allocation6 + $0x3f8] sm:$0xff]
    %v3379 = vld [vmem:[#allocation6 + $0x400] sm:$0xff]
    %v3380 = vld [vmem:[#allocation6 + $0x408] sm:$0xff]
    %v3381 = vld [vmem:[#allocation6 + $0x410] sm:$0xff]
    %v3382 = vld [vmem:[#allocation6 + $0x418] sm:$0xff]
    %v3383 = vld [vmem:[#allocation6 + $0x420] sm:$0xff]
    %v3384 = vld [vmem:[#allocation6 + $0x428] sm:$0xff]
    %v3385 = vld [vmem:[#allocation6 + $0x430] sm:$0xff]
    %v3386 = vld [vmem:[#allocation6 + $0x438] sm:$0xff]
    %v3387 = vld [vmem:[#allocation6 + $0x440] sm:$0xff]
    %v3388 = vld [vmem:[#allocation6 + $0x448] sm:$0xff]
    %v3389 = vld [vmem:[#allocation6 + $0x450] sm:$0xff]
    %v3390 = vld [vmem:[#allocation6 + $0x458] sm:$0xff]
    %v3391 = vld [vmem:[#allocation6 + $0x460] sm:$0xff]
    %v3392 = vld [vmem:[#allocation6 + $0x468] sm:$0xff]
    %v3393 = vld [vmem:[#allocation6 + $0x470] sm:$0xff]
    %v3394 = vld [vmem:[#allocation6 + $0x478] sm:$0xff]
    %v3395 = vld [vmem:[#allocation6 + $0x480] sm:$0xff]
    %v3396 = vld [vmem:[#allocation6 + $0x488] sm:$0xff]
    %v3397 = vld [vmem:[#allocation6 + $0x490] sm:$0xff]
    %v3398 = vld [vmem:[#allocation6 + $0x498] sm:$0xff]
    %v3399 = vld [vmem:[#allocation6 + $0x4a0] sm:$0xff]
    %v3400 = vld [vmem:[#allocation6 + $0x4a8] sm:$0xff]
    %v3401 = vld [vmem:[#allocation6 + $0x4b0] sm:$0xff]
    %v3402 = vld [vmem:[#allocation6 + $0x4b8] sm:$0xff]
    %v3403 = vld [vmem:[#allocation6 + $0x4c0] sm:$0xff]
    %v3404 = vld [vmem:[#allocation6 + $0x4c8] sm:$0xff]
    %v3405 = vld [vmem:[#allocation6 + $0x4d0] sm:$0xff]
    %v3406 = vld [vmem:[#allocation6 + $0x4d8] sm:$0xff]
    %v3407 = vld [vmem:[#allocation6 + $0x4e0] sm:$0xff]
    %v3408 = vld [vmem:[#allocation6 + $0x4e8] sm:$0xff]
    %v3409 = vld [vmem:[#allocation6 + $0x4f0] sm:$0xff]
    %v3410 = vld [vmem:[#allocation6 + $0x4f8] sm:$0xff]
    %v3411 = vld [vmem:[#allocation6 + $0x500] sm:$0xff]
    %v3412 = vld [vmem:[#allocation6 + $0x508] sm:$0xff]
    %v3413 = vld [vmem:[#allocation6 + $0x510] sm:$0xff]
    %v3414 = vld [vmem:[#allocation6 + $0x518] sm:$0xff]
    %v3415 = vld [vmem:[#allocation6 + $0x520] sm:$0xff]
    %v3416 = vld [vmem:[#allocation6 + $0x528] sm:$0xff]
    %v3417 = vld [vmem:[#allocation6 + $0x530] sm:$0xff]
    %v3418 = vld [vmem:[#allocation6 + $0x538] sm:$0xff]
    %v3419 = vld [vmem:[#allocation6 + $0x540] sm:$0xff]
    %v3420 = vld [vmem:[#allocation6 + $0x548] sm:$0xff]
    %v3421 = vld [vmem:[#allocation6 + $0x550] sm:$0xff]
    %v3422 = vld [vmem:[#allocation6 + $0x558] sm:$0xff]
    %v3423 = vld [vmem:[#allocation6 + $0x560] sm:$0xff]
    %v3424 = vld [vmem:[#allocation6 + $0x568] sm:$0xff]
    %v3425 = vld [vmem:[#allocation6 + $0x570] sm:$0xff]
    %v3426 = vld [vmem:[#allocation6 + $0x578] sm:$0xff]
    %v3427 = vld [vmem:[#allocation6 + $0x580] sm:$0xff]
    %v3428 = vld [vmem:[#allocation6 + $0x588] sm:$0xff]
    %v3429 = vld [vmem:[#allocation6 + $0x590] sm:$0xff]
    %v3430 = vld [vmem:[#allocation6 + $0x598] sm:$0xff]
    %v3431 = vld [vmem:[#allocation6 + $0x5a0] sm:$0xff]
    %v3432 = vld [vmem:[#allocation6 + $0x5a8] sm:$0xff]
    %v3433 = vld [vmem:[#allocation6 + $0x5b0] sm:$0xff]
    %v3434 = vld [vmem:[#allocation6 + $0x5b8] sm:$0xff]
    %v3435 = vld [vmem:[#allocation6 + $0x5c0] sm:$0xff]
    %v3436 = vld [vmem:[#allocation6 + $0x5c8] sm:$0xff]
    %v3437 = vld [vmem:[#allocation6 + $0x5d0] sm:$0xff]
    %v3438 = vld [vmem:[#allocation6 + $0x5d8] sm:$0xff]
    %v3439 = vld [vmem:[#allocation6 + $0x5e0] sm:$0xff]
    %v3440 = vld [vmem:[#allocation6 + $0x5e8] sm:$0xff]
    %v3441 = vld [vmem:[#allocation6 + $0x5f0] sm:$0xff]
    %v3442 = vld [vmem:[#allocation6 + $0x5f8] sm:$0xff]
    %v3443 = vld [vmem:[#allocation6 + $0x600] sm:$0xff]
    %v3444 = vld [vmem:[#allocation6 + $0x608] sm:$0xff]
    %v3445 = vld [vmem:[#allocation6 + $0x610] sm:$0xff]
    %v3446 = vld [vmem:[#allocation6 + $0x618] sm:$0xff]
    %v3447 = vld [vmem:[#allocation6 + $0x620] sm:$0xff]
    %v3448 = vld [vmem:[#allocation6 + $0x628] sm:$0xff]
    %v3449 = vld [vmem:[#allocation6 + $0x630] sm:$0xff]
    %v3450 = vld [vmem:[#allocation6 + $0x638] sm:$0xff]
    %v3451 = vld [vmem:[#allocation6 + $0x640] sm:$0xff]
    %v3452 = vld [vmem:[#allocation6 + $0x648] sm:$0xff]
    %v3453 = vld [vmem:[#allocation6 + $0x650] sm:$0xff]
    %v3454 = vld [vmem:[#allocation6 + $0x658] sm:$0xff]
    %v3455 = vld [vmem:[#allocation6 + $0x660] sm:$0xff]
    %v3456 = vld [vmem:[#allocation6 + $0x668] sm:$0xff]
    %v3457 = vld [vmem:[#allocation6 + $0x670] sm:$0xff]
    %v3458 = vld [vmem:[#allocation6 + $0x678] sm:$0xff]
    %v3459 = vld [vmem:[#allocation6 + $0x680] sm:$0xff]
    %v3460 = vld [vmem:[#allocation6 + $0x688] sm:$0xff]
    %v3461 = vld [vmem:[#allocation6 + $0x690] sm:$0xff]
    %v3462 = vld [vmem:[#allocation6 + $0x698] sm:$0xff]
    %v3463 = vld [vmem:[#allocation6 + $0x6a0] sm:$0xff]
    %v3464 = vld [vmem:[#allocation6 + $0x6a8] sm:$0xff]
    %v3465 = vld [vmem:[#allocation6 + $0x6b0] sm:$0xff]
    %v3466 = vld [vmem:[#allocation6 + $0x6b8] sm:$0xff]
    %v3467 = vld [vmem:[#allocation6 + $0x6c0] sm:$0xff]
    %v3468 = vld [vmem:[#allocation6 + $0x6c8] sm:$0xff]
    %v3469 = vld [vmem:[#allocation6 + $0x6d0] sm:$0xff]
    %v3470 = vld [vmem:[#allocation6 + $0x6d8] sm:$0xff]
    %v3471 = vld [vmem:[#allocation6 + $0x6e0] sm:$0xff]
    %v3472 = vld [vmem:[#allocation6 + $0x6e8] sm:$0xff]
    %v3473 = vld [vmem:[#allocation6 + $0x6f0] sm:$0xff]
    %v3474 = vld [vmem:[#allocation6 + $0x6f8] sm:$0xff]
    %v3475 = vld [vmem:[#allocation6 + $0x700] sm:$0xff]
    %v3476 = vld [vmem:[#allocation6 + $0x708] sm:$0xff]
    %v3477 = vld [vmem:[#allocation6 + $0x710] sm:$0xff]
    %v3478 = vld [vmem:[#allocation6 + $0x718] sm:$0xff]
    %v3479 = vld [vmem:[#allocation6 + $0x720] sm:$0xff]
    %v3480 = vld [vmem:[#allocation6 + $0x728] sm:$0xff]
    %v3481 = vld [vmem:[#allocation6 + $0x730] sm:$0xff]
    %v3482 = vld [vmem:[#allocation6 + $0x738] sm:$0xff]
    %v3483 = vld [vmem:[#allocation6 + $0x740] sm:$0xff]
    %v3484 = vld [vmem:[#allocation6 + $0x748] sm:$0xff]
    %v3485 = vld [vmem:[#allocation6 + $0x750] sm:$0xff]
    %v3486 = vld [vmem:[#allocation6 + $0x758] sm:$0xff]
    %v3487 = vld [vmem:[#allocation6 + $0x760] sm:$0xff]
    %v3488 = vld [vmem:[#allocation6 + $0x768] sm:$0xff]
    %v3489 = vld [vmem:[#allocation6 + $0x770] sm:$0xff]
    %v3490 = vld [vmem:[#allocation6 + $0x778] sm:$0xff]
    %v3491 = vld [vmem:[#allocation6 + $0x780] sm:$0xff]
    %v3492 = vld [vmem:[#allocation6 + $0x788] sm:$0xff]
    %v3493 = vld [vmem:[#allocation6 + $0x790] sm:$0xff]
    %v3494 = vld [vmem:[#allocation6 + $0x798] sm:$0xff]
    %v3495 = vld [vmem:[#allocation6 + $0x7a0] sm:$0xff]
    %v3496 = vld [vmem:[#allocation6 + $0x7a8] sm:$0xff]
    %v3497 = vld [vmem:[#allocation6 + $0x7b0] sm:$0xff]
    %v3498 = vld [vmem:[#allocation6 + $0x7b8] sm:$0xff]
    %v3499 = vld [vmem:[#allocation6 + $0x7c0] sm:$0xff]
    %v3500 = vld [vmem:[#allocation6 + $0x7c8] sm:$0xff]
    %v3501 = vld [vmem:[#allocation6 + $0x7d0] sm:$0xff]
    %v3502 = vld [vmem:[#allocation6 + $0x7d8] sm:$0xff]
    %v3503 = vld [vmem:[#allocation6 + $0x7e0] sm:$0xff]
    %v3504 = vld [vmem:[#allocation6 + $0x7e8] sm:$0xff]
    %v3505 = vld [vmem:[#allocation6 + $0x7f0] sm:$0xff]
    %v3506 = vld [vmem:[#allocation6 + $0x7f8] sm:$0xff]
    %v3507 = vld [vmem:[#allocation6 + $0x800] sm:$0xff]
    %v3508 = vld [vmem:[#allocation6 + $0x808] sm:$0xff]
    %v3509 = vld [vmem:[#allocation6 + $0x810] sm:$0xff]
    %v3510 = vld [vmem:[#allocation6 + $0x818] sm:$0xff]
    %v3511 = vld [vmem:[#allocation6 + $0x820] sm:$0xff]
    %v3512 = vld [vmem:[#allocation6 + $0x828] sm:$0xff]
    %v3513 = vld [vmem:[#allocation6 + $0x830] sm:$0xff]
    %v3514 = vld [vmem:[#allocation6 + $0x838] sm:$0xff]
    %v3515 = vld [vmem:[#allocation6 + $0x840] sm:$0xff]
    %v3516 = vld [vmem:[#allocation6 + $0x848] sm:$0xff]
    %v3517 = vld [vmem:[#allocation6 + $0x850] sm:$0xff]
    %v3518 = vld [vmem:[#allocation6 + $0x858] sm:$0xff]
    %v3519 = vld [vmem:[#allocation6 + $0x860] sm:$0xff]
    %v3520 = vld [vmem:[#allocation6 + $0x868] sm:$0xff]
    %v3521 = vld [vmem:[#allocation6 + $0x870] sm:$0xff]
    %v3522 = vld [vmem:[#allocation6 + $0x878] sm:$0xff]
    %v3523 = vld [vmem:[#allocation6 + $0x880] sm:$0xff]
    %v3524 = vld [vmem:[#allocation6 + $0x888] sm:$0xff]
    %v3525 = vld [vmem:[#allocation6 + $0x890] sm:$0xff]
    %v3526 = vld [vmem:[#allocation6 + $0x898] sm:$0xff]
    %v3527 = vld [vmem:[#allocation6 + $0x8a0] sm:$0xff]
    %v3528 = vld [vmem:[#allocation6 + $0x8a8] sm:$0xff]
    %v3529 = vld [vmem:[#allocation6 + $0x8b0] sm:$0xff]
    %v3530 = vld [vmem:[#allocation6 + $0x8b8] sm:$0xff]
    %v3531 = vld [vmem:[#allocation6 + $0x8c0] sm:$0xff]
    %v3532 = vld [vmem:[#allocation6 + $0x8c8] sm:$0xff]
    %v3533 = vld [vmem:[#allocation6 + $0x8d0] sm:$0xff]
    %v3534 = vld [vmem:[#allocation6 + $0x8d8] sm:$0xff]
    %v3535 = vld [vmem:[#allocation6 + $0x8e0] sm:$0xff]
    %v3536 = vld [vmem:[#allocation6 + $0x8e8] sm:$0xff]
    %v3537 = vld [vmem:[#allocation6 + $0x8f0] sm:$0xff]
    %v3538 = vld [vmem:[#allocation6 + $0x8f8] sm:$0xff]
    %v3539 = vld [vmem:[#allocation6 + $0x900] sm:$0xff]
    %v3540 = vld [vmem:[#allocation6 + $0x908] sm:$0xff]
    %v3541 = vld [vmem:[#allocation6 + $0x910] sm:$0xff]
    %v3542 = vld [vmem:[#allocation6 + $0x918] sm:$0xff]
    %v3543 = vld [vmem:[#allocation6 + $0x920] sm:$0xff]
    %v3544 = vld [vmem:[#allocation6 + $0x928] sm:$0xff]
    %v3545 = vld [vmem:[#allocation6 + $0x930] sm:$0xff]
    %v3546 = vld [vmem:[#allocation6 + $0x938] sm:$0xff]
    %v3547 = vld [vmem:[#allocation6 + $0x940] sm:$0xff]
    %v3548 = vld [vmem:[#allocation6 + $0x948] sm:$0xff]
    %v3549 = vld [vmem:[#allocation6 + $0x950] sm:$0xff]
    %v3550 = vld [vmem:[#allocation6 + $0x958] sm:$0xff]
    %v3551 = vld [vmem:[#allocation6 + $0x960] sm:$0xff]
    %v3552 = vld [vmem:[#allocation6 + $0x968] sm:$0xff]
    %v3553 = vld [vmem:[#allocation6 + $0x970] sm:$0xff]
    %v3554 = vld [vmem:[#allocation6 + $0x978] sm:$0xff]
    %v3555 = vld [vmem:[#allocation6 + $0x980] sm:$0xff]
    %v3556 = vld [vmem:[#allocation6 + $0x988] sm:$0xff]
    %v3557 = vld [vmem:[#allocation6 + $0x990] sm:$0xff]
    %v3558 = vld [vmem:[#allocation6 + $0x998] sm:$0xff]
    %v3559 = vld [vmem:[#allocation6 + $0x9a0] sm:$0xff]
    %v3560 = vld [vmem:[#allocation6 + $0x9a8] sm:$0xff]
    %v3561 = vld [vmem:[#allocation6 + $0x9b0] sm:$0xff]
    %v3562 = vld [vmem:[#allocation6 + $0x9b8] sm:$0xff]
    %v3563 = vld [vmem:[#allocation6 + $0x9c0] sm:$0xff]
    %v3564 = vld [vmem:[#allocation6 + $0x9c8] sm:$0xff]
    %v3565 = vld [vmem:[#allocation6 + $0x9d0] sm:$0xff]
    %v3566 = vld [vmem:[#allocation6 + $0x9d8] sm:$0xff]
    %v3567 = vld [vmem:[#allocation6 + $0x9e0] sm:$0xff]
    %v3568 = vld [vmem:[#allocation6 + $0x9e8] sm:$0xff]
    %v3569 = vld [vmem:[#allocation6 + $0x9f0] sm:$0xff]
    %v3570 = vld [vmem:[#allocation6 + $0x9f8] sm:$0xff]
    %v3571 = vld [vmem:[#allocation6 + $0xa00] sm:$0xff]
    %v3572 = vld [vmem:[#allocation6 + $0xa08] sm:$0xff]
    %v3573 = vld [vmem:[#allocation6 + $0xa10] sm:$0xff]
    %v3574 = vld [vmem:[#allocation6 + $0xa18] sm:$0xff]
    %v3575 = vld [vmem:[#allocation6 + $0xa20] sm:$0xff]
    %v3576 = vld [vmem:[#allocation6 + $0xa28] sm:$0xff]
    %v3577 = vld [vmem:[#allocation6 + $0xa30] sm:$0xff]
    %v3578 = vld [vmem:[#allocation6 + $0xa38] sm:$0xff]
    %v3579 = vld [vmem:[#allocation6 + $0xa40] sm:$0xff]
    %v3580 = vld [vmem:[#allocation6 + $0xa48] sm:$0xff]
    %v3581 = vld [vmem:[#allocation6 + $0xa50] sm:$0xff]
    %v3582 = vld [vmem:[#allocation6 + $0xa58] sm:$0xff]
    %v3583 = vld [vmem:[#allocation6 + $0xa60] sm:$0xff]
    %v3584 = vld [vmem:[#allocation6 + $0xa68] sm:$0xff]
    %v3585 = vld [vmem:[#allocation6 + $0xa70] sm:$0xff]
    %v3586 = vld [vmem:[#allocation6 + $0xa78] sm:$0xff]
    %v3587 = vld [vmem:[#allocation6 + $0xa80] sm:$0xff]
    %v3588 = vld [vmem:[#allocation6 + $0xa88] sm:$0xff]
    %v3589 = vld [vmem:[#allocation6 + $0xa90] sm:$0xff]
    %v3590 = vld [vmem:[#allocation6 + $0xa98] sm:$0xff]
    %v3591 = vld [vmem:[#allocation6 + $0xaa0] sm:$0xff]
    %v3592 = vld [vmem:[#allocation6 + $0xaa8] sm:$0xff]
    %v3593 = vld [vmem:[#allocation6 + $0xab0] sm:$0xff]
    %v3594 = vld [vmem:[#allocation6 + $0xab8] sm:$0xff]
    %v3595 = vld [vmem:[#allocation6 + $0xac0] sm:$0xff]
    %v3596 = vld [vmem:[#allocation6 + $0xac8] sm:$0xff]
    %v3597 = vld [vmem:[#allocation6 + $0xad0] sm:$0xff]
    %v3598 = vld [vmem:[#allocation6 + $0xad8] sm:$0xff]
    %v3599 = vld [vmem:[#allocation6 + $0xae0] sm:$0xff]
    %v3600 = vld [vmem:[#allocation6 + $0xae8] sm:$0xff]
    %v3601 = vld [vmem:[#allocation6 + $0xaf0] sm:$0xff]
    %v3602 = vld [vmem:[#allocation6 + $0xaf8] sm:$0xff]
    %v3603 = vld [vmem:[#allocation6 + $0xb00] sm:$0xff]
    %v3604 = vld [vmem:[#allocation6 + $0xb08] sm:$0xff]
    %v3605 = vld [vmem:[#allocation6 + $0xb10] sm:$0xff]
    %v3606 = vld [vmem:[#allocation6 + $0xb18] sm:$0xff]
    %v3607 = vld [vmem:[#allocation6 + $0xb20] sm:$0xff]
    %v3608 = vld [vmem:[#allocation6 + $0xb28] sm:$0xff]
    %v3609 = vld [vmem:[#allocation6 + $0xb30] sm:$0xff]
    %v3610 = vld [vmem:[#allocation6 + $0xb38] sm:$0xff]
    %v3611 = vld [vmem:[#allocation6 + $0xb40] sm:$0xff]
    %v3612 = vld [vmem:[#allocation6 + $0xb48] sm:$0xff]
    %v3613 = vld [vmem:[#allocation6 + $0xb50] sm:$0xff]
    %v3614 = vld [vmem:[#allocation6 + $0xb58] sm:$0xff]
    %v3615 = vld [vmem:[#allocation6 + $0xb60] sm:$0xff]
    %v3616 = vld [vmem:[#allocation6 + $0xb68] sm:$0xff]
    %v3617 = vld [vmem:[#allocation6 + $0xb70] sm:$0xff]
    %v3618 = vld [vmem:[#allocation6 + $0xb78] sm:$0xff]
    %v3619 = vld [vmem:[#allocation6 + $0xb80] sm:$0xff]
    %v3620 = vld [vmem:[#allocation6 + $0xb88] sm:$0xff]
    %v3621 = vld [vmem:[#allocation6 + $0xb90] sm:$0xff]
    %v3622 = vld [vmem:[#allocation6 + $0xb98] sm:$0xff]
    %v3623 = vld [vmem:[#allocation6 + $0xba0] sm:$0xff]
    %v3624 = vld [vmem:[#allocation6 + $0xba8] sm:$0xff]
    %v3625 = vld [vmem:[#allocation6 + $0xbb0] sm:$0xff]
    %v3626 = vld [vmem:[#allocation6 + $0xbb8] sm:$0xff]
    %v3627 = vld [vmem:[#allocation6 + $0xbc0] sm:$0xff]
    %v3628 = vld [vmem:[#allocation6 + $0xbc8] sm:$0xff]
    %v3629 = vld [vmem:[#allocation6 + $0xbd0] sm:$0xff]
    %v3630 = vld [vmem:[#allocation6 + $0xbd8] sm:$0xff]
    %v3631 = vld [vmem:[#allocation6 + $0xbe0] sm:$0xff]
    %v3632 = vld [vmem:[#allocation6 + $0xbe8] sm:$0xff]
    %v3633 = vld [vmem:[#allocation6 + $0xbf0] sm:$0xff]
    %v3634 = vld [vmem:[#allocation6 + $0xbf8] sm:$0xff]
    %v3635 = vld [vmem:[#allocation6 + $0xc00] sm:$0xff]
    %v3636 = vld [vmem:[#allocation6 + $0xc08] sm:$0xff]
    %v3637 = vld [vmem:[#allocation6 + $0xc10] sm:$0xff]
    %v3638 = vld [vmem:[#allocation6 + $0xc18] sm:$0xff]
    %v3639 = vld [vmem:[#allocation6 + $0xc20] sm:$0xff]
    %v3640 = vld [vmem:[#allocation6 + $0xc28] sm:$0xff]
    %v3641 = vld [vmem:[#allocation6 + $0xc30] sm:$0xff]
    %v3642 = vld [vmem:[#allocation6 + $0xc38] sm:$0xff]
    %v3643 = vld [vmem:[#allocation6 + $0xc40] sm:$0xff]
    %v3644 = vld [vmem:[#allocation6 + $0xc48] sm:$0xff]
    %v3645 = vld [vmem:[#allocation6 + $0xc50] sm:$0xff]
    %v3646 = vld [vmem:[#allocation6 + $0xc58] sm:$0xff]
    %v3647 = vld [vmem:[#allocation6 + $0xc60] sm:$0xff]
    %v3648 = vld [vmem:[#allocation6 + $0xc68] sm:$0xff]
    %v3649 = vld [vmem:[#allocation6 + $0xc70] sm:$0xff]
    %v3650 = vld [vmem:[#allocation6 + $0xc78] sm:$0xff]
    %v3651 = vld [vmem:[#allocation6 + $0xc80] sm:$0xff]
    %v3652 = vld [vmem:[#allocation6 + $0xc88] sm:$0xff]
    %v3653 = vld [vmem:[#allocation6 + $0xc90] sm:$0xff]
    %v3654 = vld [vmem:[#allocation6 + $0xc98] sm:$0xff]
    %v3655 = vld [vmem:[#allocation6 + $0xca0] sm:$0xff]
    %v3656 = vld [vmem:[#allocation6 + $0xca8] sm:$0xff]
    %v3657 = vld [vmem:[#allocation6 + $0xcb0] sm:$0xff]
    %v3658 = vld [vmem:[#allocation6 + $0xcb8] sm:$0xff]
    %v3659 = vld [vmem:[#allocation6 + $0xcc0] sm:$0xff]
    %v3660 = vld [vmem:[#allocation6 + $0xcc8] sm:$0xff]
    %v3661 = vld [vmem:[#allocation6 + $0xcd0] sm:$0xff]
    %v3662 = vld [vmem:[#allocation6 + $0xcd8] sm:$0xff]
    %v3663 = vld [vmem:[#allocation6 + $0xce0] sm:$0xff]
    %v3664 = vld [vmem:[#allocation6 + $0xce8] sm:$0xff]
    %v3665 = vld [vmem:[#allocation6 + $0xcf0] sm:$0xff]
    %v3666 = vld [vmem:[#allocation6 + $0xcf8] sm:$0xff]
    %v3667 = vld [vmem:[#allocation6 + $0xd00] sm:$0xff]
    %v3668 = vld [vmem:[#allocation6 + $0xd08] sm:$0xff]
    %v3669 = vld [vmem:[#allocation6 + $0xd10] sm:$0xff]
    %v3670 = vld [vmem:[#allocation6 + $0xd18] sm:$0xff]
    %v3671 = vld [vmem:[#allocation6 + $0xd20] sm:$0xff]
    %v3672 = vld [vmem:[#allocation6 + $0xd28] sm:$0xff]
    %v3673 = vld [vmem:[#allocation6 + $0xd30] sm:$0xff]
    %v3674 = vld [vmem:[#allocation6 + $0xd38] sm:$0xff]
    %v3675 = vld [vmem:[#allocation6 + $0xd40] sm:$0xff]
    %v3676 = vld [vmem:[#allocation6 + $0xd48] sm:$0xff]
    %v3677 = vld [vmem:[#allocation6 + $0xd50] sm:$0xff]
    %v3678 = vld [vmem:[#allocation6 + $0xd58] sm:$0xff]
    %v3679 = vld [vmem:[#allocation6 + $0xd60] sm:$0xff]
    %v3680 = vld [vmem:[#allocation6 + $0xd68] sm:$0xff]
    %v3681 = vld [vmem:[#allocation6 + $0xd70] sm:$0xff]
    %v3682 = vld [vmem:[#allocation6 + $0xd78] sm:$0xff]
    %v3683 = vld [vmem:[#allocation6 + $0xd80] sm:$0xff]
    %v3684 = vld [vmem:[#allocation6 + $0xd88] sm:$0xff]
    %v3685 = vld [vmem:[#allocation6 + $0xd90] sm:$0xff]
    %v3686 = vld [vmem:[#allocation6 + $0xd98] sm:$0xff]
    %v3687 = vld [vmem:[#allocation6 + $0xda0] sm:$0xff]
    %v3688 = vld [vmem:[#allocation6 + $0xda8] sm:$0xff]
    %v3689 = vld [vmem:[#allocation6 + $0xdb0] sm:$0xff]
    %v3690 = vld [vmem:[#allocation6 + $0xdb8] sm:$0xff]
    %v3691 = vld [vmem:[#allocation6 + $0xdc0] sm:$0xff]
    %v3692 = vld [vmem:[#allocation6 + $0xdc8] sm:$0xff]
    %v3693 = vld [vmem:[#allocation6 + $0xdd0] sm:$0xff]
    %v3694 = vld [vmem:[#allocation6 + $0xdd8] sm:$0xff]
    %v3695 = vld [vmem:[#allocation6 + $0xde0] sm:$0xff]
    %v3696 = vld [vmem:[#allocation6 + $0xde8] sm:$0xff]
    %v3697 = vld [vmem:[#allocation6 + $0xdf0] sm:$0xff]
    %v3698 = vld [vmem:[#allocation6 + $0xdf8] sm:$0xff]
    %v3699 = vld [vmem:[#allocation6 + $0xe00] sm:$0xff]
    %v3700 = vld [vmem:[#allocation6 + $0xe08] sm:$0xff]
    %v3701 = vld [vmem:[#allocation6 + $0xe10] sm:$0xff]
    %v3702 = vld [vmem:[#allocation6 + $0xe18] sm:$0xff]
    %v3703 = vld [vmem:[#allocation6 + $0xe20] sm:$0xff]
    %v3704 = vld [vmem:[#allocation6 + $0xe28] sm:$0xff]
    %v3705 = vld [vmem:[#allocation6 + $0xe30] sm:$0xff]
    %v3706 = vld [vmem:[#allocation6 + $0xe38] sm:$0xff]
    %v3707 = vld [vmem:[#allocation6 + $0xe40] sm:$0xff]
    %v3708 = vld [vmem:[#allocation6 + $0xe48] sm:$0xff]
    %v3709 = vld [vmem:[#allocation6 + $0xe50] sm:$0xff]
    %v3710 = vld [vmem:[#allocation6 + $0xe58] sm:$0xff]
    %v3711 = vld [vmem:[#allocation6 + $0xe60] sm:$0xff]
    %v3712 = vld [vmem:[#allocation6 + $0xe68] sm:$0xff]
    %v3713 = vld [vmem:[#allocation6 + $0xe70] sm:$0xff]
    %v3714 = vld [vmem:[#allocation6 + $0xe78] sm:$0xff]
    %v3715 = vld [vmem:[#allocation6 + $0xe80] sm:$0xff]
    %v3716 = vld [vmem:[#allocation6 + $0xe88] sm:$0xff]
    %v3717 = vld [vmem:[#allocation6 + $0xe90] sm:$0xff]
    %v3718 = vld [vmem:[#allocation6 + $0xe98] sm:$0xff]
    %v3719 = vld [vmem:[#allocation6 + $0xea0] sm:$0xff]
    %v3720 = vld [vmem:[#allocation6 + $0xea8] sm:$0xff]
    %v3721 = vld [vmem:[#allocation6 + $0xeb0] sm:$0xff]
    %v3722 = vld [vmem:[#allocation6 + $0xeb8] sm:$0xff]
    %v3723 = vld [vmem:[#allocation6 + $0xec0] sm:$0xff]
    %v3724 = vld [vmem:[#allocation6 + $0xec8] sm:$0xff]
    %v3725 = vld [vmem:[#allocation6 + $0xed0] sm:$0xff]
    %v3726 = vld [vmem:[#allocation6 + $0xed8] sm:$0xff]
    %v3727 = vld [vmem:[#allocation6 + $0xee0] sm:$0xff]
    %v3728 = vld [vmem:[#allocation6 + $0xee8] sm:$0xff]
    %v3729 = vld [vmem:[#allocation6 + $0xef0] sm:$0xff]
    %v3730 = vld [vmem:[#allocation6 + $0xef8] sm:$0xff]
    %v3731 = vld [vmem:[#allocation6 + $0xf00] sm:$0xff]
    %v3732 = vld [vmem:[#allocation6 + $0xf08] sm:$0xff]
    %v3733 = vld [vmem:[#allocation6 + $0xf10] sm:$0xff]
    %v3734 = vld [vmem:[#allocation6 + $0xf18] sm:$0xff]
    %v3735 = vld [vmem:[#allocation6 + $0xf20] sm:$0xff]
    %v3736 = vld [vmem:[#allocation6 + $0xf28] sm:$0xff]
    %v3737 = vld [vmem:[#allocation6 + $0xf30] sm:$0xff]
    %v3738 = vld [vmem:[#allocation6 + $0xf38] sm:$0xff]
    %v3739 = vld [vmem:[#allocation6 + $0xf40] sm:$0xff]
    %v3740 = vld [vmem:[#allocation6 + $0xf48] sm:$0xff]
    %v3741 = vld [vmem:[#allocation6 + $0xf50] sm:$0xff]
    %v3742 = vld [vmem:[#allocation6 + $0xf58] sm:$0xff]
    %v3743 = vld [vmem:[#allocation6 + $0xf60] sm:$0xff]
    %v3744 = vld [vmem:[#allocation6 + $0xf68] sm:$0xff]
    %v3745 = vld [vmem:[#allocation6 + $0xf70] sm:$0xff]
    %v3746 = vld [vmem:[#allocation6 + $0xf78] sm:$0xff]
    %v3747 = vld [vmem:[#allocation6 + $0xf80] sm:$0xff]
    %v3748 = vld [vmem:[#allocation6 + $0xf88] sm:$0xff]
    %v3749 = vld [vmem:[#allocation6 + $0xf90] sm:$0xff]
    %v3750 = vld [vmem:[#allocation6 + $0xf98] sm:$0xff]
    %v3751 = vld [vmem:[#allocation6 + $0xfa0] sm:$0xff]
    %v3752 = vld [vmem:[#allocation6 + $0xfa8] sm:$0xff]
    %v3753 = vld [vmem:[#allocation6 + $0xfb0] sm:$0xff]
    %v3754 = vld [vmem:[#allocation6 + $0xfb8] sm:$0xff]
    %v3755 = vld [vmem:[#allocation6 + $0xfc0] sm:$0xff]
    %v3756 = vld [vmem:[#allocation6 + $0xfc8] sm:$0xff]
    %v3757 = vld [vmem:[#allocation6 + $0xfd0] sm:$0xff]
    %v3758 = vld [vmem:[#allocation6 + $0xfd8] sm:$0xff]
    %v3759 = vld [vmem:[#allocation6 + $0xfe0] sm:$0xff]
    %v3760 = vld [vmem:[#allocation6 + $0xfe8] sm:$0xff]
    %v3761 = vld [vmem:[#allocation6 + $0xff0] sm:$0xff]
    %v3762 = vld [vmem:[#allocation6 + $0xff8] sm:$0xff]
    %v3763 = vld [vmem:[#allocation6 + $0x1000] sm:$0xff]
    %v3764 = vld [vmem:[#allocation6 + $0x1008] sm:$0xff]
    %v3765 = vld [vmem:[#allocation6 + $0x1010] sm:$0xff]
    %v3766 = vld [vmem:[#allocation6 + $0x1018] sm:$0xff]
    %v3767 = vld [vmem:[#allocation6 + $0x1020] sm:$0xff]
    %v3768 = vld [vmem:[#allocation6 + $0x1028] sm:$0xff]
    %v3769 = vld [vmem:[#allocation6 + $0x1030] sm:$0xff]
    %v3770 = vld [vmem:[#allocation6 + $0x1038] sm:$0xff]
    %v3771 = vld [vmem:[#allocation6 + $0x1040] sm:$0xff]
    %v3772 = vld [vmem:[#allocation6 + $0x1048] sm:$0xff]
    %v3773 = vld [vmem:[#allocation6 + $0x1050] sm:$0xff]
    %v3774 = vld [vmem:[#allocation6 + $0x1058] sm:$0xff]
    %v3775 = vld [vmem:[#allocation6 + $0x1060] sm:$0xff]
    %v3776 = vld [vmem:[#allocation6 + $0x1068] sm:$0xff]
    %v3777 = vld [vmem:[#allocation6 + $0x1070] sm:$0xff]
    %v3778 = vld [vmem:[#allocation6 + $0x1078] sm:$0xff]
    %v3779 = vld [vmem:[#allocation6 + $0x1080] sm:$0xff]
    %v3780 = vld [vmem:[#allocation6 + $0x1088] sm:$0xff]
    %v3781 = vld [vmem:[#allocation6 + $0x1090] sm:$0xff]
    %v3782 = vld [vmem:[#allocation6 + $0x1098] sm:$0xff]
    %v3783 = vld [vmem:[#allocation6 + $0x10a0] sm:$0xff]
    %v3784 = vld [vmem:[#allocation6 + $0x10a8] sm:$0xff]
    %v3785 = vld [vmem:[#allocation6 + $0x10b0] sm:$0xff]
    %v3786 = vld [vmem:[#allocation6 + $0x10b8] sm:$0xff]
    %v3787 = vld [vmem:[#allocation6 + $0x10c0] sm:$0xff]
    %v3788 = vld [vmem:[#allocation6 + $0x10c8] sm:$0xff]
    %v3789 = vld [vmem:[#allocation6 + $0x10d0] sm:$0xff]
    %v3790 = vld [vmem:[#allocation6 + $0x10d8] sm:$0xff]
    %v3791 = vld [vmem:[#allocation6 + $0x10e0] sm:$0xff]
    %v3792 = vld [vmem:[#allocation6 + $0x10e8] sm:$0xff]
    %v3793 = vld [vmem:[#allocation6 + $0x10f0] sm:$0xff]
    %v3794 = vld [vmem:[#allocation6 + $0x10f8] sm:$0xff]
    %v3795 = vld [vmem:[#allocation6 + $0x1100] sm:$0xff]
    %v3796 = vld [vmem:[#allocation6 + $0x1108] sm:$0xff]
    %v3797 = vld [vmem:[#allocation6 + $0x1110] sm:$0xff]
    %v3798 = vld [vmem:[#allocation6 + $0x1118] sm:$0xff]
    %v3799 = vld [vmem:[#allocation6 + $0x1120] sm:$0xff]
    %v3800 = vld [vmem:[#allocation6 + $0x1128] sm:$0xff]
    %v3801 = vld [vmem:[#allocation6 + $0x1130] sm:$0xff]
    %v3802 = vld [vmem:[#allocation6 + $0x1138] sm:$0xff]
    %v3803 = vld [vmem:[#allocation6 + $0x1140] sm:$0xff]
    %v3804 = vld [vmem:[#allocation6 + $0x1148] sm:$0xff]
    %v3805 = vld [vmem:[#allocation6 + $0x1150] sm:$0xff]
    %v3806 = vld [vmem:[#allocation6 + $0x1158] sm:$0xff]
    %v3807 = vld [vmem:[#allocation6 + $0x1160] sm:$0xff]
    %v3808 = vld [vmem:[#allocation6 + $0x1168] sm:$0xff]
    %v3809 = vld [vmem:[#allocation6 + $0x1170] sm:$0xff]
    %v3810 = vld [vmem:[#allocation6 + $0x1178] sm:$0xff]
    %v3811 = vld [vmem:[#allocation6 + $0x1180] sm:$0xff]
    %v3812 = vld [vmem:[#allocation6 + $0x1188] sm:$0xff]
    %v3813 = vld [vmem:[#allocation6 + $0x1190] sm:$0xff]
    %v3814 = vld [vmem:[#allocation6 + $0x1198] sm:$0xff]
    %v3815 = vld [vmem:[#allocation6 + $0x11a0] sm:$0xff]
    %v3816 = vld [vmem:[#allocation6 + $0x11a8] sm:$0xff]
    %v3817 = vld [vmem:[#allocation6 + $0x11b0] sm:$0xff]
    %v3818 = vld [vmem:[#allocation6 + $0x11b8] sm:$0xff]
    %v3819 = vld [vmem:[#allocation6 + $0x11c0] sm:$0xff]
    %v3820 = vld [vmem:[#allocation6 + $0x11c8] sm:$0xff]
    %v3821 = vld [vmem:[#allocation6 + $0x11d0] sm:$0xff]
    %v3822 = vld [vmem:[#allocation6 + $0x11d8] sm:$0xff]
    %v3823 = vld [vmem:[#allocation6 + $0x11e0] sm:$0xff]
    %v3824 = vld [vmem:[#allocation6 + $0x11e8] sm:$0xff]
    %v3825 = vld [vmem:[#allocation6 + $0x11f0] sm:$0xff]
    %v3826 = vld [vmem:[#allocation6 + $0x11f8] sm:$0xff]
    %v3827 = vld [vmem:[#allocation6 + $0x1200] sm:$0xff]
    %v3828 = vld [vmem:[#allocation6 + $0x1208] sm:$0xff]
    %v3829 = vld [vmem:[#allocation6 + $0x1210] sm:$0xff]
    %v3830 = vld [vmem:[#allocation6 + $0x1218] sm:$0xff]
    %v3831 = vld [vmem:[#allocation6 + $0x1220] sm:$0xff]
    %v3832 = vld [vmem:[#allocation6 + $0x1228] sm:$0xff]
    %v3833 = vld [vmem:[#allocation6 + $0x1230] sm:$0xff]
    %v3834 = vld [vmem:[#allocation6 + $0x1238] sm:$0xff]
    %v3835 = vld [vmem:[#allocation6 + $0x1240] sm:$0xff]
    %v3836 = vld [vmem:[#allocation6 + $0x1248] sm:$0xff]
    %v3837 = vld [vmem:[#allocation6 + $0x1250] sm:$0xff]
    %v3838 = vld [vmem:[#allocation6 + $0x1258] sm:$0xff]
    %v3839 = vld [vmem:[#allocation6 + $0x1260] sm:$0xff]
    %v3840 = vld [vmem:[#allocation6 + $0x1268] sm:$0xff]
    %v3841 = vld [vmem:[#allocation6 + $0x1270] sm:$0xff]
    %v3842 = vld [vmem:[#allocation6 + $0x1278] sm:$0xff]
    %v3843 = vld [vmem:[#allocation6 + $0x1280] sm:$0xff]
    %v3844 = vld [vmem:[#allocation6 + $0x1288] sm:$0xff]
    %v3845 = vld [vmem:[#allocation6 + $0x1290] sm:$0xff]
    %v3846 = vld [vmem:[#allocation6 + $0x1298] sm:$0xff]
    %v3847 = vld [vmem:[#allocation6 + $0x12a0] sm:$0xff]
    %v3848 = vld [vmem:[#allocation6 + $0x12a8] sm:$0xff]
    %v3849 = vld [vmem:[#allocation6 + $0x12b0] sm:$0xff]
    %v3850 = vld [vmem:[#allocation6 + $0x12b8] sm:$0xff]
    %v3851 = vld [vmem:[#allocation6 + $0x12c0] sm:$0xff]
    %v3852 = vld [vmem:[#allocation6 + $0x12c8] sm:$0xff]
    %v3853 = vld [vmem:[#allocation6 + $0x12d0] sm:$0xff]
    %v3854 = vld [vmem:[#allocation6 + $0x12d8] sm:$0xff]
    %v3855 = vld [vmem:[#allocation6 + $0x12e0] sm:$0xff]
    %v3856 = vld [vmem:[#allocation6 + $0x12e8] sm:$0xff]
    %v3857 = vld [vmem:[#allocation6 + $0x12f0] sm:$0xff]
    %v3858 = vld [vmem:[#allocation6 + $0x12f8] sm:$0xff]
    %v3859 = vld [vmem:[#allocation6 + $0x1300] sm:$0xff]
    %v3860 = vld [vmem:[#allocation6 + $0x1308] sm:$0xff]
    %v3861 = vld [vmem:[#allocation6 + $0x1310] sm:$0xff]
    %v3862 = vld [vmem:[#allocation6 + $0x1318] sm:$0xff]
    %v3863 = vld [vmem:[#allocation6 + $0x1320] sm:$0xff]
    %v3864 = vld [vmem:[#allocation6 + $0x1328] sm:$0xff]
    %v3865 = vld [vmem:[#allocation6 + $0x1330] sm:$0xff]
    %v3866 = vld [vmem:[#allocation6 + $0x1338] sm:$0xff]
    %v3867 = vld [vmem:[#allocation6 + $0x1340] sm:$0xff]
    %v3868 = vld [vmem:[#allocation6 + $0x1348] sm:$0xff]
    %v3869 = vld [vmem:[#allocation6 + $0x1350] sm:$0xff]
    %v3870 = vld [vmem:[#allocation6 + $0x1358] sm:$0xff]
    %v3871 = vld [vmem:[#allocation6 + $0x1360] sm:$0xff]
    %v3872 = vld [vmem:[#allocation6 + $0x1368] sm:$0xff]
    %v3873 = vld [vmem:[#allocation6 + $0x1370] sm:$0xff]
    %v3874 = vld [vmem:[#allocation6 + $0x1378] sm:$0xff]
    %v3875 = vld [vmem:[#allocation6 + $0x1380] sm:$0xff]
    %v3876 = vld [vmem:[#allocation6 + $0x1388] sm:$0xff]
    %v3877 = vld [vmem:[#allocation6 + $0x1390] sm:$0xff]
    %v3878 = vld [vmem:[#allocation6 + $0x1398] sm:$0xff]
    %v3879 = vld [vmem:[#allocation6 + $0x13a0] sm:$0xff]
    %v3880 = vld [vmem:[#allocation6 + $0x13a8] sm:$0xff]
    %v3881 = vld [vmem:[#allocation6 + $0x13b0] sm:$0xff]
    %v3882 = vld [vmem:[#allocation6 + $0x13b8] sm:$0xff]
    %v3883 = vld [vmem:[#allocation6 + $0x13c0] sm:$0xff]
    %v3884 = vld [vmem:[#allocation6 + $0x13c8] sm:$0xff]
    %v3885 = vld [vmem:[#allocation6 + $0x13d0] sm:$0xff]
    %v3886 = vld [vmem:[#allocation6 + $0x13d8] sm:$0xff]
    %v3887 = vld [vmem:[#allocation6 + $0x13e0] sm:$0xff]
    %v3888 = vld [vmem:[#allocation6 + $0x13e8] sm:$0xff]
    %v3889 = vld [vmem:[#allocation6 + $0x13f0] sm:$0xff]
    %v3890 = vld [vmem:[#allocation6 + $0x13f8] sm:$0xff]
    %v3891 = vld [vmem:[#allocation6 + $0x1400] sm:$0xff]
    %v3892 = vld [vmem:[#allocation6 + $0x1408] sm:$0xff]
    %v3893 = vld [vmem:[#allocation6 + $0x1410] sm:$0xff]
    %v3894 = vld [vmem:[#allocation6 + $0x1418] sm:$0xff]
    %v3895 = vld [vmem:[#allocation6 + $0x1420] sm:$0xff]
    %v3896 = vld [vmem:[#allocation6 + $0x1428] sm:$0xff]
    %v3897 = vld [vmem:[#allocation6 + $0x1430] sm:$0xff]
    %v3898 = vld [vmem:[#allocation6 + $0x1438] sm:$0xff]
    %v3899 = vld [vmem:[#allocation6 + $0x1440] sm:$0xff]
    %v3900 = vld [vmem:[#allocation6 + $0x1448] sm:$0xff]
    %v3901 = vld [vmem:[#allocation6 + $0x1450] sm:$0xff]
    %v3902 = vld [vmem:[#allocation6 + $0x1458] sm:$0xff]
    %v3903 = vld [vmem:[#allocation6 + $0x1460] sm:$0xff]
    %v3904 = vld [vmem:[#allocation6 + $0x1468] sm:$0xff]
    %v3905 = vld [vmem:[#allocation6 + $0x1470] sm:$0xff]
    %v3906 = vld [vmem:[#allocation6 + $0x1478] sm:$0xff]
    %v3907 = vld [vmem:[#allocation6 + $0x1480] sm:$0xff]
    %v3908 = vld [vmem:[#allocation6 + $0x1488] sm:$0xff]
    %v3909 = vld [vmem:[#allocation6 + $0x1490] sm:$0xff]
    %v3910 = vld [vmem:[#allocation6 + $0x1498] sm:$0xff]
    %v3911 = vld [vmem:[#allocation6 + $0x14a0] sm:$0xff]
    %v3912 = vld [vmem:[#allocation6 + $0x14a8] sm:$0xff]
    %v3913 = vld [vmem:[#allocation6 + $0x14b0] sm:$0xff]
    %v3914 = vld [vmem:[#allocation6 + $0x14b8] sm:$0xff]
    %v3915 = vld [vmem:[#allocation6 + $0x14c0] sm:$0xff]
    %v3916 = vld [vmem:[#allocation6 + $0x14c8] sm:$0xff]
    %v3917 = vld [vmem:[#allocation6 + $0x14d0] sm:$0xff]
    %v3918 = vld [vmem:[#allocation6 + $0x14d8] sm:$0xff]
    %v3919 = vld [vmem:[#allocation6 + $0x14e0] sm:$0xff]
    %v3920 = vld [vmem:[#allocation6 + $0x14e8] sm:$0xff]
    %v3921 = vld [vmem:[#allocation6 + $0x14f0] sm:$0xff]
    %v3922 = vld [vmem:[#allocation6 + $0x14f8] sm:$0xff]
    %v3923 = vld [vmem:[#allocation6 + $0x1500] sm:$0xff]
    %v3924 = vld [vmem:[#allocation6 + $0x1508] sm:$0xff]
    %v3925 = vld [vmem:[#allocation6 + $0x1510] sm:$0xff]
    %v3926 = vld [vmem:[#allocation6 + $0x1518] sm:$0xff]
    %v3927 = vld [vmem:[#allocation6 + $0x1520] sm:$0xff]
    %v3928 = vld [vmem:[#allocation6 + $0x1528] sm:$0xff]
    %v3929 = vld [vmem:[#allocation6 + $0x1530] sm:$0xff]
    %v3930 = vld [vmem:[#allocation6 + $0x1538] sm:$0xff]
    %v3931 = vld [vmem:[#allocation6 + $0x1540] sm:$0xff]
    %v3932 = vld [vmem:[#allocation6 + $0x1548] sm:$0xff]
    %v3933 = vld [vmem:[#allocation6 + $0x1550] sm:$0xff]
    %v3934 = vld [vmem:[#allocation6 + $0x1558] sm:$0xff]
    %v3935 = vld [vmem:[#allocation6 + $0x1560] sm:$0xff]
    %v3936 = vld [vmem:[#allocation6 + $0x1568] sm:$0xff]
    %v3937 = vld [vmem:[#allocation6 + $0x1570] sm:$0xff]
    %v3938 = vld [vmem:[#allocation6 + $0x1578] sm:$0xff]
    %v3939 = vld [vmem:[#allocation6 + $0x1580] sm:$0xff]
    %v3940 = vld [vmem:[#allocation6 + $0x1588] sm:$0xff]
    %v3941 = vld [vmem:[#allocation6 + $0x1590] sm:$0xff]
    %v3942 = vld [vmem:[#allocation6 + $0x1598] sm:$0xff]
    %v3943 = vld [vmem:[#allocation6 + $0x15a0] sm:$0xff]
    %v3944 = vld [vmem:[#allocation6 + $0x15a8] sm:$0xff]
    %v3945 = vld [vmem:[#allocation6 + $0x15b0] sm:$0xff]
    %v3946 = vld [vmem:[#allocation6 + $0x15b8] sm:$0xff]
    %v3947 = vld [vmem:[#allocation6 + $0x15c0] sm:$0xff]
    %v3948 = vld [vmem:[#allocation6 + $0x15c8] sm:$0xff]
    %v3949 = vld [vmem:[#allocation6 + $0x15d0] sm:$0xff]
    %v3950 = vld [vmem:[#allocation6 + $0x15d8] sm:$0xff]
    %v3951 = vld [vmem:[#allocation6 + $0x15e0] sm:$0xff]
    %v3952 = vld [vmem:[#allocation6 + $0x15e8] sm:$0xff]
    %v3953 = vld [vmem:[#allocation6 + $0x15f0] sm:$0xff]
    %v3954 = vld [vmem:[#allocation6 + $0x15f8] sm:$0xff]
    %v3955 = vld [vmem:[#allocation6 + $0x1600] sm:$0xff]
    %v3956 = vld [vmem:[#allocation6 + $0x1608] sm:$0xff]
    %v3957 = vld [vmem:[#allocation6 + $0x1610] sm:$0xff]
    %v3958 = vld [vmem:[#allocation6 + $0x1618] sm:$0xff]
    %v3959 = vld [vmem:[#allocation6 + $0x1620] sm:$0xff]
    %v3960 = vld [vmem:[#allocation6 + $0x1628] sm:$0xff]
    %v3961 = vld [vmem:[#allocation6 + $0x1630] sm:$0xff]
    %v3962 = vld [vmem:[#allocation6 + $0x1638] sm:$0xff]
    %v3963 = vld [vmem:[#allocation6 + $0x1640] sm:$0xff]
    %v3964 = vld [vmem:[#allocation6 + $0x1648] sm:$0xff]
    %v3965 = vld [vmem:[#allocation6 + $0x1650] sm:$0xff]
    %v3966 = vld [vmem:[#allocation6 + $0x1658] sm:$0xff]
    %v3967 = vld [vmem:[#allocation6 + $0x1660] sm:$0xff]
    %v3968 = vld [vmem:[#allocation6 + $0x1668] sm:$0xff]
    %v3969 = vld [vmem:[#allocation6 + $0x1670] sm:$0xff]
    %v3970 = vld [vmem:[#allocation6 + $0x1678] sm:$0xff]
    %v3971 = vld [vmem:[#allocation6 + $0x1680] sm:$0xff]
    %v3972 = vld [vmem:[#allocation6 + $0x1688] sm:$0xff]
    %v3973 = vld [vmem:[#allocation6 + $0x1690] sm:$0xff]
    %v3974 = vld [vmem:[#allocation6 + $0x1698] sm:$0xff]
    %v3975 = vld [vmem:[#allocation6 + $0x16a0] sm:$0xff]
    %v3976 = vld [vmem:[#allocation6 + $0x16a8] sm:$0xff]
    %v3977 = vld [vmem:[#allocation6 + $0x16b0] sm:$0xff]
    %v3978 = vld [vmem:[#allocation6 + $0x16b8] sm:$0xff]
    %v3979 = vld [vmem:[#allocation6 + $0x16c0] sm:$0xff]
    %v3980 = vld [vmem:[#allocation6 + $0x16c8] sm:$0xff]
    %v3981 = vld [vmem:[#allocation6 + $0x16d0] sm:$0xff]
    %v3982 = vld [vmem:[#allocation6 + $0x16d8] sm:$0xff]
    %v3983 = vld [vmem:[#allocation6 + $0x16e0] sm:$0xff]
    %v3984 = vld [vmem:[#allocation6 + $0x16e8] sm:$0xff]
    %v3985 = vld [vmem:[#allocation6 + $0x16f0] sm:$0xff]
    %v3986 = vld [vmem:[#allocation6 + $0x16f8] sm:$0xff]
    %v3987 = vld [vmem:[#allocation6 + $0x1700] sm:$0xff]
    %v3988 = vld [vmem:[#allocation6 + $0x1708] sm:$0xff]
    %v3989 = vld [vmem:[#allocation6 + $0x1710] sm:$0xff]
    %v3990 = vld [vmem:[#allocation6 + $0x1718] sm:$0xff]
    %v3991 = vld [vmem:[#allocation6 + $0x1720] sm:$0xff]
    %v3992 = vld [vmem:[#allocation6 + $0x1728] sm:$0xff]
    %v3993 = vld [vmem:[#allocation6 + $0x1730] sm:$0xff]
    %v3994 = vld [vmem:[#allocation6 + $0x1738] sm:$0xff]
    %v3995 = vld [vmem:[#allocation6 + $0x1740] sm:$0xff]
    %v3996 = vld [vmem:[#allocation6 + $0x1748] sm:$0xff]
    %v3997 = vld [vmem:[#allocation6 + $0x1750] sm:$0xff]
    %v3998 = vld [vmem:[#allocation6 + $0x1758] sm:$0xff]
    %v3999 = vld [vmem:[#allocation6 + $0x1760] sm:$0xff]
    %v4000 = vld [vmem:[#allocation6 + $0x1768] sm:$0xff]
    %v4001 = vld [vmem:[#allocation6 + $0x1770] sm:$0xff]
    %v4002 = vld [vmem:[#allocation6 + $0x1778] sm:$0xff]
    %v4003 = vld [vmem:[#allocation6 + $0x1780] sm:$0xff]
    %v4004 = vld [vmem:[#allocation6 + $0x1788] sm:$0xff]
    %v4005 = vld [vmem:[#allocation6 + $0x1790] sm:$0xff]
    %v4006 = vld [vmem:[#allocation6 + $0x1798] sm:$0xff]
    %v4007 = vld [vmem:[#allocation6 + $0x17a0] sm:$0xff]
    %v4008 = vld [vmem:[#allocation6 + $0x17a8] sm:$0xff]
    %v4009 = vld [vmem:[#allocation6 + $0x17b0] sm:$0xff]
    %v4010 = vld [vmem:[#allocation6 + $0x17b8] sm:$0xff]
    %v4011 = vld [vmem:[#allocation6 + $0x17c0] sm:$0xff]
    %v4012 = vld [vmem:[#allocation6 + $0x17c8] sm:$0xff]
    %v4013 = vld [vmem:[#allocation6 + $0x17d0] sm:$0xff]
    %v4014 = vld [vmem:[#allocation6 + $0x17d8] sm:$0xff]
    %v4015 = vld [vmem:[#allocation6 + $0x17e0] sm:$0xff]
    %v4016 = vld [vmem:[#allocation6 + $0x17e8] sm:$0xff]
    %v4017 = vld [vmem:[#allocation6 + $0x17f0] sm:$0xff]
    %v4018 = vld [vmem:[#allocation6 + $0x17f8] sm:$0xff]
    %v4019 = vld [vmem:[#allocation6 + $0x1800] sm:$0xff]
    %v4020 = vld [vmem:[#allocation6 + $0x1808] sm:$0xff]
    %v4021 = vld [vmem:[#allocation6 + $0x1810] sm:$0xff]
    %v4022 = vld [vmem:[#allocation6 + $0x1818] sm:$0xff]
    %v4023 = vld [vmem:[#allocation6 + $0x1820] sm:$0xff]
    %v4024 = vld [vmem:[#allocation6 + $0x1828] sm:$0xff]
    %v4025 = vld [vmem:[#allocation6 + $0x1830] sm:$0xff]
    %v4026 = vld [vmem:[#allocation6 + $0x1838] sm:$0xff]
    %v4027 = vld [vmem:[#allocation6 + $0x1840] sm:$0xff]
    %v4028 = vld [vmem:[#allocation6 + $0x1848] sm:$0xff]
    %v4029 = vld [vmem:[#allocation6 + $0x1850] sm:$0xff]
    %v4030 = vld [vmem:[#allocation6 + $0x1858] sm:$0xff]
    %v4031 = vld [vmem:[#allocation6 + $0x1860] sm:$0xff]
    %v4032 = vld [vmem:[#allocation6 + $0x1868] sm:$0xff]
    %v4033 = vld [vmem:[#allocation6 + $0x1870] sm:$0xff]
    %v4034 = vld [vmem:[#allocation6 + $0x1878] sm:$0xff]
    %v4035 = vld [vmem:[#allocation6 + $0x1880] sm:$0xff]
    %v4036 = vld [vmem:[#allocation6 + $0x1888] sm:$0xff]
    %v4037 = vld [vmem:[#allocation6 + $0x1890] sm:$0xff]
    %v4038 = vld [vmem:[#allocation6 + $0x1898] sm:$0xff]
    %v4039 = vld [vmem:[#allocation6 + $0x18a0] sm:$0xff]
    %v4040 = vld [vmem:[#allocation6 + $0x18a8] sm:$0xff]
    %v4041 = vld [vmem:[#allocation6 + $0x18b0] sm:$0xff]
    %v4042 = vld [vmem:[#allocation6 + $0x18b8] sm:$0xff]
    %v4043 = vld [vmem:[#allocation6 + $0x18c0] sm:$0xff]
    %v4044 = vld [vmem:[#allocation6 + $0x18c8] sm:$0xff]
    %v4045 = vld [vmem:[#allocation6 + $0x18d0] sm:$0xff]
    %v4046 = vld [vmem:[#allocation6 + $0x18d8] sm:$0xff]
    %v4047 = vld [vmem:[#allocation6 + $0x18e0] sm:$0xff]
    %v4048 = vld [vmem:[#allocation6 + $0x18e8] sm:$0xff]
    %v4049 = vld [vmem:[#allocation6 + $0x18f0] sm:$0xff]
    %v4050 = vld [vmem:[#allocation6 + $0x18f8] sm:$0xff]
    %v4051 = vld [vmem:[#allocation6 + $0x1900] sm:$0xff]
    %v4052 = vld [vmem:[#allocation6 + $0x1908] sm:$0xff]
    %v4053 = vld [vmem:[#allocation6 + $0x1910] sm:$0xff]
    %v4054 = vld [vmem:[#allocation6 + $0x1918] sm:$0xff]
    %v4055 = vld [vmem:[#allocation6 + $0x1920] sm:$0xff]
    %v4056 = vld [vmem:[#allocation6 + $0x1928] sm:$0xff]
    %v4057 = vld [vmem:[#allocation6 + $0x1930] sm:$0xff]
    %v4058 = vld [vmem:[#allocation6 + $0x1938] sm:$0xff]
    %v4059 = vld [vmem:[#allocation6 + $0x1940] sm:$0xff]
    %v4060 = vld [vmem:[#allocation6 + $0x1948] sm:$0xff]
    %v4061 = vld [vmem:[#allocation6 + $0x1950] sm:$0xff]
    %v4062 = vld [vmem:[#allocation6 + $0x1958] sm:$0xff]
    %v4063 = vld [vmem:[#allocation6 + $0x1960] sm:$0xff]
    %v4064 = vld [vmem:[#allocation6 + $0x1968] sm:$0xff]
    %v4065 = vld [vmem:[#allocation6 + $0x1970] sm:$0xff]
    %v4066 = vld [vmem:[#allocation6 + $0x1978] sm:$0xff]
    %v4067 = vld [vmem:[#allocation6 + $0x1980] sm:$0xff]
    %v4068 = vld [vmem:[#allocation6 + $0x1988] sm:$0xff]
    %v4069 = vld [vmem:[#allocation6 + $0x1990] sm:$0xff]
    %v4070 = vld [vmem:[#allocation6 + $0x1998] sm:$0xff]
    %v4071 = vld [vmem:[#allocation6 + $0x19a0] sm:$0xff]
    %v4072 = vld [vmem:[#allocation6 + $0x19a8] sm:$0xff]
    %v4073 = vld [vmem:[#allocation6 + $0x19b0] sm:$0xff]
    %v4074 = vld [vmem:[#allocation6 + $0x19b8] sm:$0xff]
    %v4075 = vld [vmem:[#allocation6 + $0x19c0] sm:$0xff]
    %v4076 = vld [vmem:[#allocation6 + $0x19c8] sm:$0xff]
    %v4077 = vld [vmem:[#allocation6 + $0x19d0] sm:$0xff]
    %v4078 = vld [vmem:[#allocation6 + $0x19d8] sm:$0xff]
    %v4079 = vld [vmem:[#allocation6 + $0x19e0] sm:$0xff]
    %v4080 = vld [vmem:[#allocation6 + $0x19e8] sm:$0xff]
    %v4081 = vld [vmem:[#allocation6 + $0x19f0] sm:$0xff]
    %v4082 = vld [vmem:[#allocation6 + $0x19f8] sm:$0xff]
    %v4083 = vld [vmem:[#allocation6 + $0x1a00] sm:$0xff]
    %v4084 = vld [vmem:[#allocation6 + $0x1a08] sm:$0xff]
    %v4085 = vld [vmem:[#allocation6 + $0x1a10] sm:$0xff]
    %v4086 = vld [vmem:[#allocation6 + $0x1a18] sm:$0xff]
    %v4087 = vld [vmem:[#allocation6 + $0x1a20] sm:$0xff]
    %v4088 = vld [vmem:[#allocation6 + $0x1a28] sm:$0xff]
    %v4089 = vld [vmem:[#allocation6 + $0x1a30] sm:$0xff]
    %v4090 = vld [vmem:[#allocation6 + $0x1a38] sm:$0xff]
    %v4091 = vld [vmem:[#allocation6 + $0x1a40] sm:$0xff]
    %v4092 = vld [vmem:[#allocation6 + $0x1a48] sm:$0xff]
    %v4093 = vld [vmem:[#allocation6 + $0x1a50] sm:$0xff]
    %v4094 = vld [vmem:[#allocation6 + $0x1a58] sm:$0xff]
    %v4095 = vld [vmem:[#allocation6 + $0x1a60] sm:$0xff]
    %v4096 = vld [vmem:[#allocation6 + $0x1a68] sm:$0xff]
    %v4097 = vld [vmem:[#allocation6 + $0x1a70] sm:$0xff]
    %v4098 = vld [vmem:[#allocation6 + $0x1a78] sm:$0xff]
    %v4099 = vld [vmem:[#allocation6 + $0x1a80] sm:$0xff]
    %v4100 = vld [vmem:[#allocation6 + $0x1a88] sm:$0xff]
    %v4101 = vld [vmem:[#allocation6 + $0x1a90] sm:$0xff]
    %v4102 = vld [vmem:[#allocation6 + $0x1a98] sm:$0xff]
    %v4103 = vld [vmem:[#allocation6 + $0x1aa0] sm:$0xff]
    %v4104 = vld [vmem:[#allocation6 + $0x1aa8] sm:$0xff]
    %v4105 = vld [vmem:[#allocation6 + $0x1ab0] sm:$0xff]
    %v4106 = vld [vmem:[#allocation6 + $0x1ab8] sm:$0xff]
    %v4107 = vld [vmem:[#allocation6 + $0x1ac0] sm:$0xff]
    %v4108 = vld [vmem:[#allocation6 + $0x1ac8] sm:$0xff]
    %v4109 = vld [vmem:[#allocation6 + $0x1ad0] sm:$0xff]
    %v4110 = vld [vmem:[#allocation6 + $0x1ad8] sm:$0xff]
    %v4111 = vld [vmem:[#allocation6 + $0x1ae0] sm:$0xff]
    %v4112 = vld [vmem:[#allocation6 + $0x1ae8] sm:$0xff]
    %v4113 = vld [vmem:[#allocation6 + $0x1af0] sm:$0xff]
    %v4114 = vld [vmem:[#allocation6 + $0x1af8] sm:$0xff]
    %v4115 = vld [vmem:[#allocation6 + $0x1b00] sm:$0xff]
    %v4116 = vld [vmem:[#allocation6 + $0x1b08] sm:$0xff]
    %v4117 = vld [vmem:[#allocation6 + $0x1b10] sm:$0xff]
    %v4118 = vld [vmem:[#allocation6 + $0x1b18] sm:$0xff]
    %v4119 = vld [vmem:[#allocation6 + $0x1b20] sm:$0xff]
    %v4120 = vld [vmem:[#allocation6 + $0x1b28] sm:$0xff]
    %v4121 = vld [vmem:[#allocation6 + $0x1b30] sm:$0xff]
    %v4122 = vld [vmem:[#allocation6 + $0x1b38] sm:$0xff]
    %v4123 = vld [vmem:[#allocation6 + $0x1b40] sm:$0xff]
    %v4124 = vld [vmem:[#allocation6 + $0x1b48] sm:$0xff]
    %v4125 = vld [vmem:[#allocation6 + $0x1b50] sm:$0xff]
    %v4126 = vld [vmem:[#allocation6 + $0x1b58] sm:$0xff]
    %v4127 = vld [vmem:[#allocation6 + $0x1b60] sm:$0xff]
    %v4128 = vld [vmem:[#allocation6 + $0x1b68] sm:$0xff]
    %v4129 = vld [vmem:[#allocation6 + $0x1b70] sm:$0xff]
    %v4130 = vld [vmem:[#allocation6 + $0x1b78] sm:$0xff]
    %v4131 = vld [vmem:[#allocation6 + $0x1b80] sm:$0xff]
    %v4132 = vld [vmem:[#allocation6 + $0x1b88] sm:$0xff]
    %v4133 = vld [vmem:[#allocation6 + $0x1b90] sm:$0xff]
    %v4134 = vld [vmem:[#allocation6 + $0x1b98] sm:$0xff]
    %v4135 = vld [vmem:[#allocation6 + $0x1ba0] sm:$0xff]
    %v4136 = vld [vmem:[#allocation6 + $0x1ba8] sm:$0xff]
    %v4137 = vld [vmem:[#allocation6 + $0x1bb0] sm:$0xff]
    %v4138 = vld [vmem:[#allocation6 + $0x1bb8] sm:$0xff]
    %v4139 = vld [vmem:[#allocation6 + $0x1bc0] sm:$0xff]
    %v4140 = vld [vmem:[#allocation6 + $0x1bc8] sm:$0xff]
    %v4141 = vld [vmem:[#allocation6 + $0x1bd0] sm:$0xff]
    %v4142 = vld [vmem:[#allocation6 + $0x1bd8] sm:$0xff]
    %v4143 = vld [vmem:[#allocation6 + $0x1be0] sm:$0xff]
    %v4144 = vld [vmem:[#allocation6 + $0x1be8] sm:$0xff]
    %v4145 = vld [vmem:[#allocation6 + $0x1bf0] sm:$0xff]
    %v4146 = vld [vmem:[#allocation6 + $0x1bf8] sm:$0xff]
    %v4147 = vld [vmem:[#allocation6 + $0x1c00] sm:$0xff]
    %v4148 = vld [vmem:[#allocation6 + $0x1c08] sm:$0xff]
    %v4149 = vld [vmem:[#allocation6 + $0x1c10] sm:$0xff]
    %v4150 = vld [vmem:[#allocation6 + $0x1c18] sm:$0xff]
    %v4151 = vld [vmem:[#allocation6 + $0x1c20] sm:$0xff]
    %v4152 = vld [vmem:[#allocation6 + $0x1c28] sm:$0xff]
    %v4153 = vld [vmem:[#allocation6 + $0x1c30] sm:$0xff]
    %v4154 = vld [vmem:[#allocation6 + $0x1c38] sm:$0xff]
    %v4155 = vld [vmem:[#allocation6 + $0x1c40] sm:$0xff]
    %v4156 = vld [vmem:[#allocation6 + $0x1c48] sm:$0xff]
    %v4157 = vld [vmem:[#allocation6 + $0x1c50] sm:$0xff]
    %v4158 = vld [vmem:[#allocation6 + $0x1c58] sm:$0xff]
    %v4159 = vld [vmem:[#allocation6 + $0x1c60] sm:$0xff]
    %v4160 = vld [vmem:[#allocation6 + $0x1c68] sm:$0xff]
    %v4161 = vld [vmem:[#allocation6 + $0x1c70] sm:$0xff]
    %v4162 = vld [vmem:[#allocation6 + $0x1c78] sm:$0xff]
    %v4163 = vld [vmem:[#allocation6 + $0x1c80] sm:$0xff]
    %v4164 = vld [vmem:[#allocation6 + $0x1c88] sm:$0xff]
    %v4165 = vld [vmem:[#allocation6 + $0x1c90] sm:$0xff]
    %v4166 = vld [vmem:[#allocation6 + $0x1c98] sm:$0xff]
    %v4167 = vld [vmem:[#allocation6 + $0x1ca0] sm:$0xff]
    %v4168 = vld [vmem:[#allocation6 + $0x1ca8] sm:$0xff]
    %v4169 = vld [vmem:[#allocation6 + $0x1cb0] sm:$0xff]
    %v4170 = vld [vmem:[#allocation6 + $0x1cb8] sm:$0xff]
    %v4171 = vld [vmem:[#allocation6 + $0x1cc0] sm:$0xff]
    %v4172 = vld [vmem:[#allocation6 + $0x1cc8] sm:$0xff]
    %v4173 = vld [vmem:[#allocation6 + $0x1cd0] sm:$0xff]
    %v4174 = vld [vmem:[#allocation6 + $0x1cd8] sm:$0xff]
    %v4175 = vld [vmem:[#allocation6 + $0x1ce0] sm:$0xff]
    %v4176 = vld [vmem:[#allocation6 + $0x1ce8] sm:$0xff]
    %v4177 = vld [vmem:[#allocation6 + $0x1cf0] sm:$0xff]
    %v4178 = vld [vmem:[#allocation6 + $0x1cf8] sm:$0xff]
    %v4179 = vld [vmem:[#allocation6 + $0x1d00] sm:$0xff]
    %v4180 = vld [vmem:[#allocation6 + $0x1d08] sm:$0xff]
    %v4181 = vld [vmem:[#allocation6 + $0x1d10] sm:$0xff]
    %v4182 = vld [vmem:[#allocation6 + $0x1d18] sm:$0xff]
    %v4183 = vld [vmem:[#allocation6 + $0x1d20] sm:$0xff]
    %v4184 = vld [vmem:[#allocation6 + $0x1d28] sm:$0xff]
    %v4185 = vld [vmem:[#allocation6 + $0x1d30] sm:$0xff]
    %v4186 = vld [vmem:[#allocation6 + $0x1d38] sm:$0xff]
    %v4187 = vld [vmem:[#allocation6 + $0x1d40] sm:$0xff]
    %v4188 = vld [vmem:[#allocation6 + $0x1d48] sm:$0xff]
    %v4189 = vld [vmem:[#allocation6 + $0x1d50] sm:$0xff]
    %v4190 = vld [vmem:[#allocation6 + $0x1d58] sm:$0xff]
    %v4191 = vld [vmem:[#allocation6 + $0x1d60] sm:$0xff]
    %v4192 = vld [vmem:[#allocation6 + $0x1d68] sm:$0xff]
    %v4193 = vld [vmem:[#allocation6 + $0x1d70] sm:$0xff]
    %v4194 = vld [vmem:[#allocation6 + $0x1d78] sm:$0xff]
    %v4195 = vld [vmem:[#allocation6 + $0x1d80] sm:$0xff]
    %v4196 = vld [vmem:[#allocation6 + $0x1d88] sm:$0xff]
    %v4197 = vld [vmem:[#allocation6 + $0x1d90] sm:$0xff]
    %v4198 = vld [vmem:[#allocation6 + $0x1d98] sm:$0xff]
    %v4199 = vld [vmem:[#allocation6 + $0x1da0] sm:$0xff]
    %v4200 = vld [vmem:[#allocation6 + $0x1da8] sm:$0xff]
    %v4201 = vld [vmem:[#allocation6 + $0x1db0] sm:$0xff]
    %v4202 = vld [vmem:[#allocation6 + $0x1db8] sm:$0xff]
    %v4203 = vld [vmem:[#allocation6 + $0x1dc0] sm:$0xff]
    %v4204 = vld [vmem:[#allocation6 + $0x1dc8] sm:$0xff]
    %v4205 = vld [vmem:[#allocation6 + $0x1dd0] sm:$0xff]
    %v4206 = vld [vmem:[#allocation6 + $0x1dd8] sm:$0xff]
    %v4207 = vld [vmem:[#allocation6 + $0x1de0] sm:$0xff]
    %v4208 = vld [vmem:[#allocation6 + $0x1de8] sm:$0xff]
    %v4209 = vld [vmem:[#allocation6 + $0x1df0] sm:$0xff]
    %v4210 = vld [vmem:[#allocation6 + $0x1df8] sm:$0xff]
    %v4211 = vld [vmem:[#allocation7] sm:$0xf]
    %v4213 = vlaneseq
    %v4214 = vshrl.u32 %v4213, 7
    %v4215 = vsub.s32 0, %v4214
    %v4216 = vrot.slane %v4211, %v4215
    %v4217 = vlaneseq
    %v4218 = vshrl.u32 %v4217, 7
    %v4219 = vsub.s32 1, %v4218
    %v4220 = vrot.slane %v4211, %v4219
    %v4221 = vlaneseq
    %v4222 = vshrl.u32 %v4221, 7
    %v4223 = vsub.s32 2, %v4222
    %v4224 = vrot.slane %v4211, %v4223
    %v4225 = vlaneseq
    %v4226 = vshrl.u32 %v4225, 7
    %v4227 = vsub.s32 3, %v4226
    %v4228 = vrot.slane %v4211, %v4227
    %4233 = vmatprep.subr.mxu0 %v3252
    %4234 = vmatpush1.msra.mxu0 %v3251
    %4235 = vmatprep.subr.mxu0 %v3256
    %4236 = vmatpush1.msra.mxu0 %v3255
    %4237 = vmatprep.subr.mxu0 %v3260
    %4238 = vmatpush1.msra.mxu0 %v3259
    %4239 = vmatprep.subr.mxu0 %v3264
    %4240 = vmatpush1.msra.mxu0 %v3263
    %4241 = vmatprep.subr.mxu0 %v3268
    %4242 = vmatpush1.msra.mxu0 %v3267
    %4243 = vmatprep.subr.mxu0 %v3272
    %4244 = vmatpush1.msra.mxu0 %v3271
    %4245 = vmatprep.subr.mxu0 %v3276
    %4246 = vmatpush1.msra.mxu0 %v3275
    %4247 = vmatprep.subr.mxu0 %v3280
    %4248 = vmatpush1.msra.mxu0 %v3279
    %4249 = vmatprep.subr.mxu0 %v3284
    %4250 = vmatpush1.msra.mxu0 %v3283
    %4251 = vmatprep.subr.mxu0 %v3288
    %4252 = vmatpush1.msra.mxu0 %v3287
    %4253 = vmatprep.subr.mxu0 %v3292
    %4254 = vmatpush1.msra.mxu0 %v3291
    %4255 = vmatprep.subr.mxu0 %v3296
    %4256 = vmatpush1.msra.mxu0 %v3295
    %4257 = vmatprep.subr.mxu0 %v3300
    %4258 = vmatpush1.msra.mxu0 %v3299
    %4259 = vmatprep.subr.mxu0 %v3304
    %4260 = vmatpush1.msra.mxu0 %v3303
    %4261 = vmatprep.subr.mxu0 %v3308
    %4262 = vmatpush1.msra.mxu0 %v3307
    %4263 = vmatprep.subr.mxu0 %v3312
    %4264 = vmatpush1.msra.mxu0 %v3311
    %4265 = vmatprep.subr.mxu0 %v3316
    %4266 = vmatpush1.msra.mxu0 %v3315
    %4267 = vmatprep.subr.mxu0 %v3320
    %4268 = vmatpush1.msra.mxu0 %v3319
    %4269 = vmatprep.subr.mxu0 %v3324
    %4270 = vmatpush1.msra.mxu0 %v3323
    %4271 = vmatprep.subr.mxu0 %v3328
    %4272 = vmatpush1.msra.mxu0 %v3327
    %4273 = vmatprep.subr.mxu0 %v3332
    %4274 = vmatpush1.msra.mxu0 %v3331
    %4275 = vmatprep.subr.mxu0 %v3336
    %4276 = vmatpush1.msra.mxu0 %v3335
    %4277 = vmatprep.subr.mxu0 %v3340
    %4278 = vmatpush1.msra.mxu0 %v3339
    %4279 = vmatprep.subr.mxu0 %v3344
    %4280 = vmatpush1.msra.mxu0 %v3343
    %4281 = vmatprep.subr.mxu0 %v3348
    %4282 = vmatpush1.msra.mxu0 %v3347
    %4283 = vmatprep.subr.mxu0 %v3352
    %4284 = vmatpush1.msra.mxu0 %v3351
    %4285 = vmatprep.subr.mxu0 %v3356
    %4286 = vmatpush1.msra.mxu0 %v3355
    %4287 = vmatprep.subr.mxu0 %v3360
    %4288 = vmatpush1.msra.mxu0 %v3359
    %4289 = vmatprep.subr.mxu0 %v3364
    %4290 = vmatpush1.msra.mxu0 %v3363
    %4291 = vmatprep.subr.mxu0 %v3368
    %4292 = vmatpush1.msra.mxu0 %v3367
    %4293 = vmatprep.subr.mxu0 %v3372
    %4294 = vmatpush1.msra.mxu0 %v3371
    %4295 = vmatprep.subr.mxu0 %v3376
    %4296 = vmatpush1.msra.mxu0 %v3375
    %4297 = vmatprep.mubr.f32.mxu0 %v2772
    %4298 = vmatmul.mubr.f32.gmra.mrb[0].mxu0 %v2771
    %v4299 = vpop.f32.mrb[0].mxu0
    %v4300 = vadd.f32 %v4216, %v4299
    %v4301 = vpop.f32.mrb[0].mxu0
    %v4302 = vadd.f32 %v4220, %v4301
    %4303 = vmatprep.mubr.f32.mxu0 %v2778
    %4304 = vmatmul.mubr.f32.gmra.mrb[0].mxu0 %v2777
    %v4305 = vpop.f32.mrb[0].mxu0
    %v4306 = vadd.f32 %v4216, %v4305
    %v4307 = vpop.f32.mrb[0].mxu0
    %v4308 = vadd.f32 %v4220, %v4307
    %4309 = vmatprep.mubr.f32.mxu0 %v2784
    %4310 = vmatmul.mubr.f32.gmra.mrb[0].mxu0 %v2783
    %v4311 = vpop.f32.mrb[0].mxu0
    %v4312 = vadd.f32 %v4216, %v4311
    %v4313 = vpop.f32.mrb[0].mxu0
    %v4314 = vadd.f32 %v4220, %v4313
    %4315 = vmatprep.mubr.f32.mxu0 %v2790
    %4316 = vmatmul.mubr.f32.gmra.mrb[0].mxu0 %v2789
    %v4317 = vpop.f32.mrb[0].mxu0
    %v4318 = vadd.f32 %v4216, %v4317
    %v4319 = vpop.f32.mrb[0].mxu0
    %v4320 = vadd.f32 %v4220, %v4319
    %4321 = vmatprep.mubr.f32.mxu0 %v2796
    %4322 = vmatmul.mubr.f32.gmra.mrb[0].mxu0 %v2795
    %v4323 = vpop.f32.mrb[0].mxu0
    %v4324 = vadd.f32 %v4216, %v4323
    %v4325 = vpop.f32.mrb[0].mxu0
    %v4326 = vadd.f32 %v4220, %v4325
    %4327 = vmatprep.mubr.f32.mxu0 %v2802
    %4328 = vmatmul.mubr.f32.gmra.mrb[0].mxu0 %v2801
    %v4329 = vpop.f32.mrb[0].mxu0
    %v4330 = vadd.f32 %v4216, %v4329
    %v4331 = vpop.f32.mrb[0].mxu0
    %v4332 = vadd.f32 %v4220, %v4331
    %4333 = vmatprep.mubr.f32.mxu0 %v2808
    %4334 = vmatmul.mubr.f32.gmra.mrb[0].mxu0 %v2807
    %v4335 = vpop.f32.mrb[0].mxu0
    %v4336 = vadd.f32 %v4216, %v4335
    %v4337 = vpop.f32.mrb[0].mxu0
    %v4338 = vadd.f32 %v4220, %v4337
    %4339 = vmatprep.mubr.f32.mxu0 %v2814
    %4340 = vmatmul.mubr.f32.gmra.mrb[0].mxu0 %v2813
    %v4341 = vpop.f32.mrb[0].mxu0
    %v4342 = vadd.f32 %v4216, %v4341
    %v4343 = vpop.f32.mrb[0].mxu0
    %v4344 = vadd.f32 %v4220, %v4343
    %4345 = vdwg.mxu0
    %4346 = vmatprep.subr.mxu0 %v3380
    %4347 = vmatpush1.msra.mxu0 %v3379
    %4348 = vmatprep.subr.mxu0 %v3384
    %4349 = vmatpush1.msra.mxu0 %v3383
    %4350 = vmatprep.subr.mxu0 %v3388
    %4351 = vmatpush1.msra.mxu0 %v3387
    %4352 = vmatprep.subr.mxu0 %v3392
    %4353 = vmatpush1.msra.mxu0 %v3391
    %4354 = vmatprep.subr.mxu0 %v3396
    %4355 = vmatpush1.msra.mxu0 %v3395
    %4356 = vmatprep.subr.mxu0 %v3400
    %4357 = vmatpush1.msra.mxu0 %v3399
    %4358 = vmatprep.subr.mxu0 %v3404
    %4359 = vmatpush1.msra.mxu0 %v3403
    %4360 = vmatprep.subr.mxu0 %v3408
    %4361 = vmatpush1.msra.mxu0 %v3407
    %4362 = vmatprep.subr.mxu0 %v3412
    %4363 = vmatpush1.msra.mxu0 %v3411
    %4364 = vmatprep.subr.mxu0 %v3416
    %4365 = vmatpush1.msra.mxu0 %v3415
    %4366 = vmatprep.subr.mxu0 %v3420
    %4367 = vmatpush1.msra.mxu0 %v3419
    %4368 = vmatprep.subr.mxu0 %v3424
    %4369 = vmatpush1.msra.mxu0 %v3423
    %4370 = vmatprep.subr.mxu0 %v3428
    %4371 = vmatpush1.msra.mxu0 %v3427
    %4372 = vmatprep.subr.mxu0 %v3432
    %4373 = vmatpush1.msra.mxu0 %v3431
    %4374 = vmatprep.subr.mxu0 %v3436
    %4375 = vmatpush1.msra.mxu0 %v3435
    %4376 = vmatprep.subr.mxu0 %v3440
    %4377 = vmatpush1.msra.mxu0 %v3439
    %4378 = vmatprep.subr.mxu0 %v3444
    %4379 = vmatpush1.msra.mxu0 %v3443
    %4380 = vmatprep.subr.mxu0 %v3448
    %4381 = vmatpush1.msra.mxu0 %v3447
    %4382 = vmatprep.subr.mxu0 %v3452
    %4383 = vmatpush1.msra.mxu0 %v3451
    %4384 = vmatprep.subr.mxu0 %v3456
    %4385 = vmatpush1.msra.mxu0 %v3455
    %4386 = vmatprep.subr.mxu0 %v3460
    %4387 = vmatpush1.msra.mxu0 %v3459
    %4388 = vmatprep.subr.mxu0 %v3464
    %4389 = vmatpush1.msra.mxu0 %v3463
    %4390 = vmatprep.subr.mxu0 %v3468
    %4391 = vmatpush1.msra.mxu0 %v3467
    %4392 = vmatprep.subr.mxu0 %v3472
    %4393 = vmatpush1.msra.mxu0 %v3471
    %4394 = vmatprep.subr.mxu0 %v3476
    %4395 = vmatpush1.msra.mxu0 %v3475
    %4396 = vmatprep.subr.mxu0 %v3480
    %4397 = vmatpush1.msra.mxu0 %v3479
    %4398 = vmatprep.subr.mxu0 %v3484
    %4399 = vmatpush1.msra.mxu0 %v3483
    %4400 = vmatprep.subr.mxu0 %v3488
    %4401 = vmatpush1.msra.mxu0 %v3487
    %4402 = vmatprep.subr.mxu0 %v3492
    %4403 = vmatpush1.msra.mxu0 %v3491
    %4404 = vmatprep.subr.mxu0 %v3496
    %4405 = vmatpush1.msra.mxu0 %v3495
    %4406 = vmatprep.subr.mxu0 %v3500
    %4407 = vmatpush1.msra.mxu0 %v3499
    %4408 = vmatprep.subr.mxu0 %v3504
    %4409 = vmatpush1.msra.mxu0 %v3503
    %4410 = vmatprep.mubr.f32.mxu0 %v2869
    %4411 = vmatmul.mubr.f32.gmra.mrb[0].mxu0 %v2773
    %v4412 = vpop.f32.mrb[0].mxu0
    %v4413 = vadd.f32 %v4300, %v4412
    %v4414 = vpop.f32.mrb[0].mxu0
    %v4415 = vadd.f32 %v4302, %v4414
    %4416 = vmatprep.mubr.f32.mxu0 %v2878
    %4417 = vmatmul.mubr.f32.gmra.mrb[0].mxu0 %v2779
    %v4418 = vpop.f32.mrb[0].mxu0
    %v4419 = vadd.f32 %v4306, %v4418
    %v4420 = vpop.f32.mrb[0].mxu0
    %v4421 = vadd.f32 %v4308, %v4420
    %4422 = vmatprep.mubr.f32.mxu0 %v2887
    %4423 = vmatmul.mubr.f32.gmra.mrb[0].mxu0 %v2785
    %v4424 = vpop.f32.mrb[0].mxu0
    %v4425 = vadd.f32 %v4312, %v4424
    %v4426 = vpop.f32.mrb[0].mxu0
    %v4427 = vadd.f32 %v4314, %v4426
    %4428 = vmatprep.mubr.f32.mxu0 %v2896
    %4429 = vmatmul.mubr.f32.gmra.mrb[0].mxu0 %v2791
    %v4430 = vpop.f32.mrb[0].mxu0
    %v4431 = vadd.f32 %v4318, %v4430
    %v4432 = vpop.f32.mrb[0].mxu0
    %v4433 = vadd.f32 %v4320, %v4432
    %4434 = vmatprep.mubr.f32.mxu0 %v2905
    %4435 = vmatmul.mubr.f32.gmra.mrb[0].mxu0 %v2797
    %v4436 = vpop.f32.mrb[0].mxu0
    %v4437 = vadd.f32 %v4324, %v4436
    %v4438 = vpop.f32.mrb[0].mxu0
    %v4439 = vadd.f32 %v4326, %v4438
    %4440 = vmatprep.mubr.f32.mxu0 %v2914
    %4441 = vmatmul.mubr.f32.gmra.mrb[0].mxu0 %v2803
    %v4442 = vpop.f32.mrb[0].mxu0
    %v4443 = vadd.f32 %v4330, %v4442
    %v4444 = vpop.f32.mrb[0].mxu0
    %v4445 = vadd.f32 %v4332, %v4444
    %4446 = vmatprep.mubr.f32.mxu0 %v2923
    %4447 = vmatmul.mubr.f32.gmra.mrb[0].mxu0 %v2809
    %v4448 = vpop.f32.mrb[0].mxu0
    %v4449 = vadd.f32 %v4336, %v4448
    %v4450 = vpop.f32.mrb[0].mxu0
    %v4451 = vadd.f32 %v4338, %v4450
    %4452 = vmatprep.mubr.f32.mxu0 %v2932
    %4453 = vmatmul.mubr.f32.gmra.mrb[0].mxu0 %v2815
    %v4454 = vpop.f32.mrb[0].mxu0
    %v4455 = vadd.f32 %v4342, %v4454
    %v4456 = vpop.f32.mrb[0].mxu0
    %v4457 = vadd.f32 %v4344, %v4456
    %4458 = vdwg.mxu0
    %4459 = vmatprep.subr.mxu0 %v3508
    %4460 = vmatpush1.msra.mxu0 %v3507
    %4461 = vmatprep.subr.mxu0 %v3512
    %4462 = vmatpush1.msra.mxu0 %v3511
    %4463 = vmatprep.subr.mxu0 %v3516
    %4464 = vmatpush1.msra.mxu0 %v3515
    %4465 = vmatprep.subr.mxu0 %v3520
    %4466 = vmatpush1.msra.mxu0 %v3519
    %4467 = vmatprep.subr.mxu0 %v3524
    %4468 = vmatpush1.msra.mxu0 %v3523
    %4469 = vmatprep.subr.mxu0 %v3528
    %4470 = vmatpush1.msra.mxu0 %v3527
    %4471 = vmatprep.subr.mxu0 %v3532
    %4472 = vmatpush1.msra.mxu0 %v3531
    %4473 = vmatprep.subr.mxu0 %v3536
    %4474 = vmatpush1.msra.mxu0 %v3535
    %4475 = vmatprep.subr.mxu0 %v3540
    %4476 = vmatpush1.msra.mxu0 %v3539
    %4477 = vmatprep.subr.mxu0 %v3544
    %4478 = vmatpush1.msra.mxu0 %v3543
    %4479 = vmatprep.subr.mxu0 %v3548
    %4480 = vmatpush1.msra.mxu0 %v3547
    %4481 = vmatprep.subr.mxu0 %v3552
    %4482 = vmatpush1.msra.mxu0 %v3551
    %4483 = vmatprep.subr.mxu0 %v3556
    %4484 = vmatpush1.msra.mxu0 %v3555
    %4485 = vmatprep.subr.mxu0 %v3560
    %4486 = vmatpush1.msra.mxu0 %v3559
    %4487 = vmatprep.subr.mxu0 %v3564
    %4488 = vmatpush1.msra.mxu0 %v3563
    %4489 = vmatprep.subr.mxu0 %v3568
    %4490 = vmatpush1.msra.mxu0 %v3567
    %4491 = vmatprep.subr.mxu0 %v3572
    %4492 = vmatpush1.msra.mxu0 %v3571
    %4493 = vmatprep.subr.mxu0 %v3576
    %4494 = vmatpush1.msra.mxu0 %v3575
    %4495 = vmatprep.subr.mxu0 %v3580
    %4496 = vmatpush1.msra.mxu0 %v3579
    %4497 = vmatprep.subr.mxu0 %v3584
    %4498 = vmatpush1.msra.mxu0 %v3583
    %4499 = vmatprep.subr.mxu0 %v3588
    %4500 = vmatpush1.msra.mxu0 %v3587
    %4501 = vmatprep.subr.mxu0 %v3592
    %4502 = vmatpush1.msra.mxu0 %v3591
    %4503 = vmatprep.subr.mxu0 %v3596
    %4504 = vmatpush1.msra.mxu0 %v3595
    %4505 = vmatprep.subr.mxu0 %v3600
    %4506 = vmatpush1.msra.mxu0 %v3599
    %4507 = vmatprep.subr.mxu0 %v3604
    %4508 = vmatpush1.msra.mxu0 %v3603
    %4509 = vmatprep.subr.mxu0 %v3608
    %4510 = vmatpush1.msra.mxu0 %v3607
    %4511 = vmatprep.subr.mxu0 %v3612
    %4512 = vmatpush1.msra.mxu0 %v3611
    %4513 = vmatprep.subr.mxu0 %v3616
    %4514 = vmatpush1.msra.mxu0 %v3615
    %4515 = vmatprep.subr.mxu0 %v3620
    %4516 = vmatpush1.msra.mxu0 %v3619
    %4517 = vmatprep.subr.mxu0 %v3624
    %4518 = vmatpush1.msra.mxu0 %v3623
    %4519 = vmatprep.subr.mxu0 %v3628
    %4520 = vmatpush1.msra.mxu0 %v3627
    %4521 = vmatprep.subr.mxu0 %v3632
    %4522 = vmatpush1.msra.mxu0 %v3631
    %4523 = vmatprep.mubr.f32.mxu0 %v2875
    %4524 = vmatmul.mubr.f32.gmra.mrb[0].mxu0 %v2872
    %v4525 = vpop.f32.mrb[0].mxu0
    %v4526 = vadd.f32 %v4413, %v4525
    %v4527 = vpop.f32.mrb[0].mxu0
    %v4528 = vadd.f32 %v4415, %v4527
    %4529 = vmatprep.mubr.f32.mxu0 %v2884
    %4530 = vmatmul.mubr.f32.gmra.mrb[0].mxu0 %v2881
    %v4531 = vpop.f32.mrb[0].mxu0
    %v4532 = vadd.f32 %v4419, %v4531
    %v4533 = vpop.f32.mrb[0].mxu0
    %v4534 = vadd.f32 %v4421, %v4533
    %4535 = vmatprep.mubr.f32.mxu0 %v2893
    %4536 = vmatmul.mubr.f32.gmra.mrb[0].mxu0 %v2890
    %v4537 = vpop.f32.mrb[0].mxu0
    %v4538 = vadd.f32 %v4425, %v4537
    %v4539 = vpop.f32.mrb[0].mxu0
    %v4540 = vadd.f32 %v4427, %v4539
    %4541 = vmatprep.mubr.f32.mxu0 %v2902
    %4542 = vmatmul.mubr.f32.gmra.mrb[0].mxu0 %v2899
    %v4543 = vpop.f32.mrb[0].mxu0
    %v4544 = vadd.f32 %v4431, %v4543
    %v4545 = vpop.f32.mrb[0].mxu0
    %v4546 = vadd.f32 %v4433, %v4545
    %4547 = vmatprep.mubr.f32.mxu0 %v2911
    %4548 = vmatmul.mubr.f32.gmra.mrb[0].mxu0 %v2908
    %v4549 = vpop.f32.mrb[0].mxu0
    %v4550 = vadd.f32 %v4437, %v4549
    %v4551 = vpop.f32.mrb[0].mxu0
    %v4552 = vadd.f32 %v4439, %v4551
    %4553 = vmatprep.mubr.f32.mxu0 %v2920
    %4554 = vmatmul.mubr.f32.gmra.mrb[0].mxu0 %v2917
    %v4555 = vpop.f32.mrb[0].mxu0
    %v4556 = vadd.f32 %v4443, %v4555
    %v4557 = vpop.f32.mrb[0].mxu0
    %v4558 = vadd.f32 %v4445, %v4557
    %4559 = vmatprep.mubr.f32.mxu0 %v2929
    %4560 = vmatmul.mubr.f32.gmra.mrb[0].mxu0 %v2926
    %v4561 = vpop.f32.mrb[0].mxu0
    %v4562 = vadd.f32 %v4449, %v4561
    %v4563 = vpop.f32.mrb[0].mxu0
    %v4564 = vadd.f32 %v4451, %v4563
    %4565 = vmatprep.mubr.f32.mxu0 %v2938
    %4566 = vmatmul.mubr.f32.gmra.mrb[0].mxu0 %v2935
    %v4567 = vpop.f32.mrb[0].mxu0
    %v4568 = vadd.f32 %v4455, %v4567
    %v4569 = vpop.f32.mrb[0].mxu0
    %v4570 = vadd.f32 %v4457, %v4569
    %4571 = vdwg.mxu0
    %4572 = vmatprep.subr.mxu0 %v3636
    %4573 = vmatpush1.msra.mxu0 %v3635
    %4574 = vmatprep.subr.mxu0 %v3640
    %4575 = vmatpush1.msra.mxu0 %v3639
    %4576 = vmatprep.subr.mxu0 %v3644
    %4577 = vmatpush1.msra.mxu0 %v3643
    %4578 = vmatprep.subr.mxu0 %v3648
    %4579 = vmatpush1.msra.mxu0 %v3647
    %4580 = vmatprep.subr.mxu0 %v3652
    %4581 = vmatpush1.msra.mxu0 %v3651
    %4582 = vmatprep.subr.mxu0 %v3656
    %4583 = vmatpush1.msra.mxu0 %v3655
    %4584 = vmatprep.subr.mxu0 %v3660
    %4585 = vmatpush1.msra.mxu0 %v3659
    %4586 = vmatprep.subr.mxu0 %v3664
    %4587 = vmatpush1.msra.mxu0 %v3663
    %4588 = vmatprep.subr.mxu0 %v3668
    %4589 = vmatpush1.msra.mxu0 %v3667
    %4590 = vmatprep.subr.mxu0 %v3672
    %4591 = vmatpush1.msra.mxu0 %v3671
    %4592 = vmatprep.subr.mxu0 %v3676
    %4593 = vmatpush1.msra.mxu0 %v3675
    %4594 = vmatprep.subr.mxu0 %v3680
    %4595 = vmatpush1.msra.mxu0 %v3679
    %4596 = vmatprep.subr.mxu0 %v3684
    %4597 = vmatpush1.msra.mxu0 %v3683
    %4598 = vmatprep.subr.mxu0 %v3688
    %4599 = vmatpush1.msra.mxu0 %v3687
    %4600 = vmatprep.subr.mxu0 %v3692
    %4601 = vmatpush1.msra.mxu0 %v3691
    %4602 = vmatprep.subr.mxu0 %v3696
    %4603 = vmatpush1.msra.mxu0 %v3695
    %4604 = vmatprep.subr.mxu0 %v3700
    %4605 = vmatpush1.msra.mxu0 %v3699
    %4606 = vmatprep.subr.mxu0 %v3704
    %4607 = vmatpush1.msra.mxu0 %v3703
    %4608 = vmatprep.subr.mxu0 %v3708
    %4609 = vmatpush1.msra.mxu0 %v3707
    %4610 = vmatprep.subr.mxu0 %v3712
    %4611 = vmatpush1.msra.mxu0 %v3711
    %4612 = vmatprep.subr.mxu0 %v3716
    %4613 = vmatpush1.msra.mxu0 %v3715
    %4614 = vmatprep.subr.mxu0 %v3720
    %4615 = vmatpush1.msra.mxu0 %v3719
    %4616 = vmatprep.subr.mxu0 %v3724
    %4617 = vmatpush1.msra.mxu0 %v3723
    %4618 = vmatprep.subr.mxu0 %v3728
    %4619 = vmatpush1.msra.mxu0 %v3727
    %4620 = vmatprep.subr.mxu0 %v3732
    %4621 = vmatpush1.msra.mxu0 %v3731
    %4622 = vmatprep.subr.mxu0 %v3736
    %4623 = vmatpush1.msra.mxu0 %v3735
    %4624 = vmatprep.subr.mxu0 %v3740
    %4625 = vmatpush1.msra.mxu0 %v3739
    %4626 = vmatprep.subr.mxu0 %v3744
    %4627 = vmatpush1.msra.mxu0 %v3743
    %4628 = vmatprep.subr.mxu0 %v3748
    %4629 = vmatpush1.msra.mxu0 %v3747
    %4630 = vmatprep.subr.mxu0 %v3752
    %4631 = vmatpush1.msra.mxu0 %v3751
    %4632 = vmatprep.subr.mxu0 %v3756
    %4633 = vmatpush1.msra.mxu0 %v3755
    %4634 = vmatprep.subr.mxu0 %v3760
    %4635 = vmatpush1.msra.mxu0 %v3759
    %4636 = vmatprep.mubr.f32.mxu0 %v2968
    %4637 = vmatmul.mubr.f32.gmra.mrb[0].mxu0 %v2965
    %v4638 = vpop.f32.mrb[0].mxu0
    %v4639 = vadd.f32 %v4526, %v4638
    %v4640 = vpop.f32.mrb[0].mxu0
    %v4641 = vadd.f32 %v4528, %v4640
    %4642 = vmatprep.mubr.f32.mxu0 %v2977
    %4643 = vmatmul.mubr.f32.gmra.mrb[0].mxu0 %v2974
    %v4644 = vpop.f32.mrb[0].mxu0
    %v4645 = vadd.f32 %v4532, %v4644
    %v4646 = vpop.f32.mrb[0].mxu0
    %v4647 = vadd.f32 %v4534, %v4646
    %4648 = vmatprep.mubr.f32.mxu0 %v2986
    %4649 = vmatmul.mubr.f32.gmra.mrb[0].mxu0 %v2983
    %v4650 = vpop.f32.mrb[0].mxu0
    %v4651 = vadd.f32 %v4538, %v4650
    %v4652 = vpop.f32.mrb[0].mxu0
    %v4653 = vadd.f32 %v4540, %v4652
    %4654 = vmatprep.mubr.f32.mxu0 %v2995
    %4655 = vmatmul.mubr.f32.gmra.mrb[0].mxu0 %v2992
    %v4656 = vpop.f32.mrb[0].mxu0
    %v4657 = vadd.f32 %v4544, %v4656
    %v4658 = vpop.f32.mrb[0].mxu0
    %v4659 = vadd.f32 %v4546, %v4658
    %4660 = vmatprep.mubr.f32.mxu0 %v3004
    %4661 = vmatmul.mubr.f32.gmra.mrb[0].mxu0 %v3001
    %v4662 = vpop.f32.mrb[0].mxu0
    %v4663 = vadd.f32 %v4550, %v4662
    %v4664 = vpop.f32.mrb[0].mxu0
    %v4665 = vadd.f32 %v4552, %v4664
    %4666 = vmatprep.mubr.f32.mxu0 %v3013
    %4667 = vmatmul.mubr.f32.gmra.mrb[0].mxu0 %v3010
    %v4668 = vpop.f32.mrb[0].mxu0
    %v4669 = vadd.f32 %v4556, %v4668
    %v4670 = vpop.f32.mrb[0].mxu0
    %v4671 = vadd.f32 %v4558, %v4670
    %4672 = vmatprep.mubr.f32.mxu0 %v3022
    %4673 = vmatmul.mubr.f32.gmra.mrb[0].mxu0 %v3019
    %v4674 = vpop.f32.mrb[0].mxu0
    %v4675 = vadd.f32 %v4562, %v4674
    %v4676 = vpop.f32.mrb[0].mxu0
    %v4677 = vadd.f32 %v4564, %v4676
    %4678 = vmatprep.mubr.f32.mxu0 %v3031
    %4679 = vmatmul.mubr.f32.gmra.mrb[0].mxu0 %v3028
    %v4680 = vpop.f32.mrb[0].mxu0
    %v4681 = vadd.f32 %v4568, %v4680
    %v4682 = vpop.f32.mrb[0].mxu0
    %v4683 = vadd.f32 %v4570, %v4682
    %4684 = vdwg.mxu0
    %4685 = vmatprep.subr.mxu0 %v3764
    %4686 = vmatpush1.msra.mxu0 %v3763
    %4687 = vmatprep.subr.mxu0 %v3768
    %4688 = vmatpush1.msra.mxu0 %v3767
    %4689 = vmatprep.subr.mxu0 %v3772
    %4690 = vmatpush1.msra.mxu0 %v3771
    %4691 = vmatprep.subr.mxu0 %v3776
    %4692 = vmatpush1.msra.mxu0 %v3775
    %4693 = vmatprep.subr.mxu0 %v3780
    %4694 = vmatpush1.msra.mxu0 %v3779
    %4695 = vmatprep.subr.mxu0 %v3784
    %4696 = vmatpush1.msra.mxu0 %v3783
    %4697 = vmatprep.subr.mxu0 %v3788
    %4698 = vmatpush1.msra.mxu0 %v3787
    %4699 = vmatprep.subr.mxu0 %v3792
    %4700 = vmatpush1.msra.mxu0 %v3791
    %4701 = vmatprep.subr.mxu0 %v3796
    %4702 = vmatpush1.msra.mxu0 %v3795
    %4703 = vmatprep.subr.mxu0 %v3800
    %4704 = vmatpush1.msra.mxu0 %v3799
    %4705 = vmatprep.subr.mxu0 %v3804
    %4706 = vmatpush1.msra.mxu0 %v3803
    %4707 = vmatprep.subr.mxu0 %v3808
    %4708 = vmatpush1.msra.mxu0 %v3807
    %4709 = vmatprep.subr.mxu0 %v3812
    %4710 = vmatpush1.msra.mxu0 %v3811
    %4711 = vmatprep.subr.mxu0 %v3816
    %4712 = vmatpush1.msra.mxu0 %v3815
    %4713 = vmatprep.subr.mxu0 %v3820
    %4714 = vmatpush1.msra.mxu0 %v3819
    %4715 = vmatprep.subr.mxu0 %v3824
    %4716 = vmatpush1.msra.mxu0 %v3823
    %4717 = vmatprep.subr.mxu0 %v3828
    %4718 = vmatpush1.msra.mxu0 %v3827
    %4719 = vmatprep.subr.mxu0 %v3832
    %4720 = vmatpush1.msra.mxu0 %v3831
    %4721 = vmatprep.subr.mxu0 %v3836
    %4722 = vmatpush1.msra.mxu0 %v3835
    %4723 = vmatprep.subr.mxu0 %v3840
    %4724 = vmatpush1.msra.mxu0 %v3839
    %4725 = vmatprep.subr.mxu0 %v3844
    %4726 = vmatpush1.msra.mxu0 %v3843
    %4727 = vmatprep.subr.mxu0 %v3848
    %4728 = vmatpush1.msra.mxu0 %v3847
    %4729 = vmatprep.subr.mxu0 %v3852
    %4730 = vmatpush1.msra.mxu0 %v3851
    %4731 = vmatprep.subr.mxu0 %v3856
    %4732 = vmatpush1.msra.mxu0 %v3855
    %4733 = vmatprep.subr.mxu0 %v3860
    %4734 = vmatpush1.msra.mxu0 %v3859
    %4735 = vmatprep.subr.mxu0 %v3864
    %4736 = vmatpush1.msra.mxu0 %v3863
    %4737 = vmatprep.subr.mxu0 %v3868
    %4738 = vmatpush1.msra.mxu0 %v3867
    %4739 = vmatprep.subr.mxu0 %v3872
    %4740 = vmatpush1.msra.mxu0 %v3871
    %4741 = vmatprep.subr.mxu0 %v3876
    %4742 = vmatpush1.msra.mxu0 %v3875
    %4743 = vmatprep.subr.mxu0 %v3880
    %4744 = vmatpush1.msra.mxu0 %v3879
    %4745 = vmatprep.subr.mxu0 %v3884
    %4746 = vmatpush1.msra.mxu0 %v3883
    %4747 = vmatprep.subr.mxu0 %v3888
    %4748 = vmatpush1.msra.mxu0 %v3887
    %4749 = vmatprep.mubr.f32.mxu0 %v3061
    %4750 = vmatmul.mubr.f32.gmra.mrb[0].mxu0 %v2971
    %v4751 = vpop.f32.mrb[0].mxu0
    %v4752 = vadd.f32 %v4639, %v4751
    %v4753 = vpop.f32.mrb[0].mxu0
    %v4754 = vadd.f32 %v4641, %v4753
    %4755 = vmatprep.mubr.f32.mxu0 %v3070
    %4756 = vmatmul.mubr.f32.gmra.mrb[0].mxu0 %v2980
    %v4757 = vpop.f32.mrb[0].mxu0
    %v4758 = vadd.f32 %v4645, %v4757
    %v4759 = vpop.f32.mrb[0].mxu0
    %v4760 = vadd.f32 %v4647, %v4759
    %4761 = vmatprep.mubr.f32.mxu0 %v3079
    %4762 = vmatmul.mubr.f32.gmra.mrb[0].mxu0 %v2989
    %v4763 = vpop.f32.mrb[0].mxu0
    %v4764 = vadd.f32 %v4651, %v4763
    %v4765 = vpop.f32.mrb[0].mxu0
    %v4766 = vadd.f32 %v4653, %v4765
    %4767 = vmatprep.mubr.f32.mxu0 %v3088
    %4768 = vmatmul.mubr.f32.gmra.mrb[0].mxu0 %v2998
    %v4769 = vpop.f32.mrb[0].mxu0
    %v4770 = vadd.f32 %v4657, %v4769
    %v4771 = vpop.f32.mrb[0].mxu0
    %v4772 = vadd.f32 %v4659, %v4771
    %4773 = vmatprep.mubr.f32.mxu0 %v3097
    %4774 = vmatmul.mubr.f32.gmra.mrb[0].mxu0 %v3007
    %v4775 = vpop.f32.mrb[0].mxu0
    %v4776 = vadd.f32 %v4663, %v4775
    %v4777 = vpop.f32.mrb[0].mxu0
    %v4778 = vadd.f32 %v4665, %v4777
    %4779 = vmatprep.mubr.f32.mxu0 %v3106
    %4780 = vmatmul.mubr.f32.gmra.mrb[0].mxu0 %v3016
    %v4781 = vpop.f32.mrb[0].mxu0
    %v4782 = vadd.f32 %v4669, %v4781
    %v4783 = vpop.f32.mrb[0].mxu0
    %v4784 = vadd.f32 %v4671, %v4783
    %4785 = vmatprep.mubr.f32.mxu0 %v3115
    %4786 = vmatmul.mubr.f32.gmra.mrb[0].mxu0 %v3025
    %v4787 = vpop.f32.mrb[0].mxu0
    %v4788 = vadd.f32 %v4675, %v4787
    %v4789 = vpop.f32.mrb[0].mxu0
    %v4790 = vadd.f32 %v4677, %v4789
    %4791 = vmatprep.mubr.f32.mxu0 %v3124
    %4792 = vmatmul.mubr.f32.gmra.mrb[0].mxu0 %v3034
    %v4793 = vpop.f32.mrb[0].mxu0
    %v4794 = vadd.f32 %v4681, %v4793
    %v4795 = vpop.f32.mrb[0].mxu0
    %v4796 = vadd.f32 %v4683, %v4795
    %4797 = vdwg.mxu0
    %4798 = vmatprep.subr.mxu0 %v3892
    %4799 = vmatpush1.msra.mxu0 %v3891
    %4800 = vmatprep.subr.mxu0 %v3896
    %4801 = vmatpush1.msra.mxu0 %v3895
    %4802 = vmatprep.subr.mxu0 %v3900
    %4803 = vmatpush1.msra.mxu0 %v3899
    %4804 = vmatprep.subr.mxu0 %v3904
    %4805 = vmatpush1.msra.mxu0 %v3903
    %4806 = vmatprep.subr.mxu0 %v3908
    %4807 = vmatpush1.msra.mxu0 %v3907
    %4808 = vmatprep.subr.mxu0 %v3912
    %4809 = vmatpush1.msra.mxu0 %v3911
    %4810 = vmatprep.subr.mxu0 %v3916
    %4811 = vmatpush1.msra.mxu0 %v3915
    %4812 = vmatprep.subr.mxu0 %v3920
    %4813 = vmatpush1.msra.mxu0 %v3919
    %4814 = vmatprep.subr.mxu0 %v3924
    %4815 = vmatpush1.msra.mxu0 %v3923
    %4816 = vmatprep.subr.mxu0 %v3928
    %4817 = vmatpush1.msra.mxu0 %v3927
    %4818 = vmatprep.subr.mxu0 %v3932
    %4819 = vmatpush1.msra.mxu0 %v3931
    %4820 = vmatprep.subr.mxu0 %v3936
    %4821 = vmatpush1.msra.mxu0 %v3935
    %4822 = vmatprep.subr.mxu0 %v3940
    %4823 = vmatpush1.msra.mxu0 %v3939
    %4824 = vmatprep.subr.mxu0 %v3944
    %4825 = vmatpush1.msra.mxu0 %v3943
    %4826 = vmatprep.subr.mxu0 %v3948
    %4827 = vmatpush1.msra.mxu0 %v3947
    %4828 = vmatprep.subr.mxu0 %v3952
    %4829 = vmatpush1.msra.mxu0 %v3951
    %4830 = vmatprep.subr.mxu0 %v3956
    %4831 = vmatpush1.msra.mxu0 %v3955
    %4832 = vmatprep.subr.mxu0 %v3960
    %4833 = vmatpush1.msra.mxu0 %v3959
    %4834 = vmatprep.subr.mxu0 %v3964
    %4835 = vmatpush1.msra.mxu0 %v3963
    %4836 = vmatprep.subr.mxu0 %v3968
    %4837 = vmatpush1.msra.mxu0 %v3967
    %4838 = vmatprep.subr.mxu0 %v3972
    %4839 = vmatpush1.msra.mxu0 %v3971
    %4840 = vmatprep.subr.mxu0 %v3976
    %4841 = vmatpush1.msra.mxu0 %v3975
    %4842 = vmatprep.subr.mxu0 %v3980
    %4843 = vmatpush1.msra.mxu0 %v3979
    %4844 = vmatprep.subr.mxu0 %v3984
    %4845 = vmatpush1.msra.mxu0 %v3983
    %4846 = vmatprep.subr.mxu0 %v3988
    %4847 = vmatpush1.msra.mxu0 %v3987
    %4848 = vmatprep.subr.mxu0 %v3992
    %4849 = vmatpush1.msra.mxu0 %v3991
    %4850 = vmatprep.subr.mxu0 %v3996
    %4851 = vmatpush1.msra.mxu0 %v3995
    %4852 = vmatprep.subr.mxu0 %v4000
    %4853 = vmatpush1.msra.mxu0 %v3999
    %4854 = vmatprep.subr.mxu0 %v4004
    %4855 = vmatpush1.msra.mxu0 %v4003
    %4856 = vmatprep.subr.mxu0 %v4008
    %4857 = vmatpush1.msra.mxu0 %v4007
    %4858 = vmatprep.subr.mxu0 %v4012
    %4859 = vmatpush1.msra.mxu0 %v4011
    %4860 = vmatprep.subr.mxu0 %v4016
    %4861 = vmatpush1.msra.mxu0 %v4015
    %4862 = vmatprep.mubr.f32.mxu0 %v3067
    %4863 = vmatmul.mubr.f32.gmra.mrb[0].mxu0 %v3064
    %v4864 = vpop.f32.mrb[0].mxu0
    %v4865 = vadd.f32 %v4752, %v4864
    %v4866 = vpop.f32.mrb[0].mxu0
    %v4867 = vadd.f32 %v4754, %v4866
    %4868 = vmatprep.mubr.f32.mxu0 %v3076
    %4869 = vmatmul.mubr.f32.gmra.mrb[0].mxu0 %v3073
    %v4870 = vpop.f32.mrb[0].mxu0
    %v4871 = vadd.f32 %v4758, %v4870
    %v4872 = vpop.f32.mrb[0].mxu0
    %v4873 = vadd.f32 %v4760, %v4872
    %4874 = vmatprep.mubr.f32.mxu0 %v3085
    %4875 = vmatmul.mubr.f32.gmra.mrb[0].mxu0 %v3082
    %v4876 = vpop.f32.mrb[0].mxu0
    %v4877 = vadd.f32 %v4764, %v4876
    %v4878 = vpop.f32.mrb[0].mxu0
    %v4879 = vadd.f32 %v4766, %v4878
    %4880 = vmatprep.mubr.f32.mxu0 %v3094
    %4881 = vmatmul.mubr.f32.gmra.mrb[0].mxu0 %v3091
    %v4882 = vpop.f32.mrb[0].mxu0
    %v4883 = vadd.f32 %v4770, %v4882
    %v4884 = vpop.f32.mrb[0].mxu0
    %v4885 = vadd.f32 %v4772, %v4884
    %4886 = vmatprep.mubr.f32.mxu0 %v3103
    %4887 = vmatmul.mubr.f32.gmra.mrb[0].mxu0 %v3100
    %v4888 = vpop.f32.mrb[0].mxu0
    %v4889 = vadd.f32 %v4776, %v4888
    %v4890 = vpop.f32.mrb[0].mxu0
    %v4891 = vadd.f32 %v4778, %v4890
    %4892 = vmatprep.mubr.f32.mxu0 %v3112
    %4893 = vmatmul.mubr.f32.gmra.mrb[0].mxu0 %v3109
    %v4894 = vpop.f32.mrb[0].mxu0
    %v4895 = vadd.f32 %v4782, %v4894
    %v4896 = vpop.f32.mrb[0].mxu0
    %v4897 = vadd.f32 %v4784, %v4896
    %4898 = vmatprep.mubr.f32.mxu0 %v3121
    %4899 = vmatmul.mubr.f32.gmra.mrb[0].mxu0 %v3118
    %v4900 = vpop.f32.mrb[0].mxu0
    %v4901 = vadd.f32 %v4788, %v4900
    %v4902 = vpop.f32.mrb[0].mxu0
    %v4903 = vadd.f32 %v4790, %v4902
    %4904 = vmatprep.mubr.f32.mxu0 %v3130
    %4905 = vmatmul.mubr.f32.gmra.mrb[0].mxu0 %v3127
    %v4906 = vpop.f32.mrb[0].mxu0
    %v4907 = vadd.f32 %v4794, %v4906
    %v4908 = vpop.f32.mrb[0].mxu0
    %v4909 = vadd.f32 %v4796, %v4908
    %4910 = vdwg.mxu0
    %4911 = vmatprep.subr.mxu0 %v4020
    %4912 = vmatpush1.msra.mxu0 %v4019
    %4913 = vmatprep.subr.mxu0 %v4024
    %4914 = vmatpush1.msra.mxu0 %v4023
    %4915 = vmatprep.subr.mxu0 %v4028
    %4916 = vmatpush1.msra.mxu0 %v4027
    %4917 = vmatprep.subr.mxu0 %v4032
    %4918 = vmatpush1.msra.mxu0 %v4031
    %4919 = vmatprep.subr.mxu0 %v4036
    %4920 = vmatpush1.msra.mxu0 %v4035
    %4921 = vmatprep.subr.mxu0 %v4040
    %4922 = vmatpush1.msra.mxu0 %v4039
    %4923 = vmatprep.subr.mxu0 %v4044
    %4924 = vmatpush1.msra.mxu0 %v4043
    %4925 = vmatprep.subr.mxu0 %v4048
    %4926 = vmatpush1.msra.mxu0 %v4047
    %4927 = vmatprep.subr.mxu0 %v4052
    %4928 = vmatpush1.msra.mxu0 %v4051
    %4929 = vmatprep.subr.mxu0 %v4056
    %4930 = vmatpush1.msra.mxu0 %v4055
    %4931 = vmatprep.subr.mxu0 %v4060
    %4932 = vmatpush1.msra.mxu0 %v4059
    %4933 = vmatprep.subr.mxu0 %v4064
    %4934 = vmatpush1.msra.mxu0 %v4063
    %4935 = vmatprep.subr.mxu0 %v4068
    %4936 = vmatpush1.msra.mxu0 %v4067
    %4937 = vmatprep.subr.mxu0 %v4072
    %4938 = vmatpush1.msra.mxu0 %v4071
    %4939 = vmatprep.subr.mxu0 %v4076
    %4940 = vmatpush1.msra.mxu0 %v4075
    %4941 = vmatprep.subr.mxu0 %v4080
    %4942 = vmatpush1.msra.mxu0 %v4079
    %4943 = vmatprep.subr.mxu0 %v4084
    %4944 = vmatpush1.msra.mxu0 %v4083
    %4945 = vmatprep.subr.mxu0 %v4088
    %4946 = vmatpush1.msra.mxu0 %v4087
    %4947 = vmatprep.subr.mxu0 %v4092
    %4948 = vmatpush1.msra.mxu0 %v4091
    %4949 = vmatprep.subr.mxu0 %v4096
    %4950 = vmatpush1.msra.mxu0 %v4095
    %4951 = vmatprep.subr.mxu0 %v4100
    %4952 = vmatpush1.msra.mxu0 %v4099
    %4953 = vmatprep.subr.mxu0 %v4104
    %4954 = vmatpush1.msra.mxu0 %v4103
    %4955 = vmatprep.subr.mxu0 %v4108
    %4956 = vmatpush1.msra.mxu0 %v4107
    %4957 = vmatprep.subr.mxu0 %v4112
    %4958 = vmatpush1.msra.mxu0 %v4111
    %4959 = vmatprep.subr.mxu0 %v4116
    %4960 = vmatpush1.msra.mxu0 %v4115
    %4961 = vmatprep.subr.mxu0 %v4120
    %4962 = vmatpush1.msra.mxu0 %v4119
    %4963 = vmatprep.subr.mxu0 %v4124
    %4964 = vmatpush1.msra.mxu0 %v4123
    %4965 = vmatprep.subr.mxu0 %v4128
    %4966 = vmatpush1.msra.mxu0 %v4127
    %4967 = vmatprep.subr.mxu0 %v4132
    %4968 = vmatpush1.msra.mxu0 %v4131
    %4969 = vmatprep.subr.mxu0 %v4136
    %4970 = vmatpush1.msra.mxu0 %v4135
    %4971 = vmatprep.subr.mxu0 %v4140
    %4972 = vmatpush1.msra.mxu0 %v4139
    %4973 = vmatprep.subr.mxu0 %v4144
    %4974 = vmatpush1.msra.mxu0 %v4143
    %4975 = vmatprep.mubr.f32.mxu0 %v3160
    %4976 = vmatmul.mubr.f32.gmra.mrb[0].mxu0 %v3157
    %v4977 = vpop.f32.mrb[0].mxu0
    %v4978 = vadd.f32 %v4865, %v4977
    %v4979 = vpop.f32.mrb[0].mxu0
    %v4980 = vadd.f32 %v4867, %v4979
    %4981 = vmatprep.mubr.f32.mxu0 %v3169
    %4982 = vmatmul.mubr.f32.gmra.mrb[0].mxu0 %v3166
    %v4983 = vpop.f32.mrb[0].mxu0
    %v4984 = vadd.f32 %v4871, %v4983
    %v4985 = vpop.f32.mrb[0].mxu0
    %v4986 = vadd.f32 %v4873, %v4985
    %4987 = vmatprep.mubr.f32.mxu0 %v3178
    %4988 = vmatmul.mubr.f32.gmra.mrb[0].mxu0 %v3175
    %v4989 = vpop.f32.mrb[0].mxu0
    %v4990 = vadd.f32 %v4877, %v4989
    %v4991 = vpop.f32.mrb[0].mxu0
    %v4992 = vadd.f32 %v4879, %v4991
    %4993 = vmatprep.mubr.f32.mxu0 %v3187
    %4994 = vmatmul.mubr.f32.gmra.mrb[0].mxu0 %v3184
    %v4995 = vpop.f32.mrb[0].mxu0
    %v4996 = vadd.f32 %v4883, %v4995
    %v4997 = vpop.f32.mrb[0].mxu0
    %v4998 = vadd.f32 %v4885, %v4997
    %4999 = vmatprep.mubr.f32.mxu0 %v3196
    %5000 = vmatmul.mubr.f32.gmra.mrb[0].mxu0 %v3193
    %v5001 = vpop.f32.mrb[0].mxu0
    %v5002 = vadd.f32 %v4889, %v5001
    %v5003 = vpop.f32.mrb[0].mxu0
    %v5004 = vadd.f32 %v4891, %v5003
    %5005 = vmatprep.mubr.f32.mxu0 %v3205
    %5006 = vmatmul.mubr.f32.gmra.mrb[0].mxu0 %v3202
    %v5007 = vpop.f32.mrb[0].mxu0
    %v5008 = vadd.f32 %v4895, %v5007
    %v5009 = vpop.f32.mrb[0].mxu0
    %v5010 = vadd.f32 %v4897, %v5009
    %5011 = vmatprep.mubr.f32.mxu0 %v3214
    %5012 = vmatmul.mubr.f32.gmra.mrb[0].mxu0 %v3211
    %v5013 = vpop.f32.mrb[0].mxu0
    %v5014 = vadd.f32 %v4901, %v5013
    %v5015 = vpop.f32.mrb[0].mxu0
    %v5016 = vadd.f32 %v4903, %v5015
    %5017 = vmatprep.mubr.f32.mxu0 %v3223
    %5018 = vmatmul.mubr.f32.gmra.mrb[0].mxu0 %v3220
    %v5019 = vpop.f32.mrb[0].mxu0
    %v5020 = vadd.f32 %v4907, %v5019
    %v5021 = vpop.f32.mrb[0].mxu0
    %v5022 = vadd.f32 %v4909, %v5021
    %5023 = vdwg.mxu0
    %5024 = vmatprep.subr.mxu0 %v4148
    %5025 = vmatpush1.msra.mxu0 %v4147
    %5026 = vmatprep.subr.mxu0 %v4152
    %5027 = vmatpush1.msra.mxu0 %v4151
    %5028 = vmatprep.subr.mxu0 %v4156
    %5029 = vmatpush1.msra.mxu0 %v4155
    %5030 = vmatprep.subr.mxu0 %v4160
    %5031 = vmatpush1.msra.mxu0 %v4159
    %5032 = vmatprep.subr.mxu0 %v4164
    %5033 = vmatpush1.msra.mxu0 %v4163
    %5034 = vmatprep.subr.mxu0 %v4168
    %5035 = vmatpush1.msra.mxu0 %v4167
    %5036 = vmatprep.subr.mxu0 %v4172
    %5037 = vmatpush1.msra.mxu0 %v4171
    %5038 = vmatprep.subr.mxu0 %v4176
    %5039 = vmatpush1.msra.mxu0 %v4175
    %5040 = vmatprep.subr.mxu0 %v4180
    %5041 = vmatpush1.msra.mxu0 %v4179
    %5042 = vmatprep.subr.mxu0 %v4184
    %5043 = vmatpush1.msra.mxu0 %v4183
    %5044 = vmatprep.subr.mxu0 %v4188
    %5045 = vmatpush1.msra.mxu0 %v4187
    %5046 = vmatprep.subr.mxu0 %v4192
    %5047 = vmatpush1.msra.mxu0 %v4191
    %5048 = vmatprep.subr.mxu0 %v4196
    %5049 = vmatpush1.msra.mxu0 %v4195
    %5050 = vmatprep.subr.mxu0 %v4200
    %5051 = vmatpush1.msra.mxu0 %v4199
    %5052 = vmatprep.subr.mxu0 %v4204
    %5053 = vmatpush1.msra.mxu0 %v4203
    %5054 = vmatprep.subr.mxu0 %v4208
    %5055 = vmatpush1.msra.mxu0 %v4207
    %5056 = vmatprep.subr.mxu0 0.0
    %5057 = vmatpush1.msra.mxu0 0.0
    %5058 = vmatprep.subr.mxu0 0.0
    %5059 = vmatpush1.msra.mxu0 0.0
    %5060 = vmatprep.subr.mxu0 0.0
    %5061 = vmatpush1.msra.mxu0 0.0
    %5062 = vmatprep.subr.mxu0 0.0
    %5063 = vmatpush1.msra.mxu0 0.0
    %5064 = vmatprep.subr.mxu0 0.0
    %5065 = vmatpush1.msra.mxu0 0.0
    %5066 = vmatprep.subr.mxu0 0.0
    %5067 = vmatpush1.msra.mxu0 0.0
    %5068 = vmatprep.subr.mxu0 0.0
    %5069 = vmatpush1.msra.mxu0 0.0
    %5070 = vmatprep.subr.mxu0 0.0
    %5071 = vmatpush1.msra.mxu0 0.0
    %5072 = vmatprep.subr.mxu0 0.0
    %5073 = vmatpush1.msra.mxu0 0.0
    %5074 = vmatprep.subr.mxu0 0.0
    %5075 = vmatpush1.msra.mxu0 0.0
    %5076 = vmatprep.subr.mxu0 0.0
    %5077 = vmatpush1.msra.mxu0 0.0
    %5078 = vmatprep.subr.mxu0 0.0
    %5079 = vmatpush1.msra.mxu0 0.0
    %5080 = vmatprep.subr.mxu0 0.0
    %5081 = vmatpush1.msra.mxu0 0.0
    %5082 = vmatprep.subr.mxu0 0.0
    %5083 = vmatpush1.msra.mxu0 0.0
    %5084 = vmatprep.subr.mxu0 0.0
    %5085 = vmatpush1.msra.mxu0 0.0
    %5086 = vmatprep.subr.mxu0 0.0
    %5087 = vmatpush1.msra.mxu0 0.0
    %5088 = vmatprep.mubr.f32.mxu0 0.0
    %5089 = vmatmul.mubr.f32.gmra.mrb[0].mxu0 %v3163
    %v5090 = vpop.f32.mrb[0].mxu0
    %v5091 = vadd.f32 %v4978, %v5090
    %v5092 = vpop.f32.mrb[0].mxu0
    %v5093 = vadd.f32 %v4980, %v5092
    %5094 = vmatprep.mubr.f32.mxu0 0.0
    %5095 = vmatmul.mubr.f32.gmra.mrb[0].mxu0 %v3172
    %v5096 = vpop.f32.mrb[0].mxu0
    %v5097 = vadd.f32 %v4984, %v5096
    %v5098 = vpop.f32.mrb[0].mxu0
    %v5099 = vadd.f32 %v4986, %v5098
    %5100 = vmatprep.mubr.f32.mxu0 0.0
    %5101 = vmatmul.mubr.f32.gmra.mrb[0].mxu0 %v3181
    %v5102 = vpop.f32.mrb[0].mxu0
    %v5103 = vadd.f32 %v4990, %v5102
    %v5104 = vpop.f32.mrb[0].mxu0
    %v5105 = vadd.f32 %v4992, %v5104
    %5106 = vmatprep.mubr.f32.mxu0 0.0
    %5107 = vmatmul.mubr.f32.gmra.mrb[0].mxu0 %v3190
    %v5108 = vpop.f32.mrb[0].mxu0
    %v5109 = vadd.f32 %v4996, %v5108
    %v5110 = vpop.f32.mrb[0].mxu0
    %v5111 = vadd.f32 %v4998, %v5110
    %5112 = vmatprep.mubr.f32.mxu0 0.0
    %5113 = vmatmul.mubr.f32.gmra.mrb[0].mxu0 %v3199
    %v5114 = vpop.f32.mrb[0].mxu0
    %v5115 = vadd.f32 %v5002, %v5114
    %v5116 = vpop.f32.mrb[0].mxu0
    %v5117 = vadd.f32 %v5004, %v5116
    %5118 = vmatprep.mubr.f32.mxu0 0.0
    %5119 = vmatmul.mubr.f32.gmra.mrb[0].mxu0 %v3208
    %v5120 = vpop.f32.mrb[0].mxu0
    %v5121 = vadd.f32 %v5008, %v5120
    %v5122 = vpop.f32.mrb[0].mxu0
    %v5123 = vadd.f32 %v5010, %v5122
    %5124 = vmatprep.mubr.f32.mxu0 0.0
    %5125 = vmatmul.mubr.f32.gmra.mrb[0].mxu0 %v3217
    %v5126 = vpop.f32.mrb[0].mxu0
    %v5127 = vadd.f32 %v5014, %v5126
    %v5128 = vpop.f32.mrb[0].mxu0
    %v5129 = vadd.f32 %v5016, %v5128
    %5130 = vmatprep.mubr.f32.mxu0 0.0
    %5131 = vmatmul.mubr.f32.gmra.mrb[0].mxu0 %v3226
    %v5132 = vpop.f32.mrb[0].mxu0
    %v5133 = vadd.f32 %v5020, %v5132
    %v5134 = vpop.f32.mrb[0].mxu0
    %v5135 = vadd.f32 %v5022, %v5134
    %5136 = vdwg.mxu0
    %5137 = vmatprep.subr.mxu0 %v3254
    %5138 = vmatpush1.msra.mxu0 %v3253
    %5139 = vmatprep.subr.mxu0 %v3258
    %5140 = vmatpush1.msra.mxu0 %v3257
    %5141 = vmatprep.subr.mxu0 %v3262
    %5142 = vmatpush1.msra.mxu0 %v3261
    %5143 = vmatprep.subr.mxu0 %v3266
    %5144 = vmatpush1.msra.mxu0 %v3265
    %5145 = vmatprep.subr.mxu0 %v3270
    %5146 = vmatpush1.msra.mxu0 %v3269
    %5147 = vmatprep.subr.mxu0 %v3274
    %5148 = vmatpush1.msra.mxu0 %v3273
    %5149 = vmatprep.subr.mxu0 %v3278
    %5150 = vmatpush1.msra.mxu0 %v3277
    %5151 = vmatprep.subr.mxu0 %v3282
    %5152 = vmatpush1.msra.mxu0 %v3281
    %5153 = vmatprep.subr.mxu0 %v3286
    %5154 = vmatpush1.msra.mxu0 %v3285
    %5155 = vmatprep.subr.mxu0 %v3290
    %5156 = vmatpush1.msra.mxu0 %v3289
    %5157 = vmatprep.subr.mxu0 %v3294
    %5158 = vmatpush1.msra.mxu0 %v3293
    %5159 = vmatprep.subr.mxu0 %v3298
    %5160 = vmatpush1.msra.mxu0 %v3297
    %5161 = vmatprep.subr.mxu0 %v3302
    %5162 = vmatpush1.msra.mxu0 %v3301
    %5163 = vmatprep.subr.mxu0 %v3306
    %5164 = vmatpush1.msra.mxu0 %v3305
    %5165 = vmatprep.subr.mxu0 %v3310
    %5166 = vmatpush1.msra.mxu0 %v3309
    %5167 = vmatprep.subr.mxu0 %v3314
    %5168 = vmatpush1.msra.mxu0 %v3313
    %5169 = vmatprep.subr.mxu0 %v3318
    %5170 = vmatpush1.msra.mxu0 %v3317
    %5171 = vmatprep.subr.mxu0 %v3322
    %5172 = vmatpush1.msra.mxu0 %v3321
    %5173 = vmatprep.subr.mxu0 %v3326
    %5174 = vmatpush1.msra.mxu0 %v3325
    %5175 = vmatprep.subr.mxu0 %v3330
    %5176 = vmatpush1.msra.mxu0 %v3329
    %5177 = vmatprep.subr.mxu0 %v3334
    %5178 = vmatpush1.msra.mxu0 %v3333
    %5179 = vmatprep.subr.mxu0 %v3338
    %5180 = vmatpush1.msra.mxu0 %v3337
    %5181 = vmatprep.subr.mxu0 %v3342
    %5182 = vmatpush1.msra.mxu0 %v3341
    %5183 = vmatprep.subr.mxu0 %v3346
    %5184 = vmatpush1.msra.mxu0 %v3345
    %5185 = vmatprep.subr.mxu0 %v3350
    %5186 = vmatpush1.msra.mxu0 %v3349
    %5187 = vmatprep.subr.mxu0 %v3354
    %5188 = vmatpush1.msra.mxu0 %v3353
    %5189 = vmatprep.subr.mxu0 %v3358
    %5190 = vmatpush1.msra.mxu0 %v3357
    %5191 = vmatprep.subr.mxu0 %v3362
    %5192 = vmatpush1.msra.mxu0 %v3361
    %5193 = vmatprep.subr.mxu0 %v3366
    %5194 = vmatpush1.msra.mxu0 %v3365
    %5195 = vmatprep.subr.mxu0 %v3370
    %5196 = vmatpush1.msra.mxu0 %v3369
    %5197 = vmatprep.subr.mxu0 %v3374
    %5198 = vmatpush1.msra.mxu0 %v3373
    %5199 = vmatprep.subr.mxu0 %v3378
    %5200 = vmatpush1.msra.mxu0 %v3377
    %5201 = vmatprep.mubr.f32.mxu0 %v2772
    %5202 = vmatmul.mubr.f32.gmra.mrb[0].mxu0 %v2771
    %v5203 = vpop.f32.mrb[0].mxu0
    %v5204 = vadd.f32 %v4224, %v5203
    %v5205 = vpop.f32.mrb[0].mxu0
    %v5206 = vadd.f32 %v4228, %v5205
    %5207 = vmatprep.mubr.f32.mxu0 %v2778
    %5208 = vmatmul.mubr.f32.gmra.mrb[0].mxu0 %v2777
    %v5209 = vpop.f32.mrb[0].mxu0
    %v5210 = vadd.f32 %v4224, %v5209
    %v5211 = vpop.f32.mrb[0].mxu0
    %v5212 = vadd.f32 %v4228, %v5211
    %5213 = vmatprep.mubr.f32.mxu0 %v2784
    %5214 = vmatmul.mubr.f32.gmra.mrb[0].mxu0 %v2783
    %v5215 = vpop.f32.mrb[0].mxu0
    %v5216 = vadd.f32 %v4224, %v5215
    %v5217 = vpop.f32.mrb[0].mxu0
    %v5218 = vadd.f32 %v4228, %v5217
    %5219 = vmatprep.mubr.f32.mxu0 %v2790
    %5220 = vmatmul.mubr.f32.gmra.mrb[0].mxu0 %v2789
    %v5221 = vpop.f32.mrb[0].mxu0
    %v5222 = vadd.f32 %v4224, %v5221
    %v5223 = vpop.f32.mrb[0].mxu0
    %v5224 = vadd.f32 %v4228, %v5223
    %5225 = vmatprep.mubr.f32.mxu0 %v2796
    %5226 = vmatmul.mubr.f32.gmra.mrb[0].mxu0 %v2795
    %v5227 = vpop.f32.mrb[0].mxu0
    %v5228 = vadd.f32 %v4224, %v5227
    %v5229 = vpop.f32.mrb[0].mxu0
    %v5230 = vadd.f32 %v4228, %v5229
    %5231 = vmatprep.mubr.f32.mxu0 %v2802
    %5232 = vmatmul.mubr.f32.gmra.mrb[0].mxu0 %v2801
    %v5233 = vpop.f32.mrb[0].mxu0
    %v5234 = vadd.f32 %v4224, %v5233
    %v5235 = vpop.f32.mrb[0].mxu0
    %v5236 = vadd.f32 %v4228, %v5235
    %5237 = vmatprep.mubr.f32.mxu0 %v2808
    %5238 = vmatmul.mubr.f32.gmra.mrb[0].mxu0 %v2807
    %v5239 = vpop.f32.mrb[0].mxu0
    %v5240 = vadd.f32 %v4224, %v5239
    %v5241 = vpop.f32.mrb[0].mxu0
    %v5242 = vadd.f32 %v4228, %v5241
    %5243 = vmatprep.mubr.f32.mxu0 %v2814
    %5244 = vmatmul.mubr.f32.gmra.mrb[0].mxu0 %v2813
    %v5245 = vpop.f32.mrb[0].mxu0
    %v5246 = vadd.f32 %v4224, %v5245
    %v5247 = vpop.f32.mrb[0].mxu0
    %v5248 = vadd.f32 %v4228, %v5247
    %5249 = vdwg.mxu0
    %5250 = vmatprep.subr.mxu0 %v3382
    %5251 = vmatpush1.msra.mxu0 %v3381
    %5252 = vmatprep.subr.mxu0 %v3386
    %5253 = vmatpush1.msra.mxu0 %v3385
    %5254 = vmatprep.subr.mxu0 %v3390
    %5255 = vmatpush1.msra.mxu0 %v3389
    %5256 = vmatprep.subr.mxu0 %v3394
    %5257 = vmatpush1.msra.mxu0 %v3393
    %5258 = vmatprep.subr.mxu0 %v3398
    %5259 = vmatpush1.msra.mxu0 %v3397
    %5260 = vmatprep.subr.mxu0 %v3402
    %5261 = vmatpush1.msra.mxu0 %v3401
    %5262 = vmatprep.subr.mxu0 %v3406
    %5263 = vmatpush1.msra.mxu0 %v3405
    %5264 = vmatprep.subr.mxu0 %v3410
    %5265 = vmatpush1.msra.mxu0 %v3409
    %5266 = vmatprep.subr.mxu0 %v3414
    %5267 = vmatpush1.msra.mxu0 %v3413
    %5268 = vmatprep.subr.mxu0 %v3418
    %5269 = vmatpush1.msra.mxu0 %v3417
    %5270 = vmatprep.subr.mxu0 %v3422
    %5271 = vmatpush1.msra.mxu0 %v3421
    %5272 = vmatprep.subr.mxu0 %v3426
    %5273 = vmatpush1.msra.mxu0 %v3425
    %5274 = vmatprep.subr.mxu0 %v3430
    %5275 = vmatpush1.msra.mxu0 %v3429
    %5276 = vmatprep.subr.mxu0 %v3434
    %5277 = vmatpush1.msra.mxu0 %v3433
    %5278 = vmatprep.subr.mxu0 %v3438
    %5279 = vmatpush1.msra.mxu0 %v3437
    %5280 = vmatprep.subr.mxu0 %v3442
    %5281 = vmatpush1.msra.mxu0 %v3441
    %5282 = vmatprep.subr.mxu0 %v3446
    %5283 = vmatpush1.msra.mxu0 %v3445
    %5284 = vmatprep.subr.mxu0 %v3450
    %5285 = vmatpush1.msra.mxu0 %v3449
    %5286 = vmatprep.subr.mxu0 %v3454
    %5287 = vmatpush1.msra.mxu0 %v3453
    %5288 = vmatprep.subr.mxu0 %v3458
    %5289 = vmatpush1.msra.mxu0 %v3457
    %5290 = vmatprep.subr.mxu0 %v3462
    %5291 = vmatpush1.msra.mxu0 %v3461
    %5292 = vmatprep.subr.mxu0 %v3466
    %5293 = vmatpush1.msra.mxu0 %v3465
    %5294 = vmatprep.subr.mxu0 %v3470
    %5295 = vmatpush1.msra.mxu0 %v3469
    %5296 = vmatprep.subr.mxu0 %v3474
    %5297 = vmatpush1.msra.mxu0 %v3473
    %5298 = vmatprep.subr.mxu0 %v3478
    %5299 = vmatpush1.msra.mxu0 %v3477
    %5300 = vmatprep.subr.mxu0 %v3482
    %5301 = vmatpush1.msra.mxu0 %v3481
    %5302 = vmatprep.subr.mxu0 %v3486
    %5303 = vmatpush1.msra.mxu0 %v3485
    %5304 = vmatprep.subr.mxu0 %v3490
    %5305 = vmatpush1.msra.mxu0 %v3489
    %5306 = vmatprep.subr.mxu0 %v3494
    %5307 = vmatpush1.msra.mxu0 %v3493
    %5308 = vmatprep.subr.mxu0 %v3498
    %5309 = vmatpush1.msra.mxu0 %v3497
    %5310 = vmatprep.subr.mxu0 %v3502
    %5311 = vmatpush1.msra.mxu0 %v3501
    %5312 = vmatprep.subr.mxu0 %v3506
    %5313 = vmatpush1.msra.mxu0 %v3505
    %5314 = vmatprep.mubr.f32.mxu0 %v2869
    %5315 = vmatmul.mubr.f32.gmra.mrb[0].mxu0 %v2773
    %v5316 = vpop.f32.mrb[0].mxu0
    %v5317 = vadd.f32 %v5204, %v5316
    %v5318 = vpop.f32.mrb[0].mxu0
    %v5319 = vadd.f32 %v5206, %v5318
    %5320 = vmatprep.mubr.f32.mxu0 %v2878
    %5321 = vmatmul.mubr.f32.gmra.mrb[0].mxu0 %v2779
    %v5322 = vpop.f32.mrb[0].mxu0
    %v5323 = vadd.f32 %v5210, %v5322
    %v5324 = vpop.f32.mrb[0].mxu0
    %v5325 = vadd.f32 %v5212, %v5324
    %5326 = vmatprep.mubr.f32.mxu0 %v2887
    %5327 = vmatmul.mubr.f32.gmra.mrb[0].mxu0 %v2785
    %v5328 = vpop.f32.mrb[0].mxu0
    %v5329 = vadd.f32 %v5216, %v5328
    %v5330 = vpop.f32.mrb[0].mxu0
    %v5331 = vadd.f32 %v5218, %v5330
    %5332 = vmatprep.mubr.f32.mxu0 %v2896
    %5333 = vmatmul.mubr.f32.gmra.mrb[0].mxu0 %v2791
    %v5334 = vpop.f32.mrb[0].mxu0
    %v5335 = vadd.f32 %v5222, %v5334
    %v5336 = vpop.f32.mrb[0].mxu0
    %v5337 = vadd.f32 %v5224, %v5336
    %5338 = vmatprep.mubr.f32.mxu0 %v2905
    %5339 = vmatmul.mubr.f32.gmra.mrb[0].mxu0 %v2797
    %v5340 = vpop.f32.mrb[0].mxu0
    %v5341 = vadd.f32 %v5228, %v5340
    %v5342 = vpop.f32.mrb[0].mxu0
    %v5343 = vadd.f32 %v5230, %v5342
    %5344 = vmatprep.mubr.f32.mxu0 %v2914
    %5345 = vmatmul.mubr.f32.gmra.mrb[0].mxu0 %v2803
    %v5346 = vpop.f32.mrb[0].mxu0
    %v5347 = vadd.f32 %v5234, %v5346
    %v5348 = vpop.f32.mrb[0].mxu0
    %v5349 = vadd.f32 %v5236, %v5348
    %5350 = vmatprep.mubr.f32.mxu0 %v2923
    %5351 = vmatmul.mubr.f32.gmra.mrb[0].mxu0 %v2809
    %v5352 = vpop.f32.mrb[0].mxu0
    %v5353 = vadd.f32 %v5240, %v5352
    %v5354 = vpop.f32.mrb[0].mxu0
    %v5355 = vadd.f32 %v5242, %v5354
    %5356 = vmatprep.mubr.f32.mxu0 %v2932
    %5357 = vmatmul.mubr.f32.gmra.mrb[0].mxu0 %v2815
    %v5358 = vpop.f32.mrb[0].mxu0
    %v5359 = vadd.f32 %v5246, %v5358
    %v5360 = vpop.f32.mrb[0].mxu0
    %v5361 = vadd.f32 %v5248, %v5360
    %5362 = vdwg.mxu0
    %5363 = vmatprep.subr.mxu0 %v3510
    %5364 = vmatpush1.msra.mxu0 %v3509
    %5365 = vmatprep.subr.mxu0 %v3514
    %5366 = vmatpush1.msra.mxu0 %v3513
    %5367 = vmatprep.subr.mxu0 %v3518
    %5368 = vmatpush1.msra.mxu0 %v3517
    %5369 = vmatprep.subr.mxu0 %v3522
    %5370 = vmatpush1.msra.mxu0 %v3521
    %5371 = vmatprep.subr.mxu0 %v3526
    %5372 = vmatpush1.msra.mxu0 %v3525
    %5373 = vmatprep.subr.mxu0 %v3530
    %5374 = vmatpush1.msra.mxu0 %v3529
    %5375 = vmatprep.subr.mxu0 %v3534
    %5376 = vmatpush1.msra.mxu0 %v3533
    %5377 = vmatprep.subr.mxu0 %v3538
    %5378 = vmatpush1.msra.mxu0 %v3537
    %5379 = vmatprep.subr.mxu0 %v3542
    %5380 = vmatpush1.msra.mxu0 %v3541
    %5381 = vmatprep.subr.mxu0 %v3546
    %5382 = vmatpush1.msra.mxu0 %v3545
    %5383 = vmatprep.subr.mxu0 %v3550
    %5384 = vmatpush1.msra.mxu0 %v3549
    %5385 = vmatprep.subr.mxu0 %v3554
    %5386 = vmatpush1.msra.mxu0 %v3553
    %5387 = vmatprep.subr.mxu0 %v3558
    %5388 = vmatpush1.msra.mxu0 %v3557
    %5389 = vmatprep.subr.mxu0 %v3562
    %5390 = vmatpush1.msra.mxu0 %v3561
    %5391 = vmatprep.subr.mxu0 %v3566
    %5392 = vmatpush1.msra.mxu0 %v3565
    %5393 = vmatprep.subr.mxu0 %v3570
    %5394 = vmatpush1.msra.mxu0 %v3569
    %5395 = vmatprep.subr.mxu0 %v3574
    %5396 = vmatpush1.msra.mxu0 %v3573
    %5397 = vmatprep.subr.mxu0 %v3578
    %5398 = vmatpush1.msra.mxu0 %v3577
    %5399 = vmatprep.subr.mxu0 %v3582
    %5400 = vmatpush1.msra.mxu0 %v3581
    %5401 = vmatprep.subr.mxu0 %v3586
    %5402 = vmatpush1.msra.mxu0 %v3585
    %5403 = vmatprep.subr.mxu0 %v3590
    %5404 = vmatpush1.msra.mxu0 %v3589
    %5405 = vmatprep.subr.mxu0 %v3594
    %5406 = vmatpush1.msra.mxu0 %v3593
    %5407 = vmatprep.subr.mxu0 %v3598
    %5408 = vmatpush1.msra.mxu0 %v3597
    %5409 = vmatprep.subr.mxu0 %v3602
    %5410 = vmatpush1.msra.mxu0 %v3601
    %5411 = vmatprep.subr.mxu0 %v3606
    %5412 = vmatpush1.msra.mxu0 %v3605
    %5413 = vmatprep.subr.mxu0 %v3610
    %5414 = vmatpush1.msra.mxu0 %v3609
    %5415 = vmatprep.subr.mxu0 %v3614
    %5416 = vmatpush1.msra.mxu0 %v3613
    %5417 = vmatprep.subr.mxu0 %v3618
    %5418 = vmatpush1.msra.mxu0 %v3617
    %5419 = vmatprep.subr.mxu0 %v3622
    %5420 = vmatpush1.msra.mxu0 %v3621
    %5421 = vmatprep.subr.mxu0 %v3626
    %5422 = vmatpush1.msra.mxu0 %v3625
    %5423 = vmatprep.subr.mxu0 %v3630
    %5424 = vmatpush1.msra.mxu0 %v3629
    %5425 = vmatprep.subr.mxu0 %v3634
    %5426 = vmatpush1.msra.mxu0 %v3633
    %5427 = vmatprep.mubr.f32.mxu0 %v2875
    %5428 = vmatmul.mubr.f32.gmra.mrb[0].mxu0 %v2872
    %v5429 = vpop.f32.mrb[0].mxu0
    %v5430 = vadd.f32 %v5317, %v5429
    %v5431 = vpop.f32.mrb[0].mxu0
    %v5432 = vadd.f32 %v5319, %v5431
    %5433 = vmatprep.mubr.f32.mxu0 %v2884
    %5434 = vmatmul.mubr.f32.gmra.mrb[0].mxu0 %v2881
    %v5435 = vpop.f32.mrb[0].mxu0
    %v5436 = vadd.f32 %v5323, %v5435
    %v5437 = vpop.f32.mrb[0].mxu0
    %v5438 = vadd.f32 %v5325, %v5437
    %5439 = vmatprep.mubr.f32.mxu0 %v2893
    %5440 = vmatmul.mubr.f32.gmra.mrb[0].mxu0 %v2890
    %v5441 = vpop.f32.mrb[0].mxu0
    %v5442 = vadd.f32 %v5329, %v5441
    %v5443 = vpop.f32.mrb[0].mxu0
    %v5444 = vadd.f32 %v5331, %v5443
    %5445 = vmatprep.mubr.f32.mxu0 %v2902
    %5446 = vmatmul.mubr.f32.gmra.mrb[0].mxu0 %v2899
    %v5447 = vpop.f32.mrb[0].mxu0
    %v5448 = vadd.f32 %v5335, %v5447
    %v5449 = vpop.f32.mrb[0].mxu0
    %v5450 = vadd.f32 %v5337, %v5449
    %5451 = vmatprep.mubr.f32.mxu0 %v2911
    %5452 = vmatmul.mubr.f32.gmra.mrb[0].mxu0 %v2908
    %v5453 = vpop.f32.mrb[0].mxu0
    %v5454 = vadd.f32 %v5341, %v5453
    %v5455 = vpop.f32.mrb[0].mxu0
    %v5456 = vadd.f32 %v5343, %v5455
    %5457 = vmatprep.mubr.f32.mxu0 %v2920
    %5458 = vmatmul.mubr.f32.gmra.mrb[0].mxu0 %v2917
    %v5459 = vpop.f32.mrb[0].mxu0
    %v5460 = vadd.f32 %v5347, %v5459
    %v5461 = vpop.f32.mrb[0].mxu0
    %v5462 = vadd.f32 %v5349, %v5461
    %5463 = vmatprep.mubr.f32.mxu0 %v2929
    %5464 = vmatmul.mubr.f32.gmra.mrb[0].mxu0 %v2926
    %v5465 = vpop.f32.mrb[0].mxu0
    %v5466 = vadd.f32 %v5353, %v5465
    %v5467 = vpop.f32.mrb[0].mxu0
    %v5468 = vadd.f32 %v5355, %v5467
    %5469 = vmatprep.mubr.f32.mxu0 %v2938
    %5470 = vmatmul.mubr.f32.gmra.mrb[0].mxu0 %v2935
    %v5471 = vpop.f32.mrb[0].mxu0
    %v5472 = vadd.f32 %v5359, %v5471
    %v5473 = vpop.f32.mrb[0].mxu0
    %v5474 = vadd.f32 %v5361, %v5473
    %5475 = vdwg.mxu0
    %5476 = vmatprep.subr.mxu0 %v3638
    %5477 = vmatpush1.msra.mxu0 %v3637
    %5478 = vmatprep.subr.mxu0 %v3642
    %5479 = vmatpush1.msra.mxu0 %v3641
    %5480 = vmatprep.subr.mxu0 %v3646
    %5481 = vmatpush1.msra.mxu0 %v3645
    %5482 = vmatprep.subr.mxu0 %v3650
    %5483 = vmatpush1.msra.mxu0 %v3649
    %5484 = vmatprep.subr.mxu0 %v3654
    %5485 = vmatpush1.msra.mxu0 %v3653
    %5486 = vmatprep.subr.mxu0 %v3658
    %5487 = vmatpush1.msra.mxu0 %v3657
    %5488 = vmatprep.subr.mxu0 %v3662
    %5489 = vmatpush1.msra.mxu0 %v3661
    %5490 = vmatprep.subr.mxu0 %v3666
    %5491 = vmatpush1.msra.mxu0 %v3665
    %5492 = vmatprep.subr.mxu0 %v3670
    %5493 = vmatpush1.msra.mxu0 %v3669
    %5494 = vmatprep.subr.mxu0 %v3674
    %5495 = vmatpush1.msra.mxu0 %v3673
    %5496 = vmatprep.subr.mxu0 %v3678
    %5497 = vmatpush1.msra.mxu0 %v3677
    %5498 = vmatprep.subr.mxu0 %v3682
    %5499 = vmatpush1.msra.mxu0 %v3681
    %5500 = vmatprep.subr.mxu0 %v3686
    %5501 = vmatpush1.msra.mxu0 %v3685
    %5502 = vmatprep.subr.mxu0 %v3690
    %5503 = vmatpush1.msra.mxu0 %v3689
    %5504 = vmatprep.subr.mxu0 %v3694
    %5505 = vmatpush1.msra.mxu0 %v3693
    %5506 = vmatprep.subr.mxu0 %v3698
    %5507 = vmatpush1.msra.mxu0 %v3697
    %5508 = vmatprep.subr.mxu0 %v3702
    %5509 = vmatpush1.msra.mxu0 %v3701
    %5510 = vmatprep.subr.mxu0 %v3706
    %5511 = vmatpush1.msra.mxu0 %v3705
    %5512 = vmatprep.subr.mxu0 %v3710
    %5513 = vmatpush1.msra.mxu0 %v3709
    %5514 = vmatprep.subr.mxu0 %v3714
    %5515 = vmatpush1.msra.mxu0 %v3713
    %5516 = vmatprep.subr.mxu0 %v3718
    %5517 = vmatpush1.msra.mxu0 %v3717
    %5518 = vmatprep.subr.mxu0 %v3722
    %5519 = vmatpush1.msra.mxu0 %v3721
    %5520 = vmatprep.subr.mxu0 %v3726
    %5521 = vmatpush1.msra.mxu0 %v3725
    %5522 = vmatprep.subr.mxu0 %v3730
    %5523 = vmatpush1.msra.mxu0 %v3729
    %5524 = vmatprep.subr.mxu0 %v3734
    %5525 = vmatpush1.msra.mxu0 %v3733
    %5526 = vmatprep.subr.mxu0 %v3738
    %5527 = vmatpush1.msra.mxu0 %v3737
    %5528 = vmatprep.subr.mxu0 %v3742
    %5529 = vmatpush1.msra.mxu0 %v3741
    %5530 = vmatprep.subr.mxu0 %v3746
    %5531 = vmatpush1.msra.mxu0 %v3745
    %5532 = vmatprep.subr.mxu0 %v3750
    %5533 = vmatpush1.msra.mxu0 %v3749
    %5534 = vmatprep.subr.mxu0 %v3754
    %5535 = vmatpush1.msra.mxu0 %v3753
    %5536 = vmatprep.subr.mxu0 %v3758
    %5537 = vmatpush1.msra.mxu0 %v3757
    %5538 = vmatprep.subr.mxu0 %v3762
    %5539 = vmatpush1.msra.mxu0 %v3761
    %5540 = vmatprep.mubr.f32.mxu0 %v2968
    %5541 = vmatmul.mubr.f32.gmra.mrb[0].mxu0 %v2965
    %v5542 = vpop.f32.mrb[0].mxu0
    %v5543 = vadd.f32 %v5430, %v5542
    %v5544 = vpop.f32.mrb[0].mxu0
    %v5545 = vadd.f32 %v5432, %v5544
    %5546 = vmatprep.mubr.f32.mxu0 %v2977
    %5547 = vmatmul.mubr.f32.gmra.mrb[0].mxu0 %v2974
    %v5548 = vpop.f32.mrb[0].mxu0
    %v5549 = vadd.f32 %v5436, %v5548
    %v5550 = vpop.f32.mrb[0].mxu0
    %v5551 = vadd.f32 %v5438, %v5550
    %5552 = vmatprep.mubr.f32.mxu0 %v2986
    %5553 = vmatmul.mubr.f32.gmra.mrb[0].mxu0 %v2983
    %v5554 = vpop.f32.mrb[0].mxu0
    %v5555 = vadd.f32 %v5442, %v5554
    %v5556 = vpop.f32.mrb[0].mxu0
    %v5557 = vadd.f32 %v5444, %v5556
    %5558 = vmatprep.mubr.f32.mxu0 %v2995
    %5559 = vmatmul.mubr.f32.gmra.mrb[0].mxu0 %v2992
    %v5560 = vpop.f32.mrb[0].mxu0
    %v5561 = vadd.f32 %v5448, %v5560
    %v5562 = vpop.f32.mrb[0].mxu0
    %v5563 = vadd.f32 %v5450, %v5562
    %5564 = vmatprep.mubr.f32.mxu0 %v3004
    %5565 = vmatmul.mubr.f32.gmra.mrb[0].mxu0 %v3001
    %v5566 = vpop.f32.mrb[0].mxu0
    %v5567 = vadd.f32 %v5454, %v5566
    %v5568 = vpop.f32.mrb[0].mxu0
    %v5569 = vadd.f32 %v5456, %v5568
    %5570 = vmatprep.mubr.f32.mxu0 %v3013
    %5571 = vmatmul.mubr.f32.gmra.mrb[0].mxu0 %v3010
    %v5572 = vpop.f32.mrb[0].mxu0
    %v5573 = vadd.f32 %v5460, %v5572
    %v5574 = vpop.f32.mrb[0].mxu0
    %v5575 = vadd.f32 %v5462, %v5574
    %5576 = vmatprep.mubr.f32.mxu0 %v3022
    %5577 = vmatmul.mubr.f32.gmra.mrb[0].mxu0 %v3019
    %v5578 = vpop.f32.mrb[0].mxu0
    %v5579 = vadd.f32 %v5466, %v5578
    %v5580 = vpop.f32.mrb[0].mxu0
    %v5581 = vadd.f32 %v5468, %v5580
    %5582 = vmatprep.mubr.f32.mxu0 %v3031
    %5583 = vmatmul.mubr.f32.gmra.mrb[0].mxu0 %v3028
    %v5584 = vpop.f32.mrb[0].mxu0
    %v5585 = vadd.f32 %v5472, %v5584
    %v5586 = vpop.f32.mrb[0].mxu0
    %v5587 = vadd.f32 %v5474, %v5586
    %5588 = vdwg.mxu0
    %5589 = vmatprep.subr.mxu0 %v3766
    %5590 = vmatpush1.msra.mxu0 %v3765
    %5591 = vmatprep.subr.mxu0 %v3770
    %5592 = vmatpush1.msra.mxu0 %v3769
    %5593 = vmatprep.subr.mxu0 %v3774
    %5594 = vmatpush1.msra.mxu0 %v3773
    %5595 = vmatprep.subr.mxu0 %v3778
    %5596 = vmatpush1.msra.mxu0 %v3777
    %5597 = vmatprep.subr.mxu0 %v3782
    %5598 = vmatpush1.msra.mxu0 %v3781
    %5599 = vmatprep.subr.mxu0 %v3786
    %5600 = vmatpush1.msra.mxu0 %v3785
    %5601 = vmatprep.subr.mxu0 %v3790
    %5602 = vmatpush1.msra.mxu0 %v3789
    %5603 = vmatprep.subr.mxu0 %v3794
    %5604 = vmatpush1.msra.mxu0 %v3793
    %5605 = vmatprep.subr.mxu0 %v3798
    %5606 = vmatpush1.msra.mxu0 %v3797
    %5607 = vmatprep.subr.mxu0 %v3802
    %5608 = vmatpush1.msra.mxu0 %v3801
    %5609 = vmatprep.subr.mxu0 %v3806
    %5610 = vmatpush1.msra.mxu0 %v3805
    %5611 = vmatprep.subr.mxu0 %v3810
    %5612 = vmatpush1.msra.mxu0 %v3809
    %5613 = vmatprep.subr.mxu0 %v3814
    %5614 = vmatpush1.msra.mxu0 %v3813
    %5615 = vmatprep.subr.mxu0 %v3818
    %5616 = vmatpush1.msra.mxu0 %v3817
    %5617 = vmatprep.subr.mxu0 %v3822
    %5618 = vmatpush1.msra.mxu0 %v3821
    %5619 = vmatprep.subr.mxu0 %v3826
    %5620 = vmatpush1.msra.mxu0 %v3825
    %5621 = vmatprep.subr.mxu0 %v3830
    %5622 = vmatpush1.msra.mxu0 %v3829
    %5623 = vmatprep.subr.mxu0 %v3834
    %5624 = vmatpush1.msra.mxu0 %v3833
    %5625 = vmatprep.subr.mxu0 %v3838
    %5626 = vmatpush1.msra.mxu0 %v3837
    %5627 = vmatprep.subr.mxu0 %v3842
    %5628 = vmatpush1.msra.mxu0 %v3841
    %5629 = vmatprep.subr.mxu0 %v3846
    %5630 = vmatpush1.msra.mxu0 %v3845
    %5631 = vmatprep.subr.mxu0 %v3850
    %5632 = vmatpush1.msra.mxu0 %v3849
    %5633 = vmatprep.subr.mxu0 %v3854
    %5634 = vmatpush1.msra.mxu0 %v3853
    %5635 = vmatprep.subr.mxu0 %v3858
    %5636 = vmatpush1.msra.mxu0 %v3857
    %5637 = vmatprep.subr.mxu0 %v3862
    %5638 = vmatpush1.msra.mxu0 %v3861
    %5639 = vmatprep.subr.mxu0 %v3866
    %5640 = vmatpush1.msra.mxu0 %v3865
    %5641 = vmatprep.subr.mxu0 %v3870
    %5642 = vmatpush1.msra.mxu0 %v3869
    %5643 = vmatprep.subr.mxu0 %v3874
    %5644 = vmatpush1.msra.mxu0 %v3873
    %5645 = vmatprep.subr.mxu0 %v3878
    %5646 = vmatpush1.msra.mxu0 %v3877
    %5647 = vmatprep.subr.mxu0 %v3882
    %5648 = vmatpush1.msra.mxu0 %v3881
    %5649 = vmatprep.subr.mxu0 %v3886
    %5650 = vmatpush1.msra.mxu0 %v3885
    %5651 = vmatprep.subr.mxu0 %v3890
    %5652 = vmatpush1.msra.mxu0 %v3889
    %5653 = vmatprep.mubr.f32.mxu0 %v3061
    %5654 = vmatmul.mubr.f32.gmra.mrb[0].mxu0 %v2971
    %v5655 = vpop.f32.mrb[0].mxu0
    %v5656 = vadd.f32 %v5543, %v5655
    %v5657 = vpop.f32.mrb[0].mxu0
    %v5658 = vadd.f32 %v5545, %v5657
    %5659 = vmatprep.mubr.f32.mxu0 %v3070
    %5660 = vmatmul.mubr.f32.gmra.mrb[0].mxu0 %v2980
    %v5661 = vpop.f32.mrb[0].mxu0
    %v5662 = vadd.f32 %v5549, %v5661
    %v5663 = vpop.f32.mrb[0].mxu0
    %v5664 = vadd.f32 %v5551, %v5663
    %5665 = vmatprep.mubr.f32.mxu0 %v3079
    %5666 = vmatmul.mubr.f32.gmra.mrb[0].mxu0 %v2989
    %v5667 = vpop.f32.mrb[0].mxu0
    %v5668 = vadd.f32 %v5555, %v5667
    %v5669 = vpop.f32.mrb[0].mxu0
    %v5670 = vadd.f32 %v5557, %v5669
    %5671 = vmatprep.mubr.f32.mxu0 %v3088
    %5672 = vmatmul.mubr.f32.gmra.mrb[0].mxu0 %v2998
    %v5673 = vpop.f32.mrb[0].mxu0
    %v5674 = vadd.f32 %v5561, %v5673
    %v5675 = vpop.f32.mrb[0].mxu0
    %v5676 = vadd.f32 %v5563, %v5675
    %5677 = vmatprep.mubr.f32.mxu0 %v3097
    %5678 = vmatmul.mubr.f32.gmra.mrb[0].mxu0 %v3007
    %v5679 = vpop.f32.mrb[0].mxu0
    %v5680 = vadd.f32 %v5567, %v5679
    %v5681 = vpop.f32.mrb[0].mxu0
    %v5682 = vadd.f32 %v5569, %v5681
    %5683 = vmatprep.mubr.f32.mxu0 %v3106
    %5684 = vmatmul.mubr.f32.gmra.mrb[0].mxu0 %v3016
    %v5685 = vpop.f32.mrb[0].mxu0
    %v5686 = vadd.f32 %v5573, %v5685
    %v5687 = vpop.f32.mrb[0].mxu0
    %v5688 = vadd.f32 %v5575, %v5687
    %5689 = vmatprep.mubr.f32.mxu0 %v3115
    %5690 = vmatmul.mubr.f32.gmra.mrb[0].mxu0 %v3025
    %v5691 = vpop.f32.mrb[0].mxu0
    %v5692 = vadd.f32 %v5579, %v5691
    %v5693 = vpop.f32.mrb[0].mxu0
    %v5694 = vadd.f32 %v5581, %v5693
    %5695 = vmatprep.mubr.f32.mxu0 %v3124
    %5696 = vmatmul.mubr.f32.gmra.mrb[0].mxu0 %v3034
    %v5697 = vpop.f32.mrb[0].mxu0
    %v5698 = vadd.f32 %v5585, %v5697
    %v5699 = vpop.f32.mrb[0].mxu0
    %v5700 = vadd.f32 %v5587, %v5699
    %5701 = vdwg.mxu0
    %5702 = vmatprep.subr.mxu0 %v3894
    %5703 = vmatpush1.msra.mxu0 %v3893
    %5704 = vmatprep.subr.mxu0 %v3898
    %5705 = vmatpush1.msra.mxu0 %v3897
    %5706 = vmatprep.subr.mxu0 %v3902
    %5707 = vmatpush1.msra.mxu0 %v3901
    %5708 = vmatprep.subr.mxu0 %v3906
    %5709 = vmatpush1.msra.mxu0 %v3905
    %5710 = vmatprep.subr.mxu0 %v3910
    %5711 = vmatpush1.msra.mxu0 %v3909
    %5712 = vmatprep.subr.mxu0 %v3914
    %5713 = vmatpush1.msra.mxu0 %v3913
    %5714 = vmatprep.subr.mxu0 %v3918
    %5715 = vmatpush1.msra.mxu0 %v3917
    %5716 = vmatprep.subr.mxu0 %v3922
    %5717 = vmatpush1.msra.mxu0 %v3921
    %5718 = vmatprep.subr.mxu0 %v3926
    %5719 = vmatpush1.msra.mxu0 %v3925
    %5720 = vmatprep.subr.mxu0 %v3930
    %5721 = vmatpush1.msra.mxu0 %v3929
    %5722 = vmatprep.subr.mxu0 %v3934
    %5723 = vmatpush1.msra.mxu0 %v3933
    %5724 = vmatprep.subr.mxu0 %v3938
    %5725 = vmatpush1.msra.mxu0 %v3937
    %5726 = vmatprep.subr.mxu0 %v3942
    %5727 = vmatpush1.msra.mxu0 %v3941
    %5728 = vmatprep.subr.mxu0 %v3946
    %5729 = vmatpush1.msra.mxu0 %v3945
    %5730 = vmatprep.subr.mxu0 %v3950
    %5731 = vmatpush1.msra.mxu0 %v3949
    %5732 = vmatprep.subr.mxu0 %v3954
    %5733 = vmatpush1.msra.mxu0 %v3953
    %5734 = vmatprep.subr.mxu0 %v3958
    %5735 = vmatpush1.msra.mxu0 %v3957
    %5736 = vmatprep.subr.mxu0 %v3962
    %5737 = vmatpush1.msra.mxu0 %v3961
    %5738 = vmatprep.subr.mxu0 %v3966
    %5739 = vmatpush1.msra.mxu0 %v3965
    %5740 = vmatprep.subr.mxu0 %v3970
    %5741 = vmatpush1.msra.mxu0 %v3969
    %5742 = vmatprep.subr.mxu0 %v3974
    %5743 = vmatpush1.msra.mxu0 %v3973
    %5744 = vmatprep.subr.mxu0 %v3978
    %5745 = vmatpush1.msra.mxu0 %v3977
    %5746 = vmatprep.subr.mxu0 %v3982
    %5747 = vmatpush1.msra.mxu0 %v3981
    %5748 = vmatprep.subr.mxu0 %v3986
    %5749 = vmatpush1.msra.mxu0 %v3985
    %5750 = vmatprep.subr.mxu0 %v3990
    %5751 = vmatpush1.msra.mxu0 %v3989
    %5752 = vmatprep.subr.mxu0 %v3994
    %5753 = vmatpush1.msra.mxu0 %v3993
    %5754 = vmatprep.subr.mxu0 %v3998
    %5755 = vmatpush1.msra.mxu0 %v3997
    %5756 = vmatprep.subr.mxu0 %v4002
    %5757 = vmatpush1.msra.mxu0 %v4001
    %5758 = vmatprep.subr.mxu0 %v4006
    %5759 = vmatpush1.msra.mxu0 %v4005
    %5760 = vmatprep.subr.mxu0 %v4010
    %5761 = vmatpush1.msra.mxu0 %v4009
    %5762 = vmatprep.subr.mxu0 %v4014
    %5763 = vmatpush1.msra.mxu0 %v4013
    %5764 = vmatprep.subr.mxu0 %v4018
    %5765 = vmatpush1.msra.mxu0 %v4017
    %5766 = vmatprep.mubr.f32.mxu0 %v3067
    %5767 = vmatmul.mubr.f32.gmra.mrb[0].mxu0 %v3064
    %v5768 = vpop.f32.mrb[0].mxu0
    %v5769 = vadd.f32 %v5656, %v5768
    %v5770 = vpop.f32.mrb[0].mxu0
    %v5771 = vadd.f32 %v5658, %v5770
    %5772 = vmatprep.mubr.f32.mxu0 %v3076
    %5773 = vmatmul.mubr.f32.gmra.mrb[0].mxu0 %v3073
    %v5774 = vpop.f32.mrb[0].mxu0
    %v5775 = vadd.f32 %v5662, %v5774
    %v5776 = vpop.f32.mrb[0].mxu0
    %v5777 = vadd.f32 %v5664, %v5776
    %5778 = vmatprep.mubr.f32.mxu0 %v3085
    %5779 = vmatmul.mubr.f32.gmra.mrb[0].mxu0 %v3082
    %v5780 = vpop.f32.mrb[0].mxu0
    %v5781 = vadd.f32 %v5668, %v5780
    %v5782 = vpop.f32.mrb[0].mxu0
    %v5783 = vadd.f32 %v5670, %v5782
    %5784 = vmatprep.mubr.f32.mxu0 %v3094
    %5785 = vmatmul.mubr.f32.gmra.mrb[0].mxu0 %v3091
    %v5786 = vpop.f32.mrb[0].mxu0
    %v5787 = vadd.f32 %v5674, %v5786
    %v5788 = vpop.f32.mrb[0].mxu0
    %v5789 = vadd.f32 %v5676, %v5788
    %5790 = vmatprep.mubr.f32.mxu0 %v3103
    %5791 = vmatmul.mubr.f32.gmra.mrb[0].mxu0 %v3100
    %v5792 = vpop.f32.mrb[0].mxu0
    %v5793 = vadd.f32 %v5680, %v5792
    %v5794 = vpop.f32.mrb[0].mxu0
    %v5795 = vadd.f32 %v5682, %v5794
    %5796 = vmatprep.mubr.f32.mxu0 %v3112
    %5797 = vmatmul.mubr.f32.gmra.mrb[0].mxu0 %v3109
    %v5798 = vpop.f32.mrb[0].mxu0
    %v5799 = vadd.f32 %v5686, %v5798
    %v5800 = vpop.f32.mrb[0].mxu0
    %v5801 = vadd.f32 %v5688, %v5800
    %5802 = vmatprep.mubr.f32.mxu0 %v3121
    %5803 = vmatmul.mubr.f32.gmra.mrb[0].mxu0 %v3118
    %v5804 = vpop.f32.mrb[0].mxu0
    %v5805 = vadd.f32 %v5692, %v5804
    %v5806 = vpop.f32.mrb[0].mxu0
    %v5807 = vadd.f32 %v5694, %v5806
    %5808 = vmatprep.mubr.f32.mxu0 %v3130
    %5809 = vmatmul.mubr.f32.gmra.mrb[0].mxu0 %v3127
    %v5810 = vpop.f32.mrb[0].mxu0
    %v5811 = vadd.f32 %v5698, %v5810
    %v5812 = vpop.f32.mrb[0].mxu0
    %v5813 = vadd.f32 %v5700, %v5812
    %5814 = vdwg.mxu0
    %5815 = vmatprep.subr.mxu0 %v4022
    %5816 = vmatpush1.msra.mxu0 %v4021
    %5817 = vmatprep.subr.mxu0 %v4026
    %5818 = vmatpush1.msra.mxu0 %v4025
    %5819 = vmatprep.subr.mxu0 %v4030
    %5820 = vmatpush1.msra.mxu0 %v4029
    %5821 = vmatprep.subr.mxu0 %v4034
    %5822 = vmatpush1.msra.mxu0 %v4033
    %5823 = vmatprep.subr.mxu0 %v4038
    %5824 = vmatpush1.msra.mxu0 %v4037
    %5825 = vmatprep.subr.mxu0 %v4042
    %5826 = vmatpush1.msra.mxu0 %v4041
    %5827 = vmatprep.subr.mxu0 %v4046
    %5828 = vmatpush1.msra.mxu0 %v4045
    %5829 = vmatprep.subr.mxu0 %v4050
    %5830 = vmatpush1.msra.mxu0 %v4049
    %5831 = vmatprep.subr.mxu0 %v4054
    %5832 = vmatpush1.msra.mxu0 %v4053
    %5833 = vmatprep.subr.mxu0 %v4058
    %5834 = vmatpush1.msra.mxu0 %v4057
    %5835 = vmatprep.subr.mxu0 %v4062
    %5836 = vmatpush1.msra.mxu0 %v4061
    %5837 = vmatprep.subr.mxu0 %v4066
    %5838 = vmatpush1.msra.mxu0 %v4065
    %5839 = vmatprep.subr.mxu0 %v4070
    %5840 = vmatpush1.msra.mxu0 %v4069
    %5841 = vmatprep.subr.mxu0 %v4074
    %5842 = vmatpush1.msra.mxu0 %v4073
    %5843 = vmatprep.subr.mxu0 %v4078
    %5844 = vmatpush1.msra.mxu0 %v4077
    %5845 = vmatprep.subr.mxu0 %v4082
    %5846 = vmatpush1.msra.mxu0 %v4081
    %5847 = vmatprep.subr.mxu0 %v4086
    %5848 = vmatpush1.msra.mxu0 %v4085
    %5849 = vmatprep.subr.mxu0 %v4090
    %5850 = vmatpush1.msra.mxu0 %v4089
    %5851 = vmatprep.subr.mxu0 %v4094
    %5852 = vmatpush1.msra.mxu0 %v4093
    %5853 = vmatprep.subr.mxu0 %v4098
    %5854 = vmatpush1.msra.mxu0 %v4097
    %5855 = vmatprep.subr.mxu0 %v4102
    %5856 = vmatpush1.msra.mxu0 %v4101
    %5857 = vmatprep.subr.mxu0 %v4106
    %5858 = vmatpush1.msra.mxu0 %v4105
    %5859 = vmatprep.subr.mxu0 %v4110
    %5860 = vmatpush1.msra.mxu0 %v4109
    %5861 = vmatprep.subr.mxu0 %v4114
    %5862 = vmatpush1.msra.mxu0 %v4113
    %5863 = vmatprep.subr.mxu0 %v4118
    %5864 = vmatpush1.msra.mxu0 %v4117
    %5865 = vmatprep.subr.mxu0 %v4122
    %5866 = vmatpush1.msra.mxu0 %v4121
    %5867 = vmatprep.subr.mxu0 %v4126
    %5868 = vmatpush1.msra.mxu0 %v4125
    %5869 = vmatprep.subr.mxu0 %v4130
    %5870 = vmatpush1.msra.mxu0 %v4129
    %5871 = vmatprep.subr.mxu0 %v4134
    %5872 = vmatpush1.msra.mxu0 %v4133
    %5873 = vmatprep.subr.mxu0 %v4138
    %5874 = vmatpush1.msra.mxu0 %v4137
    %5875 = vmatprep.subr.mxu0 %v4142
    %5876 = vmatpush1.msra.mxu0 %v4141
    %5877 = vmatprep.subr.mxu0 %v4146
    %5878 = vmatpush1.msra.mxu0 %v4145
    %5879 = vmatprep.mubr.f32.mxu0 %v3160
    %5880 = vmatmul.mubr.f32.gmra.mrb[0].mxu0 %v3157
    %v5881 = vpop.f32.mrb[0].mxu0
    %v5882 = vadd.f32 %v5769, %v5881
    %v5883 = vpop.f32.mrb[0].mxu0
    %v5884 = vadd.f32 %v5771, %v5883
    %5885 = vmatprep.mubr.f32.mxu0 %v3169
    %5886 = vmatmul.mubr.f32.gmra.mrb[0].mxu0 %v3166
    %v5887 = vpop.f32.mrb[0].mxu0
    %v5888 = vadd.f32 %v5775, %v5887
    %v5889 = vpop.f32.mrb[0].mxu0
    %v5890 = vadd.f32 %v5777, %v5889
    %5891 = vmatprep.mubr.f32.mxu0 %v3178
    %5892 = vmatmul.mubr.f32.gmra.mrb[0].mxu0 %v3175
    %v5893 = vpop.f32.mrb[0].mxu0
    %v5894 = vadd.f32 %v5781, %v5893
    %v5895 = vpop.f32.mrb[0].mxu0
    %v5896 = vadd.f32 %v5783, %v5895
    %5897 = vmatprep.mubr.f32.mxu0 %v3187
    %5898 = vmatmul.mubr.f32.gmra.mrb[0].mxu0 %v3184
    %v5899 = vpop.f32.mrb[0].mxu0
    %v5900 = vadd.f32 %v5787, %v5899
    %v5901 = vpop.f32.mrb[0].mxu0
    %v5902 = vadd.f32 %v5789, %v5901
    %5903 = vmatprep.mubr.f32.mxu0 %v3196
    %5904 = vmatmul.mubr.f32.gmra.mrb[0].mxu0 %v3193
    %v5905 = vpop.f32.mrb[0].mxu0
    %v5906 = vadd.f32 %v5793, %v5905
    %v5907 = vpop.f32.mrb[0].mxu0
    %v5908 = vadd.f32 %v5795, %v5907
    %5909 = vmatprep.mubr.f32.mxu0 %v3205
    %5910 = vmatmul.mubr.f32.gmra.mrb[0].mxu0 %v3202
    %v5911 = vpop.f32.mrb[0].mxu0
    %v5912 = vadd.f32 %v5799, %v5911
    %v5913 = vpop.f32.mrb[0].mxu0
    %v5914 = vadd.f32 %v5801, %v5913
    %5915 = vmatprep.mubr.f32.mxu0 %v3214
    %5916 = vmatmul.mubr.f32.gmra.mrb[0].mxu0 %v3211
    %v5917 = vpop.f32.mrb[0].mxu0
    %v5918 = vadd.f32 %v5805, %v5917
    %v5919 = vpop.f32.mrb[0].mxu0
    %v5920 = vadd.f32 %v5807, %v5919
    %5921 = vmatprep.mubr.f32.mxu0 %v3223
    %5922 = vmatmul.mubr.f32.gmra.mrb[0].mxu0 %v3220
    %v5923 = vpop.f32.mrb[0].mxu0
    %v5924 = vadd.f32 %v5811, %v5923
    %v5925 = vpop.f32.mrb[0].mxu0
    %v5926 = vadd.f32 %v5813, %v5925
    %5927 = vdwg.mxu0
    %5928 = vmatprep.subr.mxu0 %v4150
    %5929 = vmatpush1.msra.mxu0 %v4149
    %5930 = vmatprep.subr.mxu0 %v4154
    %5931 = vmatpush1.msra.mxu0 %v4153
    %5932 = vmatprep.subr.mxu0 %v4158
    %5933 = vmatpush1.msra.mxu0 %v4157
    %5934 = vmatprep.subr.mxu0 %v4162
    %5935 = vmatpush1.msra.mxu0 %v4161
    %5936 = vmatprep.subr.mxu0 %v4166
    %5937 = vmatpush1.msra.mxu0 %v4165
    %5938 = vmatprep.subr.mxu0 %v4170
    %5939 = vmatpush1.msra.mxu0 %v4169
    %5940 = vmatprep.subr.mxu0 %v4174
    %5941 = vmatpush1.msra.mxu0 %v4173
    %5942 = vmatprep.subr.mxu0 %v4178
    %5943 = vmatpush1.msra.mxu0 %v4177
    %5944 = vmatprep.subr.mxu0 %v4182
    %5945 = vmatpush1.msra.mxu0 %v4181
    %5946 = vmatprep.subr.mxu0 %v4186
    %5947 = vmatpush1.msra.mxu0 %v4185
    %5948 = vmatprep.subr.mxu0 %v4190
    %5949 = vmatpush1.msra.mxu0 %v4189
    %5950 = vmatprep.subr.mxu0 %v4194
    %5951 = vmatpush1.msra.mxu0 %v4193
    %5952 = vmatprep.subr.mxu0 %v4198
    %5953 = vmatpush1.msra.mxu0 %v4197
    %5954 = vmatprep.subr.mxu0 %v4202
    %5955 = vmatpush1.msra.mxu0 %v4201
    %5956 = vmatprep.subr.mxu0 %v4206
    %5957 = vmatpush1.msra.mxu0 %v4205
    %5958 = vmatprep.subr.mxu0 %v4210
    %5959 = vmatpush1.msra.mxu0 %v4209
    %5960 = vmatprep.subr.mxu0 0.0
    %5961 = vmatpush1.msra.mxu0 0.0
    %5962 = vmatprep.subr.mxu0 0.0
    %5963 = vmatpush1.msra.mxu0 0.0
    %5964 = vmatprep.subr.mxu0 0.0
    %5965 = vmatpush1.msra.mxu0 0.0
    %5966 = vmatprep.subr.mxu0 0.0
    %5967 = vmatpush1.msra.mxu0 0.0
    %5968 = vmatprep.subr.mxu0 0.0
    %5969 = vmatpush1.msra.mxu0 0.0
    %5970 = vmatprep.subr.mxu0 0.0
    %5971 = vmatpush1.msra.mxu0 0.0
    %5972 = vmatprep.subr.mxu0 0.0
    %5973 = vmatpush1.msra.mxu0 0.0
    %5974 = vmatprep.subr.mxu0 0.0
    %5975 = vmatpush1.msra.mxu0 0.0
    %5976 = vmatprep.subr.mxu0 0.0
    %5977 = vmatpush1.msra.mxu0 0.0
    %5978 = vmatprep.subr.mxu0 0.0
    %5979 = vmatpush1.msra.mxu0 0.0
    %5980 = vmatprep.subr.mxu0 0.0
    %5981 = vmatpush1.msra.mxu0 0.0
    %5982 = vmatprep.subr.mxu0 0.0
    %5983 = vmatpush1.msra.mxu0 0.0
    %5984 = vmatprep.subr.mxu0 0.0
    %5985 = vmatpush1.msra.mxu0 0.0
    %5986 = vmatprep.subr.mxu0 0.0
    %5987 = vmatpush1.msra.mxu0 0.0
    %5988 = vmatprep.subr.mxu0 0.0
    %5989 = vmatpush1.msra.mxu0 0.0
    %5990 = vmatprep.subr.mxu0 0.0
    %5991 = vmatpush1.msra.mxu0 0.0
    %5992 = vmatprep.mubr.f32.mxu0 0.0
    %5993 = vmatmul.mubr.f32.gmra.mrb[0].mxu0 %v3163
    %v5994 = vpop.f32.mrb[0].mxu0
    %v5995 = vadd.f32 %v5882, %v5994
    %v5996 = vpop.f32.mrb[0].mxu0
    %v5997 = vadd.f32 %v5884, %v5996
    %5998 = vmatprep.mubr.f32.mxu0 0.0
    %5999 = vmatmul.mubr.f32.gmra.mrb[0].mxu0 %v3172
    %v6000 = vpop.f32.mrb[0].mxu0
    %v6001 = vadd.f32 %v5888, %v6000
    %v6002 = vpop.f32.mrb[0].mxu0
    %v6003 = vadd.f32 %v5890, %v6002
    %6004 = vmatprep.mubr.f32.mxu0 0.0
    %6005 = vmatmul.mubr.f32.gmra.mrb[0].mxu0 %v3181
    %v6006 = vpop.f32.mrb[0].mxu0
    %v6007 = vadd.f32 %v5894, %v6006
    %v6008 = vpop.f32.mrb[0].mxu0
    %v6009 = vadd.f32 %v5896, %v6008
    %6010 = vmatprep.mubr.f32.mxu0 0.0
    %6011 = vmatmul.mubr.f32.gmra.mrb[0].mxu0 %v3190
    %v6012 = vpop.f32.mrb[0].mxu0
    %v6013 = vadd.f32 %v5900, %v6012
    %v6014 = vpop.f32.mrb[0].mxu0
    %v6015 = vadd.f32 %v5902, %v6014
    %6016 = vmatprep.mubr.f32.mxu0 0.0
    %6017 = vmatmul.mubr.f32.gmra.mrb[0].mxu0 %v3199
    %v6018 = vpop.f32.mrb[0].mxu0
    %v6019 = vadd.f32 %v5906, %v6018
    %v6020 = vpop.f32.mrb[0].mxu0
    %v6021 = vadd.f32 %v5908, %v6020
    %6022 = vmatprep.mubr.f32.mxu0 0.0
    %6023 = vmatmul.mubr.f32.gmra.mrb[0].mxu0 %v3208
    %v6024 = vpop.f32.mrb[0].mxu0
    %v6025 = vadd.f32 %v5912, %v6024
    %v6026 = vpop.f32.mrb[0].mxu0
    %v6027 = vadd.f32 %v5914, %v6026
    %6028 = vmatprep.mubr.f32.mxu0 0.0
    %6029 = vmatmul.mubr.f32.gmra.mrb[0].mxu0 %v3217
    %v6030 = vpop.f32.mrb[0].mxu0
    %v6031 = vadd.f32 %v5918, %v6030
    %v6032 = vpop.f32.mrb[0].mxu0
    %v6033 = vadd.f32 %v5920, %v6032
    %6034 = vmatprep.mubr.f32.mxu0 0.0
    %6035 = vmatmul.mubr.f32.gmra.mrb[0].mxu0 %v3226
    %v6036 = vpop.f32.mrb[0].mxu0
    %v6037 = vadd.f32 %v5924, %v6036
    %v6038 = vpop.f32.mrb[0].mxu0
    %v6039 = vadd.f32 %v5926, %v6038
    %6040 = vdwg.mxu0
    %v6041 = vmax.f32 %v5091, %v5995
    %v6042 = vmax.f32 %v5093, %v5997
    %v6043 = vmax.f32 %v5097, %v6001
    %v6044 = vmax.f32 %v5099, %v6003
    %v6045 = vmax.f32 %v5103, %v6007
    %v6046 = vmax.f32 %v5105, %v6009
    %v6047 = vmax.f32 %v5109, %v6013
    %v6048 = vmax.f32 %v5111, %v6015
    %v6049 = vmax.f32 %v5115, %v6019
    %v6050 = vmax.f32 %v5117, %v6021
    %v6051 = vmax.f32 %v5121, %v6025
    %v6052 = vmax.f32 %v5123, %v6027
    %v6053 = vmax.f32 %v5127, %v6031
    %v6054 = vmax.f32 %v5129, %v6033
    %v6055 = vmax.f32 %v5133, %v6037
    %v6056 = vmax.f32 %v5135, %v6039
    %v6073 = vrot.slane %v6041, 1
    %v6074 = vrot.slane %v6042, 1
    %v6075 = vrot.slane %v6043, 1
    %v6076 = vrot.slane %v6044, 1
    %v6077 = vrot.slane %v6045, 1
    %v6078 = vrot.slane %v6046, 1
    %v6079 = vrot.slane %v6047, 1
    %v6080 = vrot.slane %v6048, 1
    %v6081 = vrot.slane %v6049, 1
    %v6082 = vrot.slane %v6050, 1
    %v6083 = vrot.slane %v6051, 1
    %v6084 = vrot.slane %v6052, 1
    %v6085 = vrot.slane %v6053, 1
    %v6086 = vrot.slane %v6054, 1
    %v6087 = vrot.slane %v6055, 1
    %v6088 = vrot.slane %v6056, 1
    %v6105 = vmax.f32 %v6041, %v6073
    %v6106 = vmax.f32 %v6042, %v6074
    %v6107 = vmax.f32 %v6043, %v6075
    %v6108 = vmax.f32 %v6044, %v6076
    %v6109 = vmax.f32 %v6045, %v6077
    %v6110 = vmax.f32 %v6046, %v6078
    %v6111 = vmax.f32 %v6047, %v6079
    %v6112 = vmax.f32 %v6048, %v6080
    %v6113 = vmax.f32 %v6049, %v6081
    %v6114 = vmax.f32 %v6050, %v6082
    %v6115 = vmax.f32 %v6051, %v6083
    %v6116 = vmax.f32 %v6052, %v6084
    %v6117 = vmax.f32 %v6053, %v6085
    %v6118 = vmax.f32 %v6054, %v6086
    %v6119 = vmax.f32 %v6055, %v6087
    %v6120 = vmax.f32 %v6056, %v6088
    %v6137 = vrot.slane %v6105, 1
    %v6138 = vrot.slane %v6106, 1
    %v6139 = vrot.slane %v6107, 1
    %v6140 = vrot.slane %v6108, 1
    %v6141 = vrot.slane %v6109, 1
    %v6142 = vrot.slane %v6110, 1
    %v6143 = vrot.slane %v6111, 1
    %v6144 = vrot.slane %v6112, 1
    %v6145 = vrot.slane %v6113, 1
    %v6146 = vrot.slane %v6114, 1
    %v6147 = vrot.slane %v6115, 1
    %v6148 = vrot.slane %v6116, 1
    %v6149 = vrot.slane %v6117, 1
    %v6150 = vrot.slane %v6118, 1
    %v6151 = vrot.slane %v6119, 1
    %v6152 = vrot.slane %v6120, 1
    %v6169 = vrot.slane %v6105, 2
    %v6170 = vrot.slane %v6106, 2
    %v6171 = vrot.slane %v6107, 2
    %v6172 = vrot.slane %v6108, 2
    %v6173 = vrot.slane %v6109, 2
    %v6174 = vrot.slane %v6110, 2
    %v6175 = vrot.slane %v6111, 2
    %v6176 = vrot.slane %v6112, 2
    %v6177 = vrot.slane %v6113, 2
    %v6178 = vrot.slane %v6114, 2
    %v6179 = vrot.slane %v6115, 2
    %v6180 = vrot.slane %v6116, 2
    %v6181 = vrot.slane %v6117, 2
    %v6182 = vrot.slane %v6118, 2
    %v6183 = vrot.slane %v6119, 2
    %v6184 = vrot.slane %v6120, 2
    %v6201 = vrot.slane %v6105, 3
    %v6202 = vrot.slane %v6106, 3
    %v6203 = vrot.slane %v6107, 3
    %v6204 = vrot.slane %v6108, 3
    %v6205 = vrot.slane %v6109, 3
    %v6206 = vrot.slane %v6110, 3
    %v6207 = vrot.slane %v6111, 3
    %v6208 = vrot.slane %v6112, 3
    %v6209 = vrot.slane %v6113, 3
    %v6210 = vrot.slane %v6114, 3
    %v6211 = vrot.slane %v6115, 3
    %v6212 = vrot.slane %v6116, 3
    %v6213 = vrot.slane %v6117, 3
    %v6214 = vrot.slane %v6118, 3
    %v6215 = vrot.slane %v6119, 3
    %v6216 = vrot.slane %v6120, 3
    %v6233 = vsel %vm2528, %v6105, %v6137
    %v6234 = vsel %vm2528, %v6106, %v6138
    %v6235 = vsel %vm2528, %v6107, %v6139
    %v6236 = vsel %vm2528, %v6108, %v6140
    %v6237 = vsel %vm2528, %v6109, %v6141
    %v6238 = vsel %vm2528, %v6110, %v6142
    %v6239 = vsel %vm2528, %v6111, %v6143
    %v6240 = vsel %vm2528, %v6112, %v6144
    %v6241 = vsel %vm2528, %v6113, %v6145
    %v6242 = vsel %vm2528, %v6114, %v6146
    %v6243 = vsel %vm2528, %v6115, %v6147
    %v6244 = vsel %vm2528, %v6116, %v6148
    %v6245 = vsel %vm2528, %v6117, %v6149
    %v6246 = vsel %vm2528, %v6118, %v6150
    %v6247 = vsel %vm2528, %v6119, %v6151
    %v6248 = vsel %vm2528, %v6120, %v6152
    %v6249 = vsel %vm2553, %v6233, %v6169
    %v6250 = vsel %vm2553, %v6234, %v6170
    %v6251 = vsel %vm2553, %v6235, %v6171
    %v6252 = vsel %vm2553, %v6236, %v6172
    %v6253 = vsel %vm2553, %v6237, %v6173
    %v6254 = vsel %vm2553, %v6238, %v6174
    %v6255 = vsel %vm2553, %v6239, %v6175
    %v6256 = vsel %vm2553, %v6240, %v6176
    %v6257 = vsel %vm2553, %v6241, %v6177
    %v6258 = vsel %vm2553, %v6242, %v6178
    %v6259 = vsel %vm2553, %v6243, %v6179
    %v6260 = vsel %vm2553, %v6244, %v6180
    %v6261 = vsel %vm2553, %v6245, %v6181
    %v6262 = vsel %vm2553, %v6246, %v6182
    %v6263 = vsel %vm2553, %v6247, %v6183
    %v6264 = vsel %vm2553, %v6248, %v6184
    %v6265 = vsel %vm2578, %v6249, %v6201
    %v6266 = vsel %vm2578, %v6250, %v6202
    %v6267 = vsel %vm2578, %v6251, %v6203
    %v6268 = vsel %vm2578, %v6252, %v6204
    %v6269 = vsel %vm2578, %v6253, %v6205
    %v6270 = vsel %vm2578, %v6254, %v6206
    %v6271 = vsel %vm2578, %v6255, %v6207
    %v6272 = vsel %vm2578, %v6256, %v6208
    %v6273 = vsel %vm2578, %v6257, %v6209
    %v6274 = vsel %vm2578, %v6258, %v6210
    %v6275 = vsel %vm2578, %v6259, %v6211
    %v6276 = vsel %vm2578, %v6260, %v6212
    %v6277 = vsel %vm2578, %v6261, %v6213
    %v6278 = vsel %vm2578, %v6262, %v6214
    %v6279 = vsel %vm2578, %v6263, %v6215
    %v6280 = vsel %vm2578, %v6264, %v6216
    %v6281 = vmax.f32 %v6265, 0.0
    %v6282 = vmax.f32 %v6266, 0.0
    %v6283 = vmax.f32 %v6267, 0.0
    %v6284 = vmax.f32 %v6268, 0.0
    %v6285 = vmax.f32 %v6269, 0.0
    %v6286 = vmax.f32 %v6270, 0.0
    %v6287 = vmax.f32 %v6271, 0.0
    %v6288 = vmax.f32 %v6272, 0.0
    %v6289 = vmax.f32 %v6273, 0.0
    %v6290 = vmax.f32 %v6274, 0.0
    %v6291 = vmax.f32 %v6275, 0.0
    %v6292 = vmax.f32 %v6276, 0.0
    %v6293 = vmax.f32 %v6277, 0.0
    %v6294 = vmax.f32 %v6278, 0.0
    %v6295 = vmax.f32 %v6279, 0.0
    %v6296 = vmax.f32 %v6280, 0.0
    %v6297 = vld [vmem:[#allocation9] sm:$0xff]
    %v6298 = vld [vmem:[#allocation9 + $0x8] sm:$0xff]
    %v6299 = vld [vmem:[#allocation9 + $0x10] sm:$0xff]
    %v6300 = vld [vmem:[#allocation9 + $0x18] sm:$0xff]
    %v6301 = vld [vmem:[#allocation9 + $0x20] sm:$0xff]
    %v6302 = vld [vmem:[#allocation9 + $0x28] sm:$0xff]
    %v6303 = vld [vmem:[#allocation9 + $0x30] sm:$0xff]
    %v6304 = vld [vmem:[#allocation9 + $0x38] sm:$0xff]
    %v6305 = vld [vmem:[#allocation9 + $0x40] sm:$0xff]
    %v6306 = vld [vmem:[#allocation9 + $0x48] sm:$0xff]
    %v6307 = vld [vmem:[#allocation9 + $0x50] sm:$0xff]
    %v6308 = vld [vmem:[#allocation9 + $0x58] sm:$0xff]
    %v6309 = vld [vmem:[#allocation9 + $0x60] sm:$0xff]
    %v6310 = vld [vmem:[#allocation9 + $0x68] sm:$0xff]
    %v6311 = vld [vmem:[#allocation9 + $0x70] sm:$0xff]
    %v6312 = vld [vmem:[#allocation9 + $0x78] sm:$0xff]
    %v6313 = vld [vmem:[#allocation9 + $0x80] sm:$0xff]
    %v6314 = vld [vmem:[#allocation9 + $0x88] sm:$0xff]
    %v6315 = vld [vmem:[#allocation9 + $0x90] sm:$0xff]
    %v6316 = vld [vmem:[#allocation9 + $0x98] sm:$0xff]
    %v6317 = vld [vmem:[#allocation9 + $0xa0] sm:$0xff]
    %v6318 = vld [vmem:[#allocation9 + $0xa8] sm:$0xff]
    %v6319 = vld [vmem:[#allocation9 + $0xb0] sm:$0xff]
    %v6320 = vld [vmem:[#allocation9 + $0xb8] sm:$0xff]
    %v6321 = vld [vmem:[#allocation9 + $0xc0] sm:$0xff]
    %v6322 = vld [vmem:[#allocation9 + $0xc8] sm:$0xff]
    %v6323 = vld [vmem:[#allocation9 + $0xd0] sm:$0xff]
    %v6324 = vld [vmem:[#allocation9 + $0xd8] sm:$0xff]
    %v6325 = vld [vmem:[#allocation9 + $0xe0] sm:$0xff]
    %v6326 = vld [vmem:[#allocation9 + $0xe8] sm:$0xff]
    %v6327 = vld [vmem:[#allocation9 + $0xf0] sm:$0xff]
    %v6328 = vld [vmem:[#allocation9 + $0xf8] sm:$0xff]
    %v6329 = vld [vmem:[#allocation9 + $0x100] sm:$0xff]
    %v6330 = vld [vmem:[#allocation9 + $0x108] sm:$0xff]
    %v6331 = vld [vmem:[#allocation9 + $0x110] sm:$0xff]
    %v6332 = vld [vmem:[#allocation9 + $0x118] sm:$0xff]
    %v6333 = vld [vmem:[#allocation9 + $0x120] sm:$0xff]
    %v6334 = vld [vmem:[#allocation9 + $0x128] sm:$0xff]
    %v6335 = vld [vmem:[#allocation9 + $0x130] sm:$0xff]
    %v6336 = vld [vmem:[#allocation9 + $0x138] sm:$0xff]
    %v6337 = vld [vmem:[#allocation9 + $0x140] sm:$0xff]
    %v6338 = vld [vmem:[#allocation9 + $0x148] sm:$0xff]
    %v6339 = vld [vmem:[#allocation9 + $0x150] sm:$0xff]
    %v6340 = vld [vmem:[#allocation9 + $0x158] sm:$0xff]
    %v6341 = vld [vmem:[#allocation9 + $0x160] sm:$0xff]
    %v6342 = vld [vmem:[#allocation9 + $0x168] sm:$0xff]
    %v6343 = vld [vmem:[#allocation9 + $0x170] sm:$0xff]
    %v6344 = vld [vmem:[#allocation9 + $0x178] sm:$0xff]
    %v6345 = vld [vmem:[#allocation9 + $0x180] sm:$0xff]
    %v6346 = vld [vmem:[#allocation9 + $0x188] sm:$0xff]
    %v6347 = vld [vmem:[#allocation9 + $0x190] sm:$0xff]
    %v6348 = vld [vmem:[#allocation9 + $0x198] sm:$0xff]
    %v6349 = vld [vmem:[#allocation9 + $0x1a0] sm:$0xff]
    %v6350 = vld [vmem:[#allocation9 + $0x1a8] sm:$0xff]
    %v6351 = vld [vmem:[#allocation9 + $0x1b0] sm:$0xff]
    %v6352 = vld [vmem:[#allocation9 + $0x1b8] sm:$0xff]
    %v6353 = vld [vmem:[#allocation9 + $0x1c0] sm:$0xff]
    %v6354 = vld [vmem:[#allocation9 + $0x1c8] sm:$0xff]
    %v6355 = vld [vmem:[#allocation9 + $0x1d0] sm:$0xff]
    %v6356 = vld [vmem:[#allocation9 + $0x1d8] sm:$0xff]
    %v6357 = vld [vmem:[#allocation9 + $0x1e0] sm:$0xff]
    %v6358 = vld [vmem:[#allocation9 + $0x1e8] sm:$0xff]
    %v6359 = vld [vmem:[#allocation9 + $0x1f0] sm:$0xff]
    %v6360 = vld [vmem:[#allocation9 + $0x1f8] sm:$0xff]
    %v6377 = vrot.slane %v6281, 1
    %vm6378 = vcmask 1041409
    %v6379 = vsel %vm6378, %v6283, %v6377
    %v6380 = vrot.slane %v6285, 7
    %vm6381 = vcmask 1042434
    %v6382 = vsel %vm6381, %v6380, %v6379
    %v6383 = vrot.slane %v6287, 6
    %vm6384 = vcmask 1043459
    %v6385 = vsel %vm6384, %v6383, %v6382
    %v6386 = vrot.slane %v6289, 5
    %vm6387 = vcmask 1044484
    %v6388 = vsel %vm6387, %v6386, %v6385
    %v6389 = vrot.slane %v6291, 4
    %vm6390 = vcmask 1045509
    %v6391 = vsel %vm6390, %v6389, %v6388
    %v6392 = vrot.slane %v6293, 3
    %vm6393 = vcmask 1046534
    %v6394 = vsel %vm6393, %v6392, %v6391
    %v6395 = vrot.slane %v6295, 2
    %vm6396 = vcmask 1047559
    %v6397 = vsel %vm6396, %v6395, %v6394
    %v6398 = vrot.slane %v6282, 1
    %v6399 = vsel %vm6378, %v6284, %v6398
    %v6400 = vrot.slane %v6286, 7
    %v6401 = vsel %vm6381, %v6400, %v6399
    %v6402 = vrot.slane %v6288, 6
    %v6403 = vsel %vm6384, %v6402, %v6401
    %v6404 = vrot.slane %v6290, 5
    %v6405 = vsel %vm6387, %v6404, %v6403
    %v6406 = vrot.slane %v6292, 4
    %v6407 = vsel %vm6390, %v6406, %v6405
    %v6408 = vrot.slane %v6294, 3
    %v6409 = vsel %vm6393, %v6408, %v6407
    %v6410 = vrot.slane %v6296, 2
    %v6411 = vsel %vm6396, %v6410, %v6409
    %6414 = vmatprep.subr.mxu0 0.0
    %6415 = vmatpush1.msra.mxu0 %v6329
    %6416 = vmatprep.subr.mxu0 0.0
    %6417 = vmatpush1.msra.mxu0 %v6330
    %6418 = vmatprep.subr.mxu0 0.0
    %6419 = vmatpush1.msra.mxu0 %v6331
    %6420 = vmatprep.subr.mxu0 0.0
    %6421 = vmatpush1.msra.mxu0 %v6332
    %6422 = vmatprep.subr.mxu0 0.0
    %6423 = vmatpush1.msra.mxu0 %v6333
    %6424 = vmatprep.subr.mxu0 0.0
    %6425 = vmatpush1.msra.mxu0 %v6334
    %6426 = vmatprep.subr.mxu0 0.0
    %6427 = vmatpush1.msra.mxu0 %v6335
    %6428 = vmatprep.subr.mxu0 0.0
    %6429 = vmatpush1.msra.mxu0 %v6336
    %6430 = vmatprep.subr.mxu0 0.0
    %6431 = vmatpush1.msra.mxu0 %v6337
    %6432 = vmatprep.subr.mxu0 0.0
    %6433 = vmatpush1.msra.mxu0 %v6338
    %6434 = vmatprep.subr.mxu0 0.0
    %6435 = vmatpush1.msra.mxu0 %v6339
    %6436 = vmatprep.subr.mxu0 0.0
    %6437 = vmatpush1.msra.mxu0 %v6340
    %6438 = vmatprep.subr.mxu0 0.0
    %6439 = vmatpush1.msra.mxu0 %v6341
    %6440 = vmatprep.subr.mxu0 0.0
    %6441 = vmatpush1.msra.mxu0 %v6342
    %6442 = vmatprep.subr.mxu0 0.0
    %6443 = vmatpush1.msra.mxu0 %v6343
    %6444 = vmatprep.subr.mxu0 0.0
    %6445 = vmatpush1.msra.mxu0 %v6344
    %6446 = vmatprep.subr.mxu0 0.0
    %6447 = vmatpush1.msra.mxu0 %v6345
    %6448 = vmatprep.subr.mxu0 0.0
    %6449 = vmatpush1.msra.mxu0 %v6346
    %6450 = vmatprep.subr.mxu0 0.0
    %6451 = vmatpush1.msra.mxu0 %v6347
    %6452 = vmatprep.subr.mxu0 0.0
    %6453 = vmatpush1.msra.mxu0 %v6348
    %6454 = vmatprep.subr.mxu0 0.0
    %6455 = vmatpush1.msra.mxu0 %v6349
    %6456 = vmatprep.subr.mxu0 0.0
    %6457 = vmatpush1.msra.mxu0 %v6350
    %6458 = vmatprep.subr.mxu0 0.0
    %6459 = vmatpush1.msra.mxu0 %v6351
    %6460 = vmatprep.subr.mxu0 0.0
    %6461 = vmatpush1.msra.mxu0 %v6352
    %6462 = vmatprep.subr.mxu0 0.0
    %6463 = vmatpush1.msra.mxu0 %v6353
    %6464 = vmatprep.subr.mxu0 0.0
    %6465 = vmatpush1.msra.mxu0 %v6354
    %6466 = vmatprep.subr.mxu0 0.0
    %6467 = vmatpush1.msra.mxu0 %v6355
    %6468 = vmatprep.subr.mxu0 0.0
    %6469 = vmatpush1.msra.mxu0 %v6356
    %6470 = vmatprep.subr.mxu0 0.0
    %6471 = vmatpush1.msra.mxu0 %v6357
    %6472 = vmatprep.subr.mxu0 0.0
    %6473 = vmatpush1.msra.mxu0 %v6358
    %6474 = vmatprep.subr.mxu0 0.0
    %6475 = vmatpush1.msra.mxu0 %v6359
    %6476 = vmatprep.subr.mxu0 0.0
    %6477 = vmatpush1.msra.mxu0 %v6360
    %6478 = vmatprep.mubr.f32.mxu0 %v6411
    %6479 = vmatmul.mubr.f32.gmra.mrb[0].mxu0 %v6397
    %v6480 = vpop.f32.mrb[0].mxu0
    %v6481 = vadd.f32 0.0, %v6480
    %v6482 = vpop.f32.mrb[0].mxu0
    %6483 = vdwg.mxu0
    %v6484 = vrot.slane %v6283, 7
    %v6485 = vsel %vm6378, %v6484, %v6281
    %v6486 = vrot.slane %v6285, 6
    %v6487 = vsel %vm6381, %v6486, %v6485
    %v6488 = vrot.slane %v6287, 5
    %v6489 = vsel %vm6384, %v6488, %v6487
    %v6490 = vrot.slane %v6289, 4
    %v6491 = vsel %vm6387, %v6490, %v6489
    %v6492 = vrot.slane %v6291, 3
    %v6493 = vsel %vm6390, %v6492, %v6491
    %v6494 = vrot.slane %v6293, 2
    %v6495 = vsel %vm6393, %v6494, %v6493
    %v6496 = vrot.slane %v6295, 1
    %v6497 = vsel %vm6396, %v6496, %v6495
    %v6498 = vrot.slane %v6284, 7
    %v6499 = vsel %vm6378, %v6498, %v6282
    %v6500 = vrot.slane %v6286, 6
    %v6501 = vsel %vm6381, %v6500, %v6499
    %v6502 = vrot.slane %v6288, 5
    %v6503 = vsel %vm6384, %v6502, %v6501
    %v6504 = vrot.slane %v6290, 4
    %v6505 = vsel %vm6387, %v6504, %v6503
    %v6506 = vrot.slane %v6292, 3
    %v6507 = vsel %vm6390, %v6506, %v6505
    %v6508 = vrot.slane %v6294, 2
    %v6509 = vsel %vm6393, %v6508, %v6507
    %v6510 = vrot.slane %v6296, 1
    %v6511 = vsel %vm6396, %v6510, %v6509
    %6514 = vmatprep.subr.mxu0 0.0
    %6515 = vmatpush1.msra.mxu0 %v6297
    %6516 = vmatprep.subr.mxu0 0.0
    %6517 = vmatpush1.msra.mxu0 %v6298
    %6518 = vmatprep.subr.mxu0 0.0
    %6519 = vmatpush1.msra.mxu0 %v6299
    %6520 = vmatprep.subr.mxu0 0.0
    %6521 = vmatpush1.msra.mxu0 %v6300
    %6522 = vmatprep.subr.mxu0 0.0
    %6523 = vmatpush1.msra.mxu0 %v6301
    %6524 = vmatprep.subr.mxu0 0.0
    %6525 = vmatpush1.msra.mxu0 %v6302
    %6526 = vmatprep.subr.mxu0 0.0
    %6527 = vmatpush1.msra.mxu0 %v6303
    %6528 = vmatprep.subr.mxu0 0.0
    %6529 = vmatpush1.msra.mxu0 %v6304
    %6530 = vmatprep.subr.mxu0 0.0
    %6531 = vmatpush1.msra.mxu0 %v6305
    %6532 = vmatprep.subr.mxu0 0.0
    %6533 = vmatpush1.msra.mxu0 %v6306
    %6534 = vmatprep.subr.mxu0 0.0
    %6535 = vmatpush1.msra.mxu0 %v6307
    %6536 = vmatprep.subr.mxu0 0.0
    %6537 = vmatpush1.msra.mxu0 %v6308
    %6538 = vmatprep.subr.mxu0 0.0
    %6539 = vmatpush1.msra.mxu0 %v6309
    %6540 = vmatprep.subr.mxu0 0.0
    %6541 = vmatpush1.msra.mxu0 %v6310
    %6542 = vmatprep.subr.mxu0 0.0
    %6543 = vmatpush1.msra.mxu0 %v6311
    %6544 = vmatprep.subr.mxu0 0.0
    %6545 = vmatpush1.msra.mxu0 %v6312
    %6546 = vmatprep.subr.mxu0 0.0
    %6547 = vmatpush1.msra.mxu0 %v6313
    %6548 = vmatprep.subr.mxu0 0.0
    %6549 = vmatpush1.msra.mxu0 %v6314
    %6550 = vmatprep.subr.mxu0 0.0
    %6551 = vmatpush1.msra.mxu0 %v6315
    %6552 = vmatprep.subr.mxu0 0.0
    %6553 = vmatpush1.msra.mxu0 %v6316
    %6554 = vmatprep.subr.mxu0 0.0
    %6555 = vmatpush1.msra.mxu0 %v6317
    %6556 = vmatprep.subr.mxu0 0.0
    %6557 = vmatpush1.msra.mxu0 %v6318
    %6558 = vmatprep.subr.mxu0 0.0
    %6559 = vmatpush1.msra.mxu0 %v6319
    %6560 = vmatprep.subr.mxu0 0.0
    %6561 = vmatpush1.msra.mxu0 %v6320
    %6562 = vmatprep.subr.mxu0 0.0
    %6563 = vmatpush1.msra.mxu0 %v6321
    %6564 = vmatprep.subr.mxu0 0.0
    %6565 = vmatpush1.msra.mxu0 %v6322
    %6566 = vmatprep.subr.mxu0 0.0
    %6567 = vmatpush1.msra.mxu0 %v6323
    %6568 = vmatprep.subr.mxu0 0.0
    %6569 = vmatpush1.msra.mxu0 %v6324
    %6570 = vmatprep.subr.mxu0 0.0
    %6571 = vmatpush1.msra.mxu0 %v6325
    %6572 = vmatprep.subr.mxu0 0.0
    %6573 = vmatpush1.msra.mxu0 %v6326
    %6574 = vmatprep.subr.mxu0 0.0
    %6575 = vmatpush1.msra.mxu0 %v6327
    %6576 = vmatprep.subr.mxu0 0.0
    %6577 = vmatpush1.msra.mxu0 %v6328
    %6578 = vmatprep.mubr.f32.mxu0 %v6511
    %6579 = vmatmul.mubr.f32.gmra.mrb[0].mxu0 %v6497
    %v6580 = vpop.f32.mrb[0].mxu0
    %v6581 = vadd.f32 %v6481, %v6580
    %v6582 = vpop.f32.mrb[0].mxu0
    %6583 = vdwg.mxu0
    %v6584 = vld [vmem:[#allocation9 + $0x200] sm:$0xff]
    %v6585 = vld [vmem:[#allocation9 + $0x208] sm:$0xff]
    %v6586 = vld [vmem:[#allocation9 + $0x210] sm:$0xff]
    %v6587 = vld [vmem:[#allocation9 + $0x218] sm:$0xff]
    %v6588 = vld [vmem:[#allocation9 + $0x220] sm:$0xff]
    %v6589 = vld [vmem:[#allocation9 + $0x228] sm:$0xff]
    %v6590 = vld [vmem:[#allocation9 + $0x230] sm:$0xff]
    %v6591 = vld [vmem:[#allocation9 + $0x238] sm:$0xff]
    %v6592 = vld [vmem:[#allocation9 + $0x240] sm:$0xff]
    %v6593 = vld [vmem:[#allocation9 + $0x248] sm:$0xff]
    %v6594 = vld [vmem:[#allocation9 + $0x250] sm:$0xff]
    %v6595 = vld [vmem:[#allocation9 + $0x258] sm:$0xff]
    %v6596 = vld [vmem:[#allocation9 + $0x260] sm:$0xff]
    %v6597 = vld [vmem:[#allocation9 + $0x268] sm:$0xff]
    %v6598 = vld [vmem:[#allocation9 + $0x270] sm:$0xff]
    %v6599 = vld [vmem:[#allocation9 + $0x278] sm:$0xff]
    %v6600 = vld [vmem:[#allocation9 + $0x280] sm:$0xff]
    %v6601 = vld [vmem:[#allocation9 + $0x288] sm:$0xff]
    %v6602 = vld [vmem:[#allocation9 + $0x290] sm:$0xff]
    %v6603 = vld [vmem:[#allocation9 + $0x298] sm:$0xff]
    %v6604 = vld [vmem:[#allocation9 + $0x2a0] sm:$0xff]
    %v6605 = vld [vmem:[#allocation9 + $0x2a8] sm:$0xff]
    %v6606 = vld [vmem:[#allocation9 + $0x2b0] sm:$0xff]
    %v6607 = vld [vmem:[#allocation9 + $0x2b8] sm:$0xff]
    %v6608 = vld [vmem:[#allocation9 + $0x2c0] sm:$0xff]
    %v6609 = vld [vmem:[#allocation9 + $0x2c8] sm:$0xff]
    %v6610 = vld [vmem:[#allocation9 + $0x2d0] sm:$0xff]
    %v6611 = vld [vmem:[#allocation9 + $0x2d8] sm:$0xff]
    %v6612 = vld [vmem:[#allocation9 + $0x2e0] sm:$0xff]
    %v6613 = vld [vmem:[#allocation9 + $0x2e8] sm:$0xff]
    %v6614 = vld [vmem:[#allocation9 + $0x2f0] sm:$0xff]
    %v6615 = vld [vmem:[#allocation9 + $0x2f8] sm:$0xff]
    %v6616 = vrot.slane %v6281, 2
    %v6617 = vrot.slane %v6283, 1
    %v6618 = vsel %vm6378, %v6617, %v6616
    %v6619 = vsel %vm6381, %v6285, %v6618
    %v6620 = vrot.slane %v6287, 7
    %v6621 = vsel %vm6384, %v6620, %v6619
    %v6622 = vrot.slane %v6289, 6
    %v6623 = vsel %vm6387, %v6622, %v6621
    %v6624 = vrot.slane %v6291, 5
    %v6625 = vsel %vm6390, %v6624, %v6623
    %v6626 = vrot.slane %v6293, 4
    %v6627 = vsel %vm6393, %v6626, %v6625
    %v6628 = vrot.slane %v6295, 3
    %v6629 = vsel %vm6396, %v6628, %v6627
    %v6630 = vrot.slane %v6282, 2
    %v6631 = vrot.slane %v6284, 1
    %v6632 = vsel %vm6378, %v6631, %v6630
    %v6633 = vsel %vm6381, %v6286, %v6632
    %v6634 = vrot.slane %v6288, 7
    %v6635 = vsel %vm6384, %v6634, %v6633
    %v6636 = vrot.slane %v6290, 6
    %v6637 = vsel %vm6387, %v6636, %v6635
    %v6638 = vrot.slane %v6292, 5
    %v6639 = vsel %vm6390, %v6638, %v6637
    %v6640 = vrot.slane %v6294, 4
    %v6641 = vsel %vm6393, %v6640, %v6639
    %v6642 = vrot.slane %v6296, 3
    %v6643 = vsel %vm6396, %v6642, %v6641
    %6646 = vmatprep.subr.mxu0 0.0
    %6647 = vmatpush1.msra.mxu0 %v6584
    %6648 = vmatprep.subr.mxu0 0.0
    %6649 = vmatpush1.msra.mxu0 %v6585
    %6650 = vmatprep.subr.mxu0 0.0
    %6651 = vmatpush1.msra.mxu0 %v6586
    %6652 = vmatprep.subr.mxu0 0.0
    %6653 = vmatpush1.msra.mxu0 %v6587
    %6654 = vmatprep.subr.mxu0 0.0
    %6655 = vmatpush1.msra.mxu0 %v6588
    %6656 = vmatprep.subr.mxu0 0.0
    %6657 = vmatpush1.msra.mxu0 %v6589
    %6658 = vmatprep.subr.mxu0 0.0
    %6659 = vmatpush1.msra.mxu0 %v6590
    %6660 = vmatprep.subr.mxu0 0.0
    %6661 = vmatpush1.msra.mxu0 %v6591
    %6662 = vmatprep.subr.mxu0 0.0
    %6663 = vmatpush1.msra.mxu0 %v6592
    %6664 = vmatprep.subr.mxu0 0.0
    %6665 = vmatpush1.msra.mxu0 %v6593
    %6666 = vmatprep.subr.mxu0 0.0
    %6667 = vmatpush1.msra.mxu0 %v6594
    %6668 = vmatprep.subr.mxu0 0.0
    %6669 = vmatpush1.msra.mxu0 %v6595
    %6670 = vmatprep.subr.mxu0 0.0
    %6671 = vmatpush1.msra.mxu0 %v6596
    %6672 = vmatprep.subr.mxu0 0.0
    %6673 = vmatpush1.msra.mxu0 %v6597
    %6674 = vmatprep.subr.mxu0 0.0
    %6675 = vmatpush1.msra.mxu0 %v6598
    %6676 = vmatprep.subr.mxu0 0.0
    %6677 = vmatpush1.msra.mxu0 %v6599
    %6678 = vmatprep.subr.mxu0 0.0
    %6679 = vmatpush1.msra.mxu0 %v6600
    %6680 = vmatprep.subr.mxu0 0.0
    %6681 = vmatpush1.msra.mxu0 %v6601
    %6682 = vmatprep.subr.mxu0 0.0
    %6683 = vmatpush1.msra.mxu0 %v6602
    %6684 = vmatprep.subr.mxu0 0.0
    %6685 = vmatpush1.msra.mxu0 %v6603
    %6686 = vmatprep.subr.mxu0 0.0
    %6687 = vmatpush1.msra.mxu0 %v6604
    %6688 = vmatprep.subr.mxu0 0.0
    %6689 = vmatpush1.msra.mxu0 %v6605
    %6690 = vmatprep.subr.mxu0 0.0
    %6691 = vmatpush1.msra.mxu0 %v6606
    %6692 = vmatprep.subr.mxu0 0.0
    %6693 = vmatpush1.msra.mxu0 %v6607
    %6694 = vmatprep.subr.mxu0 0.0
    %6695 = vmatpush1.msra.mxu0 %v6608
    %6696 = vmatprep.subr.mxu0 0.0
    %6697 = vmatpush1.msra.mxu0 %v6609
    %6698 = vmatprep.subr.mxu0 0.0
    %6699 = vmatpush1.msra.mxu0 %v6610
    %6700 = vmatprep.subr.mxu0 0.0
    %6701 = vmatpush1.msra.mxu0 %v6611
    %6702 = vmatprep.subr.mxu0 0.0
    %6703 = vmatpush1.msra.mxu0 %v6612
    %6704 = vmatprep.subr.mxu0 0.0
    %6705 = vmatpush1.msra.mxu0 %v6613
    %6706 = vmatprep.subr.mxu0 0.0
    %6707 = vmatpush1.msra.mxu0 %v6614
    %6708 = vmatprep.subr.mxu0 0.0
    %6709 = vmatpush1.msra.mxu0 %v6615
    %6710 = vmatprep.mubr.f32.mxu0 %v6643
    %6711 = vmatmul.mubr.f32.gmra.mrb[0].mxu0 %v6629
    %v6712 = vpop.f32.mrb[0].mxu0
    %v6713 = vadd.f32 0.0, %v6712
    %v6714 = vpop.f32.mrb[0].mxu0
    %6715 = vdwg.mxu0
    %v6716 = vadd.f32 %v6581, %v6713
    %v6717 = vld [vmem:[#allocation9 + $0x300] sm:$0xff]
    %v6718 = vld [vmem:[#allocation9 + $0x308] sm:$0xff]
    %v6719 = vld [vmem:[#allocation9 + $0x310] sm:$0xff]
    %v6720 = vld [vmem:[#allocation9 + $0x318] sm:$0xff]
    %v6721 = vld [vmem:[#allocation9 + $0x320] sm:$0xff]
    %v6722 = vld [vmem:[#allocation9 + $0x328] sm:$0xff]
    %v6723 = vld [vmem:[#allocation9 + $0x330] sm:$0xff]
    %v6724 = vld [vmem:[#allocation9 + $0x338] sm:$0xff]
    %v6725 = vld [vmem:[#allocation9 + $0x340] sm:$0xff]
    %v6726 = vld [vmem:[#allocation9 + $0x348] sm:$0xff]
    %v6727 = vld [vmem:[#allocation9 + $0x350] sm:$0xff]
    %v6728 = vld [vmem:[#allocation9 + $0x358] sm:$0xff]
    %v6729 = vld [vmem:[#allocation9 + $0x360] sm:$0xff]
    %v6730 = vld [vmem:[#allocation9 + $0x368] sm:$0xff]
    %v6731 = vld [vmem:[#allocation9 + $0x370] sm:$0xff]
    %v6732 = vld [vmem:[#allocation9 + $0x378] sm:$0xff]
    %v6733 = vld [vmem:[#allocation9 + $0x380] sm:$0xff]
    %v6734 = vld [vmem:[#allocation9 + $0x388] sm:$0xff]
    %v6735 = vld [vmem:[#allocation9 + $0x390] sm:$0xff]
    %v6736 = vld [vmem:[#allocation9 + $0x398] sm:$0xff]
    %v6737 = vld [vmem:[#allocation9 + $0x3a0] sm:$0xff]
    %v6738 = vld [vmem:[#allocation9 + $0x3a8] sm:$0xff]
    %v6739 = vld [vmem:[#allocation9 + $0x3b0] sm:$0xff]
    %v6740 = vld [vmem:[#allocation9 + $0x3b8] sm:$0xff]
    %v6741 = vld [vmem:[#allocation9 + $0x3c0] sm:$0xff]
    %v6742 = vld [vmem:[#allocation9 + $0x3c8] sm:$0xff]
    %v6743 = vld [vmem:[#allocation9 + $0x3d0] sm:$0xff]
    %v6744 = vld [vmem:[#allocation9 + $0x3d8] sm:$0xff]
    %v6745 = vld [vmem:[#allocation9 + $0x3e0] sm:$0xff]
    %v6746 = vld [vmem:[#allocation9 + $0x3e8] sm:$0xff]
    %v6747 = vld [vmem:[#allocation9 + $0x3f0] sm:$0xff]
    %v6748 = vld [vmem:[#allocation9 + $0x3f8] sm:$0xff]
    %v6749 = vrot.slane %v6281, 3
    %v6750 = vrot.slane %v6283, 2
    %v6751 = vsel %vm6378, %v6750, %v6749
    %v6752 = vrot.slane %v6285, 1
    %v6753 = vsel %vm6381, %v6752, %v6751
    %v6754 = vsel %vm6384, %v6287, %v6753
    %v6755 = vrot.slane %v6289, 7
    %v6756 = vsel %vm6387, %v6755, %v6754
    %v6757 = vrot.slane %v6291, 6
    %v6758 = vsel %vm6390, %v6757, %v6756
    %v6759 = vrot.slane %v6293, 5
    %v6760 = vsel %vm6393, %v6759, %v6758
    %v6761 = vrot.slane %v6295, 4
    %v6762 = vsel %vm6396, %v6761, %v6760
    %v6763 = vrot.slane %v6282, 3
    %v6764 = vrot.slane %v6284, 2
    %v6765 = vsel %vm6378, %v6764, %v6763
    %v6766 = vrot.slane %v6286, 1
    %v6767 = vsel %vm6381, %v6766, %v6765
    %v6768 = vsel %vm6384, %v6288, %v6767
    %v6769 = vrot.slane %v6290, 7
    %v6770 = vsel %vm6387, %v6769, %v6768
    %v6771 = vrot.slane %v6292, 6
    %v6772 = vsel %vm6390, %v6771, %v6770
    %v6773 = vrot.slane %v6294, 5
    %v6774 = vsel %vm6393, %v6773, %v6772
    %v6775 = vrot.slane %v6296, 4
    %v6776 = vsel %vm6396, %v6775, %v6774
    %6779 = vmatprep.subr.mxu0 0.0
    %6780 = vmatpush1.msra.mxu0 %v6717
    %6781 = vmatprep.subr.mxu0 0.0
    %6782 = vmatpush1.msra.mxu0 %v6718
    %6783 = vmatprep.subr.mxu0 0.0
    %6784 = vmatpush1.msra.mxu0 %v6719
    %6785 = vmatprep.subr.mxu0 0.0
    %6786 = vmatpush1.msra.mxu0 %v6720
    %6787 = vmatprep.subr.mxu0 0.0
    %6788 = vmatpush1.msra.mxu0 %v6721
    %6789 = vmatprep.subr.mxu0 0.0
    %6790 = vmatpush1.msra.mxu0 %v6722
    %6791 = vmatprep.subr.mxu0 0.0
    %6792 = vmatpush1.msra.mxu0 %v6723
    %6793 = vmatprep.subr.mxu0 0.0
    %6794 = vmatpush1.msra.mxu0 %v6724
    %6795 = vmatprep.subr.mxu0 0.0
    %6796 = vmatpush1.msra.mxu0 %v6725
    %6797 = vmatprep.subr.mxu0 0.0
    %6798 = vmatpush1.msra.mxu0 %v6726
    %6799 = vmatprep.subr.mxu0 0.0
    %6800 = vmatpush1.msra.mxu0 %v6727
    %6801 = vmatprep.subr.mxu0 0.0
    %6802 = vmatpush1.msra.mxu0 %v6728
    %6803 = vmatprep.subr.mxu0 0.0
    %6804 = vmatpush1.msra.mxu0 %v6729
    %6805 = vmatprep.subr.mxu0 0.0
    %6806 = vmatpush1.msra.mxu0 %v6730
    %6807 = vmatprep.subr.mxu0 0.0
    %6808 = vmatpush1.msra.mxu0 %v6731
    %6809 = vmatprep.subr.mxu0 0.0
    %6810 = vmatpush1.msra.mxu0 %v6732
    %6811 = vmatprep.subr.mxu0 0.0
    %6812 = vmatpush1.msra.mxu0 %v6733
    %6813 = vmatprep.subr.mxu0 0.0
    %6814 = vmatpush1.msra.mxu0 %v6734
    %6815 = vmatprep.subr.mxu0 0.0
    %6816 = vmatpush1.msra.mxu0 %v6735
    %6817 = vmatprep.subr.mxu0 0.0
    %6818 = vmatpush1.msra.mxu0 %v6736
    %6819 = vmatprep.subr.mxu0 0.0
    %6820 = vmatpush1.msra.mxu0 %v6737
    %6821 = vmatprep.subr.mxu0 0.0
    %6822 = vmatpush1.msra.mxu0 %v6738
    %6823 = vmatprep.subr.mxu0 0.0
    %6824 = vmatpush1.msra.mxu0 %v6739
    %6825 = vmatprep.subr.mxu0 0.0
    %6826 = vmatpush1.msra.mxu0 %v6740
    %6827 = vmatprep.subr.mxu0 0.0
    %6828 = vmatpush1.msra.mxu0 %v6741
    %6829 = vmatprep.subr.mxu0 0.0
    %6830 = vmatpush1.msra.mxu0 %v6742
    %6831 = vmatprep.subr.mxu0 0.0
    %6832 = vmatpush1.msra.mxu0 %v6743
    %6833 = vmatprep.subr.mxu0 0.0
    %6834 = vmatpush1.msra.mxu0 %v6744
    %6835 = vmatprep.subr.mxu0 0.0
    %6836 = vmatpush1.msra.mxu0 %v6745
    %6837 = vmatprep.subr.mxu0 0.0
    %6838 = vmatpush1.msra.mxu0 %v6746
    %6839 = vmatprep.subr.mxu0 0.0
    %6840 = vmatpush1.msra.mxu0 %v6747
    %6841 = vmatprep.subr.mxu0 0.0
    %6842 = vmatpush1.msra.mxu0 %v6748
    %6843 = vmatprep.mubr.f32.mxu0 %v6776
    %6844 = vmatmul.mubr.f32.gmra.mrb[0].mxu0 %v6762
    %v6845 = vpop.f32.mrb[0].mxu0
    %v6846 = vadd.f32 0.0, %v6845
    %v6847 = vpop.f32.mrb[0].mxu0
    %6848 = vdwg.mxu0
    %v6849 = vadd.f32 %v6716, %v6846
    %v6850 = vld [vmem:[#allocation10] sm:$0x1]
    %v6852 = vlaneseq
    %v6853 = vshrl.u32 %v6852, 7
    %v6854 = vsub.s32 0, %v6853
    %v6855 = vrot.slane %v6850, %v6854
    %v6857 = vadd.f32 %v6849, %v6855
    %6858 = vst [vmem:[%s7] sm:$0xff] %v6857
    // Predicated region
    $region54: #{simple_cnn_forward.1} parent=1 // pred_check
      _
    $region55: #{simple_cnn_forward.1} parent=1 // pred_check_branch
      %6860 = sbr.rel (0) target = $region57
    $region56: #{simple_cnn_forward.1} parent=1 // pred_region
      _
    $region57: #{simple_cnn_forward.1} parent=1 // pred_fallthru
      _
    // Predicated region
    $region58: #{simple_cnn_forward.1} parent=1 // pred_check
      _
    $region59: #{simple_cnn_forward.1} parent=1 // pred_check_branch
      %6862 = sbr.rel (0) target = $region61
    $region60: #{simple_cnn_forward.1} parent=1 // pred_region
      _
    $region61: #{simple_cnn_forward.1} parent=1 // pred_fallthru
      _
    %6863 = vsyncpa [#allocation3], 1
    %6864 = vsyncpa [#allocation5], 1
    %6865 = vsyncpa [#allocation8], 1
    %6866 = vsyncpa [#allocation11], 1

</llo_original>
